<compile_context>
chip_gen: v7x
topology: tpu7x:2x2x1
jax: 0.10.0
libtpu: 0.0.40
codegen_flags: <defaults>
</compile_context>

<pallas_src>
import functools

import jax
import jax.numpy as jnp
from jax import lax
from jax.experimental import pallas as pl
from jax.experimental.pallas import tpu as pltpu

BN_EPS = 1e-5

_PARAM_ORDER = (
    'sa_rw', 'sa_rb', 'sa_cw', 'sa_cb', 'sa_lw', 'sa_lb',
    'ca_w0', 'ca_b0', 'ca_w1', 'ca_b1', 'ca_w2', 'ca_b2', 'ca_wl', 'ca_bl',
    'p1_w', 'p1_b', 'p21_w', 'p21_b', 'p22_w', 'p22_b',
)


def _sigmoid(z):
    # Exact logistic: exp on the EUP + one VALU divide.
    # TODO(synk): move the divide to pl.reciprocal(approx=True) (EUP slot) once a
    # tolerance test vs. the PyTorch reference blesses the ~1e-3 rel-error that
    # compounds through the two (1+sigmoid) gates.
    return 1.0 / (1.0 + jnp.exp(-z))


def _pick_chunk(hw):
    for c in (64, 32, 16, 8):
        if hw % c == 0:
            return c
    return hw


# --------------------------------------------------------------------------
# Fused BAMBlock kernel (one grid step per batch image)
# --------------------------------------------------------------------------
def _bam_kernel(
    x_ref,                    # ((H+4)*W, C) f32  -- x row-padded by 2 zero rows top/bottom
    sa_rw_ref, sa_rb_ref,     # (C, Cr) bf16, (1, Cr) f32        SA reduce 1x1 (BN folded)
    sa_cw_ref, sa_cb_ref,     # (3, 9*Cr, Cr) bf16, (3, 1, Cr)   SA dilated 3x3 (im2col-packed)
    sa_lw_ref, sa_lb_ref,     # (Cr, 1) bf16, (1, 1) f32         SA last 1x1
    ca_w0_ref, ca_b0_ref,     # (C, Cr) f32, (1, Cr) f32         CA MLP (BN folded)
    ca_w1_ref, ca_b1_ref,     # (Cr, Cr), (1, Cr)
    ca_w2_ref, ca_b2_ref,     # (Cr, Cr), (1, Cr)
    ca_wl_ref, ca_bl_ref,     # (Cr, C), (1, C)
    p1_w_ref, p1_b_ref,       # (9*C, C) bf16, (1, C) f32        prm_1 3x3 (im2col-packed)
    p21_w_ref, p21_b_ref,     # (C, C) f32, (1, C)               prm_2_1 1x1
    p22_w_ref, p22_b_ref,     # (C, C) f32, (1, C)               prm_2_2 1x1
    o_ref,                    # (HW, C) f32
    t_pad_ref,                # scratch (HW + 2*(dil+1)*W, Cr) f32  -- SA halo
    sa_slab_ref,              # scratch (HW, 9*Cr) bf16             -- SA im2col slab
    p1_slab_ref,              # scratch (HW, 9*C) bf16              -- prm_1 im2col slab
    sa_map_ref,               # scratch (HW, 1) f32                 -- SA map for the epilogue
    *, H, W, dil, chunk):
    HW = H * W
    xb = 2 * W                 # base row of the true image inside row-padded x
    tb = (dil + 1) * W         # base row of the true map inside the SA halo scratch
    Cr = sa_rb_ref.shape[-1]
    inv_hw = 1.0 / float(HW)

    def col_masks(n, d):
        # Column index is periodic with W and every halo offset is a multiple of W,
        # so a plain iota-mod gives the output column of each haloed-slab row.
        col = lax.broadcasted_iota(jnp.int32, (n, 1), 0) % W
        m_p = (col + d < W).astype(jnp.float32)    # valid output cols for the +d taps
        m_m = (col >= d).astype(jnp.float32)       # valid output cols for the -d taps
        return m_p, m_m

    def conv3x3(src_ref, base, slab_ref, w, bias, d, masks):
        """'same' 3x3 dilated conv as ONE K=9*Cin MXU matmul.

        Three haloed row slabs (centre + the two column-shifted ones, masked in f32
        before a single bf16 cast each) are scattered into an in-VMEM im2col slab.
        Per conv: 2 mask multiplies, 3 casts, 2 misaligned slab reads, 1 matmul
        (previously 6 masks / 9 casts / 6 misaligned reads / 9 small matmuls)."""
        n = HW + 2 * d * W
        m_p, m_m = masks
        cin = src_ref.shape[-1]
        s_c = src_ref[pl.ds(base - d * W, n), :].astype(jnp.bfloat16)
        s_p = (src_ref[pl.ds(base - d * W + d, n), :] * m_p).astype(jnp.bfloat16)
        s_m = (src_ref[pl.ds(base - d * W - d, n), :] * m_m).astype(jnp.bfloat16)
        for kh in range(3):
            r0 = kh * d * W                       # aligned (multiple of W) value slice
            for kw, s in ((0, s_m), (1, s_c), (2, s_p)):
                k = kh * 3 + kw                   # matches (kh, kw, cin) weight packing
                slab_ref[:, k * cin:(k + 1) * cin] = s[r0:r0 + HW, :]
        return jnp.dot(slab_ref[...], w, preferred_element_type=jnp.float32) + bias

    def ca_mlp(v):
        """ChannelAttention MLP (BN folded), f32 throughout.  v: (1, C) -> (1, C)."""
        h = jnp.maximum(jnp.dot(v, ca_w0_ref[...],
                                preferred_element_type=jnp.float32) + ca_b0_ref[...], 0.0)
        h = jnp.maximum(jnp.dot(h, ca_w1_ref[...],
                                preferred_element_type=jnp.float32) + ca_b1_ref[...], 0.0)
        h = jnp.maximum(jnp.dot(h, ca_w2_ref[...],
                                preferred_element_type=jnp.float32) + ca_b2_ref[...], 0.0)
        return jnp.dot(h, ca_wl_ref[...],
                       preferred_element_type=jnp.float32) + ca_bl_ref[...]

    # ---- load x once; channel attention on the XLU column-sum mean ----------------
    x = x_ref[pl.ds(xb, HW), :]                                      # (HW, C) f32
    x_mean = jnp.sum(x, axis=0, keepdims=True) * inv_hw              # (1, C)
    ca_vec = ca_mlp(x_mean)                                          # (1, C)

    # ---- spatial attention on the full map (all intermediates VMEM-resident) ------
    t = jnp.maximum(
        jnp.dot(x.astype(jnp.bfloat16), sa_rw_ref[...],
                preferred_element_type=jnp.float32) + sa_rb_ref[...], 0.0)    # (HW, Cr)
    t_pad_ref[...] = jnp.zeros(t_pad_ref.shape, t_pad_ref.dtype)     # zero halo once
    sa_masks = col_masks(HW + 2 * dil * W, dil)
    for l in range(3):
        t_pad_ref[pl.ds(tb, HW), :] = t
        t = jnp.maximum(
            conv3x3(t_pad_ref, tb, sa_slab_ref, sa_cw_ref[l], sa_cb_ref[l],
                    dil, sa_masks), 0.0)
    sa_map_ref[...] = jnp.dot(t.astype(jnp.bfloat16), sa_lw_ref[...],
                              preferred_element_type=jnp.float32) + sa_lb_ref[...]

    # ---- prm_1 (3x3 conv + BN + ReLU) -> global average pool ----------------------
    y = jnp.maximum(
        conv3x3(x_ref, xb, p1_slab_ref, p1_w_ref[...], p1_b_ref[...],
                1, col_masks(HW + 2 * W, 1)), 0.0)                   # (HW, C)
    v = jnp.sum(y, axis=0, keepdims=True) * inv_hw                   # (1, C)

    # ---- prm_2_1 / prm_2_2 on the pooled vector -----------------------------------
    v = jnp.maximum(jnp.dot(v, p21_w_ref[...],
                            preferred_element_type=jnp.float32) + p21_b_ref[...], 0.0)
    v = jnp.maximum(jnp.dot(v, p22_w_ref[...],
                            preferred_element_type=jnp.float32) + p22_b_ref[...], 0.0)

    # ---- SA / CA on the pooled 1x1 map (only the centre conv tap sees data) -------
    s1 = jnp.maximum(
        jnp.dot(v.astype(jnp.bfloat16), sa_rw_ref[...],
                preferred_element_type=jnp.float32) + sa_rb_ref[...], 0.0)    # (1, Cr)
    for l in range(3):
        wc = sa_cw_ref[l][4 * Cr:5 * Cr, :]                          # centre-tap weights
        s1 = jnp.maximum(
            jnp.dot(s1.astype(jnp.bfloat16), wc,
                    preferred_element_type=jnp.float32) + sa_cb_ref[l], 0.0)
    sa2 = jnp.dot(s1.astype(jnp.bfloat16), sa_lw_ref[...],
                  preferred_element_type=jnp.float32) + sa_lb_ref[...]        # (1, 1)
    ca2 = ca_mlp(v)                                                  # (1, C)

    # ---- chunked epilogue: out1 = (1+sig(sa+ca))*x ; out = (1+sig(out1+sa2+ca2))*x -
    g1 = ca_vec                                                      # (1, C)
    g2 = sa2 + ca2                                                   # (1, C)

    def epilogue(c, carry):
        r = pl.multiple_of(c * chunk, chunk)
        xc = x_ref[pl.ds(xb + r, chunk), :]                          # (chunk, C)
        sc = sa_map_ref[pl.ds(r, chunk), :]                          # (chunk, 1)
        w1 = _sigmoid(sc + g1)
        out1 = (1.0 + w1) * xc
        w2 = _sigmoid(out1 + g2)
        o_ref[pl.ds(r, chunk), :] = ((1.0 + w2) * xc).astype(o_ref.dtype)
        return carry

    lax.fori_loop(0, HW // chunk, epilogue, 0, unroll=True)


# --------------------------------------------------------------------------
# BAMBlock forward wrapper
# --------------------------------------------------------------------------
def bam_forward(x_nchw, P, *, dia_val=2):
    N, C, H, W = x_nchw.shape
    HW = H * W
    Cr = P['sa_rb'].shape[-1]
    # 2 zero rows of padding top/bottom: enough halo for prm_1's 3x3/dil=1 slab
    # reads (W + 1 rows needed).  The SA convs use their own haloed scratch.
    Lp = (H + 4) * W
    chunk = _pick_chunk(HW)

    x_nhwc = jnp.transpose(x_nchw, (0, 2, 3, 1)).astype(jnp.float32)
    xp = jnp.pad(x_nhwc, ((0, 0), (2, 2), (0, 0), (0, 0))).reshape(N, Lp, C)

    def _wspec(a):
        zeros = (0,) * a.ndim
        return pl.BlockSpec(a.shape, lambda n, _z=zeros: _z)   # weights VMEM-resident

    kern = functools.partial(_bam_kernel, H=H, W=W, dil=dia_val, chunk=chunk)
    out_flat = pl.pallas_call(
        kern,
        out_shape=jax.ShapeDtypeStruct((N, HW, C), jnp.float32),
        grid_spec=pltpu.PrefetchScalarGridSpec(
            num_scalar_prefetch=0,
            grid=(N,),
            in_specs=[pl.BlockSpec((None, Lp, C), lambda n: (n, 0, 0))]
                     + [_wspec(P[k]) for k in _PARAM_ORDER],
            out_specs=pl.BlockSpec((None, HW, C), lambda n: (n, 0, 0)),
            scratch_shapes=[
                pltpu.VMEM((HW + 2 * (dia_val + 1) * W, Cr), jnp.float32),  # SA halo
                pltpu.VMEM((HW, 9 * Cr), jnp.bfloat16),                     # SA im2col
                pltpu.VMEM((HW, 9 * C), jnp.bfloat16),                      # prm_1 im2col
                pltpu.VMEM((HW, 1), jnp.float32),                           # SA map
            ],
        ),
        compiler_params=pltpu.CompilerParams(
            dimension_semantics=("parallel",),
            # Explicit scoped-VMEM budget (v7x has 64 MiB physical / 32 MiB default).
            vmem_limit_bytes=32 * 1024 * 1024,
        ),
    )(xp, *[P[k] for k in _PARAM_ORDER])

    return jnp.transpose(out_flat.reshape(N, H, W, C), (0, 3, 1, 2))   # NCHW


# --------------------------------------------------------------------------
# Parameter init (deterministic, synthetic) + eval-mode BN folding
# --------------------------------------------------------------------------
def _fold_bn_conv(w, b, gamma, beta, mean, var, eps=BN_EPS):
    scale = gamma / jnp.sqrt(var + eps)
    return w * scale[:, None, None, None], (b - mean) * scale + beta


def _fold_bn_linear(w, b, gamma, beta, mean, var, eps=BN_EPS):
    scale = gamma / jnp.sqrt(var + eps)
    return w * scale[:, None], (b - mean) * scale + beta


def _init_conv(key, cout, cin, k):
    kw, kb = jax.random.split(key)
    fan = cin * k * k
    w = jax.random.normal(kw, (cout, cin, k, k), jnp.float32) / jnp.sqrt(float(fan))
    b = 0.01 * jax.random.normal(kb, (cout,), jnp.float32)
    return w, b


def _init_linear(key, cout, cin):
    kw, _ = jax.random.split(key)
    w = 0.05 * jax.random.normal(kw, (cout, cin), jnp.float32)
    b = jnp.zeros((cout,), jnp.float32)
    return w, b


def _init_bn(key, c):
    k1, k2 = jax.random.split(key)
    gamma = 1.0 + 0.1 * jax.random.normal(k1, (c,), jnp.float32)
    beta = 0.1 * jax.random.normal(k2, (c,), jnp.float32)
    mean = jnp.zeros((c,), jnp.float32)
    var = jnp.ones((c,), jnp.float32)
    return gamma, beta, mean, var


def init_params(key, channel, reduction=16):
    """Kernel-ready parameters: BN folded, im2col-packed conv weights, bf16 MXU weights."""
    Cr = channel // reduction
    keys = iter(jax.random.split(key, 48))

    def conv(cout, cin, k):
        w, b = _init_conv(next(keys), cout, cin, k)
        return _fold_bn_conv(w, b, *_init_bn(next(keys), cout))

    def lin(cout, cin):
        w, b = _init_linear(next(keys), cout, cin)
        return _fold_bn_linear(w, b, *_init_bn(next(keys), cout))

    P = {}
    # SpatialAttention (shared between sa(x) and sa(out_2))
    w, b = conv(Cr, channel, 1)
    P['sa_rw'] = w[:, :, 0, 0].T.astype(jnp.bfloat16)                 # (C, Cr)
    P['sa_rb'] = b.reshape(1, Cr)
    cws, cbs = [], []
    for _ in range(3):                                                # num_layers=3, dil=2
        w, b = conv(Cr, Cr, 3)
        # (Cout, Cin, kh, kw) -> (kh, kw, Cin, Cout) -> (9*Cin, Cout): im2col packing
        cws.append(jnp.transpose(w, (2, 3, 1, 0)).reshape(9 * Cr, Cr))
        cbs.append(b.reshape(1, Cr))
    P['sa_cw'] = jnp.stack(cws, 0).astype(jnp.bfloat16)               # (3, 9*Cr, Cr)
    P['sa_cb'] = jnp.stack(cbs, 0)                                    # (3, 1, Cr)
    w, b = _init_conv(next(keys), 1, Cr, 1)                           # last conv: no BN
    P['sa_lw'] = w[:, :, 0, 0].T.astype(jnp.bfloat16)                 # (Cr, 1)
    P['sa_lb'] = b.reshape(1, 1)

    # ChannelAttention MLP: gate_channels = [C, Cr, Cr, Cr, C]
    gate = [channel, Cr, Cr, Cr, channel]
    for i in range(3):
        w, b = lin(gate[i + 1], gate[i])
        P[f'ca_w{i}'] = w.T                                           # (Cin, Cout) f32
        P[f'ca_b{i}'] = b.reshape(1, gate[i + 1])
    w, b = _init_linear(next(keys), channel, Cr)                      # last fc: no BN
    P['ca_wl'] = w.T                                                  # (Cr, C)
    P['ca_bl'] = b.reshape(1, channel)

    # conv_bn_relu_prm_1 / _2_1 / _2_2
    w, b = conv(channel, channel, 3)
    P['p1_w'] = jnp.transpose(w, (2, 3, 1, 0)).reshape(
        9 * channel, channel).astype(jnp.bfloat16)                    # (9*C, C) im2col
    P['p1_b'] = b.reshape(1, channel)
    w, b = conv(channel, channel, 1)
    P['p21_w'] = w[:, :, 0, 0].T
    P['p21_b'] = b.reshape(1, channel)
    w, b = conv(channel, channel, 1)
    P['p22_w'] = w[:, :, 0, 0].T
    P['p22_b'] = b.reshape(1, channel)
    return P


# --------------------------------------------------------------------------
if __name__ == "__main__":
    key = jax.random.PRNGKey(0)
    kx, kp = jax.random.split(key)

    N, C, H, W = 2, 64, 16, 16          # channel divisible by reduction=16 (Cr=4)
    x = jax.random.normal(kx, (N, C, H, W), jnp.float32)
    params = init_params(kp, C, reduction=16)

    out = jax.jit(bam_forward)(x, params)
    out = jax.block_until_ready(out)
    assert out.shape == (N, C, H, W) and out.dtype == jnp.float32
    assert bool(jnp.all(jnp.isfinite(out)))
    print("KERNEL_OK")
</pallas_src>

<mosaic_0001>
module attributes {stable_mosaic.version = 11 : i64} {
  func.func @_bam_kernel(%arg0: i32, %arg1: memref<1x320x64xf32, #tpu.memory_space<vmem>>, %arg2: memref<64x4xbf16, #tpu.memory_space<vmem>>, %arg3: memref<1x4xf32, #tpu.memory_space<vmem>>, %arg4: memref<3x36x4xbf16, #tpu.memory_space<vmem>>, %arg5: memref<3x1x4xf32, #tpu.memory_space<vmem>>, %arg6: memref<4x1xbf16, #tpu.memory_space<vmem>>, %arg7: memref<1x1xf32, #tpu.memory_space<vmem>>, %arg8: memref<64x4xf32, #tpu.memory_space<vmem>>, %arg9: memref<1x4xf32, #tpu.memory_space<vmem>>, %arg10: memref<4x4xf32, #tpu.memory_space<vmem>>, %arg11: memref<1x4xf32, #tpu.memory_space<vmem>>, %arg12: memref<4x4xf32, #tpu.memory_space<vmem>>, %arg13: memref<1x4xf32, #tpu.memory_space<vmem>>, %arg14: memref<4x64xf32, #tpu.memory_space<vmem>>, %arg15: memref<1x64xf32, #tpu.memory_space<vmem>>, %arg16: memref<576x64xbf16, #tpu.memory_space<vmem>>, %arg17: memref<1x64xf32, #tpu.memory_space<vmem>>, %arg18: memref<64x64xf32, #tpu.memory_space<vmem>>, %arg19: memref<1x64xf32, #tpu.memory_space<vmem>>, %arg20: memref<64x64xf32, #tpu.memory_space<vmem>>, %arg21: memref<1x64xf32, #tpu.memory_space<vmem>>, %arg22: memref<1x256x64xf32, #tpu.memory_space<vmem>>, %arg23: memref<352x4xf32, #tpu.memory_space<vmem>>, %arg24: memref<256x36xbf16, #tpu.memory_space<vmem>>, %arg25: memref<256x576xbf16, #tpu.memory_space<vmem>>, %arg26: memref<256x1xf32, #tpu.memory_space<vmem>>) attributes {dimension_semantics = [#tpu.dimension_semantics<parallel>], iteration_bounds = array<i64: 2>, scalar_prefetch = 0 : i64, scratch_operands = 4 : i64, tpu.core_type = #tpu.core_type<tc>, window_params = [{transform_indices = @transform_0, window_bounds = array<i64: 1, 320, 64>}, {pipeline_mode = #tpu.pipeline_mode<synchronous>, transform_indices = @transform_1, window_bounds = array<i64: 64, 4>}, {pipeline_mode = #tpu.pipeline_mode<synchronous>, transform_indices = @transform_2, window_bounds = array<i64: 1, 4>}, {pipeline_mode = #tpu.pipeline_mode<synchronous>, transform_indices = @transform_3, window_bounds = array<i64: 3, 36, 4>}, {pipeline_mode = #tpu.pipeline_mode<synchronous>, transform_indices = @transform_4, window_bounds = array<i64: 3, 1, 4>}, {pipeline_mode = #tpu.pipeline_mode<synchronous>, transform_indices = @transform_5, window_bounds = array<i64: 4, 1>}, {pipeline_mode = #tpu.pipeline_mode<synchronous>, transform_indices = @transform_6, window_bounds = array<i64: 1, 1>}, {pipeline_mode = #tpu.pipeline_mode<synchronous>, transform_indices = @transform_7, window_bounds = array<i64: 64, 4>}, {pipeline_mode = #tpu.pipeline_mode<synchronous>, transform_indices = @transform_8, window_bounds = array<i64: 1, 4>}, {pipeline_mode = #tpu.pipeline_mode<synchronous>, transform_indices = @transform_9, window_bounds = array<i64: 4, 4>}, {pipeline_mode = #tpu.pipeline_mode<synchronous>, transform_indices = @transform_10, window_bounds = array<i64: 1, 4>}, {pipeline_mode = #tpu.pipeline_mode<synchronous>, transform_indices = @transform_11, window_bounds = array<i64: 4, 4>}, {pipeline_mode = #tpu.pipeline_mode<synchronous>, transform_indices = @transform_12, window_bounds = array<i64: 1, 4>}, {pipeline_mode = #tpu.pipeline_mode<synchronous>, transform_indices = @transform_13, window_bounds = array<i64: 4, 64>}, {pipeline_mode = #tpu.pipeline_mode<synchronous>, transform_indices = @transform_14, window_bounds = array<i64: 1, 64>}, {pipeline_mode = #tpu.pipeline_mode<synchronous>, transform_indices = @transform_15, window_bounds = array<i64: 576, 64>}, {pipeline_mode = #tpu.pipeline_mode<synchronous>, transform_indices = @transform_16, window_bounds = array<i64: 1, 64>}, {pipeline_mode = #tpu.pipeline_mode<synchronous>, transform_indices = @transform_17, window_bounds = array<i64: 64, 64>}, {pipeline_mode = #tpu.pipeline_mode<synchronous>, transform_indices = @transform_18, window_bounds = array<i64: 1, 64>}, {pipeline_mode = #tpu.pipeline_mode<synchronous>, transform_indices = @transform_19, window_bounds = array<i64: 64, 64>}, {pipeline_mode = #tpu.pipeline_mode<synchronous>, transform_indices = @transform_20, window_bounds = array<i64: 1, 64>}, {transform_indices = @transform_21, window_bounds = array<i64: 1, 256, 64>}]} {
    %c0 = arith.constant 0 : index
    %c32 = arith.constant 32 : index
    %c0_0 = arith.constant 0 : index
    %0 = vector.load %arg1[%c0, %c32, %c0_0] : memref<1x320x64xf32, #tpu.memory_space<vmem>>, vector<1x256x64xf32>
    %1 = vector.shape_cast %0 : vector<1x256x64xf32> to vector<256x64xf32>
    %cst = arith.constant dense<0.000000e+00> : vector<64xf32>
    %2 = vector.multi_reduction <add>, %1, %cst [0] : vector<256x64xf32> to vector<64xf32>
    %3 = vector.shape_cast %2 : vector<64xf32> to vector<1x64xf32>
    %cst_1 = arith.constant 3.906250e-03 : f32
    %4 = vector.broadcast %cst_1 : f32 to vector<1x64xf32>
    %5 = arith.mulf %3, %4 : vector<1x64xf32>
    %c0_2 = arith.constant 0 : index
    %c0_3 = arith.constant 0 : index
    %6 = vector.load %arg8[%c0_2, %c0_3] : memref<64x4xf32, #tpu.memory_space<vmem>>, vector<64x4xf32>
    %cst_4 = arith.constant dense<0.000000e+00> : vector<1x4xf32>
    %7 = tpu.matmul %5, %6, %cst_4 {dimension_numbers = #tpu.dot_dimension_numbers<[1], [0], [0], [1], [0, 0, 1, 1], [], []>} : vector<1x64xf32>, vector<64x4xf32>, vector<1x4xf32> -> vector<1x4xf32>
    %c0_5 = arith.constant 0 : index
    %c0_6 = arith.constant 0 : index
    %8 = vector.load %arg9[%c0_5, %c0_6] : memref<1x4xf32, #tpu.memory_space<vmem>>, vector<1x4xf32>
    %9 = arith.addf %7, %8 : vector<1x4xf32>
    %cst_7 = arith.constant 0.000000e+00 : f32
    %10 = vector.broadcast %cst_7 : f32 to vector<1x4xf32>
    %11 = arith.maximumf %9, %10 : vector<1x4xf32>
    %c0_8 = arith.constant 0 : index
    %c0_9 = arith.constant 0 : index
    %12 = vector.load %arg10[%c0_8, %c0_9] : memref<4x4xf32, #tpu.memory_space<vmem>>, vector<4x4xf32>
    %cst_10 = arith.constant dense<0.000000e+00> : vector<1x4xf32>
    %13 = tpu.matmul %11, %12, %cst_10 {dimension_numbers = #tpu.dot_dimension_numbers<[1], [0], [0], [1], [0, 0, 1, 1], [], []>} : vector<1x4xf32>, vector<4x4xf32>, vector<1x4xf32> -> vector<1x4xf32>
    %c0_11 = arith.constant 0 : index
    %c0_12 = arith.constant 0 : index
    %14 = vector.load %arg11[%c0_11, %c0_12] : memref<1x4xf32, #tpu.memory_space<vmem>>, vector<1x4xf32>
    %15 = arith.addf %13, %14 : vector<1x4xf32>
    %cst_13 = arith.constant 0.000000e+00 : f32
    %16 = vector.broadcast %cst_13 : f32 to vector<1x4xf32>
    %17 = arith.maximumf %15, %16 : vector<1x4xf32>
    %c0_14 = arith.constant 0 : index
    %c0_15 = arith.constant 0 : index
    %18 = vector.load %arg12[%c0_14, %c0_15] : memref<4x4xf32, #tpu.memory_space<vmem>>, vector<4x4xf32>
    %cst_16 = arith.constant dense<0.000000e+00> : vector<1x4xf32>
    %19 = tpu.matmul %17, %18, %cst_16 {dimension_numbers = #tpu.dot_dimension_numbers<[1], [0], [0], [1], [0, 0, 1, 1], [], []>} : vector<1x4xf32>, vector<4x4xf32>, vector<1x4xf32> -> vector<1x4xf32>
    %c0_17 = arith.constant 0 : index
    %c0_18 = arith.constant 0 : index
    %20 = vector.load %arg13[%c0_17, %c0_18] : memref<1x4xf32, #tpu.memory_space<vmem>>, vector<1x4xf32>
    %21 = arith.addf %19, %20 : vector<1x4xf32>
    %cst_19 = arith.constant 0.000000e+00 : f32
    %22 = vector.broadcast %cst_19 : f32 to vector<1x4xf32>
    %23 = arith.maximumf %21, %22 : vector<1x4xf32>
    %c0_20 = arith.constant 0 : index
    %c0_21 = arith.constant 0 : index
    %24 = vector.load %arg14[%c0_20, %c0_21] : memref<4x64xf32, #tpu.memory_space<vmem>>, vector<4x64xf32>
    %cst_22 = arith.constant dense<0.000000e+00> : vector<1x64xf32>
    %25 = tpu.matmul %23, %24, %cst_22 {dimension_numbers = #tpu.dot_dimension_numbers<[1], [0], [0], [1], [0, 0, 1, 1], [], []>} : vector<1x4xf32>, vector<4x64xf32>, vector<1x64xf32> -> vector<1x64xf32>
    %c0_23 = arith.constant 0 : index
    %c0_24 = arith.constant 0 : index
    %26 = vector.load %arg15[%c0_23, %c0_24] : memref<1x64xf32, #tpu.memory_space<vmem>>, vector<1x64xf32>
    %27 = arith.addf %25, %26 : vector<1x64xf32>
    %28 = arith.truncf %1 : vector<256x64xf32> to vector<256x64xbf16>
    %c0_25 = arith.constant 0 : index
    %c0_26 = arith.constant 0 : index
    %29 = vector.load %arg2[%c0_25, %c0_26] : memref<64x4xbf16, #tpu.memory_space<vmem>>, vector<64x4xbf16>
    %cst_27 = arith.constant dense<0.000000e+00> : vector<256x4xf32>
    %30 = tpu.matmul %28, %29, %cst_27 {dimension_numbers = #tpu.dot_dimension_numbers<[1], [0], [0], [1], [0, 0, 1, 1], [], []>} : vector<256x64xbf16>, vector<64x4xbf16>, vector<256x4xf32> -> vector<256x4xf32>
    %c0_28 = arith.constant 0 : index
    %c0_29 = arith.constant 0 : index
    %31 = vector.load %arg3[%c0_28, %c0_29] : memref<1x4xf32, #tpu.memory_space<vmem>>, vector<1x4xf32>
    %32 = vector.broadcast %31 : vector<1x4xf32> to vector<256x4xf32>
    %33 = arith.addf %30, %32 : vector<256x4xf32>
    %cst_30 = arith.constant 0.000000e+00 : f32
    %34 = vector.broadcast %cst_30 : f32 to vector<256x4xf32>
    %35 = arith.maximumf %33, %34 : vector<256x4xf32>
    %cst_31 = arith.constant 0.000000e+00 : f32
    %36 = vector.broadcast %cst_31 : f32 to vector<352x4xf32>
    %c0_32 = arith.constant 0 : index
    %c0_33 = arith.constant 0 : index
    %37 = vector.load %arg23[%c0_32, %c0_33] : memref<352x4xf32, #tpu.memory_space<vmem>>, vector<352x4xf32>
    tpu.vector_store %arg23[%c0_32, %c0_33], %36 {strides = array<i32>} : memref<352x4xf32, #tpu.memory_space<vmem>>, vector<352x4xf32>,
    %38 = tpu.iota {dimensions = array<i32: 0>} : vector<320x1xi32>
    %c16_i32 = arith.constant 16 : i32
    %c0_i32 = arith.constant 0 : i32
    %39 = arith.cmpi eq, %c16_i32, %c0_i32 : i32
    %c1_i32 = arith.constant 1 : i32
    %40 = arith.select %39, %c1_i32, %c16_i32 : i32
    %41 = vector.broadcast %40 : i32 to vector<320x1xi32>
    %42 = arith.remsi %38, %41 : vector<320x1xi32>
    %c0_i32_34 = arith.constant 0 : i32
    %43 = vector.broadcast %c0_i32_34 : i32 to vector<320x1xi32>
    %44 = arith.cmpi ne, %42, %43 : vector<320x1xi32>
    %c0_i32_35 = arith.constant 0 : i32
    %45 = vector.broadcast %c0_i32_35 : i32 to vector<320x1xi32>
    %46 = arith.cmpi slt, %42, %45 : vector<320x1xi32>
    %c0_i32_36 = arith.constant 0 : i32
    %47 = arith.cmpi slt, %40, %c0_i32_36 : i32
    %48 = vector.broadcast %47 : i1 to vector<320x1xi1>
    %49 = vector.broadcast %48 : vector<320x1xi1> to vector<320x1xi1>
    %50 = arith.xori %46, %49 : vector<320x1xi1>
    %51 = arith.andi %50, %44 : vector<320x1xi1>
    %52 = vector.broadcast %40 : i32 to vector<320x1xi32>
    %53 = arith.addi %42, %52 : vector<320x1xi32>
    %54 = arith.select %51, %53, %42 : vector<320x1xi1>, vector<320x1xi32>
    %c2_i32 = arith.constant 2 : i32
    %55 = vector.broadcast %c2_i32 : i32 to vector<320x1xi32>
    %56 = arith.addi %54, %55 : vector<320x1xi32>
    %c16_i32_37 = arith.constant 16 : i32
    %57 = vector.broadcast %c16_i32_37 : i32 to vector<320x1xi32>
    %58 = arith.cmpi slt, %56, %57 : vector<320x1xi32>
    %59 = arith.extui %58 : vector<320x1xi1> to vector<320x1xi32>
    %60 = arith.sitofp %59 : vector<320x1xi32> to vector<320x1xf32>
    %c2_i32_38 = arith.constant 2 : i32
    %61 = vector.broadcast %c2_i32_38 : i32 to vector<320x1xi32>
    %62 = arith.cmpi sge, %54, %61 : vector<320x1xi32>
    %63 = arith.extui %62 : vector<320x1xi1> to vector<320x1xi32>
    %64 = arith.sitofp %63 : vector<320x1xi32> to vector<320x1xf32>
    %c48 = arith.constant 48 : index
    %c0_39 = arith.constant 0 : index
    %65 = vector.load %arg23[%c48, %c0_39] : memref<352x4xf32, #tpu.memory_space<vmem>>, vector<256x4xf32>
    tpu.vector_store %arg23[%c48, %c0_39], %35 {strides = array<i32>} : memref<352x4xf32, #tpu.memory_space<vmem>>, vector<256x4xf32>,
    %c0_40 = arith.constant 0 : index
    %c0_41 = arith.constant 0 : index
    %c0_42 = arith.constant 0 : index
    %66 = vector.load %arg4[%c0_40, %c0_41, %c0_42] : memref<3x36x4xbf16, #tpu.memory_space<vmem>>, vector<1x36x4xbf16>
    %67 = vector.shape_cast %66 : vector<1x36x4xbf16> to vector<36x4xbf16>
    %c0_43 = arith.constant 0 : index
    %c0_44 = arith.constant 0 : index
    %c0_45 = arith.constant 0 : index
    %68 = vector.load %arg5[%c0_43, %c0_44, %c0_45] : memref<3x1x4xf32, #tpu.memory_space<vmem>>, vector<1x1x4xf32>
    %69 = vector.shape_cast %68 : vector<1x1x4xf32> to vector<1x4xf32>
    %c16 = arith.constant 16 : index
    %c0_46 = arith.constant 0 : index
    %70 = vector.load %arg23[%c16, %c0_46] : memref<352x4xf32, #tpu.memory_space<vmem>>, vector<320x4xf32>
    %71 = arith.truncf %70 : vector<320x4xf32> to vector<320x4xbf16>
    %c18 = arith.constant 18 : index
    %c0_47 = arith.constant 0 : index
    %72 = vector.load %arg23[%c18, %c0_47] : memref<352x4xf32, #tpu.memory_space<vmem>>, vector<320x4xf32>
    %73 = vector.broadcast %60 : vector<320x1xf32> to vector<320x4xf32>
    %74 = arith.mulf %72, %73 : vector<320x4xf32>
    %75 = arith.truncf %74 : vector<320x4xf32> to vector<320x4xbf16>
    %c14 = arith.constant 14 : index
    %c0_48 = arith.constant 0 : index
    %76 = vector.load %arg23[%c14, %c0_48] : memref<352x4xf32, #tpu.memory_space<vmem>>, vector<320x4xf32>
    %77 = vector.broadcast %64 : vector<320x1xf32> to vector<320x4xf32>
    %78 = arith.mulf %76, %77 : vector<320x4xf32>
    %79 = arith.truncf %78 : vector<320x4xf32> to vector<320x4xbf16>
    %80 = vector.extract_strided_slice %79 {offsets = [0, 0], sizes = [256, 4], strides = [1, 1]} : vector<320x4xbf16> to vector<256x4xbf16>
    %c0_49 = arith.constant 0 : index
    %c0_50 = arith.constant 0 : index
    %81 = vector.load %arg24[%c0_49, %c0_50] : memref<256x36xbf16, #tpu.memory_space<vmem>>, vector<256x4xbf16>
    tpu.vector_store %arg24[%c0_49, %c0_50], %80 {strides = array<i32>} : memref<256x36xbf16, #tpu.memory_space<vmem>>, vector<256x4xbf16>,
    %82 = vector.extract_strided_slice %71 {offsets = [0, 0], sizes = [256, 4], strides = [1, 1]} : vector<320x4xbf16> to vector<256x4xbf16>
    %c0_51 = arith.constant 0 : index
    %c4 = arith.constant 4 : index
    %83 = vector.load %arg24[%c0_51, %c4] : memref<256x36xbf16, #tpu.memory_space<vmem>>, vector<256x4xbf16>
    tpu.vector_store %arg24[%c0_51, %c4], %82 {strides = array<i32>} : memref<256x36xbf16, #tpu.memory_space<vmem>>, vector<256x4xbf16>,
    %84 = vector.extract_strided_slice %75 {offsets = [0, 0], sizes = [256, 4], strides = [1, 1]} : vector<320x4xbf16> to vector<256x4xbf16>
    %c0_52 = arith.constant 0 : index
    %c8 = arith.constant 8 : index
    %85 = vector.load %arg24[%c0_52, %c8] : memref<256x36xbf16, #tpu.memory_space<vmem>>, vector<256x4xbf16>
    tpu.vector_store %arg24[%c0_52, %c8], %84 {strides = array<i32>} : memref<256x36xbf16, #tpu.memory_space<vmem>>, vector<256x4xbf16>,
    %86 = vector.extract_strided_slice %79 {offsets = [32, 0], sizes = [256, 4], strides = [1, 1]} : vector<320x4xbf16> to vector<256x4xbf16>
    %c0_53 = arith.constant 0 : index
    %c12 = arith.constant 12 : index
    %87 = vector.load %arg24[%c0_53, %c12] : memref<256x36xbf16, #tpu.memory_space<vmem>>, vector<256x4xbf16>
    tpu.vector_store %arg24[%c0_53, %c12], %86 {strides = array<i32>} : memref<256x36xbf16, #tpu.memory_space<vmem>>, vector<256x4xbf16>,
    %88 = vector.extract_strided_slice %71 {offsets = [32, 0], sizes = [256, 4], strides = [1, 1]} : vector<320x4xbf16> to vector<256x4xbf16>
    %c0_54 = arith.constant 0 : index
    %c16_55 = arith.constant 16 : index
    %89 = vector.load %arg24[%c0_54, %c16_55] : memref<256x36xbf16, #tpu.memory_space<vmem>>, vector<256x4xbf16>
    tpu.vector_store %arg24[%c0_54, %c16_55], %88 {strides = array<i32>} : memref<256x36xbf16, #tpu.memory_space<vmem>>, vector<256x4xbf16>,
    %90 = vector.extract_strided_slice %75 {offsets = [32, 0], sizes = [256, 4], strides = [1, 1]} : vector<320x4xbf16> to vector<256x4xbf16>
    %c0_56 = arith.constant 0 : index
    %c20 = arith.constant 20 : index
    %91 = vector.load %arg24[%c0_56, %c20] : memref<256x36xbf16, #tpu.memory_space<vmem>>, vector<256x4xbf16>
    tpu.vector_store %arg24[%c0_56, %c20], %90 {strides = array<i32>} : memref<256x36xbf16, #tpu.memory_space<vmem>>, vector<256x4xbf16>,
    %92 = vector.extract_strided_slice %79 {offsets = [64, 0], sizes = [256, 4], strides = [1, 1]} : vector<320x4xbf16> to vector<256x4xbf16>
    %c0_57 = arith.constant 0 : index
    %c24 = arith.constant 24 : index
    %93 = vector.load %arg24[%c0_57, %c24] : memref<256x36xbf16, #tpu.memory_space<vmem>>, vector<256x4xbf16>
    tpu.vector_store %arg24[%c0_57, %c24], %92 {strides = array<i32>} : memref<256x36xbf16, #tpu.memory_space<vmem>>, vector<256x4xbf16>,
    %94 = vector.extract_strided_slice %71 {offsets = [64, 0], sizes = [256, 4], strides = [1, 1]} : vector<320x4xbf16> to vector<256x4xbf16>
    %c0_58 = arith.constant 0 : index
    %c28 = arith.constant 28 : index
    %95 = vector.load %arg24[%c0_58, %c28] : memref<256x36xbf16, #tpu.memory_space<vmem>>, vector<256x4xbf16>
    tpu.vector_store %arg24[%c0_58, %c28], %94 {strides = array<i32>} : memref<256x36xbf16, #tpu.memory_space<vmem>>, vector<256x4xbf16>,
    %96 = vector.extract_strided_slice %75 {offsets = [64, 0], sizes = [256, 4], strides = [1, 1]} : vector<320x4xbf16> to vector<256x4xbf16>
    %c0_59 = arith.constant 0 : index
    %c32_60 = arith.constant 32 : index
    %97 = vector.load %arg24[%c0_59, %c32_60] : memref<256x36xbf16, #tpu.memory_space<vmem>>, vector<256x4xbf16>
    tpu.vector_store %arg24[%c0_59, %c32_60], %96 {strides = array<i32>} : memref<256x36xbf16, #tpu.memory_space<vmem>>, vector<256x4xbf16>,
    %c0_61 = arith.constant 0 : index
    %c0_62 = arith.constant 0 : index
    %98 = vector.load %arg24[%c0_61, %c0_62] : memref<256x36xbf16, #tpu.memory_space<vmem>>, vector<256x36xbf16>
    %cst_63 = arith.constant dense<0.000000e+00> : vector<256x4xf32>
    %99 = tpu.matmul %98, %67, %cst_63 {dimension_numbers = #tpu.dot_dimension_numbers<[1], [0], [0], [1], [0, 0, 1, 1], [], []>} : vector<256x36xbf16>, vector<36x4xbf16>, vector<256x4xf32> -> vector<256x4xf32>
    %100 = vector.broadcast %69 : vector<1x4xf32> to vector<256x4xf32>
    %101 = arith.addf %99, %100 : vector<256x4xf32>
    %cst_64 = arith.constant 0.000000e+00 : f32
    %102 = vector.broadcast %cst_64 : f32 to vector<256x4xf32>
    %103 = arith.maximumf %101, %102 : vector<256x4xf32>
    %c48_65 = arith.constant 48 : index
    %c0_66 = arith.constant 0 : index
    %104 = vector.load %arg23[%c48_65, %c0_66] : memref<352x4xf32, #tpu.memory_space<vmem>>, vector<256x4xf32>
    tpu.vector_store %arg23[%c48_65, %c0_66], %103 {strides = array<i32>} : memref<352x4xf32, #tpu.memory_space<vmem>>, vector<256x4xf32>,
    %c1 = arith.constant 1 : index
    %c0_67 = arith.constant 0 : index
    %c0_68 = arith.constant 0 : index
    %105 = vector.load %arg4[%c1, %c0_67, %c0_68] : memref<3x36x4xbf16, #tpu.memory_space<vmem>>, vector<1x36x4xbf16>
    %106 = vector.shape_cast %105 : vector<1x36x4xbf16> to vector<36x4xbf16>
    %c1_69 = arith.constant 1 : index
    %c0_70 = arith.constant 0 : index
    %c0_71 = arith.constant 0 : index
    %107 = vector.load %arg5[%c1_69, %c0_70, %c0_71] : memref<3x1x4xf32, #tpu.memory_space<vmem>>, vector<1x1x4xf32>
    %108 = vector.shape_cast %107 : vector<1x1x4xf32> to vector<1x4xf32>
    %c16_72 = arith.constant 16 : index
    %c0_73 = arith.constant 0 : index
    %109 = vector.load %arg23[%c16_72, %c0_73] : memref<352x4xf32, #tpu.memory_space<vmem>>, vector<320x4xf32>
    %110 = arith.truncf %109 : vector<320x4xf32> to vector<320x4xbf16>
    %c18_74 = arith.constant 18 : index
    %c0_75 = arith.constant 0 : index
    %111 = vector.load %arg23[%c18_74, %c0_75] : memref<352x4xf32, #tpu.memory_space<vmem>>, vector<320x4xf32>
    %112 = vector.broadcast %60 : vector<320x1xf32> to vector<320x4xf32>
    %113 = arith.mulf %111, %112 : vector<320x4xf32>
    %114 = arith.truncf %113 : vector<320x4xf32> to vector<320x4xbf16>
    %c14_76 = arith.constant 14 : index
    %c0_77 = arith.constant 0 : index
    %115 = vector.load %arg23[%c14_76, %c0_77] : memref<352x4xf32, #tpu.memory_space<vmem>>, vector<320x4xf32>
    %116 = vector.broadcast %64 : vector<320x1xf32> to vector<320x4xf32>
    %117 = arith.mulf %115, %116 : vector<320x4xf32>
    %118 = arith.truncf %117 : vector<320x4xf32> to vector<320x4xbf16>
    %119 = vector.extract_strided_slice %118 {offsets = [0, 0], sizes = [256, 4], strides = [1, 1]} : vector<320x4xbf16> to vector<256x4xbf16>
    %c0_78 = arith.constant 0 : index
    %c0_79 = arith.constant 0 : index
    %120 = vector.load %arg24[%c0_78, %c0_79] : memref<256x36xbf16, #tpu.memory_space<vmem>>, vector<256x4xbf16>
    tpu.vector_store %arg24[%c0_78, %c0_79], %119 {strides = array<i32>} : memref<256x36xbf16, #tpu.memory_space<vmem>>, vector<256x4xbf16>,
    %121 = vector.extract_strided_slice %110 {offsets = [0, 0], sizes = [256, 4], strides = [1, 1]} : vector<320x4xbf16> to vector<256x4xbf16>
    %c0_80 = arith.constant 0 : index
    %c4_81 = arith.constant 4 : index
    %122 = vector.load %arg24[%c0_80, %c4_81] : memref<256x36xbf16, #tpu.memory_space<vmem>>, vector<256x4xbf16>
    tpu.vector_store %arg24[%c0_80, %c4_81], %121 {strides = array<i32>} : memref<256x36xbf16, #tpu.memory_space<vmem>>, vector<256x4xbf16>,
    %123 = vector.extract_strided_slice %114 {offsets = [0, 0], sizes = [256, 4], strides = [1, 1]} : vector<320x4xbf16> to vector<256x4xbf16>
    %c0_82 = arith.constant 0 : index
    %c8_83 = arith.constant 8 : index
    %124 = vector.load %arg24[%c0_82, %c8_83] : memref<256x36xbf16, #tpu.memory_space<vmem>>, vector<256x4xbf16>
    tpu.vector_store %arg24[%c0_82, %c8_83], %123 {strides = array<i32>} : memref<256x36xbf16, #tpu.memory_space<vmem>>, vector<256x4xbf16>,
    %125 = vector.extract_strided_slice %118 {offsets = [32, 0], sizes = [256, 4], strides = [1, 1]} : vector<320x4xbf16> to vector<256x4xbf16>
    %c0_84 = arith.constant 0 : index
    %c12_85 = arith.constant 12 : index
    %126 = vector.load %arg24[%c0_84, %c12_85] : memref<256x36xbf16, #tpu.memory_space<vmem>>, vector<256x4xbf16>
    tpu.vector_store %arg24[%c0_84, %c12_85], %125 {strides = array<i32>} : memref<256x36xbf16, #tpu.memory_space<vmem>>, vector<256x4xbf16>,
    %127 = vector.extract_strided_slice %110 {offsets = [32, 0], sizes = [256, 4], strides = [1, 1]} : vector<320x4xbf16> to vector<256x4xbf16>
    %c0_86 = arith.constant 0 : index
    %c16_87 = arith.constant 16 : index
    %128 = vector.load %arg24[%c0_86, %c16_87] : memref<256x36xbf16, #tpu.memory_space<vmem>>, vector<256x4xbf16>
    tpu.vector_store %arg24[%c0_86, %c16_87], %127 {strides = array<i32>} : memref<256x36xbf16, #tpu.memory_space<vmem>>, vector<256x4xbf16>,
    %129 = vector.extract_strided_slice %114 {offsets = [32, 0], sizes = [256, 4], strides = [1, 1]} : vector<320x4xbf16> to vector<256x4xbf16>
    %c0_88 = arith.constant 0 : index
    %c20_89 = arith.constant 20 : index
    %130 = vector.load %arg24[%c0_88, %c20_89] : memref<256x36xbf16, #tpu.memory_space<vmem>>, vector<256x4xbf16>
    tpu.vector_store %arg24[%c0_88, %c20_89], %129 {strides = array<i32>} : memref<256x36xbf16, #tpu.memory_space<vmem>>, vector<256x4xbf16>,
    %131 = vector.extract_strided_slice %118 {offsets = [64, 0], sizes = [256, 4], strides = [1, 1]} : vector<320x4xbf16> to vector<256x4xbf16>
    %c0_90 = arith.constant 0 : index
    %c24_91 = arith.constant 24 : index
    %132 = vector.load %arg24[%c0_90, %c24_91] : memref<256x36xbf16, #tpu.memory_space<vmem>>, vector<256x4xbf16>
    tpu.vector_store %arg24[%c0_90, %c24_91], %131 {strides = array<i32>} : memref<256x36xbf16, #tpu.memory_space<vmem>>, vector<256x4xbf16>,
    %133 = vector.extract_strided_slice %110 {offsets = [64, 0], sizes = [256, 4], strides = [1, 1]} : vector<320x4xbf16> to vector<256x4xbf16>
    %c0_92 = arith.constant 0 : index
    %c28_93 = arith.constant 28 : index
    %134 = vector.load %arg24[%c0_92, %c28_93] : memref<256x36xbf16, #tpu.memory_space<vmem>>, vector<256x4xbf16>
    tpu.vector_store %arg24[%c0_92, %c28_93], %133 {strides = array<i32>} : memref<256x36xbf16, #tpu.memory_space<vmem>>, vector<256x4xbf16>,
    %135 = vector.extract_strided_slice %114 {offsets = [64, 0], sizes = [256, 4], strides = [1, 1]} : vector<320x4xbf16> to vector<256x4xbf16>
    %c0_94 = arith.constant 0 : index
    %c32_95 = arith.constant 32 : index
    %136 = vector.load %arg24[%c0_94, %c32_95] : memref<256x36xbf16, #tpu.memory_space<vmem>>, vector<256x4xbf16>
    tpu.vector_store %arg24[%c0_94, %c32_95], %135 {strides = array<i32>} : memref<256x36xbf16, #tpu.memory_space<vmem>>, vector<256x4xbf16>,
    %c0_96 = arith.constant 0 : index
    %c0_97 = arith.constant 0 : index
    %137 = vector.load %arg24[%c0_96, %c0_97] : memref<256x36xbf16, #tpu.memory_space<vmem>>, vector<256x36xbf16>
    %cst_98 = arith.constant dense<0.000000e+00> : vector<256x4xf32>
    %138 = tpu.matmul %137, %106, %cst_98 {dimension_numbers = #tpu.dot_dimension_numbers<[1], [0], [0], [1], [0, 0, 1, 1], [], []>} : vector<256x36xbf16>, vector<36x4xbf16>, vector<256x4xf32> -> vector<256x4xf32>
    %139 = vector.broadcast %108 : vector<1x4xf32> to vector<256x4xf32>
    %140 = arith.addf %138, %139 : vector<256x4xf32>
    %cst_99 = arith.constant 0.000000e+00 : f32
    %141 = vector.broadcast %cst_99 : f32 to vector<256x4xf32>
    %142 = arith.maximumf %140, %141 : vector<256x4xf32>
    %c48_100 = arith.constant 48 : index
    %c0_101 = arith.constant 0 : index
    %143 = vector.load %arg23[%c48_100, %c0_101] : memref<352x4xf32, #tpu.memory_space<vmem>>, vector<256x4xf32>
    tpu.vector_store %arg23[%c48_100, %c0_101], %142 {strides = array<i32>} : memref<352x4xf32, #tpu.memory_space<vmem>>, vector<256x4xf32>,
    %c2 = arith.constant 2 : index
    %c0_102 = arith.constant 0 : index
    %c0_103 = arith.constant 0 : index
    %144 = vector.load %arg4[%c2, %c0_102, %c0_103] : memref<3x36x4xbf16, #tpu.memory_space<vmem>>, vector<1x36x4xbf16>
    %145 = vector.shape_cast %144 : vector<1x36x4xbf16> to vector<36x4xbf16>
    %c2_104 = arith.constant 2 : index
    %c0_105 = arith.constant 0 : index
    %c0_106 = arith.constant 0 : index
    %146 = vector.load %arg5[%c2_104, %c0_105, %c0_106] : memref<3x1x4xf32, #tpu.memory_space<vmem>>, vector<1x1x4xf32>
    %147 = vector.shape_cast %146 : vector<1x1x4xf32> to vector<1x4xf32>
    %c16_107 = arith.constant 16 : index
    %c0_108 = arith.constant 0 : index
    %148 = vector.load %arg23[%c16_107, %c0_108] : memref<352x4xf32, #tpu.memory_space<vmem>>, vector<320x4xf32>
    %149 = arith.truncf %148 : vector<320x4xf32> to vector<320x4xbf16>
    %c18_109 = arith.constant 18 : index
    %c0_110 = arith.constant 0 : index
    %150 = vector.load %arg23[%c18_109, %c0_110] : memref<352x4xf32, #tpu.memory_space<vmem>>, vector<320x4xf32>
    %151 = vector.broadcast %60 : vector<320x1xf32> to vector<320x4xf32>
    %152 = arith.mulf %150, %151 : vector<320x4xf32>
    %153 = arith.truncf %152 : vector<320x4xf32> to vector<320x4xbf16>
    %c14_111 = arith.constant 14 : index
    %c0_112 = arith.constant 0 : index
    %154 = vector.load %arg23[%c14_111, %c0_112] : memref<352x4xf32, #tpu.memory_space<vmem>>, vector<320x4xf32>
    %155 = vector.broadcast %64 : vector<320x1xf32> to vector<320x4xf32>
    %156 = arith.mulf %154, %155 : vector<320x4xf32>
    %157 = arith.truncf %156 : vector<320x4xf32> to vector<320x4xbf16>
    %158 = vector.extract_strided_slice %157 {offsets = [0, 0], sizes = [256, 4], strides = [1, 1]} : vector<320x4xbf16> to vector<256x4xbf16>
    %c0_113 = arith.constant 0 : index
    %c0_114 = arith.constant 0 : index
    %159 = vector.load %arg24[%c0_113, %c0_114] : memref<256x36xbf16, #tpu.memory_space<vmem>>, vector<256x4xbf16>
    tpu.vector_store %arg24[%c0_113, %c0_114], %158 {strides = array<i32>} : memref<256x36xbf16, #tpu.memory_space<vmem>>, vector<256x4xbf16>,
    %160 = vector.extract_strided_slice %149 {offsets = [0, 0], sizes = [256, 4], strides = [1, 1]} : vector<320x4xbf16> to vector<256x4xbf16>
    %c0_115 = arith.constant 0 : index
    %c4_116 = arith.constant 4 : index
    %161 = vector.load %arg24[%c0_115, %c4_116] : memref<256x36xbf16, #tpu.memory_space<vmem>>, vector<256x4xbf16>
    tpu.vector_store %arg24[%c0_115, %c4_116], %160 {strides = array<i32>} : memref<256x36xbf16, #tpu.memory_space<vmem>>, vector<256x4xbf16>,
    %162 = vector.extract_strided_slice %153 {offsets = [0, 0], sizes = [256, 4], strides = [1, 1]} : vector<320x4xbf16> to vector<256x4xbf16>
    %c0_117 = arith.constant 0 : index
    %c8_118 = arith.constant 8 : index
    %163 = vector.load %arg24[%c0_117, %c8_118] : memref<256x36xbf16, #tpu.memory_space<vmem>>, vector<256x4xbf16>
    tpu.vector_store %arg24[%c0_117, %c8_118], %162 {strides = array<i32>} : memref<256x36xbf16, #tpu.memory_space<vmem>>, vector<256x4xbf16>,
    %164 = vector.extract_strided_slice %157 {offsets = [32, 0], sizes = [256, 4], strides = [1, 1]} : vector<320x4xbf16> to vector<256x4xbf16>
    %c0_119 = arith.constant 0 : index
    %c12_120 = arith.constant 12 : index
    %165 = vector.load %arg24[%c0_119, %c12_120] : memref<256x36xbf16, #tpu.memory_space<vmem>>, vector<256x4xbf16>
    tpu.vector_store %arg24[%c0_119, %c12_120], %164 {strides = array<i32>} : memref<256x36xbf16, #tpu.memory_space<vmem>>, vector<256x4xbf16>,
    %166 = vector.extract_strided_slice %149 {offsets = [32, 0], sizes = [256, 4], strides = [1, 1]} : vector<320x4xbf16> to vector<256x4xbf16>
    %c0_121 = arith.constant 0 : index
    %c16_122 = arith.constant 16 : index
    %167 = vector.load %arg24[%c0_121, %c16_122] : memref<256x36xbf16, #tpu.memory_space<vmem>>, vector<256x4xbf16>
    tpu.vector_store %arg24[%c0_121, %c16_122], %166 {strides = array<i32>} : memref<256x36xbf16, #tpu.memory_space<vmem>>, vector<256x4xbf16>,
    %168 = vector.extract_strided_slice %153 {offsets = [32, 0], sizes = [256, 4], strides = [1, 1]} : vector<320x4xbf16> to vector<256x4xbf16>
    %c0_123 = arith.constant 0 : index
    %c20_124 = arith.constant 20 : index
    %169 = vector.load %arg24[%c0_123, %c20_124] : memref<256x36xbf16, #tpu.memory_space<vmem>>, vector<256x4xbf16>
    tpu.vector_store %arg24[%c0_123, %c20_124], %168 {strides = array<i32>} : memref<256x36xbf16, #tpu.memory_space<vmem>>, vector<256x4xbf16>,
    %170 = vector.extract_strided_slice %157 {offsets = [64, 0], sizes = [256, 4], strides = [1, 1]} : vector<320x4xbf16> to vector<256x4xbf16>
    %c0_125 = arith.constant 0 : index
    %c24_126 = arith.constant 24 : index
    %171 = vector.load %arg24[%c0_125, %c24_126] : memref<256x36xbf16, #tpu.memory_space<vmem>>, vector<256x4xbf16>
    tpu.vector_store %arg24[%c0_125, %c24_126], %170 {strides = array<i32>} : memref<256x36xbf16, #tpu.memory_space<vmem>>, vector<256x4xbf16>,
    %172 = vector.extract_strided_slice %149 {offsets = [64, 0], sizes = [256, 4], strides = [1, 1]} : vector<320x4xbf16> to vector<256x4xbf16>
    %c0_127 = arith.constant 0 : index
    %c28_128 = arith.constant 28 : index
    %173 = vector.load %arg24[%c0_127, %c28_128] : memref<256x36xbf16, #tpu.memory_space<vmem>>, vector<256x4xbf16>
    tpu.vector_store %arg24[%c0_127, %c28_128], %172 {strides = array<i32>} : memref<256x36xbf16, #tpu.memory_space<vmem>>, vector<256x4xbf16>,
    %174 = vector.extract_strided_slice %153 {offsets = [64, 0], sizes = [256, 4], strides = [1, 1]} : vector<320x4xbf16> to vector<256x4xbf16>
    %c0_129 = arith.constant 0 : index
    %c32_130 = arith.constant 32 : index
    %175 = vector.load %arg24[%c0_129, %c32_130] : memref<256x36xbf16, #tpu.memory_space<vmem>>, vector<256x4xbf16>
    tpu.vector_store %arg24[%c0_129, %c32_130], %174 {strides = array<i32>} : memref<256x36xbf16, #tpu.memory_space<vmem>>, vector<256x4xbf16>,
    %c0_131 = arith.constant 0 : index
    %c0_132 = arith.constant 0 : index
    %176 = vector.load %arg24[%c0_131, %c0_132] : memref<256x36xbf16, #tpu.memory_space<vmem>>, vector<256x36xbf16>
    %cst_133 = arith.constant dense<0.000000e+00> : vector<256x4xf32>
    %177 = tpu.matmul %176, %145, %cst_133 {dimension_numbers = #tpu.dot_dimension_numbers<[1], [0], [0], [1], [0, 0, 1, 1], [], []>} : vector<256x36xbf16>, vector<36x4xbf16>, vector<256x4xf32> -> vector<256x4xf32>
    %178 = vector.broadcast %147 : vector<1x4xf32> to vector<256x4xf32>
    %179 = arith.addf %177, %178 : vector<256x4xf32>
    %cst_134 = arith.constant 0.000000e+00 : f32
    %180 = vector.broadcast %cst_134 : f32 to vector<256x4xf32>
    %181 = arith.maximumf %179, %180 : vector<256x4xf32>
    %182 = arith.truncf %181 : vector<256x4xf32> to vector<256x4xbf16>
    %c0_135 = arith.constant 0 : index
    %c0_136 = arith.constant 0 : index
    %183 = vector.load %arg6[%c0_135, %c0_136] : memref<4x1xbf16, #tpu.memory_space<vmem>>, vector<4x1xbf16>
    %cst_137 = arith.constant dense<0.000000e+00> : vector<256x1xf32>
    %184 = tpu.matmul %182, %183, %cst_137 {dimension_numbers = #tpu.dot_dimension_numbers<[1], [0], [0], [1], [0, 0, 1, 1], [], []>} : vector<256x4xbf16>, vector<4x1xbf16>, vector<256x1xf32> -> vector<256x1xf32>
    %c0_138 = arith.constant 0 : index
    %c0_139 = arith.constant 0 : index
    %185 = vector.load %arg7[%c0_138, %c0_139] : memref<1x1xf32, #tpu.memory_space<vmem>>, vector<1x1xf32>
    %186 = vector.broadcast %185 : vector<1x1xf32> to vector<256x1xf32>
    %187 = arith.addf %184, %186 : vector<256x1xf32>
    %c0_140 = arith.constant 0 : index
    %c0_141 = arith.constant 0 : index
    %188 = vector.load %arg26[%c0_140, %c0_141] : memref<256x1xf32, #tpu.memory_space<vmem>>, vector<256x1xf32>
    tpu.vector_store %arg26[%c0_140, %c0_141], %187 {strides = array<i32>} : memref<256x1xf32, #tpu.memory_space<vmem>>, vector<256x1xf32>,
    %c0_142 = arith.constant 0 : index
    %c0_143 = arith.constant 0 : index
    %189 = vector.load %arg16[%c0_142, %c0_143] : memref<576x64xbf16, #tpu.memory_space<vmem>>, vector<576x64xbf16>
    %c0_144 = arith.constant 0 : index
    %c0_145 = arith.constant 0 : index
    %190 = vector.load %arg17[%c0_144, %c0_145] : memref<1x64xf32, #tpu.memory_space<vmem>>, vector<1x64xf32>
    %191 = tpu.iota {dimensions = array<i32: 0>} : vector<288x1xi32>
    %c16_i32_146 = arith.constant 16 : i32
    %c0_i32_147 = arith.constant 0 : i32
    %192 = arith.cmpi eq, %c16_i32_146, %c0_i32_147 : i32
    %c1_i32_148 = arith.constant 1 : i32
    %193 = arith.select %192, %c1_i32_148, %c16_i32_146 : i32
    %194 = vector.broadcast %193 : i32 to vector<288x1xi32>
    %195 = arith.remsi %191, %194 : vector<288x1xi32>
    %c0_i32_149 = arith.constant 0 : i32
    %196 = vector.broadcast %c0_i32_149 : i32 to vector<288x1xi32>
    %197 = arith.cmpi ne, %195, %196 : vector<288x1xi32>
    %c0_i32_150 = arith.constant 0 : i32
    %198 = vector.broadcast %c0_i32_150 : i32 to vector<288x1xi32>
    %199 = arith.cmpi slt, %195, %198 : vector<288x1xi32>
    %c0_i32_151 = arith.constant 0 : i32
    %200 = arith.cmpi slt, %193, %c0_i32_151 : i32
    %201 = vector.broadcast %200 : i1 to vector<288x1xi1>
    %202 = vector.broadcast %201 : vector<288x1xi1> to vector<288x1xi1>
    %203 = arith.xori %199, %202 : vector<288x1xi1>
    %204 = arith.andi %203, %197 : vector<288x1xi1>
    %205 = vector.broadcast %193 : i32 to vector<288x1xi32>
    %206 = arith.addi %195, %205 : vector<288x1xi32>
    %207 = arith.select %204, %206, %195 : vector<288x1xi1>, vector<288x1xi32>
    %c1_i32_152 = arith.constant 1 : i32
    %208 = vector.broadcast %c1_i32_152 : i32 to vector<288x1xi32>
    %209 = arith.addi %207, %208 : vector<288x1xi32>
    %c16_i32_153 = arith.constant 16 : i32
    %210 = vector.broadcast %c16_i32_153 : i32 to vector<288x1xi32>
    %211 = arith.cmpi slt, %209, %210 : vector<288x1xi32>
    %212 = arith.extui %211 : vector<288x1xi1> to vector<288x1xi32>
    %213 = arith.sitofp %212 : vector<288x1xi32> to vector<288x1xf32>
    %c1_i32_154 = arith.constant 1 : i32
    %214 = vector.broadcast %c1_i32_154 : i32 to vector<288x1xi32>
    %215 = arith.cmpi sge, %207, %214 : vector<288x1xi32>
    %216 = arith.extui %215 : vector<288x1xi1> to vector<288x1xi32>
    %217 = arith.sitofp %216 : vector<288x1xi32> to vector<288x1xf32>
    %c0_155 = arith.constant 0 : index
    %c16_156 = arith.constant 16 : index
    %c0_157 = arith.constant 0 : index
    %218 = vector.load %arg1[%c0_155, %c16_156, %c0_157] : memref<1x320x64xf32, #tpu.memory_space<vmem>>, vector<1x288x64xf32>
    %219 = vector.shape_cast %218 : vector<1x288x64xf32> to vector<288x64xf32>
    %220 = arith.truncf %219 : vector<288x64xf32> to vector<288x64xbf16>
    %c0_158 = arith.constant 0 : index
    %c17 = arith.constant 17 : index
    %c0_159 = arith.constant 0 : index
    %221 = vector.load %arg1[%c0_158, %c17, %c0_159] : memref<1x320x64xf32, #tpu.memory_space<vmem>>, vector<1x288x64xf32>
    %222 = vector.shape_cast %221 : vector<1x288x64xf32> to vector<288x64xf32>
    %223 = vector.broadcast %213 : vector<288x1xf32> to vector<288x64xf32>
    %224 = arith.mulf %222, %223 : vector<288x64xf32>
    %225 = arith.truncf %224 : vector<288x64xf32> to vector<288x64xbf16>
    %c0_160 = arith.constant 0 : index
    %c15 = arith.constant 15 : index
    %c0_161 = arith.constant 0 : index
    %226 = vector.load %arg1[%c0_160, %c15, %c0_161] : memref<1x320x64xf32, #tpu.memory_space<vmem>>, vector<1x288x64xf32>
    %227 = vector.shape_cast %226 : vector<1x288x64xf32> to vector<288x64xf32>
    %228 = vector.broadcast %217 : vector<288x1xf32> to vector<288x64xf32>
    %229 = arith.mulf %227, %228 : vector<288x64xf32>
    %230 = arith.truncf %229 : vector<288x64xf32> to vector<288x64xbf16>
    %231 = vector.extract_strided_slice %230 {offsets = [0, 0], sizes = [256, 64], strides = [1, 1]} : vector<288x64xbf16> to vector<256x64xbf16>
    %c0_162 = arith.constant 0 : index
    %c0_163 = arith.constant 0 : index
    %232 = vector.load %arg25[%c0_162, %c0_163] : memref<256x576xbf16, #tpu.memory_space<vmem>>, vector<256x64xbf16>
    tpu.vector_store %arg25[%c0_162, %c0_163], %231 {strides = array<i32>} : memref<256x576xbf16, #tpu.memory_space<vmem>>, vector<256x64xbf16>,
    %233 = vector.extract_strided_slice %220 {offsets = [0, 0], sizes = [256, 64], strides = [1, 1]} : vector<288x64xbf16> to vector<256x64xbf16>
    %c0_164 = arith.constant 0 : index
    %c64 = arith.constant 64 : index
    %234 = vector.load %arg25[%c0_164, %c64] : memref<256x576xbf16, #tpu.memory_space<vmem>>, vector<256x64xbf16>
    tpu.vector_store %arg25[%c0_164, %c64], %233 {strides = array<i32>} : memref<256x576xbf16, #tpu.memory_space<vmem>>, vector<256x64xbf16>,
    %235 = vector.extract_strided_slice %225 {offsets = [0, 0], sizes = [256, 64], strides = [1, 1]} : vector<288x64xbf16> to vector<256x64xbf16>
    %c0_165 = arith.constant 0 : index
    %c128 = arith.constant 128 : index
    %236 = vector.load %arg25[%c0_165, %c128] : memref<256x576xbf16, #tpu.memory_space<vmem>>, vector<256x64xbf16>
    tpu.vector_store %arg25[%c0_165, %c128], %235 {strides = array<i32>} : memref<256x576xbf16, #tpu.memory_space<vmem>>, vector<256x64xbf16>,
    %237 = vector.extract_strided_slice %230 {offsets = [16, 0], sizes = [256, 64], strides = [1, 1]} : vector<288x64xbf16> to vector<256x64xbf16>
    %c0_166 = arith.constant 0 : index
    %c192 = arith.constant 192 : index
    %238 = vector.load %arg25[%c0_166, %c192] : memref<256x576xbf16, #tpu.memory_space<vmem>>, vector<256x64xbf16>
    tpu.vector_store %arg25[%c0_166, %c192], %237 {strides = array<i32>} : memref<256x576xbf16, #tpu.memory_space<vmem>>, vector<256x64xbf16>,
    %239 = vector.extract_strided_slice %220 {offsets = [16, 0], sizes = [256, 64], strides = [1, 1]} : vector<288x64xbf16> to vector<256x64xbf16>
    %c0_167 = arith.constant 0 : index
    %c256 = arith.constant 256 : index
    %240 = vector.load %arg25[%c0_167, %c256] : memref<256x576xbf16, #tpu.memory_space<vmem>>, vector<256x64xbf16>
    tpu.vector_store %arg25[%c0_167, %c256], %239 {strides = array<i32>} : memref<256x576xbf16, #tpu.memory_space<vmem>>, vector<256x64xbf16>,
    %241 = vector.extract_strided_slice %225 {offsets = [16, 0], sizes = [256, 64], strides = [1, 1]} : vector<288x64xbf16> to vector<256x64xbf16>
    %c0_168 = arith.constant 0 : index
    %c320 = arith.constant 320 : index
    %242 = vector.load %arg25[%c0_168, %c320] : memref<256x576xbf16, #tpu.memory_space<vmem>>, vector<256x64xbf16>
    tpu.vector_store %arg25[%c0_168, %c320], %241 {strides = array<i32>} : memref<256x576xbf16, #tpu.memory_space<vmem>>, vector<256x64xbf16>,
    %243 = vector.extract_strided_slice %230 {offsets = [32, 0], sizes = [256, 64], strides = [1, 1]} : vector<288x64xbf16> to vector<256x64xbf16>
    %c0_169 = arith.constant 0 : index
    %c384 = arith.constant 384 : index
    %244 = vector.load %arg25[%c0_169, %c384] : memref<256x576xbf16, #tpu.memory_space<vmem>>, vector<256x64xbf16>
    tpu.vector_store %arg25[%c0_169, %c384], %243 {strides = array<i32>} : memref<256x576xbf16, #tpu.memory_space<vmem>>, vector<256x64xbf16>,
    %245 = vector.extract_strided_slice %220 {offsets = [32, 0], sizes = [256, 64], strides = [1, 1]} : vector<288x64xbf16> to vector<256x64xbf16>
    %c0_170 = arith.constant 0 : index
    %c448 = arith.constant 448 : index
    %246 = vector.load %arg25[%c0_170, %c448] : memref<256x576xbf16, #tpu.memory_space<vmem>>, vector<256x64xbf16>
    tpu.vector_store %arg25[%c0_170, %c448], %245 {strides = array<i32>} : memref<256x576xbf16, #tpu.memory_space<vmem>>, vector<256x64xbf16>,
    %247 = vector.extract_strided_slice %225 {offsets = [32, 0], sizes = [256, 64], strides = [1, 1]} : vector<288x64xbf16> to vector<256x64xbf16>
    %c0_171 = arith.constant 0 : index
    %c512 = arith.constant 512 : index
    %248 = vector.load %arg25[%c0_171, %c512] : memref<256x576xbf16, #tpu.memory_space<vmem>>, vector<256x64xbf16>
    tpu.vector_store %arg25[%c0_171, %c512], %247 {strides = array<i32>} : memref<256x576xbf16, #tpu.memory_space<vmem>>, vector<256x64xbf16>,
    %c0_172 = arith.constant 0 : index
    %c0_173 = arith.constant 0 : index
    %249 = vector.load %arg25[%c0_172, %c0_173] : memref<256x576xbf16, #tpu.memory_space<vmem>>, vector<256x576xbf16>
    %cst_174 = arith.constant dense<0.000000e+00> : vector<256x64xf32>
    %250 = tpu.matmul %249, %189, %cst_174 {dimension_numbers = #tpu.dot_dimension_numbers<[1], [0], [0], [1], [0, 0, 1, 1], [], []>} : vector<256x576xbf16>, vector<576x64xbf16>, vector<256x64xf32> -> vector<256x64xf32>
    %251 = vector.broadcast %190 : vector<1x64xf32> to vector<256x64xf32>
    %252 = arith.addf %250, %251 : vector<256x64xf32>
    %cst_175 = arith.constant 0.000000e+00 : f32
    %253 = vector.broadcast %cst_175 : f32 to vector<256x64xf32>
    %254 = arith.maximumf %252, %253 : vector<256x64xf32>
    %cst_176 = arith.constant dense<0.000000e+00> : vector<64xf32>
    %255 = vector.multi_reduction <add>, %254, %cst_176 [0] : vector<256x64xf32> to vector<64xf32>
    %256 = vector.shape_cast %255 : vector<64xf32> to vector<1x64xf32>
    %cst_177 = arith.constant 3.906250e-03 : f32
    %257 = vector.broadcast %cst_177 : f32 to vector<1x64xf32>
    %258 = arith.mulf %256, %257 : vector<1x64xf32>
    %c0_178 = arith.constant 0 : index
    %c0_179 = arith.constant 0 : index
    %259 = vector.load %arg18[%c0_178, %c0_179] : memref<64x64xf32, #tpu.memory_space<vmem>>, vector<64x64xf32>
    %cst_180 = arith.constant dense<0.000000e+00> : vector<1x64xf32>
    %260 = tpu.matmul %258, %259, %cst_180 {dimension_numbers = #tpu.dot_dimension_numbers<[1], [0], [0], [1], [0, 0, 1, 1], [], []>} : vector<1x64xf32>, vector<64x64xf32>, vector<1x64xf32> -> vector<1x64xf32>
    %c0_181 = arith.constant 0 : index
    %c0_182 = arith.constant 0 : index
    %261 = vector.load %arg19[%c0_181, %c0_182] : memref<1x64xf32, #tpu.memory_space<vmem>>, vector<1x64xf32>
    %262 = arith.addf %260, %261 : vector<1x64xf32>
    %cst_183 = arith.constant 0.000000e+00 : f32
    %263 = vector.broadcast %cst_183 : f32 to vector<1x64xf32>
    %264 = arith.maximumf %262, %263 : vector<1x64xf32>
    %c0_184 = arith.constant 0 : index
    %c0_185 = arith.constant 0 : index
    %265 = vector.load %arg20[%c0_184, %c0_185] : memref<64x64xf32, #tpu.memory_space<vmem>>, vector<64x64xf32>
    %cst_186 = arith.constant dense<0.000000e+00> : vector<1x64xf32>
    %266 = tpu.matmul %264, %265, %cst_186 {dimension_numbers = #tpu.dot_dimension_numbers<[1], [0], [0], [1], [0, 0, 1, 1], [], []>} : vector<1x64xf32>, vector<64x64xf32>, vector<1x64xf32> -> vector<1x64xf32>
    %c0_187 = arith.constant 0 : index
    %c0_188 = arith.constant 0 : index
    %267 = vector.load %arg21[%c0_187, %c0_188] : memref<1x64xf32, #tpu.memory_space<vmem>>, vector<1x64xf32>
    %268 = arith.addf %266, %267 : vector<1x64xf32>
    %cst_189 = arith.constant 0.000000e+00 : f32
    %269 = vector.broadcast %cst_189 : f32 to vector<1x64xf32>
    %270 = arith.maximumf %268, %269 : vector<1x64xf32>
    %271 = arith.truncf %270 : vector<1x64xf32> to vector<1x64xbf16>
    %c0_190 = arith.constant 0 : index
    %c0_191 = arith.constant 0 : index
    %272 = vector.load %arg2[%c0_190, %c0_191] : memref<64x4xbf16, #tpu.memory_space<vmem>>, vector<64x4xbf16>
    %cst_192 = arith.constant dense<0.000000e+00> : vector<1x4xf32>
    %273 = tpu.matmul %271, %272, %cst_192 {dimension_numbers = #tpu.dot_dimension_numbers<[1], [0], [0], [1], [0, 0, 1, 1], [], []>} : vector<1x64xbf16>, vector<64x4xbf16>, vector<1x4xf32> -> vector<1x4xf32>
    %c0_193 = arith.constant 0 : index
    %c0_194 = arith.constant 0 : index
    %274 = vector.load %arg3[%c0_193, %c0_194] : memref<1x4xf32, #tpu.memory_space<vmem>>, vector<1x4xf32>
    %275 = arith.addf %273, %274 : vector<1x4xf32>
    %cst_195 = arith.constant 0.000000e+00 : f32
    %276 = vector.broadcast %cst_195 : f32 to vector<1x4xf32>
    %277 = arith.maximumf %275, %276 : vector<1x4xf32>
    %c0_196 = arith.constant 0 : index
    %c0_197 = arith.constant 0 : index
    %c0_198 = arith.constant 0 : index
    %278 = vector.load %arg4[%c0_196, %c0_197, %c0_198] : memref<3x36x4xbf16, #tpu.memory_space<vmem>>, vector<1x36x4xbf16>
    %279 = vector.shape_cast %278 : vector<1x36x4xbf16> to vector<36x4xbf16>
    %280 = vector.extract_strided_slice %279 {offsets = [16, 0], sizes = [4, 4], strides = [1, 1]} : vector<36x4xbf16> to vector<4x4xbf16>
    %281 = arith.truncf %277 : vector<1x4xf32> to vector<1x4xbf16>
    %cst_199 = arith.constant dense<0.000000e+00> : vector<1x4xf32>
    %282 = tpu.matmul %281, %280, %cst_199 {dimension_numbers = #tpu.dot_dimension_numbers<[1], [0], [0], [1], [0, 0, 1, 1], [], []>} : vector<1x4xbf16>, vector<4x4xbf16>, vector<1x4xf32> -> vector<1x4xf32>
    %c0_200 = arith.constant 0 : index
    %c0_201 = arith.constant 0 : index
    %c0_202 = arith.constant 0 : index
    %283 = vector.load %arg5[%c0_200, %c0_201, %c0_202] : memref<3x1x4xf32, #tpu.memory_space<vmem>>, vector<1x1x4xf32>
    %284 = vector.shape_cast %283 : vector<1x1x4xf32> to vector<1x4xf32>
    %285 = arith.addf %282, %284 : vector<1x4xf32>
    %cst_203 = arith.constant 0.000000e+00 : f32
    %286 = vector.broadcast %cst_203 : f32 to vector<1x4xf32>
    %287 = arith.maximumf %285, %286 : vector<1x4xf32>
    %c1_204 = arith.constant 1 : index
    %c0_205 = arith.constant 0 : index
    %c0_206 = arith.constant 0 : index
    %288 = vector.load %arg4[%c1_204, %c0_205, %c0_206] : memref<3x36x4xbf16, #tpu.memory_space<vmem>>, vector<1x36x4xbf16>
    %289 = vector.shape_cast %288 : vector<1x36x4xbf16> to vector<36x4xbf16>
    %290 = vector.extract_strided_slice %289 {offsets = [16, 0], sizes = [4, 4], strides = [1, 1]} : vector<36x4xbf16> to vector<4x4xbf16>
    %291 = arith.truncf %287 : vector<1x4xf32> to vector<1x4xbf16>
    %cst_207 = arith.constant dense<0.000000e+00> : vector<1x4xf32>
    %292 = tpu.matmul %291, %290, %cst_207 {dimension_numbers = #tpu.dot_dimension_numbers<[1], [0], [0], [1], [0, 0, 1, 1], [], []>} : vector<1x4xbf16>, vector<4x4xbf16>, vector<1x4xf32> -> vector<1x4xf32>
    %c1_208 = arith.constant 1 : index
    %c0_209 = arith.constant 0 : index
    %c0_210 = arith.constant 0 : index
    %293 = vector.load %arg5[%c1_208, %c0_209, %c0_210] : memref<3x1x4xf32, #tpu.memory_space<vmem>>, vector<1x1x4xf32>
    %294 = vector.shape_cast %293 : vector<1x1x4xf32> to vector<1x4xf32>
    %295 = arith.addf %292, %294 : vector<1x4xf32>
    %cst_211 = arith.constant 0.000000e+00 : f32
    %296 = vector.broadcast %cst_211 : f32 to vector<1x4xf32>
    %297 = arith.maximumf %295, %296 : vector<1x4xf32>
    %c2_212 = arith.constant 2 : index
    %c0_213 = arith.constant 0 : index
    %c0_214 = arith.constant 0 : index
    %298 = vector.load %arg4[%c2_212, %c0_213, %c0_214] : memref<3x36x4xbf16, #tpu.memory_space<vmem>>, vector<1x36x4xbf16>
    %299 = vector.shape_cast %298 : vector<1x36x4xbf16> to vector<36x4xbf16>
    %300 = vector.extract_strided_slice %299 {offsets = [16, 0], sizes = [4, 4], strides = [1, 1]} : vector<36x4xbf16> to vector<4x4xbf16>
    %301 = arith.truncf %297 : vector<1x4xf32> to vector<1x4xbf16>
    %cst_215 = arith.constant dense<0.000000e+00> : vector<1x4xf32>
    %302 = tpu.matmul %301, %300, %cst_215 {dimension_numbers = #tpu.dot_dimension_numbers<[1], [0], [0], [1], [0, 0, 1, 1], [], []>} : vector<1x4xbf16>, vector<4x4xbf16>, vector<1x4xf32> -> vector<1x4xf32>
    %c2_216 = arith.constant 2 : index
    %c0_217 = arith.constant 0 : index
    %c0_218 = arith.constant 0 : index
    %303 = vector.load %arg5[%c2_216, %c0_217, %c0_218] : memref<3x1x4xf32, #tpu.memory_space<vmem>>, vector<1x1x4xf32>
    %304 = vector.shape_cast %303 : vector<1x1x4xf32> to vector<1x4xf32>
    %305 = arith.addf %302, %304 : vector<1x4xf32>
    %cst_219 = arith.constant 0.000000e+00 : f32
    %306 = vector.broadcast %cst_219 : f32 to vector<1x4xf32>
    %307 = arith.maximumf %305, %306 : vector<1x4xf32>
    %308 = arith.truncf %307 : vector<1x4xf32> to vector<1x4xbf16>
    %c0_220 = arith.constant 0 : index
    %c0_221 = arith.constant 0 : index
    %309 = vector.load %arg6[%c0_220, %c0_221] : memref<4x1xbf16, #tpu.memory_space<vmem>>, vector<4x1xbf16>
    %cst_222 = arith.constant dense<0.000000e+00> : vector<1x1xf32>
    %310 = tpu.matmul %308, %309, %cst_222 {dimension_numbers = #tpu.dot_dimension_numbers<[1], [0], [0], [1], [0, 0, 1, 1], [], []>} : vector<1x4xbf16>, vector<4x1xbf16>, vector<1x1xf32> -> vector<1x1xf32>
    %c0_223 = arith.constant 0 : index
    %c0_224 = arith.constant 0 : index
    %311 = vector.load %arg7[%c0_223, %c0_224] : memref<1x1xf32, #tpu.memory_space<vmem>>, vector<1x1xf32>
    %312 = arith.addf %310, %311 : vector<1x1xf32>
    %c0_225 = arith.constant 0 : index
    %c0_226 = arith.constant 0 : index
    %313 = vector.load %arg8[%c0_225, %c0_226] : memref<64x4xf32, #tpu.memory_space<vmem>>, vector<64x4xf32>
    %cst_227 = arith.constant dense<0.000000e+00> : vector<1x4xf32>
    %314 = tpu.matmul %270, %313, %cst_227 {dimension_numbers = #tpu.dot_dimension_numbers<[1], [0], [0], [1], [0, 0, 1, 1], [], []>} : vector<1x64xf32>, vector<64x4xf32>, vector<1x4xf32> -> vector<1x4xf32>
    %c0_228 = arith.constant 0 : index
    %c0_229 = arith.constant 0 : index
    %315 = vector.load %arg9[%c0_228, %c0_229] : memref<1x4xf32, #tpu.memory_space<vmem>>, vector<1x4xf32>
    %316 = arith.addf %314, %315 : vector<1x4xf32>
    %cst_230 = arith.constant 0.000000e+00 : f32
    %317 = vector.broadcast %cst_230 : f32 to vector<1x4xf32>
    %318 = arith.maximumf %316, %317 : vector<1x4xf32>
    %c0_231 = arith.constant 0 : index
    %c0_232 = arith.constant 0 : index
    %319 = vector.load %arg10[%c0_231, %c0_232] : memref<4x4xf32, #tpu.memory_space<vmem>>, vector<4x4xf32>
    %cst_233 = arith.constant dense<0.000000e+00> : vector<1x4xf32>
    %320 = tpu.matmul %318, %319, %cst_233 {dimension_numbers = #tpu.dot_dimension_numbers<[1], [0], [0], [1], [0, 0, 1, 1], [], []>} : vector<1x4xf32>, vector<4x4xf32>, vector<1x4xf32> -> vector<1x4xf32>
    %c0_234 = arith.constant 0 : index
    %c0_235 = arith.constant 0 : index
    %321 = vector.load %arg11[%c0_234, %c0_235] : memref<1x4xf32, #tpu.memory_space<vmem>>, vector<1x4xf32>
    %322 = arith.addf %320, %321 : vector<1x4xf32>
    %cst_236 = arith.constant 0.000000e+00 : f32
    %323 = vector.broadcast %cst_236 : f32 to vector<1x4xf32>
    %324 = arith.maximumf %322, %323 : vector<1x4xf32>
    %c0_237 = arith.constant 0 : index
    %c0_238 = arith.constant 0 : index
    %325 = vector.load %arg12[%c0_237, %c0_238] : memref<4x4xf32, #tpu.memory_space<vmem>>, vector<4x4xf32>
    %cst_239 = arith.constant dense<0.000000e+00> : vector<1x4xf32>
    %326 = tpu.matmul %324, %325, %cst_239 {dimension_numbers = #tpu.dot_dimension_numbers<[1], [0], [0], [1], [0, 0, 1, 1], [], []>} : vector<1x4xf32>, vector<4x4xf32>, vector<1x4xf32> -> vector<1x4xf32>
    %c0_240 = arith.constant 0 : index
    %c0_241 = arith.constant 0 : index
    %327 = vector.load %arg13[%c0_240, %c0_241] : memref<1x4xf32, #tpu.memory_space<vmem>>, vector<1x4xf32>
    %328 = arith.addf %326, %327 : vector<1x4xf32>
    %cst_242 = arith.constant 0.000000e+00 : f32
    %329 = vector.broadcast %cst_242 : f32 to vector<1x4xf32>
    %330 = arith.maximumf %328, %329 : vector<1x4xf32>
    %c0_243 = arith.constant 0 : index
    %c0_244 = arith.constant 0 : index
    %331 = vector.load %arg14[%c0_243, %c0_244] : memref<4x64xf32, #tpu.memory_space<vmem>>, vector<4x64xf32>
    %cst_245 = arith.constant dense<0.000000e+00> : vector<1x64xf32>
    %332 = tpu.matmul %330, %331, %cst_245 {dimension_numbers = #tpu.dot_dimension_numbers<[1], [0], [0], [1], [0, 0, 1, 1], [], []>} : vector<1x4xf32>, vector<4x64xf32>, vector<1x64xf32> -> vector<1x64xf32>
    %c0_246 = arith.constant 0 : index
    %c0_247 = arith.constant 0 : index
    %333 = vector.load %arg15[%c0_246, %c0_247] : memref<1x64xf32, #tpu.memory_space<vmem>>, vector<1x64xf32>
    %334 = arith.addf %332, %333 : vector<1x64xf32>
    %335 = vector.broadcast %312 : vector<1x1xf32> to vector<1x64xf32>
    %336 = arith.addf %335, %334 : vector<1x64xf32>
    %c0_i32_248 = arith.constant 0 : i32
    %c64_i32 = arith.constant 64 : i32
    %337 = arith.muli %c0_i32_248, %c64_i32 : i32
    %338 = tpu.assume_multiple %337, 64 : i32
    %c32_i32 = arith.constant 32 : i32
    %339 = arith.addi %c32_i32, %338 : i32
    %c0_249 = arith.constant 0 : index
    %340 = arith.index_cast %339 : i32 to index
    %c0_250 = arith.constant 0 : index
    %341 = vector.load %arg1[%c0_249, %340, %c0_250] : memref<1x320x64xf32, #tpu.memory_space<vmem>>, vector<1x64x64xf32>
    %342 = vector.shape_cast %341 : vector<1x64x64xf32> to vector<64x64xf32>
    %343 = arith.index_cast %338 : i32 to index
    %c0_251 = arith.constant 0 : index
    %344 = vector.load %arg26[%343, %c0_251] : memref<256x1xf32, #tpu.memory_space<vmem>>, vector<64x1xf32>
    %345 = vector.broadcast %344 : vector<64x1xf32> to vector<64x64xf32>
    %346 = vector.broadcast %27 : vector<1x64xf32> to vector<64x64xf32>
    %347 = arith.addf %345, %346 : vector<64x64xf32>
    %cst_252 = arith.constant 0.000000e+00 : f32
    %348 = vector.broadcast %cst_252 : f32 to vector<64x64xf32>
    %349 = arith.subf %348, %347 : vector<64x64xf32>
    %350 = math.exp %349 : vector<64x64xf32>
    %cst_253 = arith.constant 1.000000e+00 : f32
    %351 = vector.broadcast %cst_253 : f32 to vector<64x64xf32>
    %352 = arith.addf %351, %350 : vector<64x64xf32>
    %cst_254 = arith.constant 1.000000e+00 : f32
    %353 = vector.broadcast %cst_254 : f32 to vector<64x64xf32>
    %354 = arith.divf %353, %352 : vector<64x64xf32>
    %cst_255 = arith.constant 1.000000e+00 : f32
    %355 = vector.broadcast %cst_255 : f32 to vector<64x64xf32>
    %356 = arith.addf %355, %354 : vector<64x64xf32>
    %357 = arith.mulf %356, %342 : vector<64x64xf32>
    %358 = vector.broadcast %336 : vector<1x64xf32> to vector<64x64xf32>
    %359 = arith.addf %357, %358 : vector<64x64xf32>
    %cst_256 = arith.constant 0.000000e+00 : f32
    %360 = vector.broadcast %cst_256 : f32 to vector<64x64xf32>
    %361 = arith.subf %360, %359 : vector<64x64xf32>
    %362 = math.exp %361 : vector<64x64xf32>
    %cst_257 = arith.constant 1.000000e+00 : f32
    %363 = vector.broadcast %cst_257 : f32 to vector<64x64xf32>
    %364 = arith.addf %363, %362 : vector<64x64xf32>
    %cst_258 = arith.constant 1.000000e+00 : f32
    %365 = vector.broadcast %cst_258 : f32 to vector<64x64xf32>
    %366 = arith.divf %365, %364 : vector<64x64xf32>
    %cst_259 = arith.constant 1.000000e+00 : f32
    %367 = vector.broadcast %cst_259 : f32 to vector<64x64xf32>
    %368 = arith.addf %367, %366 : vector<64x64xf32>
    %369 = arith.mulf %368, %342 : vector<64x64xf32>
    %c0_260 = arith.constant 0 : index
    %370 = arith.index_cast %338 : i32 to index
    %c0_261 = arith.constant 0 : index
    %371 = vector.load %arg22[%c0_260, %370, %c0_261] : memref<1x256x64xf32, #tpu.memory_space<vmem>>, vector<1x64x64xf32>
    %372 = vector.shape_cast %371 : vector<1x64x64xf32> to vector<64x64xf32>
    %373 = vector.shape_cast %369 : vector<64x64xf32> to vector<1x64x64xf32>
    tpu.vector_store %arg22[%c0_260, %370, %c0_261], %373 {strides = array<i32>} : memref<1x256x64xf32, #tpu.memory_space<vmem>>, vector<1x64x64xf32>,
    %c1_i32_262 = arith.constant 1 : i32
    %c64_i32_263 = arith.constant 64 : i32
    %374 = arith.muli %c1_i32_262, %c64_i32_263 : i32
    %375 = tpu.assume_multiple %374, 64 : i32
    %c32_i32_264 = arith.constant 32 : i32
    %376 = arith.addi %c32_i32_264, %375 : i32
    %c0_265 = arith.constant 0 : index
    %377 = arith.index_cast %376 : i32 to index
    %c0_266 = arith.constant 0 : index
    %378 = vector.load %arg1[%c0_265, %377, %c0_266] : memref<1x320x64xf32, #tpu.memory_space<vmem>>, vector<1x64x64xf32>
    %379 = vector.shape_cast %378 : vector<1x64x64xf32> to vector<64x64xf32>
    %380 = arith.index_cast %375 : i32 to index
    %c0_267 = arith.constant 0 : index
    %381 = vector.load %arg26[%380, %c0_267] : memref<256x1xf32, #tpu.memory_space<vmem>>, vector<64x1xf32>
    %382 = vector.broadcast %381 : vector<64x1xf32> to vector<64x64xf32>
    %383 = vector.broadcast %27 : vector<1x64xf32> to vector<64x64xf32>
    %384 = arith.addf %382, %383 : vector<64x64xf32>
    %cst_268 = arith.constant 0.000000e+00 : f32
    %385 = vector.broadcast %cst_268 : f32 to vector<64x64xf32>
    %386 = arith.subf %385, %384 : vector<64x64xf32>
    %387 = math.exp %386 : vector<64x64xf32>
    %cst_269 = arith.constant 1.000000e+00 : f32
    %388 = vector.broadcast %cst_269 : f32 to vector<64x64xf32>
    %389 = arith.addf %388, %387 : vector<64x64xf32>
    %cst_270 = arith.constant 1.000000e+00 : f32
    %390 = vector.broadcast %cst_270 : f32 to vector<64x64xf32>
    %391 = arith.divf %390, %389 : vector<64x64xf32>
    %cst_271 = arith.constant 1.000000e+00 : f32
    %392 = vector.broadcast %cst_271 : f32 to vector<64x64xf32>
    %393 = arith.addf %392, %391 : vector<64x64xf32>
    %394 = arith.mulf %393, %379 : vector<64x64xf32>
    %395 = vector.broadcast %336 : vector<1x64xf32> to vector<64x64xf32>
    %396 = arith.addf %394, %395 : vector<64x64xf32>
    %cst_272 = arith.constant 0.000000e+00 : f32
    %397 = vector.broadcast %cst_272 : f32 to vector<64x64xf32>
    %398 = arith.subf %397, %396 : vector<64x64xf32>
    %399 = math.exp %398 : vector<64x64xf32>
    %cst_273 = arith.constant 1.000000e+00 : f32
    %400 = vector.broadcast %cst_273 : f32 to vector<64x64xf32>
    %401 = arith.addf %400, %399 : vector<64x64xf32>
    %cst_274 = arith.constant 1.000000e+00 : f32
    %402 = vector.broadcast %cst_274 : f32 to vector<64x64xf32>
    %403 = arith.divf %402, %401 : vector<64x64xf32>
    %cst_275 = arith.constant 1.000000e+00 : f32
    %404 = vector.broadcast %cst_275 : f32 to vector<64x64xf32>
    %405 = arith.addf %404, %403 : vector<64x64xf32>
    %406 = arith.mulf %405, %379 : vector<64x64xf32>
    %c0_276 = arith.constant 0 : index
    %407 = arith.index_cast %375 : i32 to index
    %c0_277 = arith.constant 0 : index
    %408 = vector.load %arg22[%c0_276, %407, %c0_277] : memref<1x256x64xf32, #tpu.memory_space<vmem>>, vector<1x64x64xf32>
    %409 = vector.shape_cast %408 : vector<1x64x64xf32> to vector<64x64xf32>
    %410 = vector.shape_cast %406 : vector<64x64xf32> to vector<1x64x64xf32>
    tpu.vector_store %arg22[%c0_276, %407, %c0_277], %410 {strides = array<i32>} : memref<1x256x64xf32, #tpu.memory_space<vmem>>, vector<1x64x64xf32>,
    %c2_i32_278 = arith.constant 2 : i32
    %c64_i32_279 = arith.constant 64 : i32
    %411 = arith.muli %c2_i32_278, %c64_i32_279 : i32
    %412 = tpu.assume_multiple %411, 64 : i32
    %c32_i32_280 = arith.constant 32 : i32
    %413 = arith.addi %c32_i32_280, %412 : i32
    %c0_281 = arith.constant 0 : index
    %414 = arith.index_cast %413 : i32 to index
    %c0_282 = arith.constant 0 : index
    %415 = vector.load %arg1[%c0_281, %414, %c0_282] : memref<1x320x64xf32, #tpu.memory_space<vmem>>, vector<1x64x64xf32>
    %416 = vector.shape_cast %415 : vector<1x64x64xf32> to vector<64x64xf32>
    %417 = arith.index_cast %412 : i32 to index
    %c0_283 = arith.constant 0 : index
    %418 = vector.load %arg26[%417, %c0_283] : memref<256x1xf32, #tpu.memory_space<vmem>>, vector<64x1xf32>
    %419 = vector.broadcast %418 : vector<64x1xf32> to vector<64x64xf32>
    %420 = vector.broadcast %27 : vector<1x64xf32> to vector<64x64xf32>
    %421 = arith.addf %419, %420 : vector<64x64xf32>
    %cst_284 = arith.constant 0.000000e+00 : f32
    %422 = vector.broadcast %cst_284 : f32 to vector<64x64xf32>
    %423 = arith.subf %422, %421 : vector<64x64xf32>
    %424 = math.exp %423 : vector<64x64xf32>
    %cst_285 = arith.constant 1.000000e+00 : f32
    %425 = vector.broadcast %cst_285 : f32 to vector<64x64xf32>
    %426 = arith.addf %425, %424 : vector<64x64xf32>
    %cst_286 = arith.constant 1.000000e+00 : f32
    %427 = vector.broadcast %cst_286 : f32 to vector<64x64xf32>
    %428 = arith.divf %427, %426 : vector<64x64xf32>
    %cst_287 = arith.constant 1.000000e+00 : f32
    %429 = vector.broadcast %cst_287 : f32 to vector<64x64xf32>
    %430 = arith.addf %429, %428 : vector<64x64xf32>
    %431 = arith.mulf %430, %416 : vector<64x64xf32>
    %432 = vector.broadcast %336 : vector<1x64xf32> to vector<64x64xf32>
    %433 = arith.addf %431, %432 : vector<64x64xf32>
    %cst_288 = arith.constant 0.000000e+00 : f32
    %434 = vector.broadcast %cst_288 : f32 to vector<64x64xf32>
    %435 = arith.subf %434, %433 : vector<64x64xf32>
    %436 = math.exp %435 : vector<64x64xf32>
    %cst_289 = arith.constant 1.000000e+00 : f32
    %437 = vector.broadcast %cst_289 : f32 to vector<64x64xf32>
    %438 = arith.addf %437, %436 : vector<64x64xf32>
    %cst_290 = arith.constant 1.000000e+00 : f32
    %439 = vector.broadcast %cst_290 : f32 to vector<64x64xf32>
    %440 = arith.divf %439, %438 : vector<64x64xf32>
    %cst_291 = arith.constant 1.000000e+00 : f32
    %441 = vector.broadcast %cst_291 : f32 to vector<64x64xf32>
    %442 = arith.addf %441, %440 : vector<64x64xf32>
    %443 = arith.mulf %442, %416 : vector<64x64xf32>
    %c0_292 = arith.constant 0 : index
    %444 = arith.index_cast %412 : i32 to index
    %c0_293 = arith.constant 0 : index
    %445 = vector.load %arg22[%c0_292, %444, %c0_293] : memref<1x256x64xf32, #tpu.memory_space<vmem>>, vector<1x64x64xf32>
    %446 = vector.shape_cast %445 : vector<1x64x64xf32> to vector<64x64xf32>
    %447 = vector.shape_cast %443 : vector<64x64xf32> to vector<1x64x64xf32>
    tpu.vector_store %arg22[%c0_292, %444, %c0_293], %447 {strides = array<i32>} : memref<1x256x64xf32, #tpu.memory_space<vmem>>, vector<1x64x64xf32>,
    %c3_i32 = arith.constant 3 : i32
    %c64_i32_294 = arith.constant 64 : i32
    %448 = arith.muli %c3_i32, %c64_i32_294 : i32
    %449 = tpu.assume_multiple %448, 64 : i32
    %c32_i32_295 = arith.constant 32 : i32
    %450 = arith.addi %c32_i32_295, %449 : i32
    %c0_296 = arith.constant 0 : index
    %451 = arith.index_cast %450 : i32 to index
    %c0_297 = arith.constant 0 : index
    %452 = vector.load %arg1[%c0_296, %451, %c0_297] : memref<1x320x64xf32, #tpu.memory_space<vmem>>, vector<1x64x64xf32>
    %453 = vector.shape_cast %452 : vector<1x64x64xf32> to vector<64x64xf32>
    %454 = arith.index_cast %449 : i32 to index
    %c0_298 = arith.constant 0 : index
    %455 = vector.load %arg26[%454, %c0_298] : memref<256x1xf32, #tpu.memory_space<vmem>>, vector<64x1xf32>
    %456 = vector.broadcast %455 : vector<64x1xf32> to vector<64x64xf32>
    %457 = vector.broadcast %27 : vector<1x64xf32> to vector<64x64xf32>
    %458 = arith.addf %456, %457 : vector<64x64xf32>
    %cst_299 = arith.constant 0.000000e+00 : f32
    %459 = vector.broadcast %cst_299 : f32 to vector<64x64xf32>
    %460 = arith.subf %459, %458 : vector<64x64xf32>
    %461 = math.exp %460 : vector<64x64xf32>
    %cst_300 = arith.constant 1.000000e+00 : f32
    %462 = vector.broadcast %cst_300 : f32 to vector<64x64xf32>
    %463 = arith.addf %462, %461 : vector<64x64xf32>
    %cst_301 = arith.constant 1.000000e+00 : f32
    %464 = vector.broadcast %cst_301 : f32 to vector<64x64xf32>
    %465 = arith.divf %464, %463 : vector<64x64xf32>
    %cst_302 = arith.constant 1.000000e+00 : f32
    %466 = vector.broadcast %cst_302 : f32 to vector<64x64xf32>
    %467 = arith.addf %466, %465 : vector<64x64xf32>
    %468 = arith.mulf %467, %453 : vector<64x64xf32>
    %469 = vector.broadcast %336 : vector<1x64xf32> to vector<64x64xf32>
    %470 = arith.addf %468, %469 : vector<64x64xf32>
    %cst_303 = arith.constant 0.000000e+00 : f32
    %471 = vector.broadcast %cst_303 : f32 to vector<64x64xf32>
    %472 = arith.subf %471, %470 : vector<64x64xf32>
    %473 = math.exp %472 : vector<64x64xf32>
    %cst_304 = arith.constant 1.000000e+00 : f32
    %474 = vector.broadcast %cst_304 : f32 to vector<64x64xf32>
    %475 = arith.addf %474, %473 : vector<64x64xf32>
    %cst_305 = arith.constant 1.000000e+00 : f32
    %476 = vector.broadcast %cst_305 : f32 to vector<64x64xf32>
    %477 = arith.divf %476, %475 : vector<64x64xf32>
    %cst_306 = arith.constant 1.000000e+00 : f32
    %478 = vector.broadcast %cst_306 : f32 to vector<64x64xf32>
    %479 = arith.addf %478, %477 : vector<64x64xf32>
    %480 = arith.mulf %479, %453 : vector<64x64xf32>
    %c0_307 = arith.constant 0 : index
    %481 = arith.index_cast %449 : i32 to index
    %c0_308 = arith.constant 0 : index
    %482 = vector.load %arg22[%c0_307, %481, %c0_308] : memref<1x256x64xf32, #tpu.memory_space<vmem>>, vector<1x64x64xf32>
    %483 = vector.shape_cast %482 : vector<1x64x64xf32> to vector<64x64xf32>
    %484 = vector.shape_cast %480 : vector<64x64xf32> to vector<1x64x64xf32>
    tpu.vector_store %arg22[%c0_307, %481, %c0_308], %484 {strides = array<i32>} : memref<1x256x64xf32, #tpu.memory_space<vmem>>, vector<1x64x64xf32>,
    %c4_i32 = arith.constant 4 : i32
    return
  }
  func.func @transform_0(%arg0: i32) -> (i32, i32, i32) {
    %c0_i32 = arith.constant 0 : i32
    %c0_i32_0 = arith.constant 0 : i32
    %c0_i32_1 = arith.constant 0 : i32
    return %arg0, %c0_i32, %c0_i32_0 : i32, i32, i32
  }
  func.func @transform_1(%arg0: i32) -> (i32, i32) {
    %c0_i32 = arith.constant 0 : i32
    %c0_i32_0 = arith.constant 0 : i32
    %c0_i32_1 = arith.constant 0 : i32
    return %c0_i32, %c0_i32_0 : i32, i32
  }
  func.func @transform_2(%arg0: i32) -> (i32, i32) {
    %c0_i32 = arith.constant 0 : i32
    %c0_i32_0 = arith.constant 0 : i32
    %c0_i32_1 = arith.constant 0 : i32
    return %c0_i32, %c0_i32_0 : i32, i32
  }
  func.func @transform_3(%arg0: i32) -> (i32, i32, i32) {
    %c0_i32 = arith.constant 0 : i32
    %c0_i32_0 = arith.constant 0 : i32
    %c0_i32_1 = arith.constant 0 : i32
    %c0_i32_2 = arith.constant 0 : i32
    return %c0_i32, %c0_i32_0, %c0_i32_1 : i32, i32, i32
  }
  func.func @transform_4(%arg0: i32) -> (i32, i32, i32) {
    %c0_i32 = arith.constant 0 : i32
    %c0_i32_0 = arith.constant 0 : i32
    %c0_i32_1 = arith.constant 0 : i32
    %c0_i32_2 = arith.constant 0 : i32
    return %c0_i32, %c0_i32_0, %c0_i32_1 : i32, i32, i32
  }
  func.func @transform_5(%arg0: i32) -> (i32, i32) {
    %c0_i32 = arith.constant 0 : i32
    %c0_i32_0 = arith.constant 0 : i32
    %c0_i32_1 = arith.constant 0 : i32
    return %c0_i32, %c0_i32_0 : i32, i32
  }
  func.func @transform_6(%arg0: i32) -> (i32, i32) {
    %c0_i32 = arith.constant 0 : i32
    %c0_i32_0 = arith.constant 0 : i32
    %c0_i32_1 = arith.constant 0 : i32
    return %c0_i32, %c0_i32_0 : i32, i32
  }
  func.func @transform_7(%arg0: i32) -> (i32, i32) {
    %c0_i32 = arith.constant 0 : i32
    %c0_i32_0 = arith.constant 0 : i32
    %c0_i32_1 = arith.constant 0 : i32
    return %c0_i32, %c0_i32_0 : i32, i32
  }
  func.func @transform_8(%arg0: i32) -> (i32, i32) {
    %c0_i32 = arith.constant 0 : i32
    %c0_i32_0 = arith.constant 0 : i32
    %c0_i32_1 = arith.constant 0 : i32
    return %c0_i32, %c0_i32_0 : i32, i32
  }
  func.func @transform_9(%arg0: i32) -> (i32, i32) {
    %c0_i32 = arith.constant 0 : i32
    %c0_i32_0 = arith.constant 0 : i32
    %c0_i32_1 = arith.constant 0 : i32
    return %c0_i32, %c0_i32_0 : i32, i32
  }
  func.func @transform_10(%arg0: i32) -> (i32, i32) {
    %c0_i32 = arith.constant 0 : i32
    %c0_i32_0 = arith.constant 0 : i32
    %c0_i32_1 = arith.constant 0 : i32
    return %c0_i32, %c0_i32_0 : i32, i32
  }
  func.func @transform_11(%arg0: i32) -> (i32, i32) {
    %c0_i32 = arith.constant 0 : i32
    %c0_i32_0 = arith.constant 0 : i32
    %c0_i32_1 = arith.constant 0 : i32
    return %c0_i32, %c0_i32_0 : i32, i32
  }
  func.func @transform_12(%arg0: i32) -> (i32, i32) {
    %c0_i32 = arith.constant 0 : i32
    %c0_i32_0 = arith.constant 0 : i32
    %c0_i32_1 = arith.constant 0 : i32
    return %c0_i32, %c0_i32_0 : i32, i32
  }
  func.func @transform_13(%arg0: i32) -> (i32, i32) {
    %c0_i32 = arith.constant 0 : i32
    %c0_i32_0 = arith.constant 0 : i32
    %c0_i32_1 = arith.constant 0 : i32
    return %c0_i32, %c0_i32_0 : i32, i32
  }
  func.func @transform_14(%arg0: i32) -> (i32, i32) {
    %c0_i32 = arith.constant 0 : i32
    %c0_i32_0 = arith.constant 0 : i32
    %c0_i32_1 = arith.constant 0 : i32
    return %c0_i32, %c0_i32_0 : i32, i32
  }
  func.func @transform_15(%arg0: i32) -> (i32, i32) {
    %c0_i32 = arith.constant 0 : i32
    %c0_i32_0 = arith.constant 0 : i32
    %c0_i32_1 = arith.constant 0 : i32
    return %c0_i32, %c0_i32_0 : i32, i32
  }
  func.func @transform_16(%arg0: i32) -> (i32, i32) {
    %c0_i32 = arith.constant 0 : i32
    %c0_i32_0 = arith.constant 0 : i32
    %c0_i32_1 = arith.constant 0 : i32
    return %c0_i32, %c0_i32_0 : i32, i32
  }
  func.func @transform_17(%arg0: i32) -> (i32, i32) {
    %c0_i32 = arith.constant 0 : i32
    %c0_i32_0 = arith.constant 0 : i32
    %c0_i32_1 = arith.constant 0 : i32
    return %c0_i32, %c0_i32_0 : i32, i32
  }
  func.func @transform_18(%arg0: i32) -> (i32, i32) {
    %c0_i32 = arith.constant 0 : i32
    %c0_i32_0 = arith.constant 0 : i32
    %c0_i32_1 = arith.constant 0 : i32
    return %c0_i32, %c0_i32_0 : i32, i32
  }
  func.func @transform_19(%arg0: i32) -> (i32, i32) {
    %c0_i32 = arith.constant 0 : i32
    %c0_i32_0 = arith.constant 0 : i32
    %c0_i32_1 = arith.constant 0 : i32
    return %c0_i32, %c0_i32_0 : i32, i32
  }
  func.func @transform_20(%arg0: i32) -> (i32, i32) {
    %c0_i32 = arith.constant 0 : i32
    %c0_i32_0 = arith.constant 0 : i32
    %c0_i32_1 = arith.constant 0 : i32
    return %c0_i32, %c0_i32_0 : i32, i32
  }
  func.func @transform_21(%arg0: i32) -> (i32, i32, i32) {
    %c0_i32 = arith.constant 0 : i32
    %c0_i32_0 = arith.constant 0 : i32
    %c0_i32_1 = arith.constant 0 : i32
    return %arg0, %c0_i32, %c0_i32_0 : i32, i32, i32
  }
}

</mosaic_0001>

<llo_original>
// kernel: bam_forward.1
$region0: #{bam_forward.1}
  #allocation0 [shape = 'u32[]', space=smem, size = 0x4, offset = 0x4, fixed_abs, tag = 'smem constant byte address 0x4 - core index']
  #allocation1 [shape = 'u32[144,128]{1,0:T(1,128)}', space=vmem, size = 0x12000, scoped, tag = 'internal scratch']
  #allocation2 [shape = 'f32[352,4]{1,0:T(8,128)}', space=vmem, size = 0x2c000, scoped, tag = 'scratch operand']
  #allocation3 [shape = 'bf16[256,36]{1,0:T(16,128)(2,1)}', space=vmem, size = 0x10000, scoped, tag = 'scratch operand']
  #allocation4 [shape = 'bf16[256,576]{1,0:T(16,128)(2,1)}', space=vmem, size = 0x50000, scoped, tag = 'scratch operand']
  #allocation5 [shape = 'f32[256,1]{1,0:T(8,128)}', space=vmem, size = 0x20000, scoped, tag = 'scratch operand']
  #allocation6 [shape = 'f32[1,1]{1,0:T(1,128)S(1)}', space=vmem, size = 0x200, scoped, tag = 'scoped memory for bam_forward.1']
  %s0 = inlined_call_operand.vmem [shape: f32[2,320,64], index: 0, kind: input, shape index: {}]
  %s1 = inlined_call_operand.vmem [shape: bf16[64,4], index: 1, kind: input, shape index: {}]
  %s2 = inlined_call_operand.vmem [shape: f32[1,4], index: 2, kind: input, shape index: {}]
  %s3 = inlined_call_operand.vmem [shape: bf16[3,36,4], index: 3, kind: input, shape index: {}]
  %s4 = inlined_call_operand.vmem [shape: f32[3,1,4], index: 4, kind: input, shape index: {}]
  %s5 = inlined_call_operand.vmem [shape: bf16[4,1], index: 5, kind: input, shape index: {}]
  %s6 = inlined_call_operand.<no memory space> [shape: f32[1,1], index: 6, kind: input, shape index: {}]
  %s7 = inlined_call_operand.vmem [shape: f32[64,4], index: 7, kind: input, shape index: {}]
  %s8 = inlined_call_operand.vmem [shape: f32[1,4], index: 8, kind: input, shape index: {}]
  %s9 = inlined_call_operand.vmem [shape: f32[4,4], index: 9, kind: input, shape index: {}]
  %s10 = inlined_call_operand.vmem [shape: f32[1,4], index: 10, kind: input, shape index: {}]
  %s11 = inlined_call_operand.vmem [shape: f32[4,4], index: 11, kind: input, shape index: {}]
  %s12 = inlined_call_operand.vmem [shape: f32[1,4], index: 12, kind: input, shape index: {}]
  %s13 = inlined_call_operand.vmem [shape: f32[4,64], index: 13, kind: input, shape index: {}]
  %s14 = inlined_call_operand.vmem [shape: f32[1,64], index: 14, kind: input, shape index: {}]
  %s15 = inlined_call_operand.vmem [shape: bf16[576,64], index: 15, kind: input, shape index: {}]
  %s16 = inlined_call_operand.vmem [shape: f32[1,64], index: 16, kind: input, shape index: {}]
  %s17 = inlined_call_operand.vmem [shape: f32[64,64], index: 17, kind: input, shape index: {}]
  %s18 = inlined_call_operand.vmem [shape: f32[1,64], index: 18, kind: input, shape index: {}]
  %s19 = inlined_call_operand.vmem [shape: f32[64,64], index: 19, kind: input, shape index: {}]
  %s20 = inlined_call_operand.vmem [shape: f32[1,64], index: 20, kind: input, shape index: {}]
  %s21 = inlined_call_operand.hbm [shape: f32[2,256,64], index: 21, kind: output, shape index: {}]
  %s22 = sld [smem:[#allocation0]]
  $region117: #{bam_forward.1} parent=0
    _
  %s24 = ssub.s32 1, %s22
  %s25 = scalar_select 0, %s24, %s22
  %v26 = vstv %s6
  %27 = vst [vmem:[#allocation6] sm:$0x1] %v26
  $region1: #{bam_forward.1} parent=0
    #allocation7 [shape = 'u8[262144]{0}', space=vmem, size = 0x40000, scoped, tag = 'output window, operand 0']
    #allocation8 [shape = 's32[2]{0}', space=sflag, size = 0x8, scoped, tag = 'scoped memory for bam_forward.1']
    %28 = vsyncpa [#allocation8], 0
    %s29 = scalar_lea.sflag [#allocation8], 1
    %30 = vsyncpa %s29, 0
    loop: start=0, step=1, limit=4
    $region2: #{bam_forward.1} parent=1 // loop_pre_header
      _
    $region3: #{bam_forward.1} parent=1 // loop_header
      %s32 = sphi 0, %s36
      %p33 = scmp.ge.s32.totalorder %s32, 4
      %s42 = sphi 0, %s44
      %s45 = sphi 0, %s42
      %s46 = sphi 0, %s45
      %s62 = sphi 0, %s46
      %s66 = sphi 0, %s66
      %s68 = sphi 0, %s66
      %s69 = sphi 0, %s68
      %s83 = sphi 0, %s69
      %s87 = sphi 0, %s87
      %s89 = sphi 0, %s87
      %s90 = sphi 0, %s89
      %s104 = sphi 0, %s90
      %s108 = sphi 0, %s108
      %s110 = sphi 0, %s108
      %s111 = sphi 0, %s110
      %s125 = sphi 0, %s111
      %s129 = sphi 0, %s129
      %s131 = sphi 0, %s129
      %s132 = sphi 0, %s131
      %s146 = sphi 0, %s132
      %s150 = sphi 0, %s150
      %s152 = sphi 0, %s150
      %s153 = sphi 0, %s152
      %s167 = sphi 0, %s153
      %s171 = sphi 0, %s171
      %s173 = sphi 0, %s171
      %s174 = sphi 0, %s173
      %s188 = sphi 0, %s174
      %s192 = sphi 0, %s192
      %s194 = sphi 0, %s192
      %s195 = sphi 0, %s194
      %s209 = sphi 0, %s195
      %s213 = sphi 0, %s213
      %s215 = sphi 0, %s213
      %s216 = sphi 0, %s215
      %s230 = sphi 0, %s216
      %s234 = sphi 0, %s234
      %s236 = sphi 0, %s234
      %s237 = sphi 0, %s236
      %s251 = sphi 0, %s237
      %s255 = sphi 0, %s255
      %s257 = sphi 0, %s255
      %s258 = sphi 0, %s257
      %s272 = sphi 0, %s258
      %s276 = sphi 0, %s276
      %s278 = sphi 0, %s276
      %s279 = sphi 0, %s278
      %s293 = sphi 0, %s279
      %s297 = sphi 0, %s297
      %s299 = sphi 0, %s297
      %s300 = sphi 0, %s299
      %s314 = sphi 0, %s300
      %s318 = sphi 0, %s318
      %s320 = sphi 0, %s318
      %s321 = sphi 0, %s320
      %s335 = sphi 0, %s321
      %s339 = sphi 0, %s339
      %s341 = sphi 0, %s339
      %s342 = sphi 0, %s341
      %s356 = sphi 0, %s342
      %s360 = sphi 0, %s360
      %s362 = sphi 0, %s360
      %s363 = sphi 0, %s362
      %s377 = sphi 0, %s363
      %s381 = sphi 0, %s381
      %s383 = sphi 0, %s381
      %s384 = sphi 0, %s383
      %s398 = sphi 0, %s384
      %s402 = sphi 0, %s402
      %s404 = sphi 0, %s402
      %s405 = sphi 0, %s404
      %s419 = sphi 0, %s405
      %s423 = sphi 0, %s423
      %s425 = sphi 0, %s423
      %s426 = sphi 0, %s425
      %s440 = sphi 0, %s426
      %s444 = sphi 0, %s444
      %s446 = sphi 0, %s444
      %s447 = sphi 0, %s446
      %s461 = sphi 0, %s447
      %s465 = sphi 0, %s465
      %s467 = sphi 0, %s465
      %s468 = sphi 0, %s467
      %s482 = sphi 0, %s468
      %s488 = sphi 0, %s490
      %s491 = sphi 0, %s488
      %s492 = sphi 0, %s491
      %s508 = sphi 0, %s492
    $region4: #{bam_forward.1} parent=1 // loop_header_branch
      %35 = sbr.rel (%p33) target = $region8
    $region5: #{bam_forward.1} parent=1 // loop_body
      %s37 = ssub.s32 %s32, 1
      %s38 = ssub.s32 %s32, 2
      %s39 = sadd.s32 %s32, 1
      %s40 = ssub.s32 %s32, %s39
      %p41 = scmp.eq.s32.totalorder %s40, 0
      %s43 = sadd.s32 %s42, 1
      %s44 = scalar_select %p41, %s42, %s43
      %p47 = pneg %p41
      %p48 = scmp.eq.s32.totalorder %s32, 1
      %p49 = por %p47, %p48
      %p50 = scmp.ne.s32.totalorder %s42, %s45
      %p51 = scmp.eq.s32.totalorder %s32, 0
      %p52 = por %p50, %p51
      %p53 = scmp.ne.s32.totalorder %s42, %s45
      %p54 = scmp.eq.s32.totalorder %s37, 1
      %p55 = por %p53, %p54
      %p56 = scmp.ne.s32.totalorder %s45, %s46
      %p57 = scmp.eq.s32.totalorder %s37, 0
      %p58 = por %p56, %p57
      %p59 = scmp.ne.s32.totalorder %s45, %s46
      %p60 = scmp.eq.s32.totalorder %s38, 1
      %p61 = por %p59, %p60
      %p63 = scmp.ne.s32.totalorder %s46, %s62
      %p64 = scmp.eq.s32.totalorder %s38, 0
      %p65 = por %p63, %p64
      %s67 = sadd.s32 %s66, 1
      %p70 = scmp.eq.s32.totalorder %s32, 1
      %p71 = scmp.ne.s32.totalorder %s66, %s68
      %p72 = scmp.eq.s32.totalorder %s32, 0
      %p73 = por %p71, %p72
      %p74 = scmp.ne.s32.totalorder %s66, %s68
      %p75 = scmp.eq.s32.totalorder %s37, 1
      %p76 = por %p74, %p75
      %p77 = scmp.ne.s32.totalorder %s68, %s69
      %p78 = scmp.eq.s32.totalorder %s37, 0
      %p79 = por %p77, %p78
      %p80 = scmp.ne.s32.totalorder %s68, %s69
      %p81 = scmp.eq.s32.totalorder %s38, 1
      %p82 = por %p80, %p81
      %p84 = scmp.ne.s32.totalorder %s69, %s83
      %p85 = scmp.eq.s32.totalorder %s38, 0
      %p86 = por %p84, %p85
      %s88 = sadd.s32 %s87, 1
      %p91 = scmp.eq.s32.totalorder %s32, 1
      %p92 = scmp.ne.s32.totalorder %s87, %s89
      %p93 = scmp.eq.s32.totalorder %s32, 0
      %p94 = por %p92, %p93
      %p95 = scmp.ne.s32.totalorder %s87, %s89
      %p96 = scmp.eq.s32.totalorder %s37, 1
      %p97 = por %p95, %p96
      %p98 = scmp.ne.s32.totalorder %s89, %s90
      %p99 = scmp.eq.s32.totalorder %s37, 0
      %p100 = por %p98, %p99
      %p101 = scmp.ne.s32.totalorder %s89, %s90
      %p102 = scmp.eq.s32.totalorder %s38, 1
      %p103 = por %p101, %p102
      %p105 = scmp.ne.s32.totalorder %s90, %s104
      %p106 = scmp.eq.s32.totalorder %s38, 0
      %p107 = por %p105, %p106
      %s109 = sadd.s32 %s108, 1
      %p112 = scmp.eq.s32.totalorder %s32, 1
      %p113 = scmp.ne.s32.totalorder %s108, %s110
      %p114 = scmp.eq.s32.totalorder %s32, 0
      %p115 = por %p113, %p114
      %p116 = scmp.ne.s32.totalorder %s108, %s110
      %p117 = scmp.eq.s32.totalorder %s37, 1
      %p118 = por %p116, %p117
      %p119 = scmp.ne.s32.totalorder %s110, %s111
      %p120 = scmp.eq.s32.totalorder %s37, 0
      %p121 = por %p119, %p120
      %p122 = scmp.ne.s32.totalorder %s110, %s111
      %p123 = scmp.eq.s32.totalorder %s38, 1
      %p124 = por %p122, %p123
      %p126 = scmp.ne.s32.totalorder %s111, %s125
      %p127 = scmp.eq.s32.totalorder %s38, 0
      %p128 = por %p126, %p127
      %s130 = sadd.s32 %s129, 1
      %p133 = scmp.eq.s32.totalorder %s32, 1
      %p134 = scmp.ne.s32.totalorder %s129, %s131
      %p135 = scmp.eq.s32.totalorder %s32, 0
      %p136 = por %p134, %p135
      %p137 = scmp.ne.s32.totalorder %s129, %s131
      %p138 = scmp.eq.s32.totalorder %s37, 1
      %p139 = por %p137, %p138
      %p140 = scmp.ne.s32.totalorder %s131, %s132
      %p141 = scmp.eq.s32.totalorder %s37, 0
      %p142 = por %p140, %p141
      %p143 = scmp.ne.s32.totalorder %s131, %s132
      %p144 = scmp.eq.s32.totalorder %s38, 1
      %p145 = por %p143, %p144
      %p147 = scmp.ne.s32.totalorder %s132, %s146
      %p148 = scmp.eq.s32.totalorder %s38, 0
      %p149 = por %p147, %p148
      %s151 = sadd.s32 %s150, 1
      %p154 = scmp.eq.s32.totalorder %s32, 1
      %p155 = scmp.ne.s32.totalorder %s150, %s152
      %p156 = scmp.eq.s32.totalorder %s32, 0
      %p157 = por %p155, %p156
      %p158 = scmp.ne.s32.totalorder %s150, %s152
      %p159 = scmp.eq.s32.totalorder %s37, 1
      %p160 = por %p158, %p159
      %p161 = scmp.ne.s32.totalorder %s152, %s153
      %p162 = scmp.eq.s32.totalorder %s37, 0
      %p163 = por %p161, %p162
      %p164 = scmp.ne.s32.totalorder %s152, %s153
      %p165 = scmp.eq.s32.totalorder %s38, 1
      %p166 = por %p164, %p165
      %p168 = scmp.ne.s32.totalorder %s153, %s167
      %p169 = scmp.eq.s32.totalorder %s38, 0
      %p170 = por %p168, %p169
      %s172 = sadd.s32 %s171, 1
      %p175 = scmp.eq.s32.totalorder %s32, 1
      %p176 = scmp.ne.s32.totalorder %s171, %s173
      %p177 = scmp.eq.s32.totalorder %s32, 0
      %p178 = por %p176, %p177
      %p179 = scmp.ne.s32.totalorder %s171, %s173
      %p180 = scmp.eq.s32.totalorder %s37, 1
      %p181 = por %p179, %p180
      %p182 = scmp.ne.s32.totalorder %s173, %s174
      %p183 = scmp.eq.s32.totalorder %s37, 0
      %p184 = por %p182, %p183
      %p185 = scmp.ne.s32.totalorder %s173, %s174
      %p186 = scmp.eq.s32.totalorder %s38, 1
      %p187 = por %p185, %p186
      %p189 = scmp.ne.s32.totalorder %s174, %s188
      %p190 = scmp.eq.s32.totalorder %s38, 0
      %p191 = por %p189, %p190
      %s193 = sadd.s32 %s192, 1
      %p196 = scmp.eq.s32.totalorder %s32, 1
      %p197 = scmp.ne.s32.totalorder %s192, %s194
      %p198 = scmp.eq.s32.totalorder %s32, 0
      %p199 = por %p197, %p198
      %p200 = scmp.ne.s32.totalorder %s192, %s194
      %p201 = scmp.eq.s32.totalorder %s37, 1
      %p202 = por %p200, %p201
      %p203 = scmp.ne.s32.totalorder %s194, %s195
      %p204 = scmp.eq.s32.totalorder %s37, 0
      %p205 = por %p203, %p204
      %p206 = scmp.ne.s32.totalorder %s194, %s195
      %p207 = scmp.eq.s32.totalorder %s38, 1
      %p208 = por %p206, %p207
      %p210 = scmp.ne.s32.totalorder %s195, %s209
      %p211 = scmp.eq.s32.totalorder %s38, 0
      %p212 = por %p210, %p211
      %s214 = sadd.s32 %s213, 1
      %p217 = scmp.eq.s32.totalorder %s32, 1
      %p218 = scmp.ne.s32.totalorder %s213, %s215
      %p219 = scmp.eq.s32.totalorder %s32, 0
      %p220 = por %p218, %p219
      %p221 = scmp.ne.s32.totalorder %s213, %s215
      %p222 = scmp.eq.s32.totalorder %s37, 1
      %p223 = por %p221, %p222
      %p224 = scmp.ne.s32.totalorder %s215, %s216
      %p225 = scmp.eq.s32.totalorder %s37, 0
      %p226 = por %p224, %p225
      %p227 = scmp.ne.s32.totalorder %s215, %s216
      %p228 = scmp.eq.s32.totalorder %s38, 1
      %p229 = por %p227, %p228
      %p231 = scmp.ne.s32.totalorder %s216, %s230
      %p232 = scmp.eq.s32.totalorder %s38, 0
      %p233 = por %p231, %p232
      %s235 = sadd.s32 %s234, 1
      %p238 = scmp.eq.s32.totalorder %s32, 1
      %p239 = scmp.ne.s32.totalorder %s234, %s236
      %p240 = scmp.eq.s32.totalorder %s32, 0
      %p241 = por %p239, %p240
      %p242 = scmp.ne.s32.totalorder %s234, %s236
      %p243 = scmp.eq.s32.totalorder %s37, 1
      %p244 = por %p242, %p243
      %p245 = scmp.ne.s32.totalorder %s236, %s237
      %p246 = scmp.eq.s32.totalorder %s37, 0
      %p247 = por %p245, %p246
      %p248 = scmp.ne.s32.totalorder %s236, %s237
      %p249 = scmp.eq.s32.totalorder %s38, 1
      %p250 = por %p248, %p249
      %p252 = scmp.ne.s32.totalorder %s237, %s251
      %p253 = scmp.eq.s32.totalorder %s38, 0
      %p254 = por %p252, %p253
      %s256 = sadd.s32 %s255, 1
      %p259 = scmp.eq.s32.totalorder %s32, 1
      %p260 = scmp.ne.s32.totalorder %s255, %s257
      %p261 = scmp.eq.s32.totalorder %s32, 0
      %p262 = por %p260, %p261
      %p263 = scmp.ne.s32.totalorder %s255, %s257
      %p264 = scmp.eq.s32.totalorder %s37, 1
      %p265 = por %p263, %p264
      %p266 = scmp.ne.s32.totalorder %s257, %s258
      %p267 = scmp.eq.s32.totalorder %s37, 0
      %p268 = por %p266, %p267
      %p269 = scmp.ne.s32.totalorder %s257, %s258
      %p270 = scmp.eq.s32.totalorder %s38, 1
      %p271 = por %p269, %p270
      %p273 = scmp.ne.s32.totalorder %s258, %s272
      %p274 = scmp.eq.s32.totalorder %s38, 0
      %p275 = por %p273, %p274
      %s277 = sadd.s32 %s276, 1
      %p280 = scmp.eq.s32.totalorder %s32, 1
      %p281 = scmp.ne.s32.totalorder %s276, %s278
      %p282 = scmp.eq.s32.totalorder %s32, 0
      %p283 = por %p281, %p282
      %p284 = scmp.ne.s32.totalorder %s276, %s278
      %p285 = scmp.eq.s32.totalorder %s37, 1
      %p286 = por %p284, %p285
      %p287 = scmp.ne.s32.totalorder %s278, %s279
      %p288 = scmp.eq.s32.totalorder %s37, 0
      %p289 = por %p287, %p288
      %p290 = scmp.ne.s32.totalorder %s278, %s279
      %p291 = scmp.eq.s32.totalorder %s38, 1
      %p292 = por %p290, %p291
      %p294 = scmp.ne.s32.totalorder %s279, %s293
      %p295 = scmp.eq.s32.totalorder %s38, 0
      %p296 = por %p294, %p295
      %s298 = sadd.s32 %s297, 1
      %p301 = scmp.eq.s32.totalorder %s32, 1
      %p302 = scmp.ne.s32.totalorder %s297, %s299
      %p303 = scmp.eq.s32.totalorder %s32, 0
      %p304 = por %p302, %p303
      %p305 = scmp.ne.s32.totalorder %s297, %s299
      %p306 = scmp.eq.s32.totalorder %s37, 1
      %p307 = por %p305, %p306
      %p308 = scmp.ne.s32.totalorder %s299, %s300
      %p309 = scmp.eq.s32.totalorder %s37, 0
      %p310 = por %p308, %p309
      %p311 = scmp.ne.s32.totalorder %s299, %s300
      %p312 = scmp.eq.s32.totalorder %s38, 1
      %p313 = por %p311, %p312
      %p315 = scmp.ne.s32.totalorder %s300, %s314
      %p316 = scmp.eq.s32.totalorder %s38, 0
      %p317 = por %p315, %p316
      %s319 = sadd.s32 %s318, 1
      %p322 = scmp.eq.s32.totalorder %s32, 1
      %p323 = scmp.ne.s32.totalorder %s318, %s320
      %p324 = scmp.eq.s32.totalorder %s32, 0
      %p325 = por %p323, %p324
      %p326 = scmp.ne.s32.totalorder %s318, %s320
      %p327 = scmp.eq.s32.totalorder %s37, 1
      %p328 = por %p326, %p327
      %p329 = scmp.ne.s32.totalorder %s320, %s321
      %p330 = scmp.eq.s32.totalorder %s37, 0
      %p331 = por %p329, %p330
      %p332 = scmp.ne.s32.totalorder %s320, %s321
      %p333 = scmp.eq.s32.totalorder %s38, 1
      %p334 = por %p332, %p333
      %p336 = scmp.ne.s32.totalorder %s321, %s335
      %p337 = scmp.eq.s32.totalorder %s38, 0
      %p338 = por %p336, %p337
      %s340 = sadd.s32 %s339, 1
      %p343 = scmp.eq.s32.totalorder %s32, 1
      %p344 = scmp.ne.s32.totalorder %s339, %s341
      %p345 = scmp.eq.s32.totalorder %s32, 0
      %p346 = por %p344, %p345
      %p347 = scmp.ne.s32.totalorder %s339, %s341
      %p348 = scmp.eq.s32.totalorder %s37, 1
      %p349 = por %p347, %p348
      %p350 = scmp.ne.s32.totalorder %s341, %s342
      %p351 = scmp.eq.s32.totalorder %s37, 0
      %p352 = por %p350, %p351
      %p353 = scmp.ne.s32.totalorder %s341, %s342
      %p354 = scmp.eq.s32.totalorder %s38, 1
      %p355 = por %p353, %p354
      %p357 = scmp.ne.s32.totalorder %s342, %s356
      %p358 = scmp.eq.s32.totalorder %s38, 0
      %p359 = por %p357, %p358
      %s361 = sadd.s32 %s360, 1
      %p364 = scmp.eq.s32.totalorder %s32, 1
      %p365 = scmp.ne.s32.totalorder %s360, %s362
      %p366 = scmp.eq.s32.totalorder %s32, 0
      %p367 = por %p365, %p366
      %p368 = scmp.ne.s32.totalorder %s360, %s362
      %p369 = scmp.eq.s32.totalorder %s37, 1
      %p370 = por %p368, %p369
      %p371 = scmp.ne.s32.totalorder %s362, %s363
      %p372 = scmp.eq.s32.totalorder %s37, 0
      %p373 = por %p371, %p372
      %p374 = scmp.ne.s32.totalorder %s362, %s363
      %p375 = scmp.eq.s32.totalorder %s38, 1
      %p376 = por %p374, %p375
      %p378 = scmp.ne.s32.totalorder %s363, %s377
      %p379 = scmp.eq.s32.totalorder %s38, 0
      %p380 = por %p378, %p379
      %s382 = sadd.s32 %s381, 1
      %p385 = scmp.eq.s32.totalorder %s32, 1
      %p386 = scmp.ne.s32.totalorder %s381, %s383
      %p387 = scmp.eq.s32.totalorder %s32, 0
      %p388 = por %p386, %p387
      %p389 = scmp.ne.s32.totalorder %s381, %s383
      %p390 = scmp.eq.s32.totalorder %s37, 1
      %p391 = por %p389, %p390
      %p392 = scmp.ne.s32.totalorder %s383, %s384
      %p393 = scmp.eq.s32.totalorder %s37, 0
      %p394 = por %p392, %p393
      %p395 = scmp.ne.s32.totalorder %s383, %s384
      %p396 = scmp.eq.s32.totalorder %s38, 1
      %p397 = por %p395, %p396
      %p399 = scmp.ne.s32.totalorder %s384, %s398
      %p400 = scmp.eq.s32.totalorder %s38, 0
      %p401 = por %p399, %p400
      %s403 = sadd.s32 %s402, 1
      %p406 = scmp.eq.s32.totalorder %s32, 1
      %p407 = scmp.ne.s32.totalorder %s402, %s404
      %p408 = scmp.eq.s32.totalorder %s32, 0
      %p409 = por %p407, %p408
      %p410 = scmp.ne.s32.totalorder %s402, %s404
      %p411 = scmp.eq.s32.totalorder %s37, 1
      %p412 = por %p410, %p411
      %p413 = scmp.ne.s32.totalorder %s404, %s405
      %p414 = scmp.eq.s32.totalorder %s37, 0
      %p415 = por %p413, %p414
      %p416 = scmp.ne.s32.totalorder %s404, %s405
      %p417 = scmp.eq.s32.totalorder %s38, 1
      %p418 = por %p416, %p417
      %p420 = scmp.ne.s32.totalorder %s405, %s419
      %p421 = scmp.eq.s32.totalorder %s38, 0
      %p422 = por %p420, %p421
      %s424 = sadd.s32 %s423, 1
      %p427 = scmp.eq.s32.totalorder %s32, 1
      %p428 = scmp.ne.s32.totalorder %s423, %s425
      %p429 = scmp.eq.s32.totalorder %s32, 0
      %p430 = por %p428, %p429
      %p431 = scmp.ne.s32.totalorder %s423, %s425
      %p432 = scmp.eq.s32.totalorder %s37, 1
      %p433 = por %p431, %p432
      %p434 = scmp.ne.s32.totalorder %s425, %s426
      %p435 = scmp.eq.s32.totalorder %s37, 0
      %p436 = por %p434, %p435
      %p437 = scmp.ne.s32.totalorder %s425, %s426
      %p438 = scmp.eq.s32.totalorder %s38, 1
      %p439 = por %p437, %p438
      %p441 = scmp.ne.s32.totalorder %s426, %s440
      %p442 = scmp.eq.s32.totalorder %s38, 0
      %p443 = por %p441, %p442
      %s445 = sadd.s32 %s444, 1
      %p448 = scmp.eq.s32.totalorder %s32, 1
      %p449 = scmp.ne.s32.totalorder %s444, %s446
      %p450 = scmp.eq.s32.totalorder %s32, 0
      %p451 = por %p449, %p450
      %p452 = scmp.ne.s32.totalorder %s444, %s446
      %p453 = scmp.eq.s32.totalorder %s37, 1
      %p454 = por %p452, %p453
      %p455 = scmp.ne.s32.totalorder %s446, %s447
      %p456 = scmp.eq.s32.totalorder %s37, 0
      %p457 = por %p455, %p456
      %p458 = scmp.ne.s32.totalorder %s446, %s447
      %p459 = scmp.eq.s32.totalorder %s38, 1
      %p460 = por %p458, %p459
      %p462 = scmp.ne.s32.totalorder %s447, %s461
      %p463 = scmp.eq.s32.totalorder %s38, 0
      %p464 = por %p462, %p463
      %s466 = sadd.s32 %s465, 1
      %p469 = scmp.eq.s32.totalorder %s32, 1
      %p470 = scmp.ne.s32.totalorder %s465, %s467
      %p471 = scmp.eq.s32.totalorder %s32, 0
      %p472 = por %p470, %p471
      %p473 = scmp.ne.s32.totalorder %s465, %s467
      %p474 = scmp.eq.s32.totalorder %s37, 1
      %p475 = por %p473, %p474
      %p476 = scmp.ne.s32.totalorder %s467, %s468
      %p477 = scmp.eq.s32.totalorder %s37, 0
      %p478 = por %p476, %p477
      %p479 = scmp.ne.s32.totalorder %s467, %s468
      %p480 = scmp.eq.s32.totalorder %s38, 1
      %p481 = por %p479, %p480
      %p483 = scmp.ne.s32.totalorder %s468, %s482
      %p484 = scmp.eq.s32.totalorder %s38, 0
      %p485 = por %p483, %p484
      %s486 = ssub.s32 %s32, %s39
      %p487 = scmp.eq.s32.totalorder %s486, 0
      %s489 = sadd.s32 %s488, 1
      %s490 = scalar_select %p487, %s488, %s489
      %p493 = pneg %p487
      %p494 = scmp.eq.s32.totalorder %s32, 1
      %p495 = por %p493, %p494
      %p496 = scmp.ne.s32.totalorder %s488, %s491
      %p497 = scmp.eq.s32.totalorder %s32, 0
      %p498 = por %p496, %p497
      %p499 = scmp.ne.s32.totalorder %s488, %s491
      %p500 = scmp.eq.s32.totalorder %s37, 1
      %p501 = por %p499, %p500
      %p502 = scmp.ne.s32.totalorder %s491, %s492
      %p503 = scmp.eq.s32.totalorder %s37, 0
      %p504 = por %p502, %p503
      %p505 = scmp.ne.s32.totalorder %s491, %s492
      %p506 = scmp.eq.s32.totalorder %s38, 1
      %p507 = por %p505, %p506
      %p509 = scmp.ne.s32.totalorder %s492, %s508
      %p510 = scmp.eq.s32.totalorder %s38, 0
      %p511 = por %p509, %p510
      %p512 = scmp.le.s32.totalorder 1, %s32
      %p513 = scmp.lt.s32.totalorder %s32, 3
      %p514 = pnand %p512, %p513
      %p515 = pneg %p514
      // Predicated region
      $region9: #{bam_forward.1} parent=5 // pred_check
        _
      $region10: #{bam_forward.1} parent=5 // pred_check_branch
        %517 = sbr.rel (%p514) target = $region12
      $region11: #{bam_forward.1} parent=5 // pred_region
        %s518 = ssub.s32 %s32, 1
        // Predicated region
        $region13: #{bam_forward.1} parent=11 // pred_check
          %p519 = pneg %p79
        $region14: #{bam_forward.1} parent=11 // pred_check_branch
          %521 = sbr.rel (%p519) target = $region16
        $region15: #{bam_forward.1} parent=11 // pred_region
          _
        $region16: #{bam_forward.1} parent=11 // pred_fallthru
          _
        // Predicated region
        $region17: #{bam_forward.1} parent=11 // pred_check
          %p522 = pneg %p100
        $region18: #{bam_forward.1} parent=11 // pred_check_branch
          %524 = sbr.rel (%p522) target = $region20
        $region19: #{bam_forward.1} parent=11 // pred_region
          _
        $region20: #{bam_forward.1} parent=11 // pred_fallthru
          _
        // Predicated region
        $region21: #{bam_forward.1} parent=11 // pred_check
          %p525 = pneg %p121
        $region22: #{bam_forward.1} parent=11 // pred_check_branch
          %527 = sbr.rel (%p525) target = $region24
        $region23: #{bam_forward.1} parent=11 // pred_region
          _
        $region24: #{bam_forward.1} parent=11 // pred_fallthru
          _
        // Predicated region
        $region25: #{bam_forward.1} parent=11 // pred_check
          %p528 = pneg %p142
        $region26: #{bam_forward.1} parent=11 // pred_check_branch
          %530 = sbr.rel (%p528) target = $region28
        $region27: #{bam_forward.1} parent=11 // pred_region
          _
        $region28: #{bam_forward.1} parent=11 // pred_fallthru
          _
        // Predicated region
        $region29: #{bam_forward.1} parent=11 // pred_check
          %p531 = pneg %p163
        $region30: #{bam_forward.1} parent=11 // pred_check_branch
          %533 = sbr.rel (%p531) target = $region32
        $region31: #{bam_forward.1} parent=11 // pred_region
          _
        $region32: #{bam_forward.1} parent=11 // pred_fallthru
          _
        // Predicated region
        $region33: #{bam_forward.1} parent=11 // pred_check
          %p534 = pneg %p184
        $region34: #{bam_forward.1} parent=11 // pred_check_branch
          %536 = sbr.rel (%p534) target = $region36
        $region35: #{bam_forward.1} parent=11 // pred_region
          _
        $region36: #{bam_forward.1} parent=11 // pred_fallthru
          _
        // Predicated region
        $region37: #{bam_forward.1} parent=11 // pred_check
          %p537 = pneg %p205
        $region38: #{bam_forward.1} parent=11 // pred_check_branch
          %539 = sbr.rel (%p537) target = $region40
        $region39: #{bam_forward.1} parent=11 // pred_region
          _
        $region40: #{bam_forward.1} parent=11 // pred_fallthru
          _
        // Predicated region
        $region41: #{bam_forward.1} parent=11 // pred_check
          %p540 = pneg %p226
        $region42: #{bam_forward.1} parent=11 // pred_check_branch
          %542 = sbr.rel (%p540) target = $region44
        $region43: #{bam_forward.1} parent=11 // pred_region
          _
        $region44: #{bam_forward.1} parent=11 // pred_fallthru
          _
        // Predicated region
        $region45: #{bam_forward.1} parent=11 // pred_check
          %p543 = pneg %p247
        $region46: #{bam_forward.1} parent=11 // pred_check_branch
          %545 = sbr.rel (%p543) target = $region48
        $region47: #{bam_forward.1} parent=11 // pred_region
          _
        $region48: #{bam_forward.1} parent=11 // pred_fallthru
          _
        // Predicated region
        $region49: #{bam_forward.1} parent=11 // pred_check
          %p546 = pneg %p268
        $region50: #{bam_forward.1} parent=11 // pred_check_branch
          %548 = sbr.rel (%p546) target = $region52
        $region51: #{bam_forward.1} parent=11 // pred_region
          _
        $region52: #{bam_forward.1} parent=11 // pred_fallthru
          _
        // Predicated region
        $region53: #{bam_forward.1} parent=11 // pred_check
          %p549 = pneg %p289
        $region54: #{bam_forward.1} parent=11 // pred_check_branch
          %551 = sbr.rel (%p549) target = $region56
        $region55: #{bam_forward.1} parent=11 // pred_region
          _
        $region56: #{bam_forward.1} parent=11 // pred_fallthru
          _
        // Predicated region
        $region57: #{bam_forward.1} parent=11 // pred_check
          %p552 = pneg %p310
        $region58: #{bam_forward.1} parent=11 // pred_check_branch
          %554 = sbr.rel (%p552) target = $region60
        $region59: #{bam_forward.1} parent=11 // pred_region
          _
        $region60: #{bam_forward.1} parent=11 // pred_fallthru
          _
        // Predicated region
        $region61: #{bam_forward.1} parent=11 // pred_check
          %p555 = pneg %p331
        $region62: #{bam_forward.1} parent=11 // pred_check_branch
          %557 = sbr.rel (%p555) target = $region64
        $region63: #{bam_forward.1} parent=11 // pred_region
          _
        $region64: #{bam_forward.1} parent=11 // pred_fallthru
          _
        // Predicated region
        $region65: #{bam_forward.1} parent=11 // pred_check
          %p558 = pneg %p352
        $region66: #{bam_forward.1} parent=11 // pred_check_branch
          %560 = sbr.rel (%p558) target = $region68
        $region67: #{bam_forward.1} parent=11 // pred_region
          _
        $region68: #{bam_forward.1} parent=11 // pred_fallthru
          _
        // Predicated region
        $region69: #{bam_forward.1} parent=11 // pred_check
          %p561 = pneg %p373
        $region70: #{bam_forward.1} parent=11 // pred_check_branch
          %563 = sbr.rel (%p561) target = $region72
        $region71: #{bam_forward.1} parent=11 // pred_region
          _
        $region72: #{bam_forward.1} parent=11 // pred_fallthru
          _
        // Predicated region
        $region73: #{bam_forward.1} parent=11 // pred_check
          %p564 = pneg %p394
        $region74: #{bam_forward.1} parent=11 // pred_check_branch
          %566 = sbr.rel (%p564) target = $region76
        $region75: #{bam_forward.1} parent=11 // pred_region
          _
        $region76: #{bam_forward.1} parent=11 // pred_fallthru
          _
        // Predicated region
        $region77: #{bam_forward.1} parent=11 // pred_check
          %p567 = pneg %p415
        $region78: #{bam_forward.1} parent=11 // pred_check_branch
          %569 = sbr.rel (%p567) target = $region80
        $region79: #{bam_forward.1} parent=11 // pred_region
          _
        $region80: #{bam_forward.1} parent=11 // pred_fallthru
          _
        // Predicated region
        $region81: #{bam_forward.1} parent=11 // pred_check
          %p570 = pneg %p436
        $region82: #{bam_forward.1} parent=11 // pred_check_branch
          %572 = sbr.rel (%p570) target = $region84
        $region83: #{bam_forward.1} parent=11 // pred_region
          _
        $region84: #{bam_forward.1} parent=11 // pred_fallthru
          _
        // Predicated region
        $region85: #{bam_forward.1} parent=11 // pred_check
          %p573 = pneg %p457
        $region86: #{bam_forward.1} parent=11 // pred_check_branch
          %575 = sbr.rel (%p573) target = $region88
        $region87: #{bam_forward.1} parent=11 // pred_region
          _
        $region88: #{bam_forward.1} parent=11 // pred_fallthru
          _
        // Predicated region
        $region89: #{bam_forward.1} parent=11 // pred_check
          %p576 = pneg %p478
        $region90: #{bam_forward.1} parent=11 // pred_check_branch
          %578 = sbr.rel (%p576) target = $region92
        $region91: #{bam_forward.1} parent=11 // pred_region
          _
        $region92: #{bam_forward.1} parent=11 // pred_fallthru
          _
      $region12: #{bam_forward.1} parent=5 // pred_fallthru
        _
      %p579 = scmp.lt.s32.totalorder %s32, 2
      // Predicated region
      $region93: #{bam_forward.1} parent=5 // pred_check
        %p580 = pneg %p579
      $region94: #{bam_forward.1} parent=5 // pred_check_branch
        %582 = sbr.rel (%p580) target = $region96
      $region95: #{bam_forward.1} parent=5 // pred_region
        // Predicated region
        $region97: #{bam_forward.1} parent=95 // pred_check
          %p583 = pneg %p52
        $region98: #{bam_forward.1} parent=95 // pred_check_branch
          %585 = sbr.rel (%p583) target = $region100
        $region99: #{bam_forward.1} parent=95 // pred_region
          %p586 = scmp.lt.s32.totalorder %s32, 1
          %s587 = scalar_select %p586, %s32, 1
          %s588 = smul.addr %s587, 40
          %s589 = smul.addr %s588, 8
          %s590 = scalar_lea.vmem %s0, %s589
        $region100: #{bam_forward.1} parent=95 // pred_fallthru
          _
      $region96: #{bam_forward.1} parent=5 // pred_fallthru
        _
      %p591 = scmp.le.s32.totalorder 1, %s32
      %p592 = scmp.lt.s32.totalorder %s32, 3
      %p593 = pnand %p591, %p592
      %p594 = pneg %p593
      // Predicated region
      $region101: #{bam_forward.1} parent=5 // pred_check
        _
      $region102: #{bam_forward.1} parent=5 // pred_check_branch
        %596 = sbr.rel (%p593) target = $region104
      $region103: #{bam_forward.1} parent=5 // pred_region
        %s597 = ssub.s32 %s32, 1
        %p598 = scmp.lt.s32.totalorder %s37, 1
        %s599 = scalar_select %p598, %s37, 1
        %s600 = smul.addr %s599, 40
        %s601 = smul.addr %s600, 8
        %s602 = scalar_lea.vmem %s0, %s601
        %p603 = pneg %p58
        %p604 = pneg %p55
        %p605 = pneg %p79
        %p606 = pneg %p76
        %p607 = pneg %p100
        %p608 = pneg %p97
        %p609 = pneg %p121
        %p610 = pneg %p118
        %p611 = pneg %p142
        %p612 = pneg %p139
        %p613 = pneg %p163
        %p614 = pneg %p160
        %p615 = pneg %p184
        %p616 = pneg %p181
        %p617 = pneg %p205
        %p618 = pneg %p202
        %p619 = pneg %p226
        %p620 = pneg %p223
        %p621 = pneg %p247
        %p622 = pneg %p244
        %p623 = pneg %p268
        %p624 = pneg %p265
        %p625 = pneg %p289
        %p626 = pneg %p286
        %p627 = pneg %p310
        %p628 = pneg %p307
        %p629 = pneg %p331
        %p630 = pneg %p328
        %p631 = pneg %p352
        %p632 = pneg %p349
        %p633 = pneg %p373
        %p634 = pneg %p370
        %p635 = pneg %p394
        %p636 = pneg %p391
        %p637 = pneg %p415
        %p638 = pneg %p412
        %p639 = pneg %p436
        %p640 = pneg %p433
        %p641 = pneg %p457
        %p642 = pneg %p454
        %p643 = pneg %p478
        %p644 = pneg %p475
        %p645 = pneg %p504
        %p646 = pneg %p501
        %s647 = sand.u32 %s491, 1
        %s648 = scalar_lea.sflag [#allocation8], %s647
        %s649 = sand.u32 %s491, 1
        %s650 = smul.addr %s649, 256
        %s651 = scalar_lea.vmem [#allocation7], %s650
        %p652 = scmp.lt.s32.totalorder %s37, 1
        %s653 = scalar_select %p652, %s37, 1
        %s654 = smul.addr %s653, 40
        %s655 = smul.addr %s654, 8
        %s656 = scalar_lea.vmem %s0, %s655
        %v658 = vld [vmem:[%s656 + $0x20] sm:$0xff]
        %v659 = vld [vmem:[%s656 + $0x28] sm:$0xff]
        %v660 = vld [vmem:[%s656 + $0x30] sm:$0xff]
        %v661 = vld [vmem:[%s656 + $0x38] sm:$0xff]
        %v662 = vld [vmem:[%s656 + $0x40] sm:$0xff]
        %v663 = vld [vmem:[%s656 + $0x48] sm:$0xff]
        %v664 = vld [vmem:[%s656 + $0x50] sm:$0xff]
        %v665 = vld [vmem:[%s656 + $0x58] sm:$0xff]
        %v666 = vld [vmem:[%s656 + $0x60] sm:$0xff]
        %v667 = vld [vmem:[%s656 + $0x68] sm:$0xff]
        %v668 = vld [vmem:[%s656 + $0x70] sm:$0xff]
        %v669 = vld [vmem:[%s656 + $0x78] sm:$0xff]
        %v670 = vld [vmem:[%s656 + $0x80] sm:$0xff]
        %v671 = vld [vmem:[%s656 + $0x88] sm:$0xff]
        %v672 = vld [vmem:[%s656 + $0x90] sm:$0xff]
        %v673 = vld [vmem:[%s656 + $0x98] sm:$0xff]
        %v674 = vld [vmem:[%s656 + $0xa0] sm:$0xff]
        %v675 = vld [vmem:[%s656 + $0xa8] sm:$0xff]
        %v676 = vld [vmem:[%s656 + $0xb0] sm:$0xff]
        %v677 = vld [vmem:[%s656 + $0xb8] sm:$0xff]
        %v678 = vld [vmem:[%s656 + $0xc0] sm:$0xff]
        %v679 = vld [vmem:[%s656 + $0xc8] sm:$0xff]
        %v680 = vld [vmem:[%s656 + $0xd0] sm:$0xff]
        %v681 = vld [vmem:[%s656 + $0xd8] sm:$0xff]
        %v682 = vld [vmem:[%s656 + $0xe0] sm:$0xff]
        %v683 = vld [vmem:[%s656 + $0xe8] sm:$0xff]
        %v684 = vld [vmem:[%s656 + $0xf0] sm:$0xff]
        %v685 = vld [vmem:[%s656 + $0xf8] sm:$0xff]
        %v686 = vld [vmem:[%s656 + $0x100] sm:$0xff]
        %v687 = vld [vmem:[%s656 + $0x108] sm:$0xff]
        %v688 = vld [vmem:[%s656 + $0x110] sm:$0xff]
        %v689 = vld [vmem:[%s656 + $0x118] sm:$0xff]
        %vm690 = vcmask 523264
        %v691 = vsel %vm690, %v658, 0.0
        %v692 = vsel %vm690, %v659, 0.0
        %v693 = vadd.f32 %v691, %v692
        %v694 = vsel %vm690, %v660, 0.0
        %v695 = vadd.f32 %v693, %v694
        %v696 = vsel %vm690, %v661, 0.0
        %v697 = vadd.f32 %v695, %v696
        %v698 = vsel %vm690, %v662, 0.0
        %v699 = vadd.f32 %v697, %v698
        %v700 = vsel %vm690, %v663, 0.0
        %v701 = vadd.f32 %v699, %v700
        %v702 = vsel %vm690, %v664, 0.0
        %v703 = vadd.f32 %v701, %v702
        %v704 = vsel %vm690, %v665, 0.0
        %v705 = vadd.f32 %v703, %v704
        %v706 = vsel %vm690, %v666, 0.0
        %v707 = vadd.f32 %v705, %v706
        %v708 = vsel %vm690, %v667, 0.0
        %v709 = vadd.f32 %v707, %v708
        %v710 = vsel %vm690, %v668, 0.0
        %v711 = vadd.f32 %v709, %v710
        %v712 = vsel %vm690, %v669, 0.0
        %v713 = vadd.f32 %v711, %v712
        %v714 = vsel %vm690, %v670, 0.0
        %v715 = vadd.f32 %v713, %v714
        %v716 = vsel %vm690, %v671, 0.0
        %v717 = vadd.f32 %v715, %v716
        %v718 = vsel %vm690, %v672, 0.0
        %v719 = vadd.f32 %v717, %v718
        %v720 = vsel %vm690, %v673, 0.0
        %v721 = vadd.f32 %v719, %v720
        %v722 = vsel %vm690, %v674, 0.0
        %v723 = vadd.f32 %v721, %v722
        %v724 = vsel %vm690, %v675, 0.0
        %v725 = vadd.f32 %v723, %v724
        %v726 = vsel %vm690, %v676, 0.0
        %v727 = vadd.f32 %v725, %v726
        %v728 = vsel %vm690, %v677, 0.0
        %v729 = vadd.f32 %v727, %v728
        %v730 = vsel %vm690, %v678, 0.0
        %v731 = vadd.f32 %v729, %v730
        %v732 = vsel %vm690, %v679, 0.0
        %v733 = vadd.f32 %v731, %v732
        %v734 = vsel %vm690, %v680, 0.0
        %v735 = vadd.f32 %v733, %v734
        %v736 = vsel %vm690, %v681, 0.0
        %v737 = vadd.f32 %v735, %v736
        %v738 = vsel %vm690, %v682, 0.0
        %v739 = vadd.f32 %v737, %v738
        %v740 = vsel %vm690, %v683, 0.0
        %v741 = vadd.f32 %v739, %v740
        %v742 = vsel %vm690, %v684, 0.0
        %v743 = vadd.f32 %v741, %v742
        %v744 = vsel %vm690, %v685, 0.0
        %v745 = vadd.f32 %v743, %v744
        %v746 = vsel %vm690, %v686, 0.0
        %v747 = vadd.f32 %v745, %v746
        %v748 = vsel %vm690, %v687, 0.0
        %v749 = vadd.f32 %v747, %v748
        %v750 = vsel %vm690, %v688, 0.0
        %v751 = vadd.f32 %v749, %v750
        %v752 = vsel %vm690, %v689, 0.0
        %v753 = vadd.f32 %v751, %v752
        %v754 = vrot.slane %v753, 4
        %v755 = vadd.f32 %v753, %v754
        %v756 = vrot.slane %v755, 2
        %v757 = vadd.f32 %v755, %v756
        %v758 = vrot.slane %v757, 1
        %v759 = vadd.f32 %v757, %v758
        %v760 = vmul.f32 %v759, 0.00390625
        %v761 = vld [vmem:[%s7] sm:$0xff]
        %v762 = vld [vmem:[%s7 + $0x8] sm:$0xff]
        %v763 = vld [vmem:[%s7 + $0x10] sm:$0xff]
        %v764 = vld [vmem:[%s7 + $0x18] sm:$0xff]
        %v765 = vld [vmem:[%s7 + $0x20] sm:$0xff]
        %v766 = vld [vmem:[%s7 + $0x28] sm:$0xff]
        %v767 = vld [vmem:[%s7 + $0x30] sm:$0xff]
        %v768 = vld [vmem:[%s7 + $0x38] sm:$0xff]
        %v769 = vld [vmem:[%s8] sm:$0x1]
        %v771 = vsel %vm690, %v760, 0
        %773 = vmatprep.subr.mxu0 0.0
        %774 = vmatpush1.msra.mxu0 %v761
        %775 = vmatprep.subr.mxu0 0.0
        %776 = vmatpush1.msra.mxu0 %v762
        %777 = vmatprep.subr.mxu0 0.0
        %778 = vmatpush1.msra.mxu0 %v763
        %779 = vmatprep.subr.mxu0 0.0
        %780 = vmatpush1.msra.mxu0 %v764
        %781 = vmatprep.subr.mxu0 0.0
        %782 = vmatpush1.msra.mxu0 %v765
        %783 = vmatprep.subr.mxu0 0.0
        %784 = vmatpush1.msra.mxu0 %v766
        %785 = vmatprep.subr.mxu0 0.0
        %786 = vmatpush1.msra.mxu0 %v767
        %787 = vmatprep.subr.mxu0 0.0
        %788 = vmatpush1.msra.mxu0 %v768
        %789 = vmatprep.subr.mxu0 0.0
        %790 = vmatpush1.msra.mxu0 0.0
        %791 = vmatprep.subr.mxu0 0.0
        %792 = vmatpush1.msra.mxu0 0.0
        %793 = vmatprep.subr.mxu0 0.0
        %794 = vmatpush1.msra.mxu0 0.0
        %795 = vmatprep.subr.mxu0 0.0
        %796 = vmatpush1.msra.mxu0 0.0
        %797 = vmatprep.subr.mxu0 0.0
        %798 = vmatpush1.msra.mxu0 0.0
        %799 = vmatprep.subr.mxu0 0.0
        %800 = vmatpush1.msra.mxu0 0.0
        %801 = vmatprep.subr.mxu0 0.0
        %802 = vmatpush1.msra.mxu0 0.0
        %803 = vmatprep.subr.mxu0 0.0
        %804 = vmatpush1.msra.mxu0 0.0
        %805 = vmatprep.subr.mxu0 0.0
        %806 = vmatpush1.msra.mxu0 0.0
        %807 = vmatprep.subr.mxu0 0.0
        %808 = vmatpush1.msra.mxu0 0.0
        %809 = vmatprep.subr.mxu0 0.0
        %810 = vmatpush1.msra.mxu0 0.0
        %811 = vmatprep.subr.mxu0 0.0
        %812 = vmatpush1.msra.mxu0 0.0
        %813 = vmatprep.subr.mxu0 0.0
        %814 = vmatpush1.msra.mxu0 0.0
        %815 = vmatprep.subr.mxu0 0.0
        %816 = vmatpush1.msra.mxu0 0.0
        %817 = vmatprep.subr.mxu0 0.0
        %818 = vmatpush1.msra.mxu0 0.0
        %819 = vmatprep.subr.mxu0 0.0
        %820 = vmatpush1.msra.mxu0 0.0
        %821 = vmatprep.subr.mxu0 0.0
        %822 = vmatpush1.msra.mxu0 0.0
        %823 = vmatprep.subr.mxu0 0.0
        %824 = vmatpush1.msra.mxu0 0.0
        %825 = vmatprep.subr.mxu0 0.0
        %826 = vmatpush1.msra.mxu0 0.0
        %827 = vmatprep.subr.mxu0 0.0
        %828 = vmatpush1.msra.mxu0 0.0
        %829 = vmatprep.subr.mxu0 0.0
        %830 = vmatpush1.msra.mxu0 0.0
        %831 = vmatprep.subr.mxu0 0.0
        %832 = vmatpush1.msra.mxu0 0.0
        %833 = vmatprep.subr.mxu0 0.0
        %834 = vmatpush1.msra.mxu0 0.0
        %835 = vmatprep.subr.mxu0 0.0
        %836 = vmatpush1.msra.mxu0 0.0
        %837 = vmatprep.mubr.f32.mxu0 0.0
        %838 = vmatmul.mubr.f32.gmra.mrb[0].mxu0 %v771
        %v839 = vpop.f32.mrb[0].mxu0
        %v840 = vadd.f32 %v769, %v839
        %v841 = vpop.f32.mrb[0].mxu0
        %842 = vdwg.mxu0
        %v843 = vmax.f32 %v840, 0.0
        %v844 = vld [vmem:[%s9] sm:$0xf]
        %v845 = vld [vmem:[%s10] sm:$0x1]
        %vm846 = vcmask 31744
        %v848 = vsel %vm846, %v843, 0
        %vm850 = vcmask 1043456
        %v852 = vsel %vm850, %v844, 0
        %854 = vmatprep.subr.mxu0 0.0
        %855 = vmatpush1.msra.mxu0 %v852
        %856 = vmatprep.subr.mxu0 0.0
        %857 = vmatpush1.msra.mxu0 0.0
        %858 = vmatprep.subr.mxu0 0.0
        %859 = vmatpush1.msra.mxu0 0.0
        %860 = vmatprep.subr.mxu0 0.0
        %861 = vmatpush1.msra.mxu0 0.0
        %862 = vmatprep.subr.mxu0 0.0
        %863 = vmatpush1.msra.mxu0 0.0
        %864 = vmatprep.subr.mxu0 0.0
        %865 = vmatpush1.msra.mxu0 0.0
        %866 = vmatprep.subr.mxu0 0.0
        %867 = vmatpush1.msra.mxu0 0.0
        %868 = vmatprep.subr.mxu0 0.0
        %869 = vmatpush1.msra.mxu0 0.0
        %870 = vmatprep.subr.mxu0 0.0
        %871 = vmatpush1.msra.mxu0 0.0
        %872 = vmatprep.subr.mxu0 0.0
        %873 = vmatpush1.msra.mxu0 0.0
        %874 = vmatprep.subr.mxu0 0.0
        %875 = vmatpush1.msra.mxu0 0.0
        %876 = vmatprep.subr.mxu0 0.0
        %877 = vmatpush1.msra.mxu0 0.0
        %878 = vmatprep.subr.mxu0 0.0
        %879 = vmatpush1.msra.mxu0 0.0
        %880 = vmatprep.subr.mxu0 0.0
        %881 = vmatpush1.msra.mxu0 0.0
        %882 = vmatprep.subr.mxu0 0.0
        %883 = vmatpush1.msra.mxu0 0.0
        %884 = vmatprep.subr.mxu0 0.0
        %885 = vmatpush1.msra.mxu0 0.0
        %886 = vmatprep.subr.mxu0 0.0
        %887 = vmatpush1.msra.mxu0 0.0
        %888 = vmatprep.subr.mxu0 0.0
        %889 = vmatpush1.msra.mxu0 0.0
        %890 = vmatprep.subr.mxu0 0.0
        %891 = vmatpush1.msra.mxu0 0.0
        %892 = vmatprep.subr.mxu0 0.0
        %893 = vmatpush1.msra.mxu0 0.0
        %894 = vmatprep.subr.mxu0 0.0
        %895 = vmatpush1.msra.mxu0 0.0
        %896 = vmatprep.subr.mxu0 0.0
        %897 = vmatpush1.msra.mxu0 0.0
        %898 = vmatprep.subr.mxu0 0.0
        %899 = vmatpush1.msra.mxu0 0.0
        %900 = vmatprep.subr.mxu0 0.0
        %901 = vmatpush1.msra.mxu0 0.0
        %902 = vmatprep.subr.mxu0 0.0
        %903 = vmatpush1.msra.mxu0 0.0
        %904 = vmatprep.subr.mxu0 0.0
        %905 = vmatpush1.msra.mxu0 0.0
        %906 = vmatprep.subr.mxu0 0.0
        %907 = vmatpush1.msra.mxu0 0.0
        %908 = vmatprep.subr.mxu0 0.0
        %909 = vmatpush1.msra.mxu0 0.0
        %910 = vmatprep.subr.mxu0 0.0
        %911 = vmatpush1.msra.mxu0 0.0
        %912 = vmatprep.subr.mxu0 0.0
        %913 = vmatpush1.msra.mxu0 0.0
        %914 = vmatprep.subr.mxu0 0.0
        %915 = vmatpush1.msra.mxu0 0.0
        %916 = vmatprep.subr.mxu0 0.0
        %917 = vmatpush1.msra.mxu0 0.0
        %918 = vmatprep.mubr.f32.mxu0 0.0
        %919 = vmatmul.mubr.f32.gmra.mrb[0].mxu0 %v848
        %v920 = vpop.f32.mrb[0].mxu0
        %v921 = vadd.f32 %v845, %v920
        %v922 = vpop.f32.mrb[0].mxu0
        %923 = vdwg.mxu0
        %v924 = vmax.f32 %v921, 0.0
        %v925 = vld [vmem:[%s11] sm:$0xf]
        %v926 = vld [vmem:[%s12] sm:$0x1]
        %v928 = vsel %vm846, %v924, 0
        %v931 = vsel %vm850, %v925, 0
        %933 = vmatprep.subr.mxu0 0.0
        %934 = vmatpush1.msra.mxu0 %v931
        %935 = vmatprep.subr.mxu0 0.0
        %936 = vmatpush1.msra.mxu0 0.0
        %937 = vmatprep.subr.mxu0 0.0
        %938 = vmatpush1.msra.mxu0 0.0
        %939 = vmatprep.subr.mxu0 0.0
        %940 = vmatpush1.msra.mxu0 0.0
        %941 = vmatprep.subr.mxu0 0.0
        %942 = vmatpush1.msra.mxu0 0.0
        %943 = vmatprep.subr.mxu0 0.0
        %944 = vmatpush1.msra.mxu0 0.0
        %945 = vmatprep.subr.mxu0 0.0
        %946 = vmatpush1.msra.mxu0 0.0
        %947 = vmatprep.subr.mxu0 0.0
        %948 = vmatpush1.msra.mxu0 0.0
        %949 = vmatprep.subr.mxu0 0.0
        %950 = vmatpush1.msra.mxu0 0.0
        %951 = vmatprep.subr.mxu0 0.0
        %952 = vmatpush1.msra.mxu0 0.0
        %953 = vmatprep.subr.mxu0 0.0
        %954 = vmatpush1.msra.mxu0 0.0
        %955 = vmatprep.subr.mxu0 0.0
        %956 = vmatpush1.msra.mxu0 0.0
        %957 = vmatprep.subr.mxu0 0.0
        %958 = vmatpush1.msra.mxu0 0.0
        %959 = vmatprep.subr.mxu0 0.0
        %960 = vmatpush1.msra.mxu0 0.0
        %961 = vmatprep.subr.mxu0 0.0
        %962 = vmatpush1.msra.mxu0 0.0
        %963 = vmatprep.subr.mxu0 0.0
        %964 = vmatpush1.msra.mxu0 0.0
        %965 = vmatprep.subr.mxu0 0.0
        %966 = vmatpush1.msra.mxu0 0.0
        %967 = vmatprep.subr.mxu0 0.0
        %968 = vmatpush1.msra.mxu0 0.0
        %969 = vmatprep.subr.mxu0 0.0
        %970 = vmatpush1.msra.mxu0 0.0
        %971 = vmatprep.subr.mxu0 0.0
        %972 = vmatpush1.msra.mxu0 0.0
        %973 = vmatprep.subr.mxu0 0.0
        %974 = vmatpush1.msra.mxu0 0.0
        %975 = vmatprep.subr.mxu0 0.0
        %976 = vmatpush1.msra.mxu0 0.0
        %977 = vmatprep.subr.mxu0 0.0
        %978 = vmatpush1.msra.mxu0 0.0
        %979 = vmatprep.subr.mxu0 0.0
        %980 = vmatpush1.msra.mxu0 0.0
        %981 = vmatprep.subr.mxu0 0.0
        %982 = vmatpush1.msra.mxu0 0.0
        %983 = vmatprep.subr.mxu0 0.0
        %984 = vmatpush1.msra.mxu0 0.0
        %985 = vmatprep.subr.mxu0 0.0
        %986 = vmatpush1.msra.mxu0 0.0
        %987 = vmatprep.subr.mxu0 0.0
        %988 = vmatpush1.msra.mxu0 0.0
        %989 = vmatprep.subr.mxu0 0.0
        %990 = vmatpush1.msra.mxu0 0.0
        %991 = vmatprep.subr.mxu0 0.0
        %992 = vmatpush1.msra.mxu0 0.0
        %993 = vmatprep.subr.mxu0 0.0
        %994 = vmatpush1.msra.mxu0 0.0
        %995 = vmatprep.subr.mxu0 0.0
        %996 = vmatpush1.msra.mxu0 0.0
        %997 = vmatprep.mubr.f32.mxu0 0.0
        %998 = vmatmul.mubr.f32.gmra.mrb[0].mxu0 %v928
        %v999 = vpop.f32.mrb[0].mxu0
        %v1000 = vadd.f32 %v926, %v999
        %v1001 = vpop.f32.mrb[0].mxu0
        %1002 = vdwg.mxu0
        %v1003 = vmax.f32 %v1000, 0.0
        %v1004 = vld [vmem:[%s13] sm:$0xf]
        %v1005 = vld [vmem:[%s14] sm:$0x1]
        %v1007 = vsel %vm846, %v1003, 0
        %v1010 = vsel %vm850, %v1004, 0
        %1012 = vmatprep.subr.mxu0 0.0
        %1013 = vmatpush1.msra.mxu0 %v1010
        %1014 = vmatprep.subr.mxu0 0.0
        %1015 = vmatpush1.msra.mxu0 0.0
        %1016 = vmatprep.subr.mxu0 0.0
        %1017 = vmatpush1.msra.mxu0 0.0
        %1018 = vmatprep.subr.mxu0 0.0
        %1019 = vmatpush1.msra.mxu0 0.0
        %1020 = vmatprep.subr.mxu0 0.0
        %1021 = vmatpush1.msra.mxu0 0.0
        %1022 = vmatprep.subr.mxu0 0.0
        %1023 = vmatpush1.msra.mxu0 0.0
        %1024 = vmatprep.subr.mxu0 0.0
        %1025 = vmatpush1.msra.mxu0 0.0
        %1026 = vmatprep.subr.mxu0 0.0
        %1027 = vmatpush1.msra.mxu0 0.0
        %1028 = vmatprep.subr.mxu0 0.0
        %1029 = vmatpush1.msra.mxu0 0.0
        %1030 = vmatprep.subr.mxu0 0.0
        %1031 = vmatpush1.msra.mxu0 0.0
        %1032 = vmatprep.subr.mxu0 0.0
        %1033 = vmatpush1.msra.mxu0 0.0
        %1034 = vmatprep.subr.mxu0 0.0
        %1035 = vmatpush1.msra.mxu0 0.0
        %1036 = vmatprep.subr.mxu0 0.0
        %1037 = vmatpush1.msra.mxu0 0.0
        %1038 = vmatprep.subr.mxu0 0.0
        %1039 = vmatpush1.msra.mxu0 0.0
        %1040 = vmatprep.subr.mxu0 0.0
        %1041 = vmatpush1.msra.mxu0 0.0
        %1042 = vmatprep.subr.mxu0 0.0
        %1043 = vmatpush1.msra.mxu0 0.0
        %1044 = vmatprep.subr.mxu0 0.0
        %1045 = vmatpush1.msra.mxu0 0.0
        %1046 = vmatprep.subr.mxu0 0.0
        %1047 = vmatpush1.msra.mxu0 0.0
        %1048 = vmatprep.subr.mxu0 0.0
        %1049 = vmatpush1.msra.mxu0 0.0
        %1050 = vmatprep.subr.mxu0 0.0
        %1051 = vmatpush1.msra.mxu0 0.0
        %1052 = vmatprep.subr.mxu0 0.0
        %1053 = vmatpush1.msra.mxu0 0.0
        %1054 = vmatprep.subr.mxu0 0.0
        %1055 = vmatpush1.msra.mxu0 0.0
        %1056 = vmatprep.subr.mxu0 0.0
        %1057 = vmatpush1.msra.mxu0 0.0
        %1058 = vmatprep.subr.mxu0 0.0
        %1059 = vmatpush1.msra.mxu0 0.0
        %1060 = vmatprep.subr.mxu0 0.0
        %1061 = vmatpush1.msra.mxu0 0.0
        %1062 = vmatprep.subr.mxu0 0.0
        %1063 = vmatpush1.msra.mxu0 0.0
        %1064 = vmatprep.subr.mxu0 0.0
        %1065 = vmatpush1.msra.mxu0 0.0
        %1066 = vmatprep.subr.mxu0 0.0
        %1067 = vmatpush1.msra.mxu0 0.0
        %1068 = vmatprep.subr.mxu0 0.0
        %1069 = vmatpush1.msra.mxu0 0.0
        %1070 = vmatprep.subr.mxu0 0.0
        %1071 = vmatpush1.msra.mxu0 0.0
        %1072 = vmatprep.subr.mxu0 0.0
        %1073 = vmatpush1.msra.mxu0 0.0
        %1074 = vmatprep.subr.mxu0 0.0
        %1075 = vmatpush1.msra.mxu0 0.0
        %1076 = vmatprep.mubr.f32.mxu0 0.0
        %1077 = vmatmul.mubr.f32.gmra.mrb[0].mxu0 %v1007
        %v1078 = vpop.f32.mrb[0].mxu0
        %v1079 = vadd.f32 %v1005, %v1078
        %v1080 = vpop.f32.mrb[0].mxu0
        %1081 = vdwg.mxu0
        %v1082 = vpack.c.bf16 %v659, %v658
        %v1083 = vpack.c.bf16 %v661, %v660
        %v1084 = vpack.c.bf16 %v663, %v662
        %v1085 = vpack.c.bf16 %v665, %v664
        %v1086 = vpack.c.bf16 %v667, %v666
        %v1087 = vpack.c.bf16 %v669, %v668
        %v1088 = vpack.c.bf16 %v671, %v670
        %v1089 = vpack.c.bf16 %v673, %v672
        %v1090 = vpack.c.bf16 %v675, %v674
        %v1091 = vpack.c.bf16 %v677, %v676
        %v1092 = vpack.c.bf16 %v679, %v678
        %v1093 = vpack.c.bf16 %v681, %v680
        %v1094 = vpack.c.bf16 %v683, %v682
        %v1095 = vpack.c.bf16 %v685, %v684
        %v1096 = vpack.c.bf16 %v687, %v686
        %v1097 = vpack.c.bf16 %v689, %v688
        %v1098 = vld [vmem:[%s1] sm:$0xf]
        %v1099 = vld [vmem:[%s1 + $0x4] sm:$0xf]
        %v1100 = vld [vmem:[%s1 + $0x8] sm:$0xf]
        %v1101 = vld [vmem:[%s1 + $0xc] sm:$0xf]
        %v1102 = vld [vmem:[%s1 + $0x10] sm:$0xf]
        %v1103 = vld [vmem:[%s1 + $0x14] sm:$0xf]
        %v1104 = vld [vmem:[%s1 + $0x18] sm:$0xf]
        %v1105 = vld [vmem:[%s1 + $0x1c] sm:$0xf]
        %v1106 = vld [vmem:[%s2] sm:$0x1]
        %v1108 = vlaneseq
        %v1109 = vshrl.u32 %v1108, 7
        %v1110 = vsub.s32 0, %v1109
        %v1111 = vrot.slane %v1106, %v1110
        %v1121 = vunpack.c.l.b16 %v1098
        %v1122 = vunpack.c.l.b16 %v1099
        %v1123 = vunpack.c.l.b16 %v1100
        %v1124 = vunpack.c.l.b16 %v1101
        %v1125 = vunpack.c.l.b16 %v1102
        %v1126 = vunpack.c.l.b16 %v1103
        %v1127 = vunpack.c.l.b16 %v1104
        %v1128 = vunpack.c.l.b16 %v1105
        %v1129 = vpack.c.b16 %v1122, %v1121
        %v1130 = vpack.c.b16 %v1124, %v1123
        %v1131 = vpack.c.b16 %v1126, %v1125
        %v1132 = vpack.c.b16 %v1128, %v1127
        %v1138 = vsel %vm690, %v1082, 0
        %v1141 = vsel %vm690, %v1083, 0
        %v1144 = vsel %vm690, %v1084, 0
        %v1147 = vsel %vm690, %v1085, 0
        %v1150 = vsel %vm690, %v1086, 0
        %v1153 = vsel %vm690, %v1087, 0
        %v1156 = vsel %vm690, %v1088, 0
        %v1159 = vsel %vm690, %v1089, 0
        %v1162 = vsel %vm690, %v1090, 0
        %v1165 = vsel %vm690, %v1091, 0
        %v1168 = vsel %vm690, %v1092, 0
        %v1171 = vsel %vm690, %v1093, 0
        %v1174 = vsel %vm690, %v1094, 0
        %v1177 = vsel %vm690, %v1095, 0
        %v1180 = vsel %vm690, %v1096, 0
        %v1183 = vsel %vm690, %v1097, 0
        %1185 = vmatprep.subr.bf16.mxu0 0
        %1186 = vmatpush1.bf16.msra.mxu0 %v1129
        %1187 = vmatprep.subr.bf16.mxu0 0
        %1188 = vmatpush1.bf16.msra.mxu0 %v1130
        %1189 = vmatprep.subr.bf16.mxu0 0
        %1190 = vmatpush1.bf16.msra.mxu0 %v1131
        %1191 = vmatprep.subr.bf16.mxu0 0
        %1192 = vmatpush1.bf16.msra.mxu0 %v1132
        %1193 = vmatprep.subr.bf16.mxu0 0
        %1194 = vmatpush1.bf16.msra.mxu0 0
        %1195 = vmatprep.subr.bf16.mxu0 0
        %1196 = vmatpush1.bf16.msra.mxu0 0
        %1197 = vmatprep.subr.bf16.mxu0 0
        %1198 = vmatpush1.bf16.msra.mxu0 0
        %1199 = vmatprep.subr.bf16.mxu0 0
        %1200 = vmatpush1.bf16.msra.mxu0 0
        %1201 = vmatprep.subr.bf16.mxu0 0
        %1202 = vmatpush1.bf16.msra.mxu0 0
        %1203 = vmatprep.subr.bf16.mxu0 0
        %1204 = vmatpush1.bf16.msra.mxu0 0
        %1205 = vmatprep.subr.bf16.mxu0 0
        %1206 = vmatpush1.bf16.msra.mxu0 0
        %1207 = vmatprep.subr.bf16.mxu0 0
        %1208 = vmatpush1.bf16.msra.mxu0 0
        %1209 = vmatprep.subr.bf16.mxu0 0
        %1210 = vmatpush1.bf16.msra.mxu0 0
        %1211 = vmatprep.subr.bf16.mxu0 0
        %1212 = vmatpush1.bf16.msra.mxu0 0
        %1213 = vmatprep.subr.bf16.mxu0 0
        %1214 = vmatpush1.bf16.msra.mxu0 0
        %1215 = vmatprep.subr.bf16.mxu0 0
        %1216 = vmatpush1.bf16.msra.mxu0 0
        %1217 = vmatprep.mubr.bf16.mxu0 0
        %1218 = vmatmul.mubr.bf16.gmra.mrb[0].mxu0 %v1138
        %v1219 = vpop.f32.mrb[0].mxu0
        %v1220 = vadd.f32 %v1111, %v1219
        %v1221 = vpop.f32.mrb[0].mxu0
        %v1222 = vpop.f32.mrb[0].mxu0
        %v1223 = vadd.f32 %v1111, %v1222
        %v1224 = vpop.f32.mrb[0].mxu0
        %1225 = vmatprep.mubr.bf16.mxu0 0
        %1226 = vmatmul.mubr.bf16.gmra.mrb[0].mxu0 %v1141
        %v1227 = vpop.f32.mrb[0].mxu0
        %v1228 = vadd.f32 %v1111, %v1227
        %v1229 = vpop.f32.mrb[0].mxu0
        %v1230 = vpop.f32.mrb[0].mxu0
        %v1231 = vadd.f32 %v1111, %v1230
        %v1232 = vpop.f32.mrb[0].mxu0
        %1233 = vmatprep.mubr.bf16.mxu0 0
        %1234 = vmatmul.mubr.bf16.gmra.mrb[0].mxu0 %v1144
        %v1235 = vpop.f32.mrb[0].mxu0
        %v1236 = vadd.f32 %v1111, %v1235
        %v1237 = vpop.f32.mrb[0].mxu0
        %v1238 = vpop.f32.mrb[0].mxu0
        %v1239 = vadd.f32 %v1111, %v1238
        %v1240 = vpop.f32.mrb[0].mxu0
        %1241 = vmatprep.mubr.bf16.mxu0 0
        %1242 = vmatmul.mubr.bf16.gmra.mrb[0].mxu0 %v1147
        %v1243 = vpop.f32.mrb[0].mxu0
        %v1244 = vadd.f32 %v1111, %v1243
        %v1245 = vpop.f32.mrb[0].mxu0
        %v1246 = vpop.f32.mrb[0].mxu0
        %v1247 = vadd.f32 %v1111, %v1246
        %v1248 = vpop.f32.mrb[0].mxu0
        %1249 = vmatprep.mubr.bf16.mxu0 0
        %1250 = vmatmul.mubr.bf16.gmra.mrb[0].mxu0 %v1150
        %v1251 = vpop.f32.mrb[0].mxu0
        %v1252 = vadd.f32 %v1111, %v1251
        %v1253 = vpop.f32.mrb[0].mxu0
        %v1254 = vpop.f32.mrb[0].mxu0
        %v1255 = vadd.f32 %v1111, %v1254
        %v1256 = vpop.f32.mrb[0].mxu0
        %1257 = vmatprep.mubr.bf16.mxu0 0
        %1258 = vmatmul.mubr.bf16.gmra.mrb[0].mxu0 %v1153
        %v1259 = vpop.f32.mrb[0].mxu0
        %v1260 = vadd.f32 %v1111, %v1259
        %v1261 = vpop.f32.mrb[0].mxu0
        %v1262 = vpop.f32.mrb[0].mxu0
        %v1263 = vadd.f32 %v1111, %v1262
        %v1264 = vpop.f32.mrb[0].mxu0
        %1265 = vmatprep.mubr.bf16.mxu0 0
        %1266 = vmatmul.mubr.bf16.gmra.mrb[0].mxu0 %v1156
        %v1267 = vpop.f32.mrb[0].mxu0
        %v1268 = vadd.f32 %v1111, %v1267
        %v1269 = vpop.f32.mrb[0].mxu0
        %v1270 = vpop.f32.mrb[0].mxu0
        %v1271 = vadd.f32 %v1111, %v1270
        %v1272 = vpop.f32.mrb[0].mxu0
        %1273 = vmatprep.mubr.bf16.mxu0 0
        %1274 = vmatmul.mubr.bf16.gmra.mrb[0].mxu0 %v1159
        %v1275 = vpop.f32.mrb[0].mxu0
        %v1276 = vadd.f32 %v1111, %v1275
        %v1277 = vpop.f32.mrb[0].mxu0
        %v1278 = vpop.f32.mrb[0].mxu0
        %v1279 = vadd.f32 %v1111, %v1278
        %v1280 = vpop.f32.mrb[0].mxu0
        %1281 = vmatprep.mubr.bf16.mxu0 0
        %1282 = vmatmul.mubr.bf16.gmra.mrb[0].mxu0 %v1162
        %v1283 = vpop.f32.mrb[0].mxu0
        %v1284 = vadd.f32 %v1111, %v1283
        %v1285 = vpop.f32.mrb[0].mxu0
        %v1286 = vpop.f32.mrb[0].mxu0
        %v1287 = vadd.f32 %v1111, %v1286
        %v1288 = vpop.f32.mrb[0].mxu0
        %1289 = vmatprep.mubr.bf16.mxu0 0
        %1290 = vmatmul.mubr.bf16.gmra.mrb[0].mxu0 %v1165
        %v1291 = vpop.f32.mrb[0].mxu0
        %v1292 = vadd.f32 %v1111, %v1291
        %v1293 = vpop.f32.mrb[0].mxu0
        %v1294 = vpop.f32.mrb[0].mxu0
        %v1295 = vadd.f32 %v1111, %v1294
        %v1296 = vpop.f32.mrb[0].mxu0
        %1297 = vmatprep.mubr.bf16.mxu0 0
        %1298 = vmatmul.mubr.bf16.gmra.mrb[0].mxu0 %v1168
        %v1299 = vpop.f32.mrb[0].mxu0
        %v1300 = vadd.f32 %v1111, %v1299
        %v1301 = vpop.f32.mrb[0].mxu0
        %v1302 = vpop.f32.mrb[0].mxu0
        %v1303 = vadd.f32 %v1111, %v1302
        %v1304 = vpop.f32.mrb[0].mxu0
        %1305 = vmatprep.mubr.bf16.mxu0 0
        %1306 = vmatmul.mubr.bf16.gmra.mrb[0].mxu0 %v1171
        %v1307 = vpop.f32.mrb[0].mxu0
        %v1308 = vadd.f32 %v1111, %v1307
        %v1309 = vpop.f32.mrb[0].mxu0
        %v1310 = vpop.f32.mrb[0].mxu0
        %v1311 = vadd.f32 %v1111, %v1310
        %v1312 = vpop.f32.mrb[0].mxu0
        %1313 = vmatprep.mubr.bf16.mxu0 0
        %1314 = vmatmul.mubr.bf16.gmra.mrb[0].mxu0 %v1174
        %v1315 = vpop.f32.mrb[0].mxu0
        %v1316 = vadd.f32 %v1111, %v1315
        %v1317 = vpop.f32.mrb[0].mxu0
        %v1318 = vpop.f32.mrb[0].mxu0
        %v1319 = vadd.f32 %v1111, %v1318
        %v1320 = vpop.f32.mrb[0].mxu0
        %1321 = vmatprep.mubr.bf16.mxu0 0
        %1322 = vmatmul.mubr.bf16.gmra.mrb[0].mxu0 %v1177
        %v1323 = vpop.f32.mrb[0].mxu0
        %v1324 = vadd.f32 %v1111, %v1323
        %v1325 = vpop.f32.mrb[0].mxu0
        %v1326 = vpop.f32.mrb[0].mxu0
        %v1327 = vadd.f32 %v1111, %v1326
        %v1328 = vpop.f32.mrb[0].mxu0
        %1329 = vmatprep.mubr.bf16.mxu0 0
        %1330 = vmatmul.mubr.bf16.gmra.mrb[0].mxu0 %v1180
        %v1331 = vpop.f32.mrb[0].mxu0
        %v1332 = vadd.f32 %v1111, %v1331
        %v1333 = vpop.f32.mrb[0].mxu0
        %v1334 = vpop.f32.mrb[0].mxu0
        %v1335 = vadd.f32 %v1111, %v1334
        %v1336 = vpop.f32.mrb[0].mxu0
        %1337 = vmatprep.mubr.bf16.mxu0 0
        %1338 = vmatmul.mubr.bf16.gmra.mrb[0].mxu0 %v1183
        %v1339 = vpop.f32.mrb[0].mxu0
        %v1340 = vadd.f32 %v1111, %v1339
        %v1341 = vpop.f32.mrb[0].mxu0
        %v1342 = vpop.f32.mrb[0].mxu0
        %v1343 = vadd.f32 %v1111, %v1342
        %v1344 = vpop.f32.mrb[0].mxu0
        %1345 = vdwg.mxu0
        %v1346 = vmax.f32 %v1220, 0.0
        %v1347 = vmax.f32 %v1223, 0.0
        %v1348 = vmax.f32 %v1228, 0.0
        %v1349 = vmax.f32 %v1231, 0.0
        %v1350 = vmax.f32 %v1236, 0.0
        %v1351 = vmax.f32 %v1239, 0.0
        %v1352 = vmax.f32 %v1244, 0.0
        %v1353 = vmax.f32 %v1247, 0.0
        %v1354 = vmax.f32 %v1252, 0.0
        %v1355 = vmax.f32 %v1255, 0.0
        %v1356 = vmax.f32 %v1260, 0.0
        %v1357 = vmax.f32 %v1263, 0.0
        %v1358 = vmax.f32 %v1268, 0.0
        %v1359 = vmax.f32 %v1271, 0.0
        %v1360 = vmax.f32 %v1276, 0.0
        %v1361 = vmax.f32 %v1279, 0.0
        %v1362 = vmax.f32 %v1284, 0.0
        %v1363 = vmax.f32 %v1287, 0.0
        %v1364 = vmax.f32 %v1292, 0.0
        %v1365 = vmax.f32 %v1295, 0.0
        %v1366 = vmax.f32 %v1300, 0.0
        %v1367 = vmax.f32 %v1303, 0.0
        %v1368 = vmax.f32 %v1308, 0.0
        %v1369 = vmax.f32 %v1311, 0.0
        %v1370 = vmax.f32 %v1316, 0.0
        %v1371 = vmax.f32 %v1319, 0.0
        %v1372 = vmax.f32 %v1324, 0.0
        %v1373 = vmax.f32 %v1327, 0.0
        %v1374 = vmax.f32 %v1332, 0.0
        %v1375 = vmax.f32 %v1335, 0.0
        %v1376 = vmax.f32 %v1340, 0.0
        %v1377 = vmax.f32 %v1343, 0.0
        %1378 = vst.msk [vmem:[#allocation2] sm:$0xff] %vm846, 0.0
        %1379 = vst.msk [vmem:[#allocation2 + $0x8] sm:$0xff] %vm846, 0.0
        %1380 = vst.msk [vmem:[#allocation2 + $0x10] sm:$0xff] %vm846, 0.0
        %1381 = vst.msk [vmem:[#allocation2 + $0x18] sm:$0xff] %vm846, 0.0
        %1382 = vst.msk [vmem:[#allocation2 + $0x20] sm:$0xff] %vm846, 0.0
        %1383 = vst.msk [vmem:[#allocation2 + $0x28] sm:$0xff] %vm846, 0.0
        %1384 = vst.msk [vmem:[#allocation2 + $0x30] sm:$0xff] %vm846, 0.0
        %1385 = vst.msk [vmem:[#allocation2 + $0x38] sm:$0xff] %vm846, 0.0
        %1386 = vst.msk [vmem:[#allocation2 + $0x40] sm:$0xff] %vm846, 0.0
        %1387 = vst.msk [vmem:[#allocation2 + $0x48] sm:$0xff] %vm846, 0.0
        %1388 = vst.msk [vmem:[#allocation2 + $0x50] sm:$0xff] %vm846, 0.0
        %1389 = vst.msk [vmem:[#allocation2 + $0x58] sm:$0xff] %vm846, 0.0
        %1390 = vst.msk [vmem:[#allocation2 + $0x60] sm:$0xff] %vm846, 0.0
        %1391 = vst.msk [vmem:[#allocation2 + $0x68] sm:$0xff] %vm846, 0.0
        %1392 = vst.msk [vmem:[#allocation2 + $0x70] sm:$0xff] %vm846, 0.0
        %1393 = vst.msk [vmem:[#allocation2 + $0x78] sm:$0xff] %vm846, 0.0
        %1394 = vst.msk [vmem:[#allocation2 + $0x80] sm:$0xff] %vm846, 0.0
        %1395 = vst.msk [vmem:[#allocation2 + $0x88] sm:$0xff] %vm846, 0.0
        %1396 = vst.msk [vmem:[#allocation2 + $0x90] sm:$0xff] %vm846, 0.0
        %1397 = vst.msk [vmem:[#allocation2 + $0x98] sm:$0xff] %vm846, 0.0
        %1398 = vst.msk [vmem:[#allocation2 + $0xa0] sm:$0xff] %vm846, 0.0
        %1399 = vst.msk [vmem:[#allocation2 + $0xa8] sm:$0xff] %vm846, 0.0
        %1400 = vst.msk [vmem:[#allocation2 + $0xb0] sm:$0xff] %vm846, 0.0
        %1401 = vst.msk [vmem:[#allocation2 + $0xb8] sm:$0xff] %vm846, 0.0
        %1402 = vst.msk [vmem:[#allocation2 + $0xc0] sm:$0xff] %vm846, 0.0
        %1403 = vst.msk [vmem:[#allocation2 + $0xc8] sm:$0xff] %vm846, 0.0
        %1404 = vst.msk [vmem:[#allocation2 + $0xd0] sm:$0xff] %vm846, 0.0
        %1405 = vst.msk [vmem:[#allocation2 + $0xd8] sm:$0xff] %vm846, 0.0
        %1406 = vst.msk [vmem:[#allocation2 + $0xe0] sm:$0xff] %vm846, 0.0
        %1407 = vst.msk [vmem:[#allocation2 + $0xe8] sm:$0xff] %vm846, 0.0
        %1408 = vst.msk [vmem:[#allocation2 + $0xf0] sm:$0xff] %vm846, 0.0
        %1409 = vst.msk [vmem:[#allocation2 + $0xf8] sm:$0xff] %vm846, 0.0
        %1410 = vst.msk [vmem:[#allocation2 + $0x100] sm:$0xff] %vm846, 0.0
        %1411 = vst.msk [vmem:[#allocation2 + $0x108] sm:$0xff] %vm846, 0.0
        %1412 = vst.msk [vmem:[#allocation2 + $0x110] sm:$0xff] %vm846, 0.0
        %1413 = vst.msk [vmem:[#allocation2 + $0x118] sm:$0xff] %vm846, 0.0
        %1414 = vst.msk [vmem:[#allocation2 + $0x120] sm:$0xff] %vm846, 0.0
        %1415 = vst.msk [vmem:[#allocation2 + $0x128] sm:$0xff] %vm846, 0.0
        %1416 = vst.msk [vmem:[#allocation2 + $0x130] sm:$0xff] %vm846, 0.0
        %1417 = vst.msk [vmem:[#allocation2 + $0x138] sm:$0xff] %vm846, 0.0
        %1418 = vst.msk [vmem:[#allocation2 + $0x140] sm:$0xff] %vm846, 0.0
        %1419 = vst.msk [vmem:[#allocation2 + $0x148] sm:$0xff] %vm846, 0.0
        %1420 = vst.msk [vmem:[#allocation2 + $0x150] sm:$0xff] %vm846, 0.0
        %1421 = vst.msk [vmem:[#allocation2 + $0x158] sm:$0xff] %vm846, 0.0
        %v1422 = vlaneseq
        %v1423 = vshrl.u32 %v1422, 7
        %v1424 = vadd.s32 %v1423, 8
        %v1425 = vadd.s32 %v1423, 16
        %v1426 = vadd.s32 %v1423, 24
        %v1427 = vadd.s32 %v1423, 32
        %v1428 = vadd.s32 %v1423, 40
        %v1429 = vadd.s32 %v1423, 48
        %v1430 = vadd.s32 %v1423, 56
        %v1431 = vadd.s32 %v1423, 64
        %v1432 = vadd.s32 %v1423, 72
        %v1433 = vadd.s32 %v1423, 80
        %v1434 = vadd.s32 %v1423, 88
        %v1435 = vadd.s32 %v1423, 96
        %v1436 = vadd.s32 %v1423, 104
        %v1437 = vadd.s32 %v1423, 112
        %v1438 = vadd.s32 %v1423, 120
        %v1439 = vadd.s32 %v1423, 128
        %v1440 = vadd.s32 %v1423, 136
        %v1441 = vadd.s32 %v1423, 144
        %v1442 = vadd.s32 %v1423, 152
        %v1443 = vadd.s32 %v1423, 160
        %v1444 = vadd.s32 %v1423, 168
        %v1445 = vadd.s32 %v1423, 176
        %v1446 = vadd.s32 %v1423, 184
        %v1447 = vadd.s32 %v1423, 192
        %v1448 = vadd.s32 %v1423, 200
        %v1449 = vadd.s32 %v1423, 208
        %v1450 = vadd.s32 %v1423, 216
        %v1451 = vadd.s32 %v1423, 224
        %v1452 = vadd.s32 %v1423, 232
        %v1453 = vadd.s32 %v1423, 240
        %v1454 = vadd.s32 %v1423, 248
        %v1455 = vadd.s32 %v1423, 256
        %v1456 = vadd.s32 %v1423, 264
        %v1457 = vadd.s32 %v1423, 272
        %v1458 = vadd.s32 %v1423, 280
        %v1459 = vadd.s32 %v1423, 288
        %v1460 = vadd.s32 %v1423, 296
        %v1461 = vadd.s32 %v1423, 304
        %v1462 = vadd.s32 %v1423, 312
        %vm1463 = vcmp.lt.s32.totalorder %v1423, 0
        %v1464 = vsub.s32 0, %v1423
        %v1465 = vsel %vm1463, %v1464, %v1423
        %v1466 = vshrl.u32 %v1465, 4
        %v1467 = vand.u32 %v1465, 15
        %v1468 = vsub.s32 0, %v1467
        %v1469 = vsel %vm1463, %v1468, %v1467
        %vm1470 = vcmp.lt.s32.totalorder %v1424, 0
        %v1471 = vsub.s32 0, %v1424
        %v1472 = vsel %vm1470, %v1471, %v1424
        %v1473 = vshrl.u32 %v1472, 4
        %v1474 = vand.u32 %v1472, 15
        %v1475 = vsub.s32 0, %v1474
        %v1476 = vsel %vm1470, %v1475, %v1474
        %vm1477 = vcmp.lt.s32.totalorder %v1425, 0
        %v1478 = vsub.s32 0, %v1425
        %v1479 = vsel %vm1477, %v1478, %v1425
        %v1480 = vshrl.u32 %v1479, 4
        %v1481 = vand.u32 %v1479, 15
        %v1482 = vsub.s32 0, %v1481
        %v1483 = vsel %vm1477, %v1482, %v1481
        %vm1484 = vcmp.lt.s32.totalorder %v1426, 0
        %v1485 = vsub.s32 0, %v1426
        %v1486 = vsel %vm1484, %v1485, %v1426
        %v1487 = vshrl.u32 %v1486, 4
        %v1488 = vand.u32 %v1486, 15
        %v1489 = vsub.s32 0, %v1488
        %v1490 = vsel %vm1484, %v1489, %v1488
        %vm1491 = vcmp.lt.s32.totalorder %v1427, 0
        %v1492 = vsub.s32 0, %v1427
        %v1493 = vsel %vm1491, %v1492, %v1427
        %v1494 = vshrl.u32 %v1493, 4
        %v1495 = vand.u32 %v1493, 15
        %v1496 = vsub.s32 0, %v1495
        %v1497 = vsel %vm1491, %v1496, %v1495
        %vm1498 = vcmp.lt.s32.totalorder %v1428, 0
        %v1499 = vsub.s32 0, %v1428
        %v1500 = vsel %vm1498, %v1499, %v1428
        %v1501 = vshrl.u32 %v1500, 4
        %v1502 = vand.u32 %v1500, 15
        %v1503 = vsub.s32 0, %v1502
        %v1504 = vsel %vm1498, %v1503, %v1502
        %vm1505 = vcmp.lt.s32.totalorder %v1429, 0
        %v1506 = vsub.s32 0, %v1429
        %v1507 = vsel %vm1505, %v1506, %v1429
        %v1508 = vshrl.u32 %v1507, 4
        %v1509 = vand.u32 %v1507, 15
        %v1510 = vsub.s32 0, %v1509
        %v1511 = vsel %vm1505, %v1510, %v1509
        %vm1512 = vcmp.lt.s32.totalorder %v1430, 0
        %v1513 = vsub.s32 0, %v1430
        %v1514 = vsel %vm1512, %v1513, %v1430
        %v1515 = vshrl.u32 %v1514, 4
        %v1516 = vand.u32 %v1514, 15
        %v1517 = vsub.s32 0, %v1516
        %v1518 = vsel %vm1512, %v1517, %v1516
        %vm1519 = vcmp.lt.s32.totalorder %v1431, 0
        %v1520 = vsub.s32 0, %v1431
        %v1521 = vsel %vm1519, %v1520, %v1431
        %v1522 = vshrl.u32 %v1521, 4
        %v1523 = vand.u32 %v1521, 15
        %v1524 = vsub.s32 0, %v1523
        %v1525 = vsel %vm1519, %v1524, %v1523
        %vm1526 = vcmp.lt.s32.totalorder %v1432, 0
        %v1527 = vsub.s32 0, %v1432
        %v1528 = vsel %vm1526, %v1527, %v1432
        %v1529 = vshrl.u32 %v1528, 4
        %v1530 = vand.u32 %v1528, 15
        %v1531 = vsub.s32 0, %v1530
        %v1532 = vsel %vm1526, %v1531, %v1530
        %vm1533 = vcmp.lt.s32.totalorder %v1433, 0
        %v1534 = vsub.s32 0, %v1433
        %v1535 = vsel %vm1533, %v1534, %v1433
        %v1536 = vshrl.u32 %v1535, 4
        %v1537 = vand.u32 %v1535, 15
        %v1538 = vsub.s32 0, %v1537
        %v1539 = vsel %vm1533, %v1538, %v1537
        %vm1540 = vcmp.lt.s32.totalorder %v1434, 0
        %v1541 = vsub.s32 0, %v1434
        %v1542 = vsel %vm1540, %v1541, %v1434
        %v1543 = vshrl.u32 %v1542, 4
        %v1544 = vand.u32 %v1542, 15
        %v1545 = vsub.s32 0, %v1544
        %v1546 = vsel %vm1540, %v1545, %v1544
        %vm1547 = vcmp.lt.s32.totalorder %v1435, 0
        %v1548 = vsub.s32 0, %v1435
        %v1549 = vsel %vm1547, %v1548, %v1435
        %v1550 = vshrl.u32 %v1549, 4
        %v1551 = vand.u32 %v1549, 15
        %v1552 = vsub.s32 0, %v1551
        %v1553 = vsel %vm1547, %v1552, %v1551
        %vm1554 = vcmp.lt.s32.totalorder %v1436, 0
        %v1555 = vsub.s32 0, %v1436
        %v1556 = vsel %vm1554, %v1555, %v1436
        %v1557 = vshrl.u32 %v1556, 4
        %v1558 = vand.u32 %v1556, 15
        %v1559 = vsub.s32 0, %v1558
        %v1560 = vsel %vm1554, %v1559, %v1558
        %vm1561 = vcmp.lt.s32.totalorder %v1437, 0
        %v1562 = vsub.s32 0, %v1437
        %v1563 = vsel %vm1561, %v1562, %v1437
        %v1564 = vshrl.u32 %v1563, 4
        %v1565 = vand.u32 %v1563, 15
        %v1566 = vsub.s32 0, %v1565
        %v1567 = vsel %vm1561, %v1566, %v1565
        %vm1568 = vcmp.lt.s32.totalorder %v1438, 0
        %v1569 = vsub.s32 0, %v1438
        %v1570 = vsel %vm1568, %v1569, %v1438
        %v1571 = vshrl.u32 %v1570, 4
        %v1572 = vand.u32 %v1570, 15
        %v1573 = vsub.s32 0, %v1572
        %v1574 = vsel %vm1568, %v1573, %v1572
        %vm1575 = vcmp.lt.s32.totalorder %v1439, 0
        %v1576 = vsub.s32 0, %v1439
        %v1577 = vsel %vm1575, %v1576, %v1439
        %v1578 = vshrl.u32 %v1577, 4
        %v1579 = vand.u32 %v1577, 15
        %v1580 = vsub.s32 0, %v1579
        %v1581 = vsel %vm1575, %v1580, %v1579
        %vm1582 = vcmp.lt.s32.totalorder %v1440, 0
        %v1583 = vsub.s32 0, %v1440
        %v1584 = vsel %vm1582, %v1583, %v1440
        %v1585 = vshrl.u32 %v1584, 4
        %v1586 = vand.u32 %v1584, 15
        %v1587 = vsub.s32 0, %v1586
        %v1588 = vsel %vm1582, %v1587, %v1586
        %vm1589 = vcmp.lt.s32.totalorder %v1441, 0
        %v1590 = vsub.s32 0, %v1441
        %v1591 = vsel %vm1589, %v1590, %v1441
        %v1592 = vshrl.u32 %v1591, 4
        %v1593 = vand.u32 %v1591, 15
        %v1594 = vsub.s32 0, %v1593
        %v1595 = vsel %vm1589, %v1594, %v1593
        %vm1596 = vcmp.lt.s32.totalorder %v1442, 0
        %v1597 = vsub.s32 0, %v1442
        %v1598 = vsel %vm1596, %v1597, %v1442
        %v1599 = vshrl.u32 %v1598, 4
        %v1600 = vand.u32 %v1598, 15
        %v1601 = vsub.s32 0, %v1600
        %v1602 = vsel %vm1596, %v1601, %v1600
        %vm1603 = vcmp.lt.s32.totalorder %v1443, 0
        %v1604 = vsub.s32 0, %v1443
        %v1605 = vsel %vm1603, %v1604, %v1443
        %v1606 = vshrl.u32 %v1605, 4
        %v1607 = vand.u32 %v1605, 15
        %v1608 = vsub.s32 0, %v1607
        %v1609 = vsel %vm1603, %v1608, %v1607
        %vm1610 = vcmp.lt.s32.totalorder %v1444, 0
        %v1611 = vsub.s32 0, %v1444
        %v1612 = vsel %vm1610, %v1611, %v1444
        %v1613 = vshrl.u32 %v1612, 4
        %v1614 = vand.u32 %v1612, 15
        %v1615 = vsub.s32 0, %v1614
        %v1616 = vsel %vm1610, %v1615, %v1614
        %vm1617 = vcmp.lt.s32.totalorder %v1445, 0
        %v1618 = vsub.s32 0, %v1445
        %v1619 = vsel %vm1617, %v1618, %v1445
        %v1620 = vshrl.u32 %v1619, 4
        %v1621 = vand.u32 %v1619, 15
        %v1622 = vsub.s32 0, %v1621
        %v1623 = vsel %vm1617, %v1622, %v1621
        %vm1624 = vcmp.lt.s32.totalorder %v1446, 0
        %v1625 = vsub.s32 0, %v1446
        %v1626 = vsel %vm1624, %v1625, %v1446
        %v1627 = vshrl.u32 %v1626, 4
        %v1628 = vand.u32 %v1626, 15
        %v1629 = vsub.s32 0, %v1628
        %v1630 = vsel %vm1624, %v1629, %v1628
        %vm1631 = vcmp.lt.s32.totalorder %v1447, 0
        %v1632 = vsub.s32 0, %v1447
        %v1633 = vsel %vm1631, %v1632, %v1447
        %v1634 = vshrl.u32 %v1633, 4
        %v1635 = vand.u32 %v1633, 15
        %v1636 = vsub.s32 0, %v1635
        %v1637 = vsel %vm1631, %v1636, %v1635
        %vm1638 = vcmp.lt.s32.totalorder %v1448, 0
        %v1639 = vsub.s32 0, %v1448
        %v1640 = vsel %vm1638, %v1639, %v1448
        %v1641 = vshrl.u32 %v1640, 4
        %v1642 = vand.u32 %v1640, 15
        %v1643 = vsub.s32 0, %v1642
        %v1644 = vsel %vm1638, %v1643, %v1642
        %vm1645 = vcmp.lt.s32.totalorder %v1449, 0
        %v1646 = vsub.s32 0, %v1449
        %v1647 = vsel %vm1645, %v1646, %v1449
        %v1648 = vshrl.u32 %v1647, 4
        %v1649 = vand.u32 %v1647, 15
        %v1650 = vsub.s32 0, %v1649
        %v1651 = vsel %vm1645, %v1650, %v1649
        %vm1652 = vcmp.lt.s32.totalorder %v1450, 0
        %v1653 = vsub.s32 0, %v1450
        %v1654 = vsel %vm1652, %v1653, %v1450
        %v1655 = vshrl.u32 %v1654, 4
        %v1656 = vand.u32 %v1654, 15
        %v1657 = vsub.s32 0, %v1656
        %v1658 = vsel %vm1652, %v1657, %v1656
        %vm1659 = vcmp.lt.s32.totalorder %v1451, 0
        %v1660 = vsub.s32 0, %v1451
        %v1661 = vsel %vm1659, %v1660, %v1451
        %v1662 = vshrl.u32 %v1661, 4
        %v1663 = vand.u32 %v1661, 15
        %v1664 = vsub.s32 0, %v1663
        %v1665 = vsel %vm1659, %v1664, %v1663
        %vm1666 = vcmp.lt.s32.totalorder %v1452, 0
        %v1667 = vsub.s32 0, %v1452
        %v1668 = vsel %vm1666, %v1667, %v1452
        %v1669 = vshrl.u32 %v1668, 4
        %v1670 = vand.u32 %v1668, 15
        %v1671 = vsub.s32 0, %v1670
        %v1672 = vsel %vm1666, %v1671, %v1670
        %vm1673 = vcmp.lt.s32.totalorder %v1453, 0
        %v1674 = vsub.s32 0, %v1453
        %v1675 = vsel %vm1673, %v1674, %v1453
        %v1676 = vshrl.u32 %v1675, 4
        %v1677 = vand.u32 %v1675, 15
        %v1678 = vsub.s32 0, %v1677
        %v1679 = vsel %vm1673, %v1678, %v1677
        %vm1680 = vcmp.lt.s32.totalorder %v1454, 0
        %v1681 = vsub.s32 0, %v1454
        %v1682 = vsel %vm1680, %v1681, %v1454
        %v1683 = vshrl.u32 %v1682, 4
        %v1684 = vand.u32 %v1682, 15
        %v1685 = vsub.s32 0, %v1684
        %v1686 = vsel %vm1680, %v1685, %v1684
        %vm1687 = vcmp.lt.s32.totalorder %v1455, 0
        %v1688 = vsub.s32 0, %v1455
        %v1689 = vsel %vm1687, %v1688, %v1455
        %v1690 = vshrl.u32 %v1689, 4
        %v1691 = vand.u32 %v1689, 15
        %v1692 = vsub.s32 0, %v1691
        %v1693 = vsel %vm1687, %v1692, %v1691
        %vm1694 = vcmp.lt.s32.totalorder %v1456, 0
        %v1695 = vsub.s32 0, %v1456
        %v1696 = vsel %vm1694, %v1695, %v1456
        %v1697 = vshrl.u32 %v1696, 4
        %v1698 = vand.u32 %v1696, 15
        %v1699 = vsub.s32 0, %v1698
        %v1700 = vsel %vm1694, %v1699, %v1698
        %vm1701 = vcmp.lt.s32.totalorder %v1457, 0
        %v1702 = vsub.s32 0, %v1457
        %v1703 = vsel %vm1701, %v1702, %v1457
        %v1704 = vshrl.u32 %v1703, 4
        %v1705 = vand.u32 %v1703, 15
        %v1706 = vsub.s32 0, %v1705
        %v1707 = vsel %vm1701, %v1706, %v1705
        %vm1708 = vcmp.lt.s32.totalorder %v1458, 0
        %v1709 = vsub.s32 0, %v1458
        %v1710 = vsel %vm1708, %v1709, %v1458
        %v1711 = vshrl.u32 %v1710, 4
        %v1712 = vand.u32 %v1710, 15
        %v1713 = vsub.s32 0, %v1712
        %v1714 = vsel %vm1708, %v1713, %v1712
        %vm1715 = vcmp.lt.s32.totalorder %v1459, 0
        %v1716 = vsub.s32 0, %v1459
        %v1717 = vsel %vm1715, %v1716, %v1459
        %v1718 = vshrl.u32 %v1717, 4
        %v1719 = vand.u32 %v1717, 15
        %v1720 = vsub.s32 0, %v1719
        %v1721 = vsel %vm1715, %v1720, %v1719
        %vm1722 = vcmp.lt.s32.totalorder %v1460, 0
        %v1723 = vsub.s32 0, %v1460
        %v1724 = vsel %vm1722, %v1723, %v1460
        %v1725 = vshrl.u32 %v1724, 4
        %v1726 = vand.u32 %v1724, 15
        %v1727 = vsub.s32 0, %v1726
        %v1728 = vsel %vm1722, %v1727, %v1726
        %vm1729 = vcmp.lt.s32.totalorder %v1461, 0
        %v1730 = vsub.s32 0, %v1461
        %v1731 = vsel %vm1729, %v1730, %v1461
        %v1732 = vshrl.u32 %v1731, 4
        %v1733 = vand.u32 %v1731, 15
        %v1734 = vsub.s32 0, %v1733
        %v1735 = vsel %vm1729, %v1734, %v1733
        %vm1736 = vcmp.lt.s32.totalorder %v1462, 0
        %v1737 = vsub.s32 0, %v1462
        %v1738 = vsel %vm1736, %v1737, %v1462
        %v1739 = vshrl.u32 %v1738, 4
        %v1740 = vand.u32 %v1738, 15
        %v1741 = vsub.s32 0, %v1740
        %v1742 = vsel %vm1736, %v1741, %v1740
        %vm1743 = vcmp.ne.s32.totalorder %v1469, 0
        %vm1744 = vcmp.ne.s32.totalorder %v1476, 0
        %vm1745 = vcmp.ne.s32.totalorder %v1483, 0
        %vm1746 = vcmp.ne.s32.totalorder %v1490, 0
        %vm1747 = vcmp.ne.s32.totalorder %v1497, 0
        %vm1748 = vcmp.ne.s32.totalorder %v1504, 0
        %vm1749 = vcmp.ne.s32.totalorder %v1511, 0
        %vm1750 = vcmp.ne.s32.totalorder %v1518, 0
        %vm1751 = vcmp.ne.s32.totalorder %v1525, 0
        %vm1752 = vcmp.ne.s32.totalorder %v1532, 0
        %vm1753 = vcmp.ne.s32.totalorder %v1539, 0
        %vm1754 = vcmp.ne.s32.totalorder %v1546, 0
        %vm1755 = vcmp.ne.s32.totalorder %v1553, 0
        %vm1756 = vcmp.ne.s32.totalorder %v1560, 0
        %vm1757 = vcmp.ne.s32.totalorder %v1567, 0
        %vm1758 = vcmp.ne.s32.totalorder %v1574, 0
        %vm1759 = vcmp.ne.s32.totalorder %v1581, 0
        %vm1760 = vcmp.ne.s32.totalorder %v1588, 0
        %vm1761 = vcmp.ne.s32.totalorder %v1595, 0
        %vm1762 = vcmp.ne.s32.totalorder %v1602, 0
        %vm1763 = vcmp.ne.s32.totalorder %v1609, 0
        %vm1764 = vcmp.ne.s32.totalorder %v1616, 0
        %vm1765 = vcmp.ne.s32.totalorder %v1623, 0
        %vm1766 = vcmp.ne.s32.totalorder %v1630, 0
        %vm1767 = vcmp.ne.s32.totalorder %v1637, 0
        %vm1768 = vcmp.ne.s32.totalorder %v1644, 0
        %vm1769 = vcmp.ne.s32.totalorder %v1651, 0
        %vm1770 = vcmp.ne.s32.totalorder %v1658, 0
        %vm1771 = vcmp.ne.s32.totalorder %v1665, 0
        %vm1772 = vcmp.ne.s32.totalorder %v1672, 0
        %vm1773 = vcmp.ne.s32.totalorder %v1679, 0
        %vm1774 = vcmp.ne.s32.totalorder %v1686, 0
        %vm1775 = vcmp.ne.s32.totalorder %v1693, 0
        %vm1776 = vcmp.ne.s32.totalorder %v1700, 0
        %vm1777 = vcmp.ne.s32.totalorder %v1707, 0
        %vm1778 = vcmp.ne.s32.totalorder %v1714, 0
        %vm1779 = vcmp.ne.s32.totalorder %v1721, 0
        %vm1780 = vcmp.ne.s32.totalorder %v1728, 0
        %vm1781 = vcmp.ne.s32.totalorder %v1735, 0
        %vm1782 = vcmp.ne.s32.totalorder %v1742, 0
        %vm1783 = vcmp.lt.s32.totalorder %v1469, 0
        %vm1784 = vcmp.lt.s32.totalorder %v1476, 0
        %vm1785 = vcmp.lt.s32.totalorder %v1483, 0
        %vm1786 = vcmp.lt.s32.totalorder %v1490, 0
        %vm1787 = vcmp.lt.s32.totalorder %v1497, 0
        %vm1788 = vcmp.lt.s32.totalorder %v1504, 0
        %vm1789 = vcmp.lt.s32.totalorder %v1511, 0
        %vm1790 = vcmp.lt.s32.totalorder %v1518, 0
        %vm1791 = vcmp.lt.s32.totalorder %v1525, 0
        %vm1792 = vcmp.lt.s32.totalorder %v1532, 0
        %vm1793 = vcmp.lt.s32.totalorder %v1539, 0
        %vm1794 = vcmp.lt.s32.totalorder %v1546, 0
        %vm1795 = vcmp.lt.s32.totalorder %v1553, 0
        %vm1796 = vcmp.lt.s32.totalorder %v1560, 0
        %vm1797 = vcmp.lt.s32.totalorder %v1567, 0
        %vm1798 = vcmp.lt.s32.totalorder %v1574, 0
        %vm1799 = vcmp.lt.s32.totalorder %v1581, 0
        %vm1800 = vcmp.lt.s32.totalorder %v1588, 0
        %vm1801 = vcmp.lt.s32.totalorder %v1595, 0
        %vm1802 = vcmp.lt.s32.totalorder %v1602, 0
        %vm1803 = vcmp.lt.s32.totalorder %v1609, 0
        %vm1804 = vcmp.lt.s32.totalorder %v1616, 0
        %vm1805 = vcmp.lt.s32.totalorder %v1623, 0
        %vm1806 = vcmp.lt.s32.totalorder %v1630, 0
        %vm1807 = vcmp.lt.s32.totalorder %v1637, 0
        %vm1808 = vcmp.lt.s32.totalorder %v1644, 0
        %vm1809 = vcmp.lt.s32.totalorder %v1651, 0
        %vm1810 = vcmp.lt.s32.totalorder %v1658, 0
        %vm1811 = vcmp.lt.s32.totalorder %v1665, 0
        %vm1812 = vcmp.lt.s32.totalorder %v1672, 0
        %vm1813 = vcmp.lt.s32.totalorder %v1679, 0
        %vm1814 = vcmp.lt.s32.totalorder %v1686, 0
        %vm1815 = vcmp.lt.s32.totalorder %v1693, 0
        %vm1816 = vcmp.lt.s32.totalorder %v1700, 0
        %vm1817 = vcmp.lt.s32.totalorder %v1707, 0
        %vm1818 = vcmp.lt.s32.totalorder %v1714, 0
        %vm1819 = vcmp.lt.s32.totalorder %v1721, 0
        %vm1820 = vcmp.lt.s32.totalorder %v1728, 0
        %vm1821 = vcmp.lt.s32.totalorder %v1735, 0
        %vm1822 = vcmp.lt.s32.totalorder %v1742, 0
        %vm1823 = vmand %vm1783, %vm1743
        %vm1824 = vmand %vm1784, %vm1744
        %vm1825 = vmand %vm1785, %vm1745
        %vm1826 = vmand %vm1786, %vm1746
        %vm1827 = vmand %vm1787, %vm1747
        %vm1828 = vmand %vm1788, %vm1748
        %vm1829 = vmand %vm1789, %vm1749
        %vm1830 = vmand %vm1790, %vm1750
        %vm1831 = vmand %vm1791, %vm1751
        %vm1832 = vmand %vm1792, %vm1752
        %vm1833 = vmand %vm1793, %vm1753
        %vm1834 = vmand %vm1794, %vm1754
        %vm1835 = vmand %vm1795, %vm1755
        %vm1836 = vmand %vm1796, %vm1756
        %vm1837 = vmand %vm1797, %vm1757
        %vm1838 = vmand %vm1798, %vm1758
        %vm1839 = vmand %vm1799, %vm1759
        %vm1840 = vmand %vm1800, %vm1760
        %vm1841 = vmand %vm1801, %vm1761
        %vm1842 = vmand %vm1802, %vm1762
        %vm1843 = vmand %vm1803, %vm1763
        %vm1844 = vmand %vm1804, %vm1764
        %vm1845 = vmand %vm1805, %vm1765
        %vm1846 = vmand %vm1806, %vm1766
        %vm1847 = vmand %vm1807, %vm1767
        %vm1848 = vmand %vm1808, %vm1768
        %vm1849 = vmand %vm1809, %vm1769
        %vm1850 = vmand %vm1810, %vm1770
        %vm1851 = vmand %vm1811, %vm1771
        %vm1852 = vmand %vm1812, %vm1772
        %vm1853 = vmand %vm1813, %vm1773
        %vm1854 = vmand %vm1814, %vm1774
        %vm1855 = vmand %vm1815, %vm1775
        %vm1856 = vmand %vm1816, %vm1776
        %vm1857 = vmand %vm1817, %vm1777
        %vm1858 = vmand %vm1818, %vm1778
        %vm1859 = vmand %vm1819, %vm1779
        %vm1860 = vmand %vm1820, %vm1780
        %vm1861 = vmand %vm1821, %vm1781
        %vm1862 = vmand %vm1822, %vm1782
        %v1863 = vadd.s32 %v1469, 16
        %v1864 = vadd.s32 %v1476, 16
        %v1865 = vadd.s32 %v1483, 16
        %v1866 = vadd.s32 %v1490, 16
        %v1867 = vadd.s32 %v1497, 16
        %v1868 = vadd.s32 %v1504, 16
        %v1869 = vadd.s32 %v1511, 16
        %v1870 = vadd.s32 %v1518, 16
        %v1871 = vadd.s32 %v1525, 16
        %v1872 = vadd.s32 %v1532, 16
        %v1873 = vadd.s32 %v1539, 16
        %v1874 = vadd.s32 %v1546, 16
        %v1875 = vadd.s32 %v1553, 16
        %v1876 = vadd.s32 %v1560, 16
        %v1877 = vadd.s32 %v1567, 16
        %v1878 = vadd.s32 %v1574, 16
        %v1879 = vadd.s32 %v1581, 16
        %v1880 = vadd.s32 %v1588, 16
        %v1881 = vadd.s32 %v1595, 16
        %v1882 = vadd.s32 %v1602, 16
        %v1883 = vadd.s32 %v1609, 16
        %v1884 = vadd.s32 %v1616, 16
        %v1885 = vadd.s32 %v1623, 16
        %v1886 = vadd.s32 %v1630, 16
        %v1887 = vadd.s32 %v1637, 16
        %v1888 = vadd.s32 %v1644, 16
        %v1889 = vadd.s32 %v1651, 16
        %v1890 = vadd.s32 %v1658, 16
        %v1891 = vadd.s32 %v1665, 16
        %v1892 = vadd.s32 %v1672, 16
        %v1893 = vadd.s32 %v1679, 16
        %v1894 = vadd.s32 %v1686, 16
        %v1895 = vadd.s32 %v1693, 16
        %v1896 = vadd.s32 %v1700, 16
        %v1897 = vadd.s32 %v1707, 16
        %v1898 = vadd.s32 %v1714, 16
        %v1899 = vadd.s32 %v1721, 16
        %v1900 = vadd.s32 %v1728, 16
        %v1901 = vadd.s32 %v1735, 16
        %v1902 = vadd.s32 %v1742, 16
        %v1903 = vsel %vm1823, %v1863, %v1469
        %v1904 = vsel %vm1824, %v1864, %v1476
        %v1905 = vsel %vm1825, %v1865, %v1483
        %v1906 = vsel %vm1826, %v1866, %v1490
        %v1907 = vsel %vm1827, %v1867, %v1497
        %v1908 = vsel %vm1828, %v1868, %v1504
        %v1909 = vsel %vm1829, %v1869, %v1511
        %v1910 = vsel %vm1830, %v1870, %v1518
        %v1911 = vsel %vm1831, %v1871, %v1525
        %v1912 = vsel %vm1832, %v1872, %v1532
        %v1913 = vsel %vm1833, %v1873, %v1539
        %v1914 = vsel %vm1834, %v1874, %v1546
        %v1915 = vsel %vm1835, %v1875, %v1553
        %v1916 = vsel %vm1836, %v1876, %v1560
        %v1917 = vsel %vm1837, %v1877, %v1567
        %v1918 = vsel %vm1838, %v1878, %v1574
        %v1919 = vsel %vm1839, %v1879, %v1581
        %v1920 = vsel %vm1840, %v1880, %v1588
        %v1921 = vsel %vm1841, %v1881, %v1595
        %v1922 = vsel %vm1842, %v1882, %v1602
        %v1923 = vsel %vm1843, %v1883, %v1609
        %v1924 = vsel %vm1844, %v1884, %v1616
        %v1925 = vsel %vm1845, %v1885, %v1623
        %v1926 = vsel %vm1846, %v1886, %v1630
        %v1927 = vsel %vm1847, %v1887, %v1637
        %v1928 = vsel %vm1848, %v1888, %v1644
        %v1929 = vsel %vm1849, %v1889, %v1651
        %v1930 = vsel %vm1850, %v1890, %v1658
        %v1931 = vsel %vm1851, %v1891, %v1665
        %v1932 = vsel %vm1852, %v1892, %v1672
        %v1933 = vsel %vm1853, %v1893, %v1679
        %v1934 = vsel %vm1854, %v1894, %v1686
        %v1935 = vsel %vm1855, %v1895, %v1693
        %v1936 = vsel %vm1856, %v1896, %v1700
        %v1937 = vsel %vm1857, %v1897, %v1707
        %v1938 = vsel %vm1858, %v1898, %v1714
        %v1939 = vsel %vm1859, %v1899, %v1721
        %v1940 = vsel %vm1860, %v1900, %v1728
        %v1941 = vsel %vm1861, %v1901, %v1735
        %v1942 = vsel %vm1862, %v1902, %v1742
        %v1943 = vadd.s32 %v1903, 2
        %v1944 = vadd.s32 %v1904, 2
        %v1945 = vadd.s32 %v1905, 2
        %v1946 = vadd.s32 %v1906, 2
        %v1947 = vadd.s32 %v1907, 2
        %v1948 = vadd.s32 %v1908, 2
        %v1949 = vadd.s32 %v1909, 2
        %v1950 = vadd.s32 %v1910, 2
        %v1951 = vadd.s32 %v1911, 2
        %v1952 = vadd.s32 %v1912, 2
        %v1953 = vadd.s32 %v1913, 2
        %v1954 = vadd.s32 %v1914, 2
        %v1955 = vadd.s32 %v1915, 2
        %v1956 = vadd.s32 %v1916, 2
        %v1957 = vadd.s32 %v1917, 2
        %v1958 = vadd.s32 %v1918, 2
        %v1959 = vadd.s32 %v1919, 2
        %v1960 = vadd.s32 %v1920, 2
        %v1961 = vadd.s32 %v1921, 2
        %v1962 = vadd.s32 %v1922, 2
        %v1963 = vadd.s32 %v1923, 2
        %v1964 = vadd.s32 %v1924, 2
        %v1965 = vadd.s32 %v1925, 2
        %v1966 = vadd.s32 %v1926, 2
        %v1967 = vadd.s32 %v1927, 2
        %v1968 = vadd.s32 %v1928, 2
        %v1969 = vadd.s32 %v1929, 2
        %v1970 = vadd.s32 %v1930, 2
        %v1971 = vadd.s32 %v1931, 2
        %v1972 = vadd.s32 %v1932, 2
        %v1973 = vadd.s32 %v1933, 2
        %v1974 = vadd.s32 %v1934, 2
        %v1975 = vadd.s32 %v1935, 2
        %v1976 = vadd.s32 %v1936, 2
        %v1977 = vadd.s32 %v1937, 2
        %v1978 = vadd.s32 %v1938, 2
        %v1979 = vadd.s32 %v1939, 2
        %v1980 = vadd.s32 %v1940, 2
        %v1981 = vadd.s32 %v1941, 2
        %v1982 = vadd.s32 %v1942, 2
        %vm1983 = vcmp.lt.s32.totalorder %v1943, 16
        %vm1984 = vcmp.lt.s32.totalorder %v1944, 16
        %vm1985 = vcmp.lt.s32.totalorder %v1945, 16
        %vm1986 = vcmp.lt.s32.totalorder %v1946, 16
        %vm1987 = vcmp.lt.s32.totalorder %v1947, 16
        %vm1988 = vcmp.lt.s32.totalorder %v1948, 16
        %vm1989 = vcmp.lt.s32.totalorder %v1949, 16
        %vm1990 = vcmp.lt.s32.totalorder %v1950, 16
        %vm1991 = vcmp.lt.s32.totalorder %v1951, 16
        %vm1992 = vcmp.lt.s32.totalorder %v1952, 16
        %vm1993 = vcmp.lt.s32.totalorder %v1953, 16
        %vm1994 = vcmp.lt.s32.totalorder %v1954, 16
        %vm1995 = vcmp.lt.s32.totalorder %v1955, 16
        %vm1996 = vcmp.lt.s32.totalorder %v1956, 16
        %vm1997 = vcmp.lt.s32.totalorder %v1957, 16
        %vm1998 = vcmp.lt.s32.totalorder %v1958, 16
        %vm1999 = vcmp.lt.s32.totalorder %v1959, 16
        %vm2000 = vcmp.lt.s32.totalorder %v1960, 16
        %vm2001 = vcmp.lt.s32.totalorder %v1961, 16
        %vm2002 = vcmp.lt.s32.totalorder %v1962, 16
        %vm2003 = vcmp.lt.s32.totalorder %v1963, 16
        %vm2004 = vcmp.lt.s32.totalorder %v1964, 16
        %vm2005 = vcmp.lt.s32.totalorder %v1965, 16
        %vm2006 = vcmp.lt.s32.totalorder %v1966, 16
        %vm2007 = vcmp.lt.s32.totalorder %v1967, 16
        %vm2008 = vcmp.lt.s32.totalorder %v1968, 16
        %vm2009 = vcmp.lt.s32.totalorder %v1969, 16
        %vm2010 = vcmp.lt.s32.totalorder %v1970, 16
        %vm2011 = vcmp.lt.s32.totalorder %v1971, 16
        %vm2012 = vcmp.lt.s32.totalorder %v1972, 16
        %vm2013 = vcmp.lt.s32.totalorder %v1973, 16
        %vm2014 = vcmp.lt.s32.totalorder %v1974, 16
        %vm2015 = vcmp.lt.s32.totalorder %v1975, 16
        %vm2016 = vcmp.lt.s32.totalorder %v1976, 16
        %vm2017 = vcmp.lt.s32.totalorder %v1977, 16
        %vm2018 = vcmp.lt.s32.totalorder %v1978, 16
        %vm2019 = vcmp.lt.s32.totalorder %v1979, 16
        %vm2020 = vcmp.lt.s32.totalorder %v1980, 16
        %vm2021 = vcmp.lt.s32.totalorder %v1981, 16
        %vm2022 = vcmp.lt.s32.totalorder %v1982, 16
        %v2023 = vsel %vm1983, 1, 0
        %v2024 = vsel %vm1984, 1, 0
        %v2025 = vsel %vm1985, 1, 0
        %v2026 = vsel %vm1986, 1, 0
        %v2027 = vsel %vm1987, 1, 0
        %v2028 = vsel %vm1988, 1, 0
        %v2029 = vsel %vm1989, 1, 0
        %v2030 = vsel %vm1990, 1, 0
        %v2031 = vsel %vm1991, 1, 0
        %v2032 = vsel %vm1992, 1, 0
        %v2033 = vsel %vm1993, 1, 0
        %v2034 = vsel %vm1994, 1, 0
        %v2035 = vsel %vm1995, 1, 0
        %v2036 = vsel %vm1996, 1, 0
        %v2037 = vsel %vm1997, 1, 0
        %v2038 = vsel %vm1998, 1, 0
        %v2039 = vsel %vm1999, 1, 0
        %v2040 = vsel %vm2000, 1, 0
        %v2041 = vsel %vm2001, 1, 0
        %v2042 = vsel %vm2002, 1, 0
        %v2043 = vsel %vm2003, 1, 0
        %v2044 = vsel %vm2004, 1, 0
        %v2045 = vsel %vm2005, 1, 0
        %v2046 = vsel %vm2006, 1, 0
        %v2047 = vsel %vm2007, 1, 0
        %v2048 = vsel %vm2008, 1, 0
        %v2049 = vsel %vm2009, 1, 0
        %v2050 = vsel %vm2010, 1, 0
        %v2051 = vsel %vm2011, 1, 0
        %v2052 = vsel %vm2012, 1, 0
        %v2053 = vsel %vm2013, 1, 0
        %v2054 = vsel %vm2014, 1, 0
        %v2055 = vsel %vm2015, 1, 0
        %v2056 = vsel %vm2016, 1, 0
        %v2057 = vsel %vm2017, 1, 0
        %v2058 = vsel %vm2018, 1, 0
        %v2059 = vsel %vm2019, 1, 0
        %v2060 = vsel %vm2020, 1, 0
        %v2061 = vsel %vm2021, 1, 0
        %v2062 = vsel %vm2022, 1, 0
        %v2063 = vcvt.s32.f32 %v2023
        %v2064 = vcvt.s32.f32 %v2024
        %v2065 = vcvt.s32.f32 %v2025
        %v2066 = vcvt.s32.f32 %v2026
        %v2067 = vcvt.s32.f32 %v2027
        %v2068 = vcvt.s32.f32 %v2028
        %v2069 = vcvt.s32.f32 %v2029
        %v2070 = vcvt.s32.f32 %v2030
        %v2071 = vcvt.s32.f32 %v2031
        %v2072 = vcvt.s32.f32 %v2032
        %v2073 = vcvt.s32.f32 %v2033
        %v2074 = vcvt.s32.f32 %v2034
        %v2075 = vcvt.s32.f32 %v2035
        %v2076 = vcvt.s32.f32 %v2036
        %v2077 = vcvt.s32.f32 %v2037
        %v2078 = vcvt.s32.f32 %v2038
        %v2079 = vcvt.s32.f32 %v2039
        %v2080 = vcvt.s32.f32 %v2040
        %v2081 = vcvt.s32.f32 %v2041
        %v2082 = vcvt.s32.f32 %v2042
        %v2083 = vcvt.s32.f32 %v2043
        %v2084 = vcvt.s32.f32 %v2044
        %v2085 = vcvt.s32.f32 %v2045
        %v2086 = vcvt.s32.f32 %v2046
        %v2087 = vcvt.s32.f32 %v2047
        %v2088 = vcvt.s32.f32 %v2048
        %v2089 = vcvt.s32.f32 %v2049
        %v2090 = vcvt.s32.f32 %v2050
        %v2091 = vcvt.s32.f32 %v2051
        %v2092 = vcvt.s32.f32 %v2052
        %v2093 = vcvt.s32.f32 %v2053
        %v2094 = vcvt.s32.f32 %v2054
        %v2095 = vcvt.s32.f32 %v2055
        %v2096 = vcvt.s32.f32 %v2056
        %v2097 = vcvt.s32.f32 %v2057
        %v2098 = vcvt.s32.f32 %v2058
        %v2099 = vcvt.s32.f32 %v2059
        %v2100 = vcvt.s32.f32 %v2060
        %v2101 = vcvt.s32.f32 %v2061
        %v2102 = vcvt.s32.f32 %v2062
        %vm2103 = vcmp.ge.s32.totalorder %v1903, 2
        %vm2104 = vcmp.ge.s32.totalorder %v1904, 2
        %vm2105 = vcmp.ge.s32.totalorder %v1905, 2
        %vm2106 = vcmp.ge.s32.totalorder %v1906, 2
        %vm2107 = vcmp.ge.s32.totalorder %v1907, 2
        %vm2108 = vcmp.ge.s32.totalorder %v1908, 2
        %vm2109 = vcmp.ge.s32.totalorder %v1909, 2
        %vm2110 = vcmp.ge.s32.totalorder %v1910, 2
        %vm2111 = vcmp.ge.s32.totalorder %v1911, 2
        %vm2112 = vcmp.ge.s32.totalorder %v1912, 2
        %vm2113 = vcmp.ge.s32.totalorder %v1913, 2
        %vm2114 = vcmp.ge.s32.totalorder %v1914, 2
        %vm2115 = vcmp.ge.s32.totalorder %v1915, 2
        %vm2116 = vcmp.ge.s32.totalorder %v1916, 2
        %vm2117 = vcmp.ge.s32.totalorder %v1917, 2
        %vm2118 = vcmp.ge.s32.totalorder %v1918, 2
        %vm2119 = vcmp.ge.s32.totalorder %v1919, 2
        %vm2120 = vcmp.ge.s32.totalorder %v1920, 2
        %vm2121 = vcmp.ge.s32.totalorder %v1921, 2
        %vm2122 = vcmp.ge.s32.totalorder %v1922, 2
        %vm2123 = vcmp.ge.s32.totalorder %v1923, 2
        %vm2124 = vcmp.ge.s32.totalorder %v1924, 2
        %vm2125 = vcmp.ge.s32.totalorder %v1925, 2
        %vm2126 = vcmp.ge.s32.totalorder %v1926, 2
        %vm2127 = vcmp.ge.s32.totalorder %v1927, 2
        %vm2128 = vcmp.ge.s32.totalorder %v1928, 2
        %vm2129 = vcmp.ge.s32.totalorder %v1929, 2
        %vm2130 = vcmp.ge.s32.totalorder %v1930, 2
        %vm2131 = vcmp.ge.s32.totalorder %v1931, 2
        %vm2132 = vcmp.ge.s32.totalorder %v1932, 2
        %vm2133 = vcmp.ge.s32.totalorder %v1933, 2
        %vm2134 = vcmp.ge.s32.totalorder %v1934, 2
        %vm2135 = vcmp.ge.s32.totalorder %v1935, 2
        %vm2136 = vcmp.ge.s32.totalorder %v1936, 2
        %vm2137 = vcmp.ge.s32.totalorder %v1937, 2
        %vm2138 = vcmp.ge.s32.totalorder %v1938, 2
        %vm2139 = vcmp.ge.s32.totalorder %v1939, 2
        %vm2140 = vcmp.ge.s32.totalorder %v1940, 2
        %vm2141 = vcmp.ge.s32.totalorder %v1941, 2
        %vm2142 = vcmp.ge.s32.totalorder %v1942, 2
        %v2143 = vsel %vm2103, 1, 0
        %v2144 = vsel %vm2104, 1, 0
        %v2145 = vsel %vm2105, 1, 0
        %v2146 = vsel %vm2106, 1, 0
        %v2147 = vsel %vm2107, 1, 0
        %v2148 = vsel %vm2108, 1, 0
        %v2149 = vsel %vm2109, 1, 0
        %v2150 = vsel %vm2110, 1, 0
        %v2151 = vsel %vm2111, 1, 0
        %v2152 = vsel %vm2112, 1, 0
        %v2153 = vsel %vm2113, 1, 0
        %v2154 = vsel %vm2114, 1, 0
        %v2155 = vsel %vm2115, 1, 0
        %v2156 = vsel %vm2116, 1, 0
        %v2157 = vsel %vm2117, 1, 0
        %v2158 = vsel %vm2118, 1, 0
        %v2159 = vsel %vm2119, 1, 0
        %v2160 = vsel %vm2120, 1, 0
        %v2161 = vsel %vm2121, 1, 0
        %v2162 = vsel %vm2122, 1, 0
        %v2163 = vsel %vm2123, 1, 0
        %v2164 = vsel %vm2124, 1, 0
        %v2165 = vsel %vm2125, 1, 0
        %v2166 = vsel %vm2126, 1, 0
        %v2167 = vsel %vm2127, 1, 0
        %v2168 = vsel %vm2128, 1, 0
        %v2169 = vsel %vm2129, 1, 0
        %v2170 = vsel %vm2130, 1, 0
        %v2171 = vsel %vm2131, 1, 0
        %v2172 = vsel %vm2132, 1, 0
        %v2173 = vsel %vm2133, 1, 0
        %v2174 = vsel %vm2134, 1, 0
        %v2175 = vsel %vm2135, 1, 0
        %v2176 = vsel %vm2136, 1, 0
        %v2177 = vsel %vm2137, 1, 0
        %v2178 = vsel %vm2138, 1, 0
        %v2179 = vsel %vm2139, 1, 0
        %v2180 = vsel %vm2140, 1, 0
        %v2181 = vsel %vm2141, 1, 0
        %v2182 = vsel %vm2142, 1, 0
        %v2183 = vcvt.s32.f32 %v2143
        %v2184 = vcvt.s32.f32 %v2144
        %v2185 = vcvt.s32.f32 %v2145
        %v2186 = vcvt.s32.f32 %v2146
        %v2187 = vcvt.s32.f32 %v2147
        %v2188 = vcvt.s32.f32 %v2148
        %v2189 = vcvt.s32.f32 %v2149
        %v2190 = vcvt.s32.f32 %v2150
        %v2191 = vcvt.s32.f32 %v2151
        %v2192 = vcvt.s32.f32 %v2152
        %v2193 = vcvt.s32.f32 %v2153
        %v2194 = vcvt.s32.f32 %v2154
        %v2195 = vcvt.s32.f32 %v2155
        %v2196 = vcvt.s32.f32 %v2156
        %v2197 = vcvt.s32.f32 %v2157
        %v2198 = vcvt.s32.f32 %v2158
        %v2199 = vcvt.s32.f32 %v2159
        %v2200 = vcvt.s32.f32 %v2160
        %v2201 = vcvt.s32.f32 %v2161
        %v2202 = vcvt.s32.f32 %v2162
        %v2203 = vcvt.s32.f32 %v2163
        %v2204 = vcvt.s32.f32 %v2164
        %v2205 = vcvt.s32.f32 %v2165
        %v2206 = vcvt.s32.f32 %v2166
        %v2207 = vcvt.s32.f32 %v2167
        %v2208 = vcvt.s32.f32 %v2168
        %v2209 = vcvt.s32.f32 %v2169
        %v2210 = vcvt.s32.f32 %v2170
        %v2211 = vcvt.s32.f32 %v2171
        %v2212 = vcvt.s32.f32 %v2172
        %v2213 = vcvt.s32.f32 %v2173
        %v2214 = vcvt.s32.f32 %v2174
        %v2215 = vcvt.s32.f32 %v2175
        %v2216 = vcvt.s32.f32 %v2176
        %v2217 = vcvt.s32.f32 %v2177
        %v2218 = vcvt.s32.f32 %v2178
        %v2219 = vcvt.s32.f32 %v2179
        %v2220 = vcvt.s32.f32 %v2180
        %v2221 = vcvt.s32.f32 %v2181
        %v2222 = vcvt.s32.f32 %v2182
        %2223 = vst.msk [vmem:[#allocation2 + $0x30] sm:$0xff] %vm846, %v1346
        %2224 = vst.msk [vmem:[#allocation2 + $0x38] sm:$0xff] %vm846, %v1347
        %2225 = vst.msk [vmem:[#allocation2 + $0x40] sm:$0xff] %vm846, %v1348
        %2226 = vst.msk [vmem:[#allocation2 + $0x48] sm:$0xff] %vm846, %v1349
        %2227 = vst.msk [vmem:[#allocation2 + $0x50] sm:$0xff] %vm846, %v1350
        %2228 = vst.msk [vmem:[#allocation2 + $0x58] sm:$0xff] %vm846, %v1351
        %2229 = vst.msk [vmem:[#allocation2 + $0x60] sm:$0xff] %vm846, %v1352
        %2230 = vst.msk [vmem:[#allocation2 + $0x68] sm:$0xff] %vm846, %v1353
        %2231 = vst.msk [vmem:[#allocation2 + $0x70] sm:$0xff] %vm846, %v1354
        %2232 = vst.msk [vmem:[#allocation2 + $0x78] sm:$0xff] %vm846, %v1355
        %2233 = vst.msk [vmem:[#allocation2 + $0x80] sm:$0xff] %vm846, %v1356
        %2234 = vst.msk [vmem:[#allocation2 + $0x88] sm:$0xff] %vm846, %v1357
        %2235 = vst.msk [vmem:[#allocation2 + $0x90] sm:$0xff] %vm846, %v1358
        %2236 = vst.msk [vmem:[#allocation2 + $0x98] sm:$0xff] %vm846, %v1359
        %2237 = vst.msk [vmem:[#allocation2 + $0xa0] sm:$0xff] %vm846, %v1360
        %2238 = vst.msk [vmem:[#allocation2 + $0xa8] sm:$0xff] %vm846, %v1361
        %2239 = vst.msk [vmem:[#allocation2 + $0xb0] sm:$0xff] %vm846, %v1362
        %2240 = vst.msk [vmem:[#allocation2 + $0xb8] sm:$0xff] %vm846, %v1363
        %2241 = vst.msk [vmem:[#allocation2 + $0xc0] sm:$0xff] %vm846, %v1364
        %2242 = vst.msk [vmem:[#allocation2 + $0xc8] sm:$0xff] %vm846, %v1365
        %2243 = vst.msk [vmem:[#allocation2 + $0xd0] sm:$0xff] %vm846, %v1366
        %2244 = vst.msk [vmem:[#allocation2 + $0xd8] sm:$0xff] %vm846, %v1367
        %2245 = vst.msk [vmem:[#allocation2 + $0xe0] sm:$0xff] %vm846, %v1368
        %2246 = vst.msk [vmem:[#allocation2 + $0xe8] sm:$0xff] %vm846, %v1369
        %2247 = vst.msk [vmem:[#allocation2 + $0xf0] sm:$0xff] %vm846, %v1370
        %2248 = vst.msk [vmem:[#allocation2 + $0xf8] sm:$0xff] %vm846, %v1371
        %2249 = vst.msk [vmem:[#allocation2 + $0x100] sm:$0xff] %vm846, %v1372
        %2250 = vst.msk [vmem:[#allocation2 + $0x108] sm:$0xff] %vm846, %v1373
        %2251 = vst.msk [vmem:[#allocation2 + $0x110] sm:$0xff] %vm846, %v1374
        %2252 = vst.msk [vmem:[#allocation2 + $0x118] sm:$0xff] %vm846, %v1375
        %2253 = vst.msk [vmem:[#allocation2 + $0x120] sm:$0xff] %vm846, %v1376
        %2254 = vst.msk [vmem:[#allocation2 + $0x128] sm:$0xff] %vm846, %v1377
        %v2255 = vld [vmem:[%s3] sm:$0xf]
        %v2256 = vld [vmem:[%s3 + $0x4] sm:$0xf]
        %v2257 = vld [vmem:[%s3 + $0x8] sm:$0xf]
        %v2258 = vld [vmem:[%s3 + $0xc] sm:$0xf]
        %v2259 = vld [vmem:[%s3 + $0x10] sm:$0x3]
        %v2260 = vld [vmem:[%s4] sm:$0x1]
        %v2261 = vld [vmem:[#allocation2 + $0x10] sm:$0xff]
        %v2262 = vld [vmem:[#allocation2 + $0x18] sm:$0xff]
        %v2263 = vld [vmem:[#allocation2 + $0x20] sm:$0xff]
        %v2264 = vld [vmem:[#allocation2 + $0x28] sm:$0xff]
        %v2265 = vld [vmem:[#allocation2 + $0x30] sm:$0xff]
        %v2266 = vld [vmem:[#allocation2 + $0x38] sm:$0xff]
        %v2267 = vld [vmem:[#allocation2 + $0x40] sm:$0xff]
        %v2268 = vld [vmem:[#allocation2 + $0x48] sm:$0xff]
        %v2269 = vld [vmem:[#allocation2 + $0x50] sm:$0xff]
        %v2270 = vld [vmem:[#allocation2 + $0x58] sm:$0xff]
        %v2271 = vld [vmem:[#allocation2 + $0x60] sm:$0xff]
        %v2272 = vld [vmem:[#allocation2 + $0x68] sm:$0xff]
        %v2273 = vld [vmem:[#allocation2 + $0x70] sm:$0xff]
        %v2274 = vld [vmem:[#allocation2 + $0x78] sm:$0xff]
        %v2275 = vld [vmem:[#allocation2 + $0x80] sm:$0xff]
        %v2276 = vld [vmem:[#allocation2 + $0x88] sm:$0xff]
        %v2277 = vld [vmem:[#allocation2 + $0x90] sm:$0xff]
        %v2278 = vld [vmem:[#allocation2 + $0x98] sm:$0xff]
        %v2279 = vld [vmem:[#allocation2 + $0xa0] sm:$0xff]
        %v2280 = vld [vmem:[#allocation2 + $0xa8] sm:$0xff]
        %v2281 = vld [vmem:[#allocation2 + $0xb0] sm:$0xff]
        %v2282 = vld [vmem:[#allocation2 + $0xb8] sm:$0xff]
        %v2283 = vld [vmem:[#allocation2 + $0xc0] sm:$0xff]
        %v2284 = vld [vmem:[#allocation2 + $0xc8] sm:$0xff]
        %v2285 = vld [vmem:[#allocation2 + $0xd0] sm:$0xff]
        %v2286 = vld [vmem:[#allocation2 + $0xd8] sm:$0xff]
        %v2287 = vld [vmem:[#allocation2 + $0xe0] sm:$0xff]
        %v2288 = vld [vmem:[#allocation2 + $0xe8] sm:$0xff]
        %v2289 = vld [vmem:[#allocation2 + $0xf0] sm:$0xff]
        %v2290 = vld [vmem:[#allocation2 + $0xf8] sm:$0xff]
        %v2291 = vld [vmem:[#allocation2 + $0x100] sm:$0xff]
        %v2292 = vld [vmem:[#allocation2 + $0x108] sm:$0xff]
        %v2293 = vld [vmem:[#allocation2 + $0x110] sm:$0xff]
        %v2294 = vld [vmem:[#allocation2 + $0x118] sm:$0xff]
        %v2295 = vld [vmem:[#allocation2 + $0x120] sm:$0xff]
        %v2296 = vld [vmem:[#allocation2 + $0x128] sm:$0xff]
        %v2297 = vld [vmem:[#allocation2 + $0x130] sm:$0xff]
        %v2298 = vld [vmem:[#allocation2 + $0x138] sm:$0xff]
        %v2299 = vld [vmem:[#allocation2 + $0x140] sm:$0xff]
        %v2300 = vld [vmem:[#allocation2 + $0x148] sm:$0xff]
        %v2301 = vpack.c.bf16 %v2262, %v2261
        %v2302 = vpack.c.bf16 %v2264, %v2263
        %v2303 = vpack.c.bf16 %v2266, %v2265
        %v2304 = vpack.c.bf16 %v2268, %v2267
        %v2305 = vpack.c.bf16 %v2270, %v2269
        %v2306 = vpack.c.bf16 %v2272, %v2271
        %v2307 = vpack.c.bf16 %v2274, %v2273
        %v2308 = vpack.c.bf16 %v2276, %v2275
        %v2309 = vpack.c.bf16 %v2278, %v2277
        %v2310 = vpack.c.bf16 %v2280, %v2279
        %v2311 = vpack.c.bf16 %v2282, %v2281
        %v2312 = vpack.c.bf16 %v2284, %v2283
        %v2313 = vpack.c.bf16 %v2286, %v2285
        %v2314 = vpack.c.bf16 %v2288, %v2287
        %v2315 = vpack.c.bf16 %v2290, %v2289
        %v2316 = vpack.c.bf16 %v2292, %v2291
        %v2317 = vpack.c.bf16 %v2294, %v2293
        %v2318 = vpack.c.bf16 %v2296, %v2295
        %v2319 = vpack.c.bf16 %v2298, %v2297
        %v2320 = vpack.c.bf16 %v2300, %v2299
        %v2321 = vld [vmem:[#allocation2 + $0x12] sm:$0xff]
        %v2322 = vld [vmem:[#allocation2 + $0x1a] sm:$0xff]
        %v2323 = vld [vmem:[#allocation2 + $0x22] sm:$0xff]
        %v2324 = vld [vmem:[#allocation2 + $0x2a] sm:$0xff]
        %v2325 = vld [vmem:[#allocation2 + $0x32] sm:$0xff]
        %v2326 = vld [vmem:[#allocation2 + $0x3a] sm:$0xff]
        %v2327 = vld [vmem:[#allocation2 + $0x42] sm:$0xff]
        %v2328 = vld [vmem:[#allocation2 + $0x4a] sm:$0xff]
        %v2329 = vld [vmem:[#allocation2 + $0x52] sm:$0xff]
        %v2330 = vld [vmem:[#allocation2 + $0x5a] sm:$0xff]
        %v2331 = vld [vmem:[#allocation2 + $0x62] sm:$0xff]
        %v2332 = vld [vmem:[#allocation2 + $0x6a] sm:$0xff]
        %v2333 = vld [vmem:[#allocation2 + $0x72] sm:$0xff]
        %v2334 = vld [vmem:[#allocation2 + $0x7a] sm:$0xff]
        %v2335 = vld [vmem:[#allocation2 + $0x82] sm:$0xff]
        %v2336 = vld [vmem:[#allocation2 + $0x8a] sm:$0xff]
        %v2337 = vld [vmem:[#allocation2 + $0x92] sm:$0xff]
        %v2338 = vld [vmem:[#allocation2 + $0x9a] sm:$0xff]
        %v2339 = vld [vmem:[#allocation2 + $0xa2] sm:$0xff]
        %v2340 = vld [vmem:[#allocation2 + $0xaa] sm:$0xff]
        %v2341 = vld [vmem:[#allocation2 + $0xb2] sm:$0xff]
        %v2342 = vld [vmem:[#allocation2 + $0xba] sm:$0xff]
        %v2343 = vld [vmem:[#allocation2 + $0xc2] sm:$0xff]
        %v2344 = vld [vmem:[#allocation2 + $0xca] sm:$0xff]
        %v2345 = vld [vmem:[#allocation2 + $0xd2] sm:$0xff]
        %v2346 = vld [vmem:[#allocation2 + $0xda] sm:$0xff]
        %v2347 = vld [vmem:[#allocation2 + $0xe2] sm:$0xff]
        %v2348 = vld [vmem:[#allocation2 + $0xea] sm:$0xff]
        %v2349 = vld [vmem:[#allocation2 + $0xf2] sm:$0xff]
        %v2350 = vld [vmem:[#allocation2 + $0xfa] sm:$0xff]
        %v2351 = vld [vmem:[#allocation2 + $0x102] sm:$0xff]
        %v2352 = vld [vmem:[#allocation2 + $0x10a] sm:$0xff]
        %v2353 = vld [vmem:[#allocation2 + $0x112] sm:$0xff]
        %v2354 = vld [vmem:[#allocation2 + $0x11a] sm:$0xff]
        %v2355 = vld [vmem:[#allocation2 + $0x122] sm:$0xff]
        %v2356 = vld [vmem:[#allocation2 + $0x12a] sm:$0xff]
        %v2357 = vld [vmem:[#allocation2 + $0x132] sm:$0xff]
        %v2358 = vld [vmem:[#allocation2 + $0x13a] sm:$0xff]
        %v2359 = vld [vmem:[#allocation2 + $0x142] sm:$0xff]
        %v2360 = vld [vmem:[#allocation2 + $0x14a] sm:$0xff]
        %v2361 = vmul.f32 %v2321, %v2063
        %v2362 = vmul.f32 %v2322, %v2064
        %v2363 = vmul.f32 %v2323, %v2065
        %v2364 = vmul.f32 %v2324, %v2066
        %v2365 = vmul.f32 %v2325, %v2067
        %v2366 = vmul.f32 %v2326, %v2068
        %v2367 = vmul.f32 %v2327, %v2069
        %v2368 = vmul.f32 %v2328, %v2070
        %v2369 = vmul.f32 %v2329, %v2071
        %v2370 = vmul.f32 %v2330, %v2072
        %v2371 = vmul.f32 %v2331, %v2073
        %v2372 = vmul.f32 %v2332, %v2074
        %v2373 = vmul.f32 %v2333, %v2075
        %v2374 = vmul.f32 %v2334, %v2076
        %v2375 = vmul.f32 %v2335, %v2077
        %v2376 = vmul.f32 %v2336, %v2078
        %v2377 = vmul.f32 %v2337, %v2079
        %v2378 = vmul.f32 %v2338, %v2080
        %v2379 = vmul.f32 %v2339, %v2081
        %v2380 = vmul.f32 %v2340, %v2082
        %v2381 = vmul.f32 %v2341, %v2083
        %v2382 = vmul.f32 %v2342, %v2084
        %v2383 = vmul.f32 %v2343, %v2085
        %v2384 = vmul.f32 %v2344, %v2086
        %v2385 = vmul.f32 %v2345, %v2087
        %v2386 = vmul.f32 %v2346, %v2088
        %v2387 = vmul.f32 %v2347, %v2089
        %v2388 = vmul.f32 %v2348, %v2090
        %v2389 = vmul.f32 %v2349, %v2091
        %v2390 = vmul.f32 %v2350, %v2092
        %v2391 = vmul.f32 %v2351, %v2093
        %v2392 = vmul.f32 %v2352, %v2094
        %v2393 = vmul.f32 %v2353, %v2095
        %v2394 = vmul.f32 %v2354, %v2096
        %v2395 = vmul.f32 %v2355, %v2097
        %v2396 = vmul.f32 %v2356, %v2098
        %v2397 = vmul.f32 %v2357, %v2099
        %v2398 = vmul.f32 %v2358, %v2100
        %v2399 = vmul.f32 %v2359, %v2101
        %v2400 = vmul.f32 %v2360, %v2102
        %v2401 = vpack.c.bf16 %v2362, %v2361
        %v2402 = vpack.c.bf16 %v2364, %v2363
        %v2403 = vpack.c.bf16 %v2366, %v2365
        %v2404 = vpack.c.bf16 %v2368, %v2367
        %v2405 = vpack.c.bf16 %v2370, %v2369
        %v2406 = vpack.c.bf16 %v2372, %v2371
        %v2407 = vpack.c.bf16 %v2374, %v2373
        %v2408 = vpack.c.bf16 %v2376, %v2375
        %v2409 = vpack.c.bf16 %v2378, %v2377
        %v2410 = vpack.c.bf16 %v2380, %v2379
        %v2411 = vpack.c.bf16 %v2382, %v2381
        %v2412 = vpack.c.bf16 %v2384, %v2383
        %v2413 = vpack.c.bf16 %v2386, %v2385
        %v2414 = vpack.c.bf16 %v2388, %v2387
        %v2415 = vpack.c.bf16 %v2390, %v2389
        %v2416 = vpack.c.bf16 %v2392, %v2391
        %v2417 = vpack.c.bf16 %v2394, %v2393
        %v2418 = vpack.c.bf16 %v2396, %v2395
        %v2419 = vpack.c.bf16 %v2398, %v2397
        %v2420 = vpack.c.bf16 %v2400, %v2399
        %v2421 = vld [vmem:[#allocation2 + $0xe] sm:$0xff]
        %v2422 = vld [vmem:[#allocation2 + $0x16] sm:$0xff]
        %v2423 = vld [vmem:[#allocation2 + $0x1e] sm:$0xff]
        %v2424 = vld [vmem:[#allocation2 + $0x26] sm:$0xff]
        %v2425 = vld [vmem:[#allocation2 + $0x2e] sm:$0xff]
        %v2426 = vld [vmem:[#allocation2 + $0x36] sm:$0xff]
        %v2427 = vld [vmem:[#allocation2 + $0x3e] sm:$0xff]
        %v2428 = vld [vmem:[#allocation2 + $0x46] sm:$0xff]
        %v2429 = vld [vmem:[#allocation2 + $0x4e] sm:$0xff]
        %v2430 = vld [vmem:[#allocation2 + $0x56] sm:$0xff]
        %v2431 = vld [vmem:[#allocation2 + $0x5e] sm:$0xff]
        %v2432 = vld [vmem:[#allocation2 + $0x66] sm:$0xff]
        %v2433 = vld [vmem:[#allocation2 + $0x6e] sm:$0xff]
        %v2434 = vld [vmem:[#allocation2 + $0x76] sm:$0xff]
        %v2435 = vld [vmem:[#allocation2 + $0x7e] sm:$0xff]
        %v2436 = vld [vmem:[#allocation2 + $0x86] sm:$0xff]
        %v2437 = vld [vmem:[#allocation2 + $0x8e] sm:$0xff]
        %v2438 = vld [vmem:[#allocation2 + $0x96] sm:$0xff]
        %v2439 = vld [vmem:[#allocation2 + $0x9e] sm:$0xff]
        %v2440 = vld [vmem:[#allocation2 + $0xa6] sm:$0xff]
        %v2441 = vld [vmem:[#allocation2 + $0xae] sm:$0xff]
        %v2442 = vld [vmem:[#allocation2 + $0xb6] sm:$0xff]
        %v2443 = vld [vmem:[#allocation2 + $0xbe] sm:$0xff]
        %v2444 = vld [vmem:[#allocation2 + $0xc6] sm:$0xff]
        %v2445 = vld [vmem:[#allocation2 + $0xce] sm:$0xff]
        %v2446 = vld [vmem:[#allocation2 + $0xd6] sm:$0xff]
        %v2447 = vld [vmem:[#allocation2 + $0xde] sm:$0xff]
        %v2448 = vld [vmem:[#allocation2 + $0xe6] sm:$0xff]
        %v2449 = vld [vmem:[#allocation2 + $0xee] sm:$0xff]
        %v2450 = vld [vmem:[#allocation2 + $0xf6] sm:$0xff]
        %v2451 = vld [vmem:[#allocation2 + $0xfe] sm:$0xff]
        %v2452 = vld [vmem:[#allocation2 + $0x106] sm:$0xff]
        %v2453 = vld [vmem:[#allocation2 + $0x10e] sm:$0xff]
        %v2454 = vld [vmem:[#allocation2 + $0x116] sm:$0xff]
        %v2455 = vld [vmem:[#allocation2 + $0x11e] sm:$0xff]
        %v2456 = vld [vmem:[#allocation2 + $0x126] sm:$0xff]
        %v2457 = vld [vmem:[#allocation2 + $0x12e] sm:$0xff]
        %v2458 = vld [vmem:[#allocation2 + $0x136] sm:$0xff]
        %v2459 = vld [vmem:[#allocation2 + $0x13e] sm:$0xff]
        %v2460 = vld [vmem:[#allocation2 + $0x146] sm:$0xff]
        %v2461 = vmul.f32 %v2421, %v2183
        %v2462 = vmul.f32 %v2422, %v2184
        %v2463 = vmul.f32 %v2423, %v2185
        %v2464 = vmul.f32 %v2424, %v2186
        %v2465 = vmul.f32 %v2425, %v2187
        %v2466 = vmul.f32 %v2426, %v2188
        %v2467 = vmul.f32 %v2427, %v2189
        %v2468 = vmul.f32 %v2428, %v2190
        %v2469 = vmul.f32 %v2429, %v2191
        %v2470 = vmul.f32 %v2430, %v2192
        %v2471 = vmul.f32 %v2431, %v2193
        %v2472 = vmul.f32 %v2432, %v2194
        %v2473 = vmul.f32 %v2433, %v2195
        %v2474 = vmul.f32 %v2434, %v2196
        %v2475 = vmul.f32 %v2435, %v2197
        %v2476 = vmul.f32 %v2436, %v2198
        %v2477 = vmul.f32 %v2437, %v2199
        %v2478 = vmul.f32 %v2438, %v2200
        %v2479 = vmul.f32 %v2439, %v2201
        %v2480 = vmul.f32 %v2440, %v2202
        %v2481 = vmul.f32 %v2441, %v2203
        %v2482 = vmul.f32 %v2442, %v2204
        %v2483 = vmul.f32 %v2443, %v2205
        %v2484 = vmul.f32 %v2444, %v2206
        %v2485 = vmul.f32 %v2445, %v2207
        %v2486 = vmul.f32 %v2446, %v2208
        %v2487 = vmul.f32 %v2447, %v2209
        %v2488 = vmul.f32 %v2448, %v2210
        %v2489 = vmul.f32 %v2449, %v2211
        %v2490 = vmul.f32 %v2450, %v2212
        %v2491 = vmul.f32 %v2451, %v2213
        %v2492 = vmul.f32 %v2452, %v2214
        %v2493 = vmul.f32 %v2453, %v2215
        %v2494 = vmul.f32 %v2454, %v2216
        %v2495 = vmul.f32 %v2455, %v2217
        %v2496 = vmul.f32 %v2456, %v2218
        %v2497 = vmul.f32 %v2457, %v2219
        %v2498 = vmul.f32 %v2458, %v2220
        %v2499 = vmul.f32 %v2459, %v2221
        %v2500 = vmul.f32 %v2460, %v2222
        %v2501 = vpack.c.bf16 %v2462, %v2461
        %v2502 = vpack.c.bf16 %v2464, %v2463
        %v2503 = vpack.c.bf16 %v2466, %v2465
        %v2504 = vpack.c.bf16 %v2468, %v2467
        %v2505 = vpack.c.bf16 %v2470, %v2469
        %v2506 = vpack.c.bf16 %v2472, %v2471
        %v2507 = vpack.c.bf16 %v2474, %v2473
        %v2508 = vpack.c.bf16 %v2476, %v2475
        %v2509 = vpack.c.bf16 %v2478, %v2477
        %v2510 = vpack.c.bf16 %v2480, %v2479
        %v2511 = vpack.c.bf16 %v2482, %v2481
        %v2512 = vpack.c.bf16 %v2484, %v2483
        %v2513 = vpack.c.bf16 %v2486, %v2485
        %v2514 = vpack.c.bf16 %v2488, %v2487
        %v2515 = vpack.c.bf16 %v2490, %v2489
        %v2516 = vpack.c.bf16 %v2492, %v2491
        %v2517 = vpack.c.bf16 %v2494, %v2493
        %v2518 = vpack.c.bf16 %v2496, %v2495
        %v2519 = vpack.c.bf16 %v2498, %v2497
        %v2520 = vpack.c.bf16 %v2500, %v2499
        %2521 = vst.msk [vmem:[#allocation3] sm:$0xff] %vm846, %v2501
        %2522 = vst.msk [vmem:[#allocation3 + $0x8] sm:$0xff] %vm846, %v2502
        %2523 = vst.msk [vmem:[#allocation3 + $0x10] sm:$0xff] %vm846, %v2503
        %2524 = vst.msk [vmem:[#allocation3 + $0x18] sm:$0xff] %vm846, %v2504
        %2525 = vst.msk [vmem:[#allocation3 + $0x20] sm:$0xff] %vm846, %v2505
        %2526 = vst.msk [vmem:[#allocation3 + $0x28] sm:$0xff] %vm846, %v2506
        %2527 = vst.msk [vmem:[#allocation3 + $0x30] sm:$0xff] %vm846, %v2507
        %2528 = vst.msk [vmem:[#allocation3 + $0x38] sm:$0xff] %vm846, %v2508
        %2529 = vst.msk [vmem:[#allocation3 + $0x40] sm:$0xff] %vm846, %v2509
        %2530 = vst.msk [vmem:[#allocation3 + $0x48] sm:$0xff] %vm846, %v2510
        %2531 = vst.msk [vmem:[#allocation3 + $0x50] sm:$0xff] %vm846, %v2511
        %2532 = vst.msk [vmem:[#allocation3 + $0x58] sm:$0xff] %vm846, %v2512
        %2533 = vst.msk [vmem:[#allocation3 + $0x60] sm:$0xff] %vm846, %v2513
        %2534 = vst.msk [vmem:[#allocation3 + $0x68] sm:$0xff] %vm846, %v2514
        %2535 = vst.msk [vmem:[#allocation3 + $0x70] sm:$0xff] %vm846, %v2515
        %2536 = vst.msk [vmem:[#allocation3 + $0x78] sm:$0xff] %vm846, %v2516
        %2553 = vrot.lane.b32.xlu0 %v2301, 4
        %v2554 = vpop.permute.xlu0 %2553
        %2555 = vrot.lane.b32.xlu0 %v2302, 4
        %v2556 = vpop.permute.xlu0 %2555
        %2557 = vrot.lane.b32.xlu0 %v2303, 4
        %v2558 = vpop.permute.xlu0 %2557
        %2559 = vrot.lane.b32.xlu0 %v2304, 4
        %v2560 = vpop.permute.xlu0 %2559
        %2561 = vrot.lane.b32.xlu0 %v2305, 4
        %v2562 = vpop.permute.xlu0 %2561
        %2563 = vrot.lane.b32.xlu0 %v2306, 4
        %v2564 = vpop.permute.xlu0 %2563
        %2565 = vrot.lane.b32.xlu0 %v2307, 4
        %v2566 = vpop.permute.xlu0 %2565
        %2567 = vrot.lane.b32.xlu0 %v2308, 4
        %v2568 = vpop.permute.xlu0 %2567
        %2569 = vrot.lane.b32.xlu0 %v2309, 4
        %v2570 = vpop.permute.xlu0 %2569
        %2571 = vrot.lane.b32.xlu0 %v2310, 4
        %v2572 = vpop.permute.xlu0 %2571
        %2573 = vrot.lane.b32.xlu0 %v2311, 4
        %v2574 = vpop.permute.xlu0 %2573
        %2575 = vrot.lane.b32.xlu0 %v2312, 4
        %v2576 = vpop.permute.xlu0 %2575
        %2577 = vrot.lane.b32.xlu0 %v2313, 4
        %v2578 = vpop.permute.xlu0 %2577
        %2579 = vrot.lane.b32.xlu0 %v2314, 4
        %v2580 = vpop.permute.xlu0 %2579
        %2581 = vrot.lane.b32.xlu0 %v2315, 4
        %v2582 = vpop.permute.xlu0 %2581
        %2583 = vrot.lane.b32.xlu0 %v2316, 4
        %v2584 = vpop.permute.xlu0 %2583
        %vm2601 = vcmask 64544
        %2602 = vst.msk [vmem:[#allocation3] sm:$0xff] %vm2601, %v2554
        %2603 = vst.msk [vmem:[#allocation3 + $0x8] sm:$0xff] %vm2601, %v2556
        %2604 = vst.msk [vmem:[#allocation3 + $0x10] sm:$0xff] %vm2601, %v2558
        %2605 = vst.msk [vmem:[#allocation3 + $0x18] sm:$0xff] %vm2601, %v2560
        %2606 = vst.msk [vmem:[#allocation3 + $0x20] sm:$0xff] %vm2601, %v2562
        %2607 = vst.msk [vmem:[#allocation3 + $0x28] sm:$0xff] %vm2601, %v2564
        %2608 = vst.msk [vmem:[#allocation3 + $0x30] sm:$0xff] %vm2601, %v2566
        %2609 = vst.msk [vmem:[#allocation3 + $0x38] sm:$0xff] %vm2601, %v2568
        %2610 = vst.msk [vmem:[#allocation3 + $0x40] sm:$0xff] %vm2601, %v2570
        %2611 = vst.msk [vmem:[#allocation3 + $0x48] sm:$0xff] %vm2601, %v2572
        %2612 = vst.msk [vmem:[#allocation3 + $0x50] sm:$0xff] %vm2601, %v2574
        %2613 = vst.msk [vmem:[#allocation3 + $0x58] sm:$0xff] %vm2601, %v2576
        %2614 = vst.msk [vmem:[#allocation3 + $0x60] sm:$0xff] %vm2601, %v2578
        %2615 = vst.msk [vmem:[#allocation3 + $0x68] sm:$0xff] %vm2601, %v2580
        %2616 = vst.msk [vmem:[#allocation3 + $0x70] sm:$0xff] %vm2601, %v2582
        %2617 = vst.msk [vmem:[#allocation3 + $0x78] sm:$0xff] %vm2601, %v2584
        %2634 = vrot.lane.b32.xlu0 %v2401, 8
        %v2635 = vpop.permute.xlu0 %2634
        %2636 = vrot.lane.b32.xlu0 %v2402, 8
        %v2637 = vpop.permute.xlu0 %2636
        %2638 = vrot.lane.b32.xlu0 %v2403, 8
        %v2639 = vpop.permute.xlu0 %2638
        %2640 = vrot.lane.b32.xlu0 %v2404, 8
        %v2641 = vpop.permute.xlu0 %2640
        %2642 = vrot.lane.b32.xlu0 %v2405, 8
        %v2643 = vpop.permute.xlu0 %2642
        %2644 = vrot.lane.b32.xlu0 %v2406, 8
        %v2645 = vpop.permute.xlu0 %2644
        %2646 = vrot.lane.b32.xlu0 %v2407, 8
        %v2647 = vpop.permute.xlu0 %2646
        %2648 = vrot.lane.b32.xlu0 %v2408, 8
        %v2649 = vpop.permute.xlu0 %2648
        %2650 = vrot.lane.b32.xlu0 %v2409, 8
        %v2651 = vpop.permute.xlu0 %2650
        %2652 = vrot.lane.b32.xlu0 %v2410, 8
        %v2653 = vpop.permute.xlu0 %2652
        %2654 = vrot.lane.b32.xlu0 %v2411, 8
        %v2655 = vpop.permute.xlu0 %2654
        %2656 = vrot.lane.b32.xlu0 %v2412, 8
        %v2657 = vpop.permute.xlu0 %2656
        %2658 = vrot.lane.b32.xlu0 %v2413, 8
        %v2659 = vpop.permute.xlu0 %2658
        %2660 = vrot.lane.b32.xlu0 %v2414, 8
        %v2661 = vpop.permute.xlu0 %2660
        %2662 = vrot.lane.b32.xlu0 %v2415, 8
        %v2663 = vpop.permute.xlu0 %2662
        %2664 = vrot.lane.b32.xlu0 %v2416, 8
        %v2665 = vpop.permute.xlu0 %2664
        %vm2682 = vcmask 97344
        %2683 = vst.msk [vmem:[#allocation3] sm:$0xff] %vm2682, %v2635
        %2684 = vst.msk [vmem:[#allocation3 + $0x8] sm:$0xff] %vm2682, %v2637
        %2685 = vst.msk [vmem:[#allocation3 + $0x10] sm:$0xff] %vm2682, %v2639
        %2686 = vst.msk [vmem:[#allocation3 + $0x18] sm:$0xff] %vm2682, %v2641
        %2687 = vst.msk [vmem:[#allocation3 + $0x20] sm:$0xff] %vm2682, %v2643
        %2688 = vst.msk [vmem:[#allocation3 + $0x28] sm:$0xff] %vm2682, %v2645
        %2689 = vst.msk [vmem:[#allocation3 + $0x30] sm:$0xff] %vm2682, %v2647
        %2690 = vst.msk [vmem:[#allocation3 + $0x38] sm:$0xff] %vm2682, %v2649
        %2691 = vst.msk [vmem:[#allocation3 + $0x40] sm:$0xff] %vm2682, %v2651
        %2692 = vst.msk [vmem:[#allocation3 + $0x48] sm:$0xff] %vm2682, %v2653
        %2693 = vst.msk [vmem:[#allocation3 + $0x50] sm:$0xff] %vm2682, %v2655
        %2694 = vst.msk [vmem:[#allocation3 + $0x58] sm:$0xff] %vm2682, %v2657
        %2695 = vst.msk [vmem:[#allocation3 + $0x60] sm:$0xff] %vm2682, %v2659
        %2696 = vst.msk [vmem:[#allocation3 + $0x68] sm:$0xff] %vm2682, %v2661
        %2697 = vst.msk [vmem:[#allocation3 + $0x70] sm:$0xff] %vm2682, %v2663
        %2698 = vst.msk [vmem:[#allocation3 + $0x78] sm:$0xff] %vm2682, %v2665
        %2715 = vrot.lane.b32.xlu0 %v2503, 12
        %v2716 = vpop.permute.xlu0 %2715
        %2717 = vrot.lane.b32.xlu0 %v2504, 12
        %v2718 = vpop.permute.xlu0 %2717
        %2719 = vrot.lane.b32.xlu0 %v2505, 12
        %v2720 = vpop.permute.xlu0 %2719
        %2721 = vrot.lane.b32.xlu0 %v2506, 12
        %v2722 = vpop.permute.xlu0 %2721
        %2723 = vrot.lane.b32.xlu0 %v2507, 12
        %v2724 = vpop.permute.xlu0 %2723
        %2725 = vrot.lane.b32.xlu0 %v2508, 12
        %v2726 = vpop.permute.xlu0 %2725
        %2727 = vrot.lane.b32.xlu0 %v2509, 12
        %v2728 = vpop.permute.xlu0 %2727
        %2729 = vrot.lane.b32.xlu0 %v2510, 12
        %v2730 = vpop.permute.xlu0 %2729
        %2731 = vrot.lane.b32.xlu0 %v2511, 12
        %v2732 = vpop.permute.xlu0 %2731
        %2733 = vrot.lane.b32.xlu0 %v2512, 12
        %v2734 = vpop.permute.xlu0 %2733
        %2735 = vrot.lane.b32.xlu0 %v2513, 12
        %v2736 = vpop.permute.xlu0 %2735
        %2737 = vrot.lane.b32.xlu0 %v2514, 12
        %v2738 = vpop.permute.xlu0 %2737
        %2739 = vrot.lane.b32.xlu0 %v2515, 12
        %v2740 = vpop.permute.xlu0 %2739
        %2741 = vrot.lane.b32.xlu0 %v2516, 12
        %v2742 = vpop.permute.xlu0 %2741
        %2743 = vrot.lane.b32.xlu0 %v2517, 12
        %v2744 = vpop.permute.xlu0 %2743
        %2745 = vrot.lane.b32.xlu0 %v2518, 12
        %v2746 = vpop.permute.xlu0 %2745
        %vm2763 = vcmask 130144
        %2764 = vst.msk [vmem:[#allocation3] sm:$0xff] %vm2763, %v2716
        %2765 = vst.msk [vmem:[#allocation3 + $0x8] sm:$0xff] %vm2763, %v2718
        %2766 = vst.msk [vmem:[#allocation3 + $0x10] sm:$0xff] %vm2763, %v2720
        %2767 = vst.msk [vmem:[#allocation3 + $0x18] sm:$0xff] %vm2763, %v2722
        %2768 = vst.msk [vmem:[#allocation3 + $0x20] sm:$0xff] %vm2763, %v2724
        %2769 = vst.msk [vmem:[#allocation3 + $0x28] sm:$0xff] %vm2763, %v2726
        %2770 = vst.msk [vmem:[#allocation3 + $0x30] sm:$0xff] %vm2763, %v2728
        %2771 = vst.msk [vmem:[#allocation3 + $0x38] sm:$0xff] %vm2763, %v2730
        %2772 = vst.msk [vmem:[#allocation3 + $0x40] sm:$0xff] %vm2763, %v2732
        %2773 = vst.msk [vmem:[#allocation3 + $0x48] sm:$0xff] %vm2763, %v2734
        %2774 = vst.msk [vmem:[#allocation3 + $0x50] sm:$0xff] %vm2763, %v2736
        %2775 = vst.msk [vmem:[#allocation3 + $0x58] sm:$0xff] %vm2763, %v2738
        %2776 = vst.msk [vmem:[#allocation3 + $0x60] sm:$0xff] %vm2763, %v2740
        %2777 = vst.msk [vmem:[#allocation3 + $0x68] sm:$0xff] %vm2763, %v2742
        %2778 = vst.msk [vmem:[#allocation3 + $0x70] sm:$0xff] %vm2763, %v2744
        %2779 = vst.msk [vmem:[#allocation3 + $0x78] sm:$0xff] %vm2763, %v2746
        %2782 = vrot.lane.b32.xlu0 %v2303, 16
        %v2783 = vpop.permute.xlu0 %2782
        %2784 = vrot.lane.b32.xlu0 %v2304, 16
        %v2785 = vpop.permute.xlu0 %2784
        %2786 = vrot.lane.b32.xlu0 %v2305, 16
        %v2787 = vpop.permute.xlu0 %2786
        %2788 = vrot.lane.b32.xlu0 %v2306, 16
        %v2789 = vpop.permute.xlu0 %2788
        %2790 = vrot.lane.b32.xlu0 %v2307, 16
        %v2791 = vpop.permute.xlu0 %2790
        %2792 = vrot.lane.b32.xlu0 %v2308, 16
        %v2793 = vpop.permute.xlu0 %2792
        %2794 = vrot.lane.b32.xlu0 %v2309, 16
        %v2795 = vpop.permute.xlu0 %2794
        %2796 = vrot.lane.b32.xlu0 %v2310, 16
        %v2797 = vpop.permute.xlu0 %2796
        %2798 = vrot.lane.b32.xlu0 %v2311, 16
        %v2799 = vpop.permute.xlu0 %2798
        %2800 = vrot.lane.b32.xlu0 %v2312, 16
        %v2801 = vpop.permute.xlu0 %2800
        %2802 = vrot.lane.b32.xlu0 %v2313, 16
        %v2803 = vpop.permute.xlu0 %2802
        %2804 = vrot.lane.b32.xlu0 %v2314, 16
        %v2805 = vpop.permute.xlu0 %2804
        %2806 = vrot.lane.b32.xlu0 %v2315, 16
        %v2807 = vpop.permute.xlu0 %2806
        %2808 = vrot.lane.b32.xlu0 %v2316, 16
        %v2809 = vpop.permute.xlu0 %2808
        %2810 = vrot.lane.b32.xlu0 %v2317, 16
        %v2811 = vpop.permute.xlu0 %2810
        %2812 = vrot.lane.b32.xlu0 %v2318, 16
        %v2813 = vpop.permute.xlu0 %2812
        %vm2830 = vcmask 162944
        %2831 = vst.msk [vmem:[#allocation3] sm:$0xff] %vm2830, %v2783
        %2832 = vst.msk [vmem:[#allocation3 + $0x8] sm:$0xff] %vm2830, %v2785
        %2833 = vst.msk [vmem:[#allocation3 + $0x10] sm:$0xff] %vm2830, %v2787
        %2834 = vst.msk [vmem:[#allocation3 + $0x18] sm:$0xff] %vm2830, %v2789
        %2835 = vst.msk [vmem:[#allocation3 + $0x20] sm:$0xff] %vm2830, %v2791
        %2836 = vst.msk [vmem:[#allocation3 + $0x28] sm:$0xff] %vm2830, %v2793
        %2837 = vst.msk [vmem:[#allocation3 + $0x30] sm:$0xff] %vm2830, %v2795
        %2838 = vst.msk [vmem:[#allocation3 + $0x38] sm:$0xff] %vm2830, %v2797
        %2839 = vst.msk [vmem:[#allocation3 + $0x40] sm:$0xff] %vm2830, %v2799
        %2840 = vst.msk [vmem:[#allocation3 + $0x48] sm:$0xff] %vm2830, %v2801
        %2841 = vst.msk [vmem:[#allocation3 + $0x50] sm:$0xff] %vm2830, %v2803
        %2842 = vst.msk [vmem:[#allocation3 + $0x58] sm:$0xff] %vm2830, %v2805
        %2843 = vst.msk [vmem:[#allocation3 + $0x60] sm:$0xff] %vm2830, %v2807
        %2844 = vst.msk [vmem:[#allocation3 + $0x68] sm:$0xff] %vm2830, %v2809
        %2845 = vst.msk [vmem:[#allocation3 + $0x70] sm:$0xff] %vm2830, %v2811
        %2846 = vst.msk [vmem:[#allocation3 + $0x78] sm:$0xff] %vm2830, %v2813
        %2849 = vrot.lane.b32.xlu0 %v2403, 20
        %v2850 = vpop.permute.xlu0 %2849
        %2851 = vrot.lane.b32.xlu0 %v2404, 20
        %v2852 = vpop.permute.xlu0 %2851
        %2853 = vrot.lane.b32.xlu0 %v2405, 20
        %v2854 = vpop.permute.xlu0 %2853
        %2855 = vrot.lane.b32.xlu0 %v2406, 20
        %v2856 = vpop.permute.xlu0 %2855
        %2857 = vrot.lane.b32.xlu0 %v2407, 20
        %v2858 = vpop.permute.xlu0 %2857
        %2859 = vrot.lane.b32.xlu0 %v2408, 20
        %v2860 = vpop.permute.xlu0 %2859
        %2861 = vrot.lane.b32.xlu0 %v2409, 20
        %v2862 = vpop.permute.xlu0 %2861
        %2863 = vrot.lane.b32.xlu0 %v2410, 20
        %v2864 = vpop.permute.xlu0 %2863
        %2865 = vrot.lane.b32.xlu0 %v2411, 20
        %v2866 = vpop.permute.xlu0 %2865
        %2867 = vrot.lane.b32.xlu0 %v2412, 20
        %v2868 = vpop.permute.xlu0 %2867
        %2869 = vrot.lane.b32.xlu0 %v2413, 20
        %v2870 = vpop.permute.xlu0 %2869
        %2871 = vrot.lane.b32.xlu0 %v2414, 20
        %v2872 = vpop.permute.xlu0 %2871
        %2873 = vrot.lane.b32.xlu0 %v2415, 20
        %v2874 = vpop.permute.xlu0 %2873
        %2875 = vrot.lane.b32.xlu0 %v2416, 20
        %v2876 = vpop.permute.xlu0 %2875
        %2877 = vrot.lane.b32.xlu0 %v2417, 20
        %v2878 = vpop.permute.xlu0 %2877
        %2879 = vrot.lane.b32.xlu0 %v2418, 20
        %v2880 = vpop.permute.xlu0 %2879
        %vm2897 = vcmask 195744
        %2898 = vst.msk [vmem:[#allocation3] sm:$0xff] %vm2897, %v2850
        %2899 = vst.msk [vmem:[#allocation3 + $0x8] sm:$0xff] %vm2897, %v2852
        %2900 = vst.msk [vmem:[#allocation3 + $0x10] sm:$0xff] %vm2897, %v2854
        %2901 = vst.msk [vmem:[#allocation3 + $0x18] sm:$0xff] %vm2897, %v2856
        %2902 = vst.msk [vmem:[#allocation3 + $0x20] sm:$0xff] %vm2897, %v2858
        %2903 = vst.msk [vmem:[#allocation3 + $0x28] sm:$0xff] %vm2897, %v2860
        %2904 = vst.msk [vmem:[#allocation3 + $0x30] sm:$0xff] %vm2897, %v2862
        %2905 = vst.msk [vmem:[#allocation3 + $0x38] sm:$0xff] %vm2897, %v2864
        %2906 = vst.msk [vmem:[#allocation3 + $0x40] sm:$0xff] %vm2897, %v2866
        %2907 = vst.msk [vmem:[#allocation3 + $0x48] sm:$0xff] %vm2897, %v2868
        %2908 = vst.msk [vmem:[#allocation3 + $0x50] sm:$0xff] %vm2897, %v2870
        %2909 = vst.msk [vmem:[#allocation3 + $0x58] sm:$0xff] %vm2897, %v2872
        %2910 = vst.msk [vmem:[#allocation3 + $0x60] sm:$0xff] %vm2897, %v2874
        %2911 = vst.msk [vmem:[#allocation3 + $0x68] sm:$0xff] %vm2897, %v2876
        %2912 = vst.msk [vmem:[#allocation3 + $0x70] sm:$0xff] %vm2897, %v2878
        %2913 = vst.msk [vmem:[#allocation3 + $0x78] sm:$0xff] %vm2897, %v2880
        %2916 = vrot.lane.b32.xlu0 %v2505, 24
        %v2917 = vpop.permute.xlu0 %2916
        %2918 = vrot.lane.b32.xlu0 %v2506, 24
        %v2919 = vpop.permute.xlu0 %2918
        %2920 = vrot.lane.b32.xlu0 %v2507, 24
        %v2921 = vpop.permute.xlu0 %2920
        %2922 = vrot.lane.b32.xlu0 %v2508, 24
        %v2923 = vpop.permute.xlu0 %2922
        %2924 = vrot.lane.b32.xlu0 %v2509, 24
        %v2925 = vpop.permute.xlu0 %2924
        %2926 = vrot.lane.b32.xlu0 %v2510, 24
        %v2927 = vpop.permute.xlu0 %2926
        %2928 = vrot.lane.b32.xlu0 %v2511, 24
        %v2929 = vpop.permute.xlu0 %2928
        %2930 = vrot.lane.b32.xlu0 %v2512, 24
        %v2931 = vpop.permute.xlu0 %2930
        %2932 = vrot.lane.b32.xlu0 %v2513, 24
        %v2933 = vpop.permute.xlu0 %2932
        %2934 = vrot.lane.b32.xlu0 %v2514, 24
        %v2935 = vpop.permute.xlu0 %2934
        %2936 = vrot.lane.b32.xlu0 %v2515, 24
        %v2937 = vpop.permute.xlu0 %2936
        %2938 = vrot.lane.b32.xlu0 %v2516, 24
        %v2939 = vpop.permute.xlu0 %2938
        %2940 = vrot.lane.b32.xlu0 %v2517, 24
        %v2941 = vpop.permute.xlu0 %2940
        %2942 = vrot.lane.b32.xlu0 %v2518, 24
        %v2943 = vpop.permute.xlu0 %2942
        %2944 = vrot.lane.b32.xlu0 %v2519, 24
        %v2945 = vpop.permute.xlu0 %2944
        %2946 = vrot.lane.b32.xlu0 %v2520, 24
        %v2947 = vpop.permute.xlu0 %2946
        %vm2964 = vcmask 228544
        %2965 = vst.msk [vmem:[#allocation3] sm:$0xff] %vm2964, %v2917
        %2966 = vst.msk [vmem:[#allocation3 + $0x8] sm:$0xff] %vm2964, %v2919
        %2967 = vst.msk [vmem:[#allocation3 + $0x10] sm:$0xff] %vm2964, %v2921
        %2968 = vst.msk [vmem:[#allocation3 + $0x18] sm:$0xff] %vm2964, %v2923
        %2969 = vst.msk [vmem:[#allocation3 + $0x20] sm:$0xff] %vm2964, %v2925
        %2970 = vst.msk [vmem:[#allocation3 + $0x28] sm:$0xff] %vm2964, %v2927
        %2971 = vst.msk [vmem:[#allocation3 + $0x30] sm:$0xff] %vm2964, %v2929
        %2972 = vst.msk [vmem:[#allocation3 + $0x38] sm:$0xff] %vm2964, %v2931
        %2973 = vst.msk [vmem:[#allocation3 + $0x40] sm:$0xff] %vm2964, %v2933
        %2974 = vst.msk [vmem:[#allocation3 + $0x48] sm:$0xff] %vm2964, %v2935
        %2975 = vst.msk [vmem:[#allocation3 + $0x50] sm:$0xff] %vm2964, %v2937
        %2976 = vst.msk [vmem:[#allocation3 + $0x58] sm:$0xff] %vm2964, %v2939
        %2977 = vst.msk [vmem:[#allocation3 + $0x60] sm:$0xff] %vm2964, %v2941
        %2978 = vst.msk [vmem:[#allocation3 + $0x68] sm:$0xff] %vm2964, %v2943
        %2979 = vst.msk [vmem:[#allocation3 + $0x70] sm:$0xff] %vm2964, %v2945
        %2980 = vst.msk [vmem:[#allocation3 + $0x78] sm:$0xff] %vm2964, %v2947
        %2983 = vrot.lane.b32.xlu0 %v2305, 28
        %v2984 = vpop.permute.xlu0 %2983
        %2985 = vrot.lane.b32.xlu0 %v2306, 28
        %v2986 = vpop.permute.xlu0 %2985
        %2987 = vrot.lane.b32.xlu0 %v2307, 28
        %v2988 = vpop.permute.xlu0 %2987
        %2989 = vrot.lane.b32.xlu0 %v2308, 28
        %v2990 = vpop.permute.xlu0 %2989
        %2991 = vrot.lane.b32.xlu0 %v2309, 28
        %v2992 = vpop.permute.xlu0 %2991
        %2993 = vrot.lane.b32.xlu0 %v2310, 28
        %v2994 = vpop.permute.xlu0 %2993
        %2995 = vrot.lane.b32.xlu0 %v2311, 28
        %v2996 = vpop.permute.xlu0 %2995
        %2997 = vrot.lane.b32.xlu0 %v2312, 28
        %v2998 = vpop.permute.xlu0 %2997
        %2999 = vrot.lane.b32.xlu0 %v2313, 28
        %v3000 = vpop.permute.xlu0 %2999
        %3001 = vrot.lane.b32.xlu0 %v2314, 28
        %v3002 = vpop.permute.xlu0 %3001
        %3003 = vrot.lane.b32.xlu0 %v2315, 28
        %v3004 = vpop.permute.xlu0 %3003
        %3005 = vrot.lane.b32.xlu0 %v2316, 28
        %v3006 = vpop.permute.xlu0 %3005
        %3007 = vrot.lane.b32.xlu0 %v2317, 28
        %v3008 = vpop.permute.xlu0 %3007
        %3009 = vrot.lane.b32.xlu0 %v2318, 28
        %v3010 = vpop.permute.xlu0 %3009
        %3011 = vrot.lane.b32.xlu0 %v2319, 28
        %v3012 = vpop.permute.xlu0 %3011
        %3013 = vrot.lane.b32.xlu0 %v2320, 28
        %v3014 = vpop.permute.xlu0 %3013
        %vm3031 = vcmask 261344
        %3032 = vst.msk [vmem:[#allocation3] sm:$0xff] %vm3031, %v2984
        %3033 = vst.msk [vmem:[#allocation3 + $0x8] sm:$0xff] %vm3031, %v2986
        %3034 = vst.msk [vmem:[#allocation3 + $0x10] sm:$0xff] %vm3031, %v2988
        %3035 = vst.msk [vmem:[#allocation3 + $0x18] sm:$0xff] %vm3031, %v2990
        %3036 = vst.msk [vmem:[#allocation3 + $0x20] sm:$0xff] %vm3031, %v2992
        %3037 = vst.msk [vmem:[#allocation3 + $0x28] sm:$0xff] %vm3031, %v2994
        %3038 = vst.msk [vmem:[#allocation3 + $0x30] sm:$0xff] %vm3031, %v2996
        %3039 = vst.msk [vmem:[#allocation3 + $0x38] sm:$0xff] %vm3031, %v2998
        %3040 = vst.msk [vmem:[#allocation3 + $0x40] sm:$0xff] %vm3031, %v3000
        %3041 = vst.msk [vmem:[#allocation3 + $0x48] sm:$0xff] %vm3031, %v3002
        %3042 = vst.msk [vmem:[#allocation3 + $0x50] sm:$0xff] %vm3031, %v3004
        %3043 = vst.msk [vmem:[#allocation3 + $0x58] sm:$0xff] %vm3031, %v3006
        %3044 = vst.msk [vmem:[#allocation3 + $0x60] sm:$0xff] %vm3031, %v3008
        %3045 = vst.msk [vmem:[#allocation3 + $0x68] sm:$0xff] %vm3031, %v3010
        %3046 = vst.msk [vmem:[#allocation3 + $0x70] sm:$0xff] %vm3031, %v3012
        %3047 = vst.msk [vmem:[#allocation3 + $0x78] sm:$0xff] %vm3031, %v3014
        %3050 = vrot.lane.b32.xlu0 %v2405, 32
        %v3051 = vpop.permute.xlu0 %3050
        %3052 = vrot.lane.b32.xlu0 %v2406, 32
        %v3053 = vpop.permute.xlu0 %3052
        %3054 = vrot.lane.b32.xlu0 %v2407, 32
        %v3055 = vpop.permute.xlu0 %3054
        %3056 = vrot.lane.b32.xlu0 %v2408, 32
        %v3057 = vpop.permute.xlu0 %3056
        %3058 = vrot.lane.b32.xlu0 %v2409, 32
        %v3059 = vpop.permute.xlu0 %3058
        %3060 = vrot.lane.b32.xlu0 %v2410, 32
        %v3061 = vpop.permute.xlu0 %3060
        %3062 = vrot.lane.b32.xlu0 %v2411, 32
        %v3063 = vpop.permute.xlu0 %3062
        %3064 = vrot.lane.b32.xlu0 %v2412, 32
        %v3065 = vpop.permute.xlu0 %3064
        %3066 = vrot.lane.b32.xlu0 %v2413, 32
        %v3067 = vpop.permute.xlu0 %3066
        %3068 = vrot.lane.b32.xlu0 %v2414, 32
        %v3069 = vpop.permute.xlu0 %3068
        %3070 = vrot.lane.b32.xlu0 %v2415, 32
        %v3071 = vpop.permute.xlu0 %3070
        %3072 = vrot.lane.b32.xlu0 %v2416, 32
        %v3073 = vpop.permute.xlu0 %3072
        %3074 = vrot.lane.b32.xlu0 %v2417, 32
        %v3075 = vpop.permute.xlu0 %3074
        %3076 = vrot.lane.b32.xlu0 %v2418, 32
        %v3077 = vpop.permute.xlu0 %3076
        %3078 = vrot.lane.b32.xlu0 %v2419, 32
        %v3079 = vpop.permute.xlu0 %3078
        %3080 = vrot.lane.b32.xlu0 %v2420, 32
        %v3081 = vpop.permute.xlu0 %3080
        %vm3098 = vcmask 294144
        %3099 = vst.msk [vmem:[#allocation3] sm:$0xff] %vm3098, %v3051
        %3100 = vst.msk [vmem:[#allocation3 + $0x8] sm:$0xff] %vm3098, %v3053
        %3101 = vst.msk [vmem:[#allocation3 + $0x10] sm:$0xff] %vm3098, %v3055
        %3102 = vst.msk [vmem:[#allocation3 + $0x18] sm:$0xff] %vm3098, %v3057
        %3103 = vst.msk [vmem:[#allocation3 + $0x20] sm:$0xff] %vm3098, %v3059
        %3104 = vst.msk [vmem:[#allocation3 + $0x28] sm:$0xff] %vm3098, %v3061
        %3105 = vst.msk [vmem:[#allocation3 + $0x30] sm:$0xff] %vm3098, %v3063
        %3106 = vst.msk [vmem:[#allocation3 + $0x38] sm:$0xff] %vm3098, %v3065
        %3107 = vst.msk [vmem:[#allocation3 + $0x40] sm:$0xff] %vm3098, %v3067
        %3108 = vst.msk [vmem:[#allocation3 + $0x48] sm:$0xff] %vm3098, %v3069
        %3109 = vst.msk [vmem:[#allocation3 + $0x50] sm:$0xff] %vm3098, %v3071
        %3110 = vst.msk [vmem:[#allocation3 + $0x58] sm:$0xff] %vm3098, %v3073
        %3111 = vst.msk [vmem:[#allocation3 + $0x60] sm:$0xff] %vm3098, %v3075
        %3112 = vst.msk [vmem:[#allocation3 + $0x68] sm:$0xff] %vm3098, %v3077
        %3113 = vst.msk [vmem:[#allocation3 + $0x70] sm:$0xff] %vm3098, %v3079
        %3114 = vst.msk [vmem:[#allocation3 + $0x78] sm:$0xff] %vm3098, %v3081
        %v3115 = vld [vmem:[#allocation3] sm:$0xff]
        %v3116 = vld [vmem:[#allocation3 + $0x8] sm:$0xff]
        %v3117 = vld [vmem:[#allocation3 + $0x10] sm:$0xff]
        %v3118 = vld [vmem:[#allocation3 + $0x18] sm:$0xff]
        %v3119 = vld [vmem:[#allocation3 + $0x20] sm:$0xff]
        %v3120 = vld [vmem:[#allocation3 + $0x28] sm:$0xff]
        %v3121 = vld [vmem:[#allocation3 + $0x30] sm:$0xff]
        %v3122 = vld [vmem:[#allocation3 + $0x38] sm:$0xff]
        %v3123 = vld [vmem:[#allocation3 + $0x40] sm:$0xff]
        %v3124 = vld [vmem:[#allocation3 + $0x48] sm:$0xff]
        %v3125 = vld [vmem:[#allocation3 + $0x50] sm:$0xff]
        %v3126 = vld [vmem:[#allocation3 + $0x58] sm:$0xff]
        %v3127 = vld [vmem:[#allocation3 + $0x60] sm:$0xff]
        %v3128 = vld [vmem:[#allocation3 + $0x68] sm:$0xff]
        %v3129 = vld [vmem:[#allocation3 + $0x70] sm:$0xff]
        %v3130 = vld [vmem:[#allocation3 + $0x78] sm:$0xff]
        %v3132 = vlaneseq
        %v3133 = vshrl.u32 %v3132, 7
        %v3134 = vsub.s32 0, %v3133
        %v3135 = vrot.slane %v2260, %v3134
        %v3142 = vunpack.c.l.b16 %v2255
        %v3143 = vunpack.c.l.b16 %v2256
        %v3144 = vunpack.c.l.b16 %v2257
        %v3145 = vunpack.c.l.b16 %v2258
        %v3146 = vunpack.c.l.b16 %v2259
        %v3147 = vpack.c.b16 %v3143, %v3142
        %v3148 = vpack.c.b16 %v3145, %v3144
        %v3149 = vpack.c.b16 %v3146, %v3146
        %vm3152 = vcmask 293888
        %v3154 = vsel %vm3152, %v3115, 0
        %v3157 = vsel %vm3152, %v3116, 0
        %v3160 = vsel %vm3152, %v3117, 0
        %v3163 = vsel %vm3152, %v3118, 0
        %v3166 = vsel %vm3152, %v3119, 0
        %v3169 = vsel %vm3152, %v3120, 0
        %v3172 = vsel %vm3152, %v3121, 0
        %v3175 = vsel %vm3152, %v3122, 0
        %v3178 = vsel %vm3152, %v3123, 0
        %v3181 = vsel %vm3152, %v3124, 0
        %v3184 = vsel %vm3152, %v3125, 0
        %v3187 = vsel %vm3152, %v3126, 0
        %v3190 = vsel %vm3152, %v3127, 0
        %v3193 = vsel %vm3152, %v3128, 0
        %v3196 = vsel %vm3152, %v3129, 0
        %v3199 = vsel %vm3152, %v3130, 0
        %vm3201 = vcmask 1041408
        %v3203 = vsel %vm3201, %v3149, 0
        %3205 = vmatprep.subr.bf16.mxu0 0
        %3206 = vmatpush1.bf16.msra.mxu0 %v3147
        %3207 = vmatprep.subr.bf16.mxu0 0
        %3208 = vmatpush1.bf16.msra.mxu0 %v3148
        %3209 = vmatprep.subr.bf16.mxu0 0
        %3210 = vmatpush1.bf16.msra.mxu0 %v3203
        %3211 = vmatprep.subr.bf16.mxu0 0
        %3212 = vmatpush1.bf16.msra.mxu0 0
        %3213 = vmatprep.subr.bf16.mxu0 0
        %3214 = vmatpush1.bf16.msra.mxu0 0
        %3215 = vmatprep.subr.bf16.mxu0 0
        %3216 = vmatpush1.bf16.msra.mxu0 0
        %3217 = vmatprep.subr.bf16.mxu0 0
        %3218 = vmatpush1.bf16.msra.mxu0 0
        %3219 = vmatprep.subr.bf16.mxu0 0
        %3220 = vmatpush1.bf16.msra.mxu0 0
        %3221 = vmatprep.subr.bf16.mxu0 0
        %3222 = vmatpush1.bf16.msra.mxu0 0
        %3223 = vmatprep.subr.bf16.mxu0 0
        %3224 = vmatpush1.bf16.msra.mxu0 0
        %3225 = vmatprep.subr.bf16.mxu0 0
        %3226 = vmatpush1.bf16.msra.mxu0 0
        %3227 = vmatprep.subr.bf16.mxu0 0
        %3228 = vmatpush1.bf16.msra.mxu0 0
        %3229 = vmatprep.subr.bf16.mxu0 0
        %3230 = vmatpush1.bf16.msra.mxu0 0
        %3231 = vmatprep.subr.bf16.mxu0 0
        %3232 = vmatpush1.bf16.msra.mxu0 0
        %3233 = vmatprep.subr.bf16.mxu0 0
        %3234 = vmatpush1.bf16.msra.mxu0 0
        %3235 = vmatprep.subr.bf16.mxu0 0
        %3236 = vmatpush1.bf16.msra.mxu0 0
        %3237 = vmatprep.mubr.bf16.mxu0 0
        %3238 = vmatmul.mubr.bf16.gmra.mrb[0].mxu0 %v3154
        %v3239 = vpop.f32.mrb[0].mxu0
        %v3240 = vadd.f32 %v3135, %v3239
        %v3241 = vpop.f32.mrb[0].mxu0
        %v3242 = vpop.f32.mrb[0].mxu0
        %v3243 = vadd.f32 %v3135, %v3242
        %v3244 = vpop.f32.mrb[0].mxu0
        %3245 = vmatprep.mubr.bf16.mxu0 0
        %3246 = vmatmul.mubr.bf16.gmra.mrb[0].mxu0 %v3157
        %v3247 = vpop.f32.mrb[0].mxu0
        %v3248 = vadd.f32 %v3135, %v3247
        %v3249 = vpop.f32.mrb[0].mxu0
        %v3250 = vpop.f32.mrb[0].mxu0
        %v3251 = vadd.f32 %v3135, %v3250
        %v3252 = vpop.f32.mrb[0].mxu0
        %3253 = vmatprep.mubr.bf16.mxu0 0
        %3254 = vmatmul.mubr.bf16.gmra.mrb[0].mxu0 %v3160
        %v3255 = vpop.f32.mrb[0].mxu0
        %v3256 = vadd.f32 %v3135, %v3255
        %v3257 = vpop.f32.mrb[0].mxu0
        %v3258 = vpop.f32.mrb[0].mxu0
        %v3259 = vadd.f32 %v3135, %v3258
        %v3260 = vpop.f32.mrb[0].mxu0
        %3261 = vmatprep.mubr.bf16.mxu0 0
        %3262 = vmatmul.mubr.bf16.gmra.mrb[0].mxu0 %v3163
        %v3263 = vpop.f32.mrb[0].mxu0
        %v3264 = vadd.f32 %v3135, %v3263
        %v3265 = vpop.f32.mrb[0].mxu0
        %v3266 = vpop.f32.mrb[0].mxu0
        %v3267 = vadd.f32 %v3135, %v3266
        %v3268 = vpop.f32.mrb[0].mxu0
        %3269 = vmatprep.mubr.bf16.mxu0 0
        %3270 = vmatmul.mubr.bf16.gmra.mrb[0].mxu0 %v3166
        %v3271 = vpop.f32.mrb[0].mxu0
        %v3272 = vadd.f32 %v3135, %v3271
        %v3273 = vpop.f32.mrb[0].mxu0
        %v3274 = vpop.f32.mrb[0].mxu0
        %v3275 = vadd.f32 %v3135, %v3274
        %v3276 = vpop.f32.mrb[0].mxu0
        %3277 = vmatprep.mubr.bf16.mxu0 0
        %3278 = vmatmul.mubr.bf16.gmra.mrb[0].mxu0 %v3169
        %v3279 = vpop.f32.mrb[0].mxu0
        %v3280 = vadd.f32 %v3135, %v3279
        %v3281 = vpop.f32.mrb[0].mxu0
        %v3282 = vpop.f32.mrb[0].mxu0
        %v3283 = vadd.f32 %v3135, %v3282
        %v3284 = vpop.f32.mrb[0].mxu0
        %3285 = vmatprep.mubr.bf16.mxu0 0
        %3286 = vmatmul.mubr.bf16.gmra.mrb[0].mxu0 %v3172
        %v3287 = vpop.f32.mrb[0].mxu0
        %v3288 = vadd.f32 %v3135, %v3287
        %v3289 = vpop.f32.mrb[0].mxu0
        %v3290 = vpop.f32.mrb[0].mxu0
        %v3291 = vadd.f32 %v3135, %v3290
        %v3292 = vpop.f32.mrb[0].mxu0
        %3293 = vmatprep.mubr.bf16.mxu0 0
        %3294 = vmatmul.mubr.bf16.gmra.mrb[0].mxu0 %v3175
        %v3295 = vpop.f32.mrb[0].mxu0
        %v3296 = vadd.f32 %v3135, %v3295
        %v3297 = vpop.f32.mrb[0].mxu0
        %v3298 = vpop.f32.mrb[0].mxu0
        %v3299 = vadd.f32 %v3135, %v3298
        %v3300 = vpop.f32.mrb[0].mxu0
        %3301 = vmatprep.mubr.bf16.mxu0 0
        %3302 = vmatmul.mubr.bf16.gmra.mrb[0].mxu0 %v3178
        %v3303 = vpop.f32.mrb[0].mxu0
        %v3304 = vadd.f32 %v3135, %v3303
        %v3305 = vpop.f32.mrb[0].mxu0
        %v3306 = vpop.f32.mrb[0].mxu0
        %v3307 = vadd.f32 %v3135, %v3306
        %v3308 = vpop.f32.mrb[0].mxu0
        %3309 = vmatprep.mubr.bf16.mxu0 0
        %3310 = vmatmul.mubr.bf16.gmra.mrb[0].mxu0 %v3181
        %v3311 = vpop.f32.mrb[0].mxu0
        %v3312 = vadd.f32 %v3135, %v3311
        %v3313 = vpop.f32.mrb[0].mxu0
        %v3314 = vpop.f32.mrb[0].mxu0
        %v3315 = vadd.f32 %v3135, %v3314
        %v3316 = vpop.f32.mrb[0].mxu0
        %3317 = vmatprep.mubr.bf16.mxu0 0
        %3318 = vmatmul.mubr.bf16.gmra.mrb[0].mxu0 %v3184
        %v3319 = vpop.f32.mrb[0].mxu0
        %v3320 = vadd.f32 %v3135, %v3319
        %v3321 = vpop.f32.mrb[0].mxu0
        %v3322 = vpop.f32.mrb[0].mxu0
        %v3323 = vadd.f32 %v3135, %v3322
        %v3324 = vpop.f32.mrb[0].mxu0
        %3325 = vmatprep.mubr.bf16.mxu0 0
        %3326 = vmatmul.mubr.bf16.gmra.mrb[0].mxu0 %v3187
        %v3327 = vpop.f32.mrb[0].mxu0
        %v3328 = vadd.f32 %v3135, %v3327
        %v3329 = vpop.f32.mrb[0].mxu0
        %v3330 = vpop.f32.mrb[0].mxu0
        %v3331 = vadd.f32 %v3135, %v3330
        %v3332 = vpop.f32.mrb[0].mxu0
        %3333 = vmatprep.mubr.bf16.mxu0 0
        %3334 = vmatmul.mubr.bf16.gmra.mrb[0].mxu0 %v3190
        %v3335 = vpop.f32.mrb[0].mxu0
        %v3336 = vadd.f32 %v3135, %v3335
        %v3337 = vpop.f32.mrb[0].mxu0
        %v3338 = vpop.f32.mrb[0].mxu0
        %v3339 = vadd.f32 %v3135, %v3338
        %v3340 = vpop.f32.mrb[0].mxu0
        %3341 = vmatprep.mubr.bf16.mxu0 0
        %3342 = vmatmul.mubr.bf16.gmra.mrb[0].mxu0 %v3193
        %v3343 = vpop.f32.mrb[0].mxu0
        %v3344 = vadd.f32 %v3135, %v3343
        %v3345 = vpop.f32.mrb[0].mxu0
        %v3346 = vpop.f32.mrb[0].mxu0
        %v3347 = vadd.f32 %v3135, %v3346
        %v3348 = vpop.f32.mrb[0].mxu0
        %3349 = vmatprep.mubr.bf16.mxu0 0
        %3350 = vmatmul.mubr.bf16.gmra.mrb[0].mxu0 %v3196
        %v3351 = vpop.f32.mrb[0].mxu0
        %v3352 = vadd.f32 %v3135, %v3351
        %v3353 = vpop.f32.mrb[0].mxu0
        %v3354 = vpop.f32.mrb[0].mxu0
        %v3355 = vadd.f32 %v3135, %v3354
        %v3356 = vpop.f32.mrb[0].mxu0
        %3357 = vmatprep.mubr.bf16.mxu0 0
        %3358 = vmatmul.mubr.bf16.gmra.mrb[0].mxu0 %v3199
        %v3359 = vpop.f32.mrb[0].mxu0
        %v3360 = vadd.f32 %v3135, %v3359
        %v3361 = vpop.f32.mrb[0].mxu0
        %v3362 = vpop.f32.mrb[0].mxu0
        %v3363 = vadd.f32 %v3135, %v3362
        %v3364 = vpop.f32.mrb[0].mxu0
        %3365 = vdwg.mxu0
        %v3366 = vmax.f32 %v3240, 0.0
        %v3367 = vmax.f32 %v3243, 0.0
        %v3368 = vmax.f32 %v3248, 0.0
        %v3369 = vmax.f32 %v3251, 0.0
        %v3370 = vmax.f32 %v3256, 0.0
        %v3371 = vmax.f32 %v3259, 0.0
        %v3372 = vmax.f32 %v3264, 0.0
        %v3373 = vmax.f32 %v3267, 0.0
        %v3374 = vmax.f32 %v3272, 0.0
        %v3375 = vmax.f32 %v3275, 0.0
        %v3376 = vmax.f32 %v3280, 0.0
        %v3377 = vmax.f32 %v3283, 0.0
        %v3378 = vmax.f32 %v3288, 0.0
        %v3379 = vmax.f32 %v3291, 0.0
        %v3380 = vmax.f32 %v3296, 0.0
        %v3381 = vmax.f32 %v3299, 0.0
        %v3382 = vmax.f32 %v3304, 0.0
        %v3383 = vmax.f32 %v3307, 0.0
        %v3384 = vmax.f32 %v3312, 0.0
        %v3385 = vmax.f32 %v3315, 0.0
        %v3386 = vmax.f32 %v3320, 0.0
        %v3387 = vmax.f32 %v3323, 0.0
        %v3388 = vmax.f32 %v3328, 0.0
        %v3389 = vmax.f32 %v3331, 0.0
        %v3390 = vmax.f32 %v3336, 0.0
        %v3391 = vmax.f32 %v3339, 0.0
        %v3392 = vmax.f32 %v3344, 0.0
        %v3393 = vmax.f32 %v3347, 0.0
        %v3394 = vmax.f32 %v3352, 0.0
        %v3395 = vmax.f32 %v3355, 0.0
        %v3396 = vmax.f32 %v3360, 0.0
        %v3397 = vmax.f32 %v3363, 0.0
        %3398 = vst.msk [vmem:[#allocation2 + $0x30] sm:$0xff] %vm846, %v3366
        %3399 = vst.msk [vmem:[#allocation2 + $0x38] sm:$0xff] %vm846, %v3367
        %3400 = vst.msk [vmem:[#allocation2 + $0x40] sm:$0xff] %vm846, %v3368
        %3401 = vst.msk [vmem:[#allocation2 + $0x48] sm:$0xff] %vm846, %v3369
        %3402 = vst.msk [vmem:[#allocation2 + $0x50] sm:$0xff] %vm846, %v3370
        %3403 = vst.msk [vmem:[#allocation2 + $0x58] sm:$0xff] %vm846, %v3371
        %3404 = vst.msk [vmem:[#allocation2 + $0x60] sm:$0xff] %vm846, %v3372
        %3405 = vst.msk [vmem:[#allocation2 + $0x68] sm:$0xff] %vm846, %v3373
        %3406 = vst.msk [vmem:[#allocation2 + $0x70] sm:$0xff] %vm846, %v3374
        %3407 = vst.msk [vmem:[#allocation2 + $0x78] sm:$0xff] %vm846, %v3375
        %3408 = vst.msk [vmem:[#allocation2 + $0x80] sm:$0xff] %vm846, %v3376
        %3409 = vst.msk [vmem:[#allocation2 + $0x88] sm:$0xff] %vm846, %v3377
        %3410 = vst.msk [vmem:[#allocation2 + $0x90] sm:$0xff] %vm846, %v3378
        %3411 = vst.msk [vmem:[#allocation2 + $0x98] sm:$0xff] %vm846, %v3379
        %3412 = vst.msk [vmem:[#allocation2 + $0xa0] sm:$0xff] %vm846, %v3380
        %3413 = vst.msk [vmem:[#allocation2 + $0xa8] sm:$0xff] %vm846, %v3381
        %3414 = vst.msk [vmem:[#allocation2 + $0xb0] sm:$0xff] %vm846, %v3382
        %3415 = vst.msk [vmem:[#allocation2 + $0xb8] sm:$0xff] %vm846, %v3383
        %3416 = vst.msk [vmem:[#allocation2 + $0xc0] sm:$0xff] %vm846, %v3384
        %3417 = vst.msk [vmem:[#allocation2 + $0xc8] sm:$0xff] %vm846, %v3385
        %3418 = vst.msk [vmem:[#allocation2 + $0xd0] sm:$0xff] %vm846, %v3386
        %3419 = vst.msk [vmem:[#allocation2 + $0xd8] sm:$0xff] %vm846, %v3387
        %3420 = vst.msk [vmem:[#allocation2 + $0xe0] sm:$0xff] %vm846, %v3388
        %3421 = vst.msk [vmem:[#allocation2 + $0xe8] sm:$0xff] %vm846, %v3389
        %3422 = vst.msk [vmem:[#allocation2 + $0xf0] sm:$0xff] %vm846, %v3390
        %3423 = vst.msk [vmem:[#allocation2 + $0xf8] sm:$0xff] %vm846, %v3391
        %3424 = vst.msk [vmem:[#allocation2 + $0x100] sm:$0xff] %vm846, %v3392
        %3425 = vst.msk [vmem:[#allocation2 + $0x108] sm:$0xff] %vm846, %v3393
        %3426 = vst.msk [vmem:[#allocation2 + $0x110] sm:$0xff] %vm846, %v3394
        %3427 = vst.msk [vmem:[#allocation2 + $0x118] sm:$0xff] %vm846, %v3395
        %3428 = vst.msk [vmem:[#allocation2 + $0x120] sm:$0xff] %vm846, %v3396
        %3429 = vst.msk [vmem:[#allocation2 + $0x128] sm:$0xff] %vm846, %v3397
        %s3430 = scalar_lea.vmem %s3, 20
        %v3431 = vld [vmem:[%s3430] sm:$0xf]
        %v3432 = vld [vmem:[%s3430 + $0x4] sm:$0xf]
        %v3433 = vld [vmem:[%s3430 + $0x8] sm:$0xf]
        %v3434 = vld [vmem:[%s3430 + $0xc] sm:$0xf]
        %v3435 = vld [vmem:[%s3430 + $0x10] sm:$0x3]
        %s3436 = scalar_lea.vmem %s4, 1
        %v3437 = vld [vmem:[%s3436] sm:$0x1]
        %v3438 = vld [vmem:[#allocation2 + $0x10] sm:$0xff]
        %v3439 = vld [vmem:[#allocation2 + $0x18] sm:$0xff]
        %v3440 = vld [vmem:[#allocation2 + $0x20] sm:$0xff]
        %v3441 = vld [vmem:[#allocation2 + $0x28] sm:$0xff]
        %v3442 = vld [vmem:[#allocation2 + $0x30] sm:$0xff]
        %v3443 = vld [vmem:[#allocation2 + $0x38] sm:$0xff]
        %v3444 = vld [vmem:[#allocation2 + $0x40] sm:$0xff]
        %v3445 = vld [vmem:[#allocation2 + $0x48] sm:$0xff]
        %v3446 = vld [vmem:[#allocation2 + $0x50] sm:$0xff]
        %v3447 = vld [vmem:[#allocation2 + $0x58] sm:$0xff]
        %v3448 = vld [vmem:[#allocation2 + $0x60] sm:$0xff]
        %v3449 = vld [vmem:[#allocation2 + $0x68] sm:$0xff]
        %v3450 = vld [vmem:[#allocation2 + $0x70] sm:$0xff]
        %v3451 = vld [vmem:[#allocation2 + $0x78] sm:$0xff]
        %v3452 = vld [vmem:[#allocation2 + $0x80] sm:$0xff]
        %v3453 = vld [vmem:[#allocation2 + $0x88] sm:$0xff]
        %v3454 = vld [vmem:[#allocation2 + $0x90] sm:$0xff]
        %v3455 = vld [vmem:[#allocation2 + $0x98] sm:$0xff]
        %v3456 = vld [vmem:[#allocation2 + $0xa0] sm:$0xff]
        %v3457 = vld [vmem:[#allocation2 + $0xa8] sm:$0xff]
        %v3458 = vld [vmem:[#allocation2 + $0xb0] sm:$0xff]
        %v3459 = vld [vmem:[#allocation2 + $0xb8] sm:$0xff]
        %v3460 = vld [vmem:[#allocation2 + $0xc0] sm:$0xff]
        %v3461 = vld [vmem:[#allocation2 + $0xc8] sm:$0xff]
        %v3462 = vld [vmem:[#allocation2 + $0xd0] sm:$0xff]
        %v3463 = vld [vmem:[#allocation2 + $0xd8] sm:$0xff]
        %v3464 = vld [vmem:[#allocation2 + $0xe0] sm:$0xff]
        %v3465 = vld [vmem:[#allocation2 + $0xe8] sm:$0xff]
        %v3466 = vld [vmem:[#allocation2 + $0xf0] sm:$0xff]
        %v3467 = vld [vmem:[#allocation2 + $0xf8] sm:$0xff]
        %v3468 = vld [vmem:[#allocation2 + $0x100] sm:$0xff]
        %v3469 = vld [vmem:[#allocation2 + $0x108] sm:$0xff]
        %v3470 = vld [vmem:[#allocation2 + $0x110] sm:$0xff]
        %v3471 = vld [vmem:[#allocation2 + $0x118] sm:$0xff]
        %v3472 = vld [vmem:[#allocation2 + $0x120] sm:$0xff]
        %v3473 = vld [vmem:[#allocation2 + $0x128] sm:$0xff]
        %v3474 = vld [vmem:[#allocation2 + $0x130] sm:$0xff]
        %v3475 = vld [vmem:[#allocation2 + $0x138] sm:$0xff]
        %v3476 = vld [vmem:[#allocation2 + $0x140] sm:$0xff]
        %v3477 = vld [vmem:[#allocation2 + $0x148] sm:$0xff]
        %v3478 = vpack.c.bf16 %v3439, %v3438
        %v3479 = vpack.c.bf16 %v3441, %v3440
        %v3480 = vpack.c.bf16 %v3443, %v3442
        %v3481 = vpack.c.bf16 %v3445, %v3444
        %v3482 = vpack.c.bf16 %v3447, %v3446
        %v3483 = vpack.c.bf16 %v3449, %v3448
        %v3484 = vpack.c.bf16 %v3451, %v3450
        %v3485 = vpack.c.bf16 %v3453, %v3452
        %v3486 = vpack.c.bf16 %v3455, %v3454
        %v3487 = vpack.c.bf16 %v3457, %v3456
        %v3488 = vpack.c.bf16 %v3459, %v3458
        %v3489 = vpack.c.bf16 %v3461, %v3460
        %v3490 = vpack.c.bf16 %v3463, %v3462
        %v3491 = vpack.c.bf16 %v3465, %v3464
        %v3492 = vpack.c.bf16 %v3467, %v3466
        %v3493 = vpack.c.bf16 %v3469, %v3468
        %v3494 = vpack.c.bf16 %v3471, %v3470
        %v3495 = vpack.c.bf16 %v3473, %v3472
        %v3496 = vpack.c.bf16 %v3475, %v3474
        %v3497 = vpack.c.bf16 %v3477, %v3476
        %v3498 = vld [vmem:[#allocation2 + $0x12] sm:$0xff]
        %v3499 = vld [vmem:[#allocation2 + $0x1a] sm:$0xff]
        %v3500 = vld [vmem:[#allocation2 + $0x22] sm:$0xff]
        %v3501 = vld [vmem:[#allocation2 + $0x2a] sm:$0xff]
        %v3502 = vld [vmem:[#allocation2 + $0x32] sm:$0xff]
        %v3503 = vld [vmem:[#allocation2 + $0x3a] sm:$0xff]
        %v3504 = vld [vmem:[#allocation2 + $0x42] sm:$0xff]
        %v3505 = vld [vmem:[#allocation2 + $0x4a] sm:$0xff]
        %v3506 = vld [vmem:[#allocation2 + $0x52] sm:$0xff]
        %v3507 = vld [vmem:[#allocation2 + $0x5a] sm:$0xff]
        %v3508 = vld [vmem:[#allocation2 + $0x62] sm:$0xff]
        %v3509 = vld [vmem:[#allocation2 + $0x6a] sm:$0xff]
        %v3510 = vld [vmem:[#allocation2 + $0x72] sm:$0xff]
        %v3511 = vld [vmem:[#allocation2 + $0x7a] sm:$0xff]
        %v3512 = vld [vmem:[#allocation2 + $0x82] sm:$0xff]
        %v3513 = vld [vmem:[#allocation2 + $0x8a] sm:$0xff]
        %v3514 = vld [vmem:[#allocation2 + $0x92] sm:$0xff]
        %v3515 = vld [vmem:[#allocation2 + $0x9a] sm:$0xff]
        %v3516 = vld [vmem:[#allocation2 + $0xa2] sm:$0xff]
        %v3517 = vld [vmem:[#allocation2 + $0xaa] sm:$0xff]
        %v3518 = vld [vmem:[#allocation2 + $0xb2] sm:$0xff]
        %v3519 = vld [vmem:[#allocation2 + $0xba] sm:$0xff]
        %v3520 = vld [vmem:[#allocation2 + $0xc2] sm:$0xff]
        %v3521 = vld [vmem:[#allocation2 + $0xca] sm:$0xff]
        %v3522 = vld [vmem:[#allocation2 + $0xd2] sm:$0xff]
        %v3523 = vld [vmem:[#allocation2 + $0xda] sm:$0xff]
        %v3524 = vld [vmem:[#allocation2 + $0xe2] sm:$0xff]
        %v3525 = vld [vmem:[#allocation2 + $0xea] sm:$0xff]
        %v3526 = vld [vmem:[#allocation2 + $0xf2] sm:$0xff]
        %v3527 = vld [vmem:[#allocation2 + $0xfa] sm:$0xff]
        %v3528 = vld [vmem:[#allocation2 + $0x102] sm:$0xff]
        %v3529 = vld [vmem:[#allocation2 + $0x10a] sm:$0xff]
        %v3530 = vld [vmem:[#allocation2 + $0x112] sm:$0xff]
        %v3531 = vld [vmem:[#allocation2 + $0x11a] sm:$0xff]
        %v3532 = vld [vmem:[#allocation2 + $0x122] sm:$0xff]
        %v3533 = vld [vmem:[#allocation2 + $0x12a] sm:$0xff]
        %v3534 = vld [vmem:[#allocation2 + $0x132] sm:$0xff]
        %v3535 = vld [vmem:[#allocation2 + $0x13a] sm:$0xff]
        %v3536 = vld [vmem:[#allocation2 + $0x142] sm:$0xff]
        %v3537 = vld [vmem:[#allocation2 + $0x14a] sm:$0xff]
        %v3538 = vmul.f32 %v3498, %v2063
        %v3539 = vmul.f32 %v3499, %v2064
        %v3540 = vmul.f32 %v3500, %v2065
        %v3541 = vmul.f32 %v3501, %v2066
        %v3542 = vmul.f32 %v3502, %v2067
        %v3543 = vmul.f32 %v3503, %v2068
        %v3544 = vmul.f32 %v3504, %v2069
        %v3545 = vmul.f32 %v3505, %v2070
        %v3546 = vmul.f32 %v3506, %v2071
        %v3547 = vmul.f32 %v3507, %v2072
        %v3548 = vmul.f32 %v3508, %v2073
        %v3549 = vmul.f32 %v3509, %v2074
        %v3550 = vmul.f32 %v3510, %v2075
        %v3551 = vmul.f32 %v3511, %v2076
        %v3552 = vmul.f32 %v3512, %v2077
        %v3553 = vmul.f32 %v3513, %v2078
        %v3554 = vmul.f32 %v3514, %v2079
        %v3555 = vmul.f32 %v3515, %v2080
        %v3556 = vmul.f32 %v3516, %v2081
        %v3557 = vmul.f32 %v3517, %v2082
        %v3558 = vmul.f32 %v3518, %v2083
        %v3559 = vmul.f32 %v3519, %v2084
        %v3560 = vmul.f32 %v3520, %v2085
        %v3561 = vmul.f32 %v3521, %v2086
        %v3562 = vmul.f32 %v3522, %v2087
        %v3563 = vmul.f32 %v3523, %v2088
        %v3564 = vmul.f32 %v3524, %v2089
        %v3565 = vmul.f32 %v3525, %v2090
        %v3566 = vmul.f32 %v3526, %v2091
        %v3567 = vmul.f32 %v3527, %v2092
        %v3568 = vmul.f32 %v3528, %v2093
        %v3569 = vmul.f32 %v3529, %v2094
        %v3570 = vmul.f32 %v3530, %v2095
        %v3571 = vmul.f32 %v3531, %v2096
        %v3572 = vmul.f32 %v3532, %v2097
        %v3573 = vmul.f32 %v3533, %v2098
        %v3574 = vmul.f32 %v3534, %v2099
        %v3575 = vmul.f32 %v3535, %v2100
        %v3576 = vmul.f32 %v3536, %v2101
        %v3577 = vmul.f32 %v3537, %v2102
        %v3578 = vpack.c.bf16 %v3539, %v3538
        %v3579 = vpack.c.bf16 %v3541, %v3540
        %v3580 = vpack.c.bf16 %v3543, %v3542
        %v3581 = vpack.c.bf16 %v3545, %v3544
        %v3582 = vpack.c.bf16 %v3547, %v3546
        %v3583 = vpack.c.bf16 %v3549, %v3548
        %v3584 = vpack.c.bf16 %v3551, %v3550
        %v3585 = vpack.c.bf16 %v3553, %v3552
        %v3586 = vpack.c.bf16 %v3555, %v3554
        %v3587 = vpack.c.bf16 %v3557, %v3556
        %v3588 = vpack.c.bf16 %v3559, %v3558
        %v3589 = vpack.c.bf16 %v3561, %v3560
        %v3590 = vpack.c.bf16 %v3563, %v3562
        %v3591 = vpack.c.bf16 %v3565, %v3564
        %v3592 = vpack.c.bf16 %v3567, %v3566
        %v3593 = vpack.c.bf16 %v3569, %v3568
        %v3594 = vpack.c.bf16 %v3571, %v3570
        %v3595 = vpack.c.bf16 %v3573, %v3572
        %v3596 = vpack.c.bf16 %v3575, %v3574
        %v3597 = vpack.c.bf16 %v3577, %v3576
        %v3598 = vld [vmem:[#allocation2 + $0xe] sm:$0xff]
        %v3599 = vld [vmem:[#allocation2 + $0x16] sm:$0xff]
        %v3600 = vld [vmem:[#allocation2 + $0x1e] sm:$0xff]
        %v3601 = vld [vmem:[#allocation2 + $0x26] sm:$0xff]
        %v3602 = vld [vmem:[#allocation2 + $0x2e] sm:$0xff]
        %v3603 = vld [vmem:[#allocation2 + $0x36] sm:$0xff]
        %v3604 = vld [vmem:[#allocation2 + $0x3e] sm:$0xff]
        %v3605 = vld [vmem:[#allocation2 + $0x46] sm:$0xff]
        %v3606 = vld [vmem:[#allocation2 + $0x4e] sm:$0xff]
        %v3607 = vld [vmem:[#allocation2 + $0x56] sm:$0xff]
        %v3608 = vld [vmem:[#allocation2 + $0x5e] sm:$0xff]
        %v3609 = vld [vmem:[#allocation2 + $0x66] sm:$0xff]
        %v3610 = vld [vmem:[#allocation2 + $0x6e] sm:$0xff]
        %v3611 = vld [vmem:[#allocation2 + $0x76] sm:$0xff]
        %v3612 = vld [vmem:[#allocation2 + $0x7e] sm:$0xff]
        %v3613 = vld [vmem:[#allocation2 + $0x86] sm:$0xff]
        %v3614 = vld [vmem:[#allocation2 + $0x8e] sm:$0xff]
        %v3615 = vld [vmem:[#allocation2 + $0x96] sm:$0xff]
        %v3616 = vld [vmem:[#allocation2 + $0x9e] sm:$0xff]
        %v3617 = vld [vmem:[#allocation2 + $0xa6] sm:$0xff]
        %v3618 = vld [vmem:[#allocation2 + $0xae] sm:$0xff]
        %v3619 = vld [vmem:[#allocation2 + $0xb6] sm:$0xff]
        %v3620 = vld [vmem:[#allocation2 + $0xbe] sm:$0xff]
        %v3621 = vld [vmem:[#allocation2 + $0xc6] sm:$0xff]
        %v3622 = vld [vmem:[#allocation2 + $0xce] sm:$0xff]
        %v3623 = vld [vmem:[#allocation2 + $0xd6] sm:$0xff]
        %v3624 = vld [vmem:[#allocation2 + $0xde] sm:$0xff]
        %v3625 = vld [vmem:[#allocation2 + $0xe6] sm:$0xff]
        %v3626 = vld [vmem:[#allocation2 + $0xee] sm:$0xff]
        %v3627 = vld [vmem:[#allocation2 + $0xf6] sm:$0xff]
        %v3628 = vld [vmem:[#allocation2 + $0xfe] sm:$0xff]
        %v3629 = vld [vmem:[#allocation2 + $0x106] sm:$0xff]
        %v3630 = vld [vmem:[#allocation2 + $0x10e] sm:$0xff]
        %v3631 = vld [vmem:[#allocation2 + $0x116] sm:$0xff]
        %v3632 = vld [vmem:[#allocation2 + $0x11e] sm:$0xff]
        %v3633 = vld [vmem:[#allocation2 + $0x126] sm:$0xff]
        %v3634 = vld [vmem:[#allocation2 + $0x12e] sm:$0xff]
        %v3635 = vld [vmem:[#allocation2 + $0x136] sm:$0xff]
        %v3636 = vld [vmem:[#allocation2 + $0x13e] sm:$0xff]
        %v3637 = vld [vmem:[#allocation2 + $0x146] sm:$0xff]
        %v3638 = vmul.f32 %v3598, %v2183
        %v3639 = vmul.f32 %v3599, %v2184
        %v3640 = vmul.f32 %v3600, %v2185
        %v3641 = vmul.f32 %v3601, %v2186
        %v3642 = vmul.f32 %v3602, %v2187
        %v3643 = vmul.f32 %v3603, %v2188
        %v3644 = vmul.f32 %v3604, %v2189
        %v3645 = vmul.f32 %v3605, %v2190
        %v3646 = vmul.f32 %v3606, %v2191
        %v3647 = vmul.f32 %v3607, %v2192
        %v3648 = vmul.f32 %v3608, %v2193
        %v3649 = vmul.f32 %v3609, %v2194
        %v3650 = vmul.f32 %v3610, %v2195
        %v3651 = vmul.f32 %v3611, %v2196
        %v3652 = vmul.f32 %v3612, %v2197
        %v3653 = vmul.f32 %v3613, %v2198
        %v3654 = vmul.f32 %v3614, %v2199
        %v3655 = vmul.f32 %v3615, %v2200
        %v3656 = vmul.f32 %v3616, %v2201
        %v3657 = vmul.f32 %v3617, %v2202
        %v3658 = vmul.f32 %v3618, %v2203
        %v3659 = vmul.f32 %v3619, %v2204
        %v3660 = vmul.f32 %v3620, %v2205
        %v3661 = vmul.f32 %v3621, %v2206
        %v3662 = vmul.f32 %v3622, %v2207
        %v3663 = vmul.f32 %v3623, %v2208
        %v3664 = vmul.f32 %v3624, %v2209
        %v3665 = vmul.f32 %v3625, %v2210
        %v3666 = vmul.f32 %v3626, %v2211
        %v3667 = vmul.f32 %v3627, %v2212
        %v3668 = vmul.f32 %v3628, %v2213
        %v3669 = vmul.f32 %v3629, %v2214
        %v3670 = vmul.f32 %v3630, %v2215
        %v3671 = vmul.f32 %v3631, %v2216
        %v3672 = vmul.f32 %v3632, %v2217
        %v3673 = vmul.f32 %v3633, %v2218
        %v3674 = vmul.f32 %v3634, %v2219
        %v3675 = vmul.f32 %v3635, %v2220
        %v3676 = vmul.f32 %v3636, %v2221
        %v3677 = vmul.f32 %v3637, %v2222
        %v3678 = vpack.c.bf16 %v3639, %v3638
        %v3679 = vpack.c.bf16 %v3641, %v3640
        %v3680 = vpack.c.bf16 %v3643, %v3642
        %v3681 = vpack.c.bf16 %v3645, %v3644
        %v3682 = vpack.c.bf16 %v3647, %v3646
        %v3683 = vpack.c.bf16 %v3649, %v3648
        %v3684 = vpack.c.bf16 %v3651, %v3650
        %v3685 = vpack.c.bf16 %v3653, %v3652
        %v3686 = vpack.c.bf16 %v3655, %v3654
        %v3687 = vpack.c.bf16 %v3657, %v3656
        %v3688 = vpack.c.bf16 %v3659, %v3658
        %v3689 = vpack.c.bf16 %v3661, %v3660
        %v3690 = vpack.c.bf16 %v3663, %v3662
        %v3691 = vpack.c.bf16 %v3665, %v3664
        %v3692 = vpack.c.bf16 %v3667, %v3666
        %v3693 = vpack.c.bf16 %v3669, %v3668
        %v3694 = vpack.c.bf16 %v3671, %v3670
        %v3695 = vpack.c.bf16 %v3673, %v3672
        %v3696 = vpack.c.bf16 %v3675, %v3674
        %v3697 = vpack.c.bf16 %v3677, %v3676
        %3698 = vst.msk [vmem:[#allocation3] sm:$0xff] %vm846, %v3678
        %3699 = vst.msk [vmem:[#allocation3 + $0x8] sm:$0xff] %vm846, %v3679
        %3700 = vst.msk [vmem:[#allocation3 + $0x10] sm:$0xff] %vm846, %v3680
        %3701 = vst.msk [vmem:[#allocation3 + $0x18] sm:$0xff] %vm846, %v3681
        %3702 = vst.msk [vmem:[#allocation3 + $0x20] sm:$0xff] %vm846, %v3682
        %3703 = vst.msk [vmem:[#allocation3 + $0x28] sm:$0xff] %vm846, %v3683
        %3704 = vst.msk [vmem:[#allocation3 + $0x30] sm:$0xff] %vm846, %v3684
        %3705 = vst.msk [vmem:[#allocation3 + $0x38] sm:$0xff] %vm846, %v3685
        %3706 = vst.msk [vmem:[#allocation3 + $0x40] sm:$0xff] %vm846, %v3686
        %3707 = vst.msk [vmem:[#allocation3 + $0x48] sm:$0xff] %vm846, %v3687
        %3708 = vst.msk [vmem:[#allocation3 + $0x50] sm:$0xff] %vm846, %v3688
        %3709 = vst.msk [vmem:[#allocation3 + $0x58] sm:$0xff] %vm846, %v3689
        %3710 = vst.msk [vmem:[#allocation3 + $0x60] sm:$0xff] %vm846, %v3690
        %3711 = vst.msk [vmem:[#allocation3 + $0x68] sm:$0xff] %vm846, %v3691
        %3712 = vst.msk [vmem:[#allocation3 + $0x70] sm:$0xff] %vm846, %v3692
        %3713 = vst.msk [vmem:[#allocation3 + $0x78] sm:$0xff] %vm846, %v3693
        %3730 = vrot.lane.b32.xlu0 %v3478, 4
        %v3731 = vpop.permute.xlu0 %3730
        %3732 = vrot.lane.b32.xlu0 %v3479, 4
        %v3733 = vpop.permute.xlu0 %3732
        %3734 = vrot.lane.b32.xlu0 %v3480, 4
        %v3735 = vpop.permute.xlu0 %3734
        %3736 = vrot.lane.b32.xlu0 %v3481, 4
        %v3737 = vpop.permute.xlu0 %3736
        %3738 = vrot.lane.b32.xlu0 %v3482, 4
        %v3739 = vpop.permute.xlu0 %3738
        %3740 = vrot.lane.b32.xlu0 %v3483, 4
        %v3741 = vpop.permute.xlu0 %3740
        %3742 = vrot.lane.b32.xlu0 %v3484, 4
        %v3743 = vpop.permute.xlu0 %3742
        %3744 = vrot.lane.b32.xlu0 %v3485, 4
        %v3745 = vpop.permute.xlu0 %3744
        %3746 = vrot.lane.b32.xlu0 %v3486, 4
        %v3747 = vpop.permute.xlu0 %3746
        %3748 = vrot.lane.b32.xlu0 %v3487, 4
        %v3749 = vpop.permute.xlu0 %3748
        %3750 = vrot.lane.b32.xlu0 %v3488, 4
        %v3751 = vpop.permute.xlu0 %3750
        %3752 = vrot.lane.b32.xlu0 %v3489, 4
        %v3753 = vpop.permute.xlu0 %3752
        %3754 = vrot.lane.b32.xlu0 %v3490, 4
        %v3755 = vpop.permute.xlu0 %3754
        %3756 = vrot.lane.b32.xlu0 %v3491, 4
        %v3757 = vpop.permute.xlu0 %3756
        %3758 = vrot.lane.b32.xlu0 %v3492, 4
        %v3759 = vpop.permute.xlu0 %3758
        %3760 = vrot.lane.b32.xlu0 %v3493, 4
        %v3761 = vpop.permute.xlu0 %3760
        %3778 = vst.msk [vmem:[#allocation3] sm:$0xff] %vm2601, %v3731
        %3779 = vst.msk [vmem:[#allocation3 + $0x8] sm:$0xff] %vm2601, %v3733
        %3780 = vst.msk [vmem:[#allocation3 + $0x10] sm:$0xff] %vm2601, %v3735
        %3781 = vst.msk [vmem:[#allocation3 + $0x18] sm:$0xff] %vm2601, %v3737
        %3782 = vst.msk [vmem:[#allocation3 + $0x20] sm:$0xff] %vm2601, %v3739
        %3783 = vst.msk [vmem:[#allocation3 + $0x28] sm:$0xff] %vm2601, %v3741
        %3784 = vst.msk [vmem:[#allocation3 + $0x30] sm:$0xff] %vm2601, %v3743
        %3785 = vst.msk [vmem:[#allocation3 + $0x38] sm:$0xff] %vm2601, %v3745
        %3786 = vst.msk [vmem:[#allocation3 + $0x40] sm:$0xff] %vm2601, %v3747
        %3787 = vst.msk [vmem:[#allocation3 + $0x48] sm:$0xff] %vm2601, %v3749
        %3788 = vst.msk [vmem:[#allocation3 + $0x50] sm:$0xff] %vm2601, %v3751
        %3789 = vst.msk [vmem:[#allocation3 + $0x58] sm:$0xff] %vm2601, %v3753
        %3790 = vst.msk [vmem:[#allocation3 + $0x60] sm:$0xff] %vm2601, %v3755
        %3791 = vst.msk [vmem:[#allocation3 + $0x68] sm:$0xff] %vm2601, %v3757
        %3792 = vst.msk [vmem:[#allocation3 + $0x70] sm:$0xff] %vm2601, %v3759
        %3793 = vst.msk [vmem:[#allocation3 + $0x78] sm:$0xff] %vm2601, %v3761
        %3810 = vrot.lane.b32.xlu0 %v3578, 8
        %v3811 = vpop.permute.xlu0 %3810
        %3812 = vrot.lane.b32.xlu0 %v3579, 8
        %v3813 = vpop.permute.xlu0 %3812
        %3814 = vrot.lane.b32.xlu0 %v3580, 8
        %v3815 = vpop.permute.xlu0 %3814
        %3816 = vrot.lane.b32.xlu0 %v3581, 8
        %v3817 = vpop.permute.xlu0 %3816
        %3818 = vrot.lane.b32.xlu0 %v3582, 8
        %v3819 = vpop.permute.xlu0 %3818
        %3820 = vrot.lane.b32.xlu0 %v3583, 8
        %v3821 = vpop.permute.xlu0 %3820
        %3822 = vrot.lane.b32.xlu0 %v3584, 8
        %v3823 = vpop.permute.xlu0 %3822
        %3824 = vrot.lane.b32.xlu0 %v3585, 8
        %v3825 = vpop.permute.xlu0 %3824
        %3826 = vrot.lane.b32.xlu0 %v3586, 8
        %v3827 = vpop.permute.xlu0 %3826
        %3828 = vrot.lane.b32.xlu0 %v3587, 8
        %v3829 = vpop.permute.xlu0 %3828
        %3830 = vrot.lane.b32.xlu0 %v3588, 8
        %v3831 = vpop.permute.xlu0 %3830
        %3832 = vrot.lane.b32.xlu0 %v3589, 8
        %v3833 = vpop.permute.xlu0 %3832
        %3834 = vrot.lane.b32.xlu0 %v3590, 8
        %v3835 = vpop.permute.xlu0 %3834
        %3836 = vrot.lane.b32.xlu0 %v3591, 8
        %v3837 = vpop.permute.xlu0 %3836
        %3838 = vrot.lane.b32.xlu0 %v3592, 8
        %v3839 = vpop.permute.xlu0 %3838
        %3840 = vrot.lane.b32.xlu0 %v3593, 8
        %v3841 = vpop.permute.xlu0 %3840
        %3858 = vst.msk [vmem:[#allocation3] sm:$0xff] %vm2682, %v3811
        %3859 = vst.msk [vmem:[#allocation3 + $0x8] sm:$0xff] %vm2682, %v3813
        %3860 = vst.msk [vmem:[#allocation3 + $0x10] sm:$0xff] %vm2682, %v3815
        %3861 = vst.msk [vmem:[#allocation3 + $0x18] sm:$0xff] %vm2682, %v3817
        %3862 = vst.msk [vmem:[#allocation3 + $0x20] sm:$0xff] %vm2682, %v3819
        %3863 = vst.msk [vmem:[#allocation3 + $0x28] sm:$0xff] %vm2682, %v3821
        %3864 = vst.msk [vmem:[#allocation3 + $0x30] sm:$0xff] %vm2682, %v3823
        %3865 = vst.msk [vmem:[#allocation3 + $0x38] sm:$0xff] %vm2682, %v3825
        %3866 = vst.msk [vmem:[#allocation3 + $0x40] sm:$0xff] %vm2682, %v3827
        %3867 = vst.msk [vmem:[#allocation3 + $0x48] sm:$0xff] %vm2682, %v3829
        %3868 = vst.msk [vmem:[#allocation3 + $0x50] sm:$0xff] %vm2682, %v3831
        %3869 = vst.msk [vmem:[#allocation3 + $0x58] sm:$0xff] %vm2682, %v3833
        %3870 = vst.msk [vmem:[#allocation3 + $0x60] sm:$0xff] %vm2682, %v3835
        %3871 = vst.msk [vmem:[#allocation3 + $0x68] sm:$0xff] %vm2682, %v3837
        %3872 = vst.msk [vmem:[#allocation3 + $0x70] sm:$0xff] %vm2682, %v3839
        %3873 = vst.msk [vmem:[#allocation3 + $0x78] sm:$0xff] %vm2682, %v3841
        %3890 = vrot.lane.b32.xlu0 %v3680, 12
        %v3891 = vpop.permute.xlu0 %3890
        %3892 = vrot.lane.b32.xlu0 %v3681, 12
        %v3893 = vpop.permute.xlu0 %3892
        %3894 = vrot.lane.b32.xlu0 %v3682, 12
        %v3895 = vpop.permute.xlu0 %3894
        %3896 = vrot.lane.b32.xlu0 %v3683, 12
        %v3897 = vpop.permute.xlu0 %3896
        %3898 = vrot.lane.b32.xlu0 %v3684, 12
        %v3899 = vpop.permute.xlu0 %3898
        %3900 = vrot.lane.b32.xlu0 %v3685, 12
        %v3901 = vpop.permute.xlu0 %3900
        %3902 = vrot.lane.b32.xlu0 %v3686, 12
        %v3903 = vpop.permute.xlu0 %3902
        %3904 = vrot.lane.b32.xlu0 %v3687, 12
        %v3905 = vpop.permute.xlu0 %3904
        %3906 = vrot.lane.b32.xlu0 %v3688, 12
        %v3907 = vpop.permute.xlu0 %3906
        %3908 = vrot.lane.b32.xlu0 %v3689, 12
        %v3909 = vpop.permute.xlu0 %3908
        %3910 = vrot.lane.b32.xlu0 %v3690, 12
        %v3911 = vpop.permute.xlu0 %3910
        %3912 = vrot.lane.b32.xlu0 %v3691, 12
        %v3913 = vpop.permute.xlu0 %3912
        %3914 = vrot.lane.b32.xlu0 %v3692, 12
        %v3915 = vpop.permute.xlu0 %3914
        %3916 = vrot.lane.b32.xlu0 %v3693, 12
        %v3917 = vpop.permute.xlu0 %3916
        %3918 = vrot.lane.b32.xlu0 %v3694, 12
        %v3919 = vpop.permute.xlu0 %3918
        %3920 = vrot.lane.b32.xlu0 %v3695, 12
        %v3921 = vpop.permute.xlu0 %3920
        %3938 = vst.msk [vmem:[#allocation3] sm:$0xff] %vm2763, %v3891
        %3939 = vst.msk [vmem:[#allocation3 + $0x8] sm:$0xff] %vm2763, %v3893
        %3940 = vst.msk [vmem:[#allocation3 + $0x10] sm:$0xff] %vm2763, %v3895
        %3941 = vst.msk [vmem:[#allocation3 + $0x18] sm:$0xff] %vm2763, %v3897
        %3942 = vst.msk [vmem:[#allocation3 + $0x20] sm:$0xff] %vm2763, %v3899
        %3943 = vst.msk [vmem:[#allocation3 + $0x28] sm:$0xff] %vm2763, %v3901
        %3944 = vst.msk [vmem:[#allocation3 + $0x30] sm:$0xff] %vm2763, %v3903
        %3945 = vst.msk [vmem:[#allocation3 + $0x38] sm:$0xff] %vm2763, %v3905
        %3946 = vst.msk [vmem:[#allocation3 + $0x40] sm:$0xff] %vm2763, %v3907
        %3947 = vst.msk [vmem:[#allocation3 + $0x48] sm:$0xff] %vm2763, %v3909
        %3948 = vst.msk [vmem:[#allocation3 + $0x50] sm:$0xff] %vm2763, %v3911
        %3949 = vst.msk [vmem:[#allocation3 + $0x58] sm:$0xff] %vm2763, %v3913
        %3950 = vst.msk [vmem:[#allocation3 + $0x60] sm:$0xff] %vm2763, %v3915
        %3951 = vst.msk [vmem:[#allocation3 + $0x68] sm:$0xff] %vm2763, %v3917
        %3952 = vst.msk [vmem:[#allocation3 + $0x70] sm:$0xff] %vm2763, %v3919
        %3953 = vst.msk [vmem:[#allocation3 + $0x78] sm:$0xff] %vm2763, %v3921
        %3956 = vrot.lane.b32.xlu0 %v3480, 16
        %v3957 = vpop.permute.xlu0 %3956
        %3958 = vrot.lane.b32.xlu0 %v3481, 16
        %v3959 = vpop.permute.xlu0 %3958
        %3960 = vrot.lane.b32.xlu0 %v3482, 16
        %v3961 = vpop.permute.xlu0 %3960
        %3962 = vrot.lane.b32.xlu0 %v3483, 16
        %v3963 = vpop.permute.xlu0 %3962
        %3964 = vrot.lane.b32.xlu0 %v3484, 16
        %v3965 = vpop.permute.xlu0 %3964
        %3966 = vrot.lane.b32.xlu0 %v3485, 16
        %v3967 = vpop.permute.xlu0 %3966
        %3968 = vrot.lane.b32.xlu0 %v3486, 16
        %v3969 = vpop.permute.xlu0 %3968
        %3970 = vrot.lane.b32.xlu0 %v3487, 16
        %v3971 = vpop.permute.xlu0 %3970
        %3972 = vrot.lane.b32.xlu0 %v3488, 16
        %v3973 = vpop.permute.xlu0 %3972
        %3974 = vrot.lane.b32.xlu0 %v3489, 16
        %v3975 = vpop.permute.xlu0 %3974
        %3976 = vrot.lane.b32.xlu0 %v3490, 16
        %v3977 = vpop.permute.xlu0 %3976
        %3978 = vrot.lane.b32.xlu0 %v3491, 16
        %v3979 = vpop.permute.xlu0 %3978
        %3980 = vrot.lane.b32.xlu0 %v3492, 16
        %v3981 = vpop.permute.xlu0 %3980
        %3982 = vrot.lane.b32.xlu0 %v3493, 16
        %v3983 = vpop.permute.xlu0 %3982
        %3984 = vrot.lane.b32.xlu0 %v3494, 16
        %v3985 = vpop.permute.xlu0 %3984
        %3986 = vrot.lane.b32.xlu0 %v3495, 16
        %v3987 = vpop.permute.xlu0 %3986
        %4004 = vst.msk [vmem:[#allocation3] sm:$0xff] %vm2830, %v3957
        %4005 = vst.msk [vmem:[#allocation3 + $0x8] sm:$0xff] %vm2830, %v3959
        %4006 = vst.msk [vmem:[#allocation3 + $0x10] sm:$0xff] %vm2830, %v3961
        %4007 = vst.msk [vmem:[#allocation3 + $0x18] sm:$0xff] %vm2830, %v3963
        %4008 = vst.msk [vmem:[#allocation3 + $0x20] sm:$0xff] %vm2830, %v3965
        %4009 = vst.msk [vmem:[#allocation3 + $0x28] sm:$0xff] %vm2830, %v3967
        %4010 = vst.msk [vmem:[#allocation3 + $0x30] sm:$0xff] %vm2830, %v3969
        %4011 = vst.msk [vmem:[#allocation3 + $0x38] sm:$0xff] %vm2830, %v3971
        %4012 = vst.msk [vmem:[#allocation3 + $0x40] sm:$0xff] %vm2830, %v3973
        %4013 = vst.msk [vmem:[#allocation3 + $0x48] sm:$0xff] %vm2830, %v3975
        %4014 = vst.msk [vmem:[#allocation3 + $0x50] sm:$0xff] %vm2830, %v3977
        %4015 = vst.msk [vmem:[#allocation3 + $0x58] sm:$0xff] %vm2830, %v3979
        %4016 = vst.msk [vmem:[#allocation3 + $0x60] sm:$0xff] %vm2830, %v3981
        %4017 = vst.msk [vmem:[#allocation3 + $0x68] sm:$0xff] %vm2830, %v3983
        %4018 = vst.msk [vmem:[#allocation3 + $0x70] sm:$0xff] %vm2830, %v3985
        %4019 = vst.msk [vmem:[#allocation3 + $0x78] sm:$0xff] %vm2830, %v3987
        %4022 = vrot.lane.b32.xlu0 %v3580, 20
        %v4023 = vpop.permute.xlu0 %4022
        %4024 = vrot.lane.b32.xlu0 %v3581, 20
        %v4025 = vpop.permute.xlu0 %4024
        %4026 = vrot.lane.b32.xlu0 %v3582, 20
        %v4027 = vpop.permute.xlu0 %4026
        %4028 = vrot.lane.b32.xlu0 %v3583, 20
        %v4029 = vpop.permute.xlu0 %4028
        %4030 = vrot.lane.b32.xlu0 %v3584, 20
        %v4031 = vpop.permute.xlu0 %4030
        %4032 = vrot.lane.b32.xlu0 %v3585, 20
        %v4033 = vpop.permute.xlu0 %4032
        %4034 = vrot.lane.b32.xlu0 %v3586, 20
        %v4035 = vpop.permute.xlu0 %4034
        %4036 = vrot.lane.b32.xlu0 %v3587, 20
        %v4037 = vpop.permute.xlu0 %4036
        %4038 = vrot.lane.b32.xlu0 %v3588, 20
        %v4039 = vpop.permute.xlu0 %4038
        %4040 = vrot.lane.b32.xlu0 %v3589, 20
        %v4041 = vpop.permute.xlu0 %4040
        %4042 = vrot.lane.b32.xlu0 %v3590, 20
        %v4043 = vpop.permute.xlu0 %4042
        %4044 = vrot.lane.b32.xlu0 %v3591, 20
        %v4045 = vpop.permute.xlu0 %4044
        %4046 = vrot.lane.b32.xlu0 %v3592, 20
        %v4047 = vpop.permute.xlu0 %4046
        %4048 = vrot.lane.b32.xlu0 %v3593, 20
        %v4049 = vpop.permute.xlu0 %4048
        %4050 = vrot.lane.b32.xlu0 %v3594, 20
        %v4051 = vpop.permute.xlu0 %4050
        %4052 = vrot.lane.b32.xlu0 %v3595, 20
        %v4053 = vpop.permute.xlu0 %4052
        %4070 = vst.msk [vmem:[#allocation3] sm:$0xff] %vm2897, %v4023
        %4071 = vst.msk [vmem:[#allocation3 + $0x8] sm:$0xff] %vm2897, %v4025
        %4072 = vst.msk [vmem:[#allocation3 + $0x10] sm:$0xff] %vm2897, %v4027
        %4073 = vst.msk [vmem:[#allocation3 + $0x18] sm:$0xff] %vm2897, %v4029
        %4074 = vst.msk [vmem:[#allocation3 + $0x20] sm:$0xff] %vm2897, %v4031
        %4075 = vst.msk [vmem:[#allocation3 + $0x28] sm:$0xff] %vm2897, %v4033
        %4076 = vst.msk [vmem:[#allocation3 + $0x30] sm:$0xff] %vm2897, %v4035
        %4077 = vst.msk [vmem:[#allocation3 + $0x38] sm:$0xff] %vm2897, %v4037
        %4078 = vst.msk [vmem:[#allocation3 + $0x40] sm:$0xff] %vm2897, %v4039
        %4079 = vst.msk [vmem:[#allocation3 + $0x48] sm:$0xff] %vm2897, %v4041
        %4080 = vst.msk [vmem:[#allocation3 + $0x50] sm:$0xff] %vm2897, %v4043
        %4081 = vst.msk [vmem:[#allocation3 + $0x58] sm:$0xff] %vm2897, %v4045
        %4082 = vst.msk [vmem:[#allocation3 + $0x60] sm:$0xff] %vm2897, %v4047
        %4083 = vst.msk [vmem:[#allocation3 + $0x68] sm:$0xff] %vm2897, %v4049
        %4084 = vst.msk [vmem:[#allocation3 + $0x70] sm:$0xff] %vm2897, %v4051
        %4085 = vst.msk [vmem:[#allocation3 + $0x78] sm:$0xff] %vm2897, %v4053
        %4088 = vrot.lane.b32.xlu0 %v3682, 24
        %v4089 = vpop.permute.xlu0 %4088
        %4090 = vrot.lane.b32.xlu0 %v3683, 24
        %v4091 = vpop.permute.xlu0 %4090
        %4092 = vrot.lane.b32.xlu0 %v3684, 24
        %v4093 = vpop.permute.xlu0 %4092
        %4094 = vrot.lane.b32.xlu0 %v3685, 24
        %v4095 = vpop.permute.xlu0 %4094
        %4096 = vrot.lane.b32.xlu0 %v3686, 24
        %v4097 = vpop.permute.xlu0 %4096
        %4098 = vrot.lane.b32.xlu0 %v3687, 24
        %v4099 = vpop.permute.xlu0 %4098
        %4100 = vrot.lane.b32.xlu0 %v3688, 24
        %v4101 = vpop.permute.xlu0 %4100
        %4102 = vrot.lane.b32.xlu0 %v3689, 24
        %v4103 = vpop.permute.xlu0 %4102
        %4104 = vrot.lane.b32.xlu0 %v3690, 24
        %v4105 = vpop.permute.xlu0 %4104
        %4106 = vrot.lane.b32.xlu0 %v3691, 24
        %v4107 = vpop.permute.xlu0 %4106
        %4108 = vrot.lane.b32.xlu0 %v3692, 24
        %v4109 = vpop.permute.xlu0 %4108
        %4110 = vrot.lane.b32.xlu0 %v3693, 24
        %v4111 = vpop.permute.xlu0 %4110
        %4112 = vrot.lane.b32.xlu0 %v3694, 24
        %v4113 = vpop.permute.xlu0 %4112
        %4114 = vrot.lane.b32.xlu0 %v3695, 24
        %v4115 = vpop.permute.xlu0 %4114
        %4116 = vrot.lane.b32.xlu0 %v3696, 24
        %v4117 = vpop.permute.xlu0 %4116
        %4118 = vrot.lane.b32.xlu0 %v3697, 24
        %v4119 = vpop.permute.xlu0 %4118
        %4136 = vst.msk [vmem:[#allocation3] sm:$0xff] %vm2964, %v4089
        %4137 = vst.msk [vmem:[#allocation3 + $0x8] sm:$0xff] %vm2964, %v4091
        %4138 = vst.msk [vmem:[#allocation3 + $0x10] sm:$0xff] %vm2964, %v4093
        %4139 = vst.msk [vmem:[#allocation3 + $0x18] sm:$0xff] %vm2964, %v4095
        %4140 = vst.msk [vmem:[#allocation3 + $0x20] sm:$0xff] %vm2964, %v4097
        %4141 = vst.msk [vmem:[#allocation3 + $0x28] sm:$0xff] %vm2964, %v4099
        %4142 = vst.msk [vmem:[#allocation3 + $0x30] sm:$0xff] %vm2964, %v4101
        %4143 = vst.msk [vmem:[#allocation3 + $0x38] sm:$0xff] %vm2964, %v4103
        %4144 = vst.msk [vmem:[#allocation3 + $0x40] sm:$0xff] %vm2964, %v4105
        %4145 = vst.msk [vmem:[#allocation3 + $0x48] sm:$0xff] %vm2964, %v4107
        %4146 = vst.msk [vmem:[#allocation3 + $0x50] sm:$0xff] %vm2964, %v4109
        %4147 = vst.msk [vmem:[#allocation3 + $0x58] sm:$0xff] %vm2964, %v4111
        %4148 = vst.msk [vmem:[#allocation3 + $0x60] sm:$0xff] %vm2964, %v4113
        %4149 = vst.msk [vmem:[#allocation3 + $0x68] sm:$0xff] %vm2964, %v4115
        %4150 = vst.msk [vmem:[#allocation3 + $0x70] sm:$0xff] %vm2964, %v4117
        %4151 = vst.msk [vmem:[#allocation3 + $0x78] sm:$0xff] %vm2964, %v4119
        %4154 = vrot.lane.b32.xlu0 %v3482, 28
        %v4155 = vpop.permute.xlu0 %4154
        %4156 = vrot.lane.b32.xlu0 %v3483, 28
        %v4157 = vpop.permute.xlu0 %4156
        %4158 = vrot.lane.b32.xlu0 %v3484, 28
        %v4159 = vpop.permute.xlu0 %4158
        %4160 = vrot.lane.b32.xlu0 %v3485, 28
        %v4161 = vpop.permute.xlu0 %4160
        %4162 = vrot.lane.b32.xlu0 %v3486, 28
        %v4163 = vpop.permute.xlu0 %4162
        %4164 = vrot.lane.b32.xlu0 %v3487, 28
        %v4165 = vpop.permute.xlu0 %4164
        %4166 = vrot.lane.b32.xlu0 %v3488, 28
        %v4167 = vpop.permute.xlu0 %4166
        %4168 = vrot.lane.b32.xlu0 %v3489, 28
        %v4169 = vpop.permute.xlu0 %4168
        %4170 = vrot.lane.b32.xlu0 %v3490, 28
        %v4171 = vpop.permute.xlu0 %4170
        %4172 = vrot.lane.b32.xlu0 %v3491, 28
        %v4173 = vpop.permute.xlu0 %4172
        %4174 = vrot.lane.b32.xlu0 %v3492, 28
        %v4175 = vpop.permute.xlu0 %4174
        %4176 = vrot.lane.b32.xlu0 %v3493, 28
        %v4177 = vpop.permute.xlu0 %4176
        %4178 = vrot.lane.b32.xlu0 %v3494, 28
        %v4179 = vpop.permute.xlu0 %4178
        %4180 = vrot.lane.b32.xlu0 %v3495, 28
        %v4181 = vpop.permute.xlu0 %4180
        %4182 = vrot.lane.b32.xlu0 %v3496, 28
        %v4183 = vpop.permute.xlu0 %4182
        %4184 = vrot.lane.b32.xlu0 %v3497, 28
        %v4185 = vpop.permute.xlu0 %4184
        %4202 = vst.msk [vmem:[#allocation3] sm:$0xff] %vm3031, %v4155
        %4203 = vst.msk [vmem:[#allocation3 + $0x8] sm:$0xff] %vm3031, %v4157
        %4204 = vst.msk [vmem:[#allocation3 + $0x10] sm:$0xff] %vm3031, %v4159
        %4205 = vst.msk [vmem:[#allocation3 + $0x18] sm:$0xff] %vm3031, %v4161
        %4206 = vst.msk [vmem:[#allocation3 + $0x20] sm:$0xff] %vm3031, %v4163
        %4207 = vst.msk [vmem:[#allocation3 + $0x28] sm:$0xff] %vm3031, %v4165
        %4208 = vst.msk [vmem:[#allocation3 + $0x30] sm:$0xff] %vm3031, %v4167
        %4209 = vst.msk [vmem:[#allocation3 + $0x38] sm:$0xff] %vm3031, %v4169
        %4210 = vst.msk [vmem:[#allocation3 + $0x40] sm:$0xff] %vm3031, %v4171
        %4211 = vst.msk [vmem:[#allocation3 + $0x48] sm:$0xff] %vm3031, %v4173
        %4212 = vst.msk [vmem:[#allocation3 + $0x50] sm:$0xff] %vm3031, %v4175
        %4213 = vst.msk [vmem:[#allocation3 + $0x58] sm:$0xff] %vm3031, %v4177
        %4214 = vst.msk [vmem:[#allocation3 + $0x60] sm:$0xff] %vm3031, %v4179
        %4215 = vst.msk [vmem:[#allocation3 + $0x68] sm:$0xff] %vm3031, %v4181
        %4216 = vst.msk [vmem:[#allocation3 + $0x70] sm:$0xff] %vm3031, %v4183
        %4217 = vst.msk [vmem:[#allocation3 + $0x78] sm:$0xff] %vm3031, %v4185
        %4220 = vrot.lane.b32.xlu0 %v3582, 32
        %v4221 = vpop.permute.xlu0 %4220
        %4222 = vrot.lane.b32.xlu0 %v3583, 32
        %v4223 = vpop.permute.xlu0 %4222
        %4224 = vrot.lane.b32.xlu0 %v3584, 32
        %v4225 = vpop.permute.xlu0 %4224
        %4226 = vrot.lane.b32.xlu0 %v3585, 32
        %v4227 = vpop.permute.xlu0 %4226
        %4228 = vrot.lane.b32.xlu0 %v3586, 32
        %v4229 = vpop.permute.xlu0 %4228
        %4230 = vrot.lane.b32.xlu0 %v3587, 32
        %v4231 = vpop.permute.xlu0 %4230
        %4232 = vrot.lane.b32.xlu0 %v3588, 32
        %v4233 = vpop.permute.xlu0 %4232
        %4234 = vrot.lane.b32.xlu0 %v3589, 32
        %v4235 = vpop.permute.xlu0 %4234
        %4236 = vrot.lane.b32.xlu0 %v3590, 32
        %v4237 = vpop.permute.xlu0 %4236
        %4238 = vrot.lane.b32.xlu0 %v3591, 32
        %v4239 = vpop.permute.xlu0 %4238
        %4240 = vrot.lane.b32.xlu0 %v3592, 32
        %v4241 = vpop.permute.xlu0 %4240
        %4242 = vrot.lane.b32.xlu0 %v3593, 32
        %v4243 = vpop.permute.xlu0 %4242
        %4244 = vrot.lane.b32.xlu0 %v3594, 32
        %v4245 = vpop.permute.xlu0 %4244
        %4246 = vrot.lane.b32.xlu0 %v3595, 32
        %v4247 = vpop.permute.xlu0 %4246
        %4248 = vrot.lane.b32.xlu0 %v3596, 32
        %v4249 = vpop.permute.xlu0 %4248
        %4250 = vrot.lane.b32.xlu0 %v3597, 32
        %v4251 = vpop.permute.xlu0 %4250
        %4268 = vst.msk [vmem:[#allocation3] sm:$0xff] %vm3098, %v4221
        %4269 = vst.msk [vmem:[#allocation3 + $0x8] sm:$0xff] %vm3098, %v4223
        %4270 = vst.msk [vmem:[#allocation3 + $0x10] sm:$0xff] %vm3098, %v4225
        %4271 = vst.msk [vmem:[#allocation3 + $0x18] sm:$0xff] %vm3098, %v4227
        %4272 = vst.msk [vmem:[#allocation3 + $0x20] sm:$0xff] %vm3098, %v4229
        %4273 = vst.msk [vmem:[#allocation3 + $0x28] sm:$0xff] %vm3098, %v4231
        %4274 = vst.msk [vmem:[#allocation3 + $0x30] sm:$0xff] %vm3098, %v4233
        %4275 = vst.msk [vmem:[#allocation3 + $0x38] sm:$0xff] %vm3098, %v4235
        %4276 = vst.msk [vmem:[#allocation3 + $0x40] sm:$0xff] %vm3098, %v4237
        %4277 = vst.msk [vmem:[#allocation3 + $0x48] sm:$0xff] %vm3098, %v4239
        %4278 = vst.msk [vmem:[#allocation3 + $0x50] sm:$0xff] %vm3098, %v4241
        %4279 = vst.msk [vmem:[#allocation3 + $0x58] sm:$0xff] %vm3098, %v4243
        %4280 = vst.msk [vmem:[#allocation3 + $0x60] sm:$0xff] %vm3098, %v4245
        %4281 = vst.msk [vmem:[#allocation3 + $0x68] sm:$0xff] %vm3098, %v4247
        %4282 = vst.msk [vmem:[#allocation3 + $0x70] sm:$0xff] %vm3098, %v4249
        %4283 = vst.msk [vmem:[#allocation3 + $0x78] sm:$0xff] %vm3098, %v4251
        %v4284 = vld [vmem:[#allocation3] sm:$0xff]
        %v4285 = vld [vmem:[#allocation3 + $0x8] sm:$0xff]
        %v4286 = vld [vmem:[#allocation3 + $0x10] sm:$0xff]
        %v4287 = vld [vmem:[#allocation3 + $0x18] sm:$0xff]
        %v4288 = vld [vmem:[#allocation3 + $0x20] sm:$0xff]
        %v4289 = vld [vmem:[#allocation3 + $0x28] sm:$0xff]
        %v4290 = vld [vmem:[#allocation3 + $0x30] sm:$0xff]
        %v4291 = vld [vmem:[#allocation3 + $0x38] sm:$0xff]
        %v4292 = vld [vmem:[#allocation3 + $0x40] sm:$0xff]
        %v4293 = vld [vmem:[#allocation3 + $0x48] sm:$0xff]
        %v4294 = vld [vmem:[#allocation3 + $0x50] sm:$0xff]
        %v4295 = vld [vmem:[#allocation3 + $0x58] sm:$0xff]
        %v4296 = vld [vmem:[#allocation3 + $0x60] sm:$0xff]
        %v4297 = vld [vmem:[#allocation3 + $0x68] sm:$0xff]
        %v4298 = vld [vmem:[#allocation3 + $0x70] sm:$0xff]
        %v4299 = vld [vmem:[#allocation3 + $0x78] sm:$0xff]
        %v4301 = vlaneseq
        %v4302 = vshrl.u32 %v4301, 7
        %v4303 = vsub.s32 0, %v4302
        %v4304 = vrot.slane %v3437, %v4303
        %v4311 = vunpack.c.l.b16 %v3431
        %v4312 = vunpack.c.l.b16 %v3432
        %v4313 = vunpack.c.l.b16 %v3433
        %v4314 = vunpack.c.l.b16 %v3434
        %v4315 = vunpack.c.l.b16 %v3435
        %v4316 = vpack.c.b16 %v4312, %v4311
        %v4317 = vpack.c.b16 %v4314, %v4313
        %v4318 = vpack.c.b16 %v4315, %v4315
        %v4322 = vsel %vm3152, %v4284, 0
        %v4325 = vsel %vm3152, %v4285, 0
        %v4328 = vsel %vm3152, %v4286, 0
        %v4331 = vsel %vm3152, %v4287, 0
        %v4334 = vsel %vm3152, %v4288, 0
        %v4337 = vsel %vm3152, %v4289, 0
        %v4340 = vsel %vm3152, %v4290, 0
        %v4343 = vsel %vm3152, %v4291, 0
        %v4346 = vsel %vm3152, %v4292, 0
        %v4349 = vsel %vm3152, %v4293, 0
        %v4352 = vsel %vm3152, %v4294, 0
        %v4355 = vsel %vm3152, %v4295, 0
        %v4358 = vsel %vm3152, %v4296, 0
        %v4361 = vsel %vm3152, %v4297, 0
        %v4364 = vsel %vm3152, %v4298, 0
        %v4367 = vsel %vm3152, %v4299, 0
        %v4370 = vsel %vm3201, %v4318, 0
        %4372 = vmatprep.subr.bf16.mxu0 0
        %4373 = vmatpush1.bf16.msra.mxu0 %v4316
        %4374 = vmatprep.subr.bf16.mxu0 0
        %4375 = vmatpush1.bf16.msra.mxu0 %v4317
        %4376 = vmatprep.subr.bf16.mxu0 0
        %4377 = vmatpush1.bf16.msra.mxu0 %v4370
        %4378 = vmatprep.subr.bf16.mxu0 0
        %4379 = vmatpush1.bf16.msra.mxu0 0
        %4380 = vmatprep.subr.bf16.mxu0 0
        %4381 = vmatpush1.bf16.msra.mxu0 0
        %4382 = vmatprep.subr.bf16.mxu0 0
        %4383 = vmatpush1.bf16.msra.mxu0 0
        %4384 = vmatprep.subr.bf16.mxu0 0
        %4385 = vmatpush1.bf16.msra.mxu0 0
        %4386 = vmatprep.subr.bf16.mxu0 0
        %4387 = vmatpush1.bf16.msra.mxu0 0
        %4388 = vmatprep.subr.bf16.mxu0 0
        %4389 = vmatpush1.bf16.msra.mxu0 0
        %4390 = vmatprep.subr.bf16.mxu0 0
        %4391 = vmatpush1.bf16.msra.mxu0 0
        %4392 = vmatprep.subr.bf16.mxu0 0
        %4393 = vmatpush1.bf16.msra.mxu0 0
        %4394 = vmatprep.subr.bf16.mxu0 0
        %4395 = vmatpush1.bf16.msra.mxu0 0
        %4396 = vmatprep.subr.bf16.mxu0 0
        %4397 = vmatpush1.bf16.msra.mxu0 0
        %4398 = vmatprep.subr.bf16.mxu0 0
        %4399 = vmatpush1.bf16.msra.mxu0 0
        %4400 = vmatprep.subr.bf16.mxu0 0
        %4401 = vmatpush1.bf16.msra.mxu0 0
        %4402 = vmatprep.subr.bf16.mxu0 0
        %4403 = vmatpush1.bf16.msra.mxu0 0
        %4404 = vmatprep.mubr.bf16.mxu0 0
        %4405 = vmatmul.mubr.bf16.gmra.mrb[0].mxu0 %v4322
        %v4406 = vpop.f32.mrb[0].mxu0
        %v4407 = vadd.f32 %v4304, %v4406
        %v4408 = vpop.f32.mrb[0].mxu0
        %v4409 = vpop.f32.mrb[0].mxu0
        %v4410 = vadd.f32 %v4304, %v4409
        %v4411 = vpop.f32.mrb[0].mxu0
        %4412 = vmatprep.mubr.bf16.mxu0 0
        %4413 = vmatmul.mubr.bf16.gmra.mrb[0].mxu0 %v4325
        %v4414 = vpop.f32.mrb[0].mxu0
        %v4415 = vadd.f32 %v4304, %v4414
        %v4416 = vpop.f32.mrb[0].mxu0
        %v4417 = vpop.f32.mrb[0].mxu0
        %v4418 = vadd.f32 %v4304, %v4417
        %v4419 = vpop.f32.mrb[0].mxu0
        %4420 = vmatprep.mubr.bf16.mxu0 0
        %4421 = vmatmul.mubr.bf16.gmra.mrb[0].mxu0 %v4328
        %v4422 = vpop.f32.mrb[0].mxu0
        %v4423 = vadd.f32 %v4304, %v4422
        %v4424 = vpop.f32.mrb[0].mxu0
        %v4425 = vpop.f32.mrb[0].mxu0
        %v4426 = vadd.f32 %v4304, %v4425
        %v4427 = vpop.f32.mrb[0].mxu0
        %4428 = vmatprep.mubr.bf16.mxu0 0
        %4429 = vmatmul.mubr.bf16.gmra.mrb[0].mxu0 %v4331
        %v4430 = vpop.f32.mrb[0].mxu0
        %v4431 = vadd.f32 %v4304, %v4430
        %v4432 = vpop.f32.mrb[0].mxu0
        %v4433 = vpop.f32.mrb[0].mxu0
        %v4434 = vadd.f32 %v4304, %v4433
        %v4435 = vpop.f32.mrb[0].mxu0
        %4436 = vmatprep.mubr.bf16.mxu0 0
        %4437 = vmatmul.mubr.bf16.gmra.mrb[0].mxu0 %v4334
        %v4438 = vpop.f32.mrb[0].mxu0
        %v4439 = vadd.f32 %v4304, %v4438
        %v4440 = vpop.f32.mrb[0].mxu0
        %v4441 = vpop.f32.mrb[0].mxu0
        %v4442 = vadd.f32 %v4304, %v4441
        %v4443 = vpop.f32.mrb[0].mxu0
        %4444 = vmatprep.mubr.bf16.mxu0 0
        %4445 = vmatmul.mubr.bf16.gmra.mrb[0].mxu0 %v4337
        %v4446 = vpop.f32.mrb[0].mxu0
        %v4447 = vadd.f32 %v4304, %v4446
        %v4448 = vpop.f32.mrb[0].mxu0
        %v4449 = vpop.f32.mrb[0].mxu0
        %v4450 = vadd.f32 %v4304, %v4449
        %v4451 = vpop.f32.mrb[0].mxu0
        %4452 = vmatprep.mubr.bf16.mxu0 0
        %4453 = vmatmul.mubr.bf16.gmra.mrb[0].mxu0 %v4340
        %v4454 = vpop.f32.mrb[0].mxu0
        %v4455 = vadd.f32 %v4304, %v4454
        %v4456 = vpop.f32.mrb[0].mxu0
        %v4457 = vpop.f32.mrb[0].mxu0
        %v4458 = vadd.f32 %v4304, %v4457
        %v4459 = vpop.f32.mrb[0].mxu0
        %4460 = vmatprep.mubr.bf16.mxu0 0
        %4461 = vmatmul.mubr.bf16.gmra.mrb[0].mxu0 %v4343
        %v4462 = vpop.f32.mrb[0].mxu0
        %v4463 = vadd.f32 %v4304, %v4462
        %v4464 = vpop.f32.mrb[0].mxu0
        %v4465 = vpop.f32.mrb[0].mxu0
        %v4466 = vadd.f32 %v4304, %v4465
        %v4467 = vpop.f32.mrb[0].mxu0
        %4468 = vmatprep.mubr.bf16.mxu0 0
        %4469 = vmatmul.mubr.bf16.gmra.mrb[0].mxu0 %v4346
        %v4470 = vpop.f32.mrb[0].mxu0
        %v4471 = vadd.f32 %v4304, %v4470
        %v4472 = vpop.f32.mrb[0].mxu0
        %v4473 = vpop.f32.mrb[0].mxu0
        %v4474 = vadd.f32 %v4304, %v4473
        %v4475 = vpop.f32.mrb[0].mxu0
        %4476 = vmatprep.mubr.bf16.mxu0 0
        %4477 = vmatmul.mubr.bf16.gmra.mrb[0].mxu0 %v4349
        %v4478 = vpop.f32.mrb[0].mxu0
        %v4479 = vadd.f32 %v4304, %v4478
        %v4480 = vpop.f32.mrb[0].mxu0
        %v4481 = vpop.f32.mrb[0].mxu0
        %v4482 = vadd.f32 %v4304, %v4481
        %v4483 = vpop.f32.mrb[0].mxu0
        %4484 = vmatprep.mubr.bf16.mxu0 0
        %4485 = vmatmul.mubr.bf16.gmra.mrb[0].mxu0 %v4352
        %v4486 = vpop.f32.mrb[0].mxu0
        %v4487 = vadd.f32 %v4304, %v4486
        %v4488 = vpop.f32.mrb[0].mxu0
        %v4489 = vpop.f32.mrb[0].mxu0
        %v4490 = vadd.f32 %v4304, %v4489
        %v4491 = vpop.f32.mrb[0].mxu0
        %4492 = vmatprep.mubr.bf16.mxu0 0
        %4493 = vmatmul.mubr.bf16.gmra.mrb[0].mxu0 %v4355
        %v4494 = vpop.f32.mrb[0].mxu0
        %v4495 = vadd.f32 %v4304, %v4494
        %v4496 = vpop.f32.mrb[0].mxu0
        %v4497 = vpop.f32.mrb[0].mxu0
        %v4498 = vadd.f32 %v4304, %v4497
        %v4499 = vpop.f32.mrb[0].mxu0
        %4500 = vmatprep.mubr.bf16.mxu0 0
        %4501 = vmatmul.mubr.bf16.gmra.mrb[0].mxu0 %v4358
        %v4502 = vpop.f32.mrb[0].mxu0
        %v4503 = vadd.f32 %v4304, %v4502
        %v4504 = vpop.f32.mrb[0].mxu0
        %v4505 = vpop.f32.mrb[0].mxu0
        %v4506 = vadd.f32 %v4304, %v4505
        %v4507 = vpop.f32.mrb[0].mxu0
        %4508 = vmatprep.mubr.bf16.mxu0 0
        %4509 = vmatmul.mubr.bf16.gmra.mrb[0].mxu0 %v4361
        %v4510 = vpop.f32.mrb[0].mxu0
        %v4511 = vadd.f32 %v4304, %v4510
        %v4512 = vpop.f32.mrb[0].mxu0
        %v4513 = vpop.f32.mrb[0].mxu0
        %v4514 = vadd.f32 %v4304, %v4513
        %v4515 = vpop.f32.mrb[0].mxu0
        %4516 = vmatprep.mubr.bf16.mxu0 0
        %4517 = vmatmul.mubr.bf16.gmra.mrb[0].mxu0 %v4364
        %v4518 = vpop.f32.mrb[0].mxu0
        %v4519 = vadd.f32 %v4304, %v4518
        %v4520 = vpop.f32.mrb[0].mxu0
        %v4521 = vpop.f32.mrb[0].mxu0
        %v4522 = vadd.f32 %v4304, %v4521
        %v4523 = vpop.f32.mrb[0].mxu0
        %4524 = vmatprep.mubr.bf16.mxu0 0
        %4525 = vmatmul.mubr.bf16.gmra.mrb[0].mxu0 %v4367
        %v4526 = vpop.f32.mrb[0].mxu0
        %v4527 = vadd.f32 %v4304, %v4526
        %v4528 = vpop.f32.mrb[0].mxu0
        %v4529 = vpop.f32.mrb[0].mxu0
        %v4530 = vadd.f32 %v4304, %v4529
        %v4531 = vpop.f32.mrb[0].mxu0
        %4532 = vdwg.mxu0
        %v4533 = vmax.f32 %v4407, 0.0
        %v4534 = vmax.f32 %v4410, 0.0
        %v4535 = vmax.f32 %v4415, 0.0
        %v4536 = vmax.f32 %v4418, 0.0
        %v4537 = vmax.f32 %v4423, 0.0
        %v4538 = vmax.f32 %v4426, 0.0
        %v4539 = vmax.f32 %v4431, 0.0
        %v4540 = vmax.f32 %v4434, 0.0
        %v4541 = vmax.f32 %v4439, 0.0
        %v4542 = vmax.f32 %v4442, 0.0
        %v4543 = vmax.f32 %v4447, 0.0
        %v4544 = vmax.f32 %v4450, 0.0
        %v4545 = vmax.f32 %v4455, 0.0
        %v4546 = vmax.f32 %v4458, 0.0
        %v4547 = vmax.f32 %v4463, 0.0
        %v4548 = vmax.f32 %v4466, 0.0
        %v4549 = vmax.f32 %v4471, 0.0
        %v4550 = vmax.f32 %v4474, 0.0
        %v4551 = vmax.f32 %v4479, 0.0
        %v4552 = vmax.f32 %v4482, 0.0
        %v4553 = vmax.f32 %v4487, 0.0
        %v4554 = vmax.f32 %v4490, 0.0
        %v4555 = vmax.f32 %v4495, 0.0
        %v4556 = vmax.f32 %v4498, 0.0
        %v4557 = vmax.f32 %v4503, 0.0
        %v4558 = vmax.f32 %v4506, 0.0
        %v4559 = vmax.f32 %v4511, 0.0
        %v4560 = vmax.f32 %v4514, 0.0
        %v4561 = vmax.f32 %v4519, 0.0
        %v4562 = vmax.f32 %v4522, 0.0
        %v4563 = vmax.f32 %v4527, 0.0
        %v4564 = vmax.f32 %v4530, 0.0
        %4565 = vst.msk [vmem:[#allocation2 + $0x30] sm:$0xff] %vm846, %v4533
        %4566 = vst.msk [vmem:[#allocation2 + $0x38] sm:$0xff] %vm846, %v4534
        %4567 = vst.msk [vmem:[#allocation2 + $0x40] sm:$0xff] %vm846, %v4535
        %4568 = vst.msk [vmem:[#allocation2 + $0x48] sm:$0xff] %vm846, %v4536
        %4569 = vst.msk [vmem:[#allocation2 + $0x50] sm:$0xff] %vm846, %v4537
        %4570 = vst.msk [vmem:[#allocation2 + $0x58] sm:$0xff] %vm846, %v4538
        %4571 = vst.msk [vmem:[#allocation2 + $0x60] sm:$0xff] %vm846, %v4539
        %4572 = vst.msk [vmem:[#allocation2 + $0x68] sm:$0xff] %vm846, %v4540
        %4573 = vst.msk [vmem:[#allocation2 + $0x70] sm:$0xff] %vm846, %v4541
        %4574 = vst.msk [vmem:[#allocation2 + $0x78] sm:$0xff] %vm846, %v4542
        %4575 = vst.msk [vmem:[#allocation2 + $0x80] sm:$0xff] %vm846, %v4543
        %4576 = vst.msk [vmem:[#allocation2 + $0x88] sm:$0xff] %vm846, %v4544
        %4577 = vst.msk [vmem:[#allocation2 + $0x90] sm:$0xff] %vm846, %v4545
        %4578 = vst.msk [vmem:[#allocation2 + $0x98] sm:$0xff] %vm846, %v4546
        %4579 = vst.msk [vmem:[#allocation2 + $0xa0] sm:$0xff] %vm846, %v4547
        %4580 = vst.msk [vmem:[#allocation2 + $0xa8] sm:$0xff] %vm846, %v4548
        %4581 = vst.msk [vmem:[#allocation2 + $0xb0] sm:$0xff] %vm846, %v4549
        %4582 = vst.msk [vmem:[#allocation2 + $0xb8] sm:$0xff] %vm846, %v4550
        %4583 = vst.msk [vmem:[#allocation2 + $0xc0] sm:$0xff] %vm846, %v4551
        %4584 = vst.msk [vmem:[#allocation2 + $0xc8] sm:$0xff] %vm846, %v4552
        %4585 = vst.msk [vmem:[#allocation2 + $0xd0] sm:$0xff] %vm846, %v4553
        %4586 = vst.msk [vmem:[#allocation2 + $0xd8] sm:$0xff] %vm846, %v4554
        %4587 = vst.msk [vmem:[#allocation2 + $0xe0] sm:$0xff] %vm846, %v4555
        %4588 = vst.msk [vmem:[#allocation2 + $0xe8] sm:$0xff] %vm846, %v4556
        %4589 = vst.msk [vmem:[#allocation2 + $0xf0] sm:$0xff] %vm846, %v4557
        %4590 = vst.msk [vmem:[#allocation2 + $0xf8] sm:$0xff] %vm846, %v4558
        %4591 = vst.msk [vmem:[#allocation2 + $0x100] sm:$0xff] %vm846, %v4559
        %4592 = vst.msk [vmem:[#allocation2 + $0x108] sm:$0xff] %vm846, %v4560
        %4593 = vst.msk [vmem:[#allocation2 + $0x110] sm:$0xff] %vm846, %v4561
        %4594 = vst.msk [vmem:[#allocation2 + $0x118] sm:$0xff] %vm846, %v4562
        %4595 = vst.msk [vmem:[#allocation2 + $0x120] sm:$0xff] %vm846, %v4563
        %4596 = vst.msk [vmem:[#allocation2 + $0x128] sm:$0xff] %vm846, %v4564
        %s4597 = scalar_lea.vmem %s3, 40
        %v4598 = vld [vmem:[%s4597] sm:$0xf]
        %v4599 = vld [vmem:[%s4597 + $0x4] sm:$0xf]
        %v4600 = vld [vmem:[%s4597 + $0x8] sm:$0xf]
        %v4601 = vld [vmem:[%s4597 + $0xc] sm:$0xf]
        %v4602 = vld [vmem:[%s4597 + $0x10] sm:$0x3]
        %s4603 = scalar_lea.vmem %s4, 2
        %v4604 = vld [vmem:[%s4603] sm:$0x1]
        %v4605 = vld [vmem:[#allocation2 + $0x10] sm:$0xff]
        %v4606 = vld [vmem:[#allocation2 + $0x18] sm:$0xff]
        %v4607 = vld [vmem:[#allocation2 + $0x20] sm:$0xff]
        %v4608 = vld [vmem:[#allocation2 + $0x28] sm:$0xff]
        %v4609 = vld [vmem:[#allocation2 + $0x30] sm:$0xff]
        %v4610 = vld [vmem:[#allocation2 + $0x38] sm:$0xff]
        %v4611 = vld [vmem:[#allocation2 + $0x40] sm:$0xff]
        %v4612 = vld [vmem:[#allocation2 + $0x48] sm:$0xff]
        %v4613 = vld [vmem:[#allocation2 + $0x50] sm:$0xff]
        %v4614 = vld [vmem:[#allocation2 + $0x58] sm:$0xff]
        %v4615 = vld [vmem:[#allocation2 + $0x60] sm:$0xff]
        %v4616 = vld [vmem:[#allocation2 + $0x68] sm:$0xff]
        %v4617 = vld [vmem:[#allocation2 + $0x70] sm:$0xff]
        %v4618 = vld [vmem:[#allocation2 + $0x78] sm:$0xff]
        %v4619 = vld [vmem:[#allocation2 + $0x80] sm:$0xff]
        %v4620 = vld [vmem:[#allocation2 + $0x88] sm:$0xff]
        %v4621 = vld [vmem:[#allocation2 + $0x90] sm:$0xff]
        %v4622 = vld [vmem:[#allocation2 + $0x98] sm:$0xff]
        %v4623 = vld [vmem:[#allocation2 + $0xa0] sm:$0xff]
        %v4624 = vld [vmem:[#allocation2 + $0xa8] sm:$0xff]
        %v4625 = vld [vmem:[#allocation2 + $0xb0] sm:$0xff]
        %v4626 = vld [vmem:[#allocation2 + $0xb8] sm:$0xff]
        %v4627 = vld [vmem:[#allocation2 + $0xc0] sm:$0xff]
        %v4628 = vld [vmem:[#allocation2 + $0xc8] sm:$0xff]
        %v4629 = vld [vmem:[#allocation2 + $0xd0] sm:$0xff]
        %v4630 = vld [vmem:[#allocation2 + $0xd8] sm:$0xff]
        %v4631 = vld [vmem:[#allocation2 + $0xe0] sm:$0xff]
        %v4632 = vld [vmem:[#allocation2 + $0xe8] sm:$0xff]
        %v4633 = vld [vmem:[#allocation2 + $0xf0] sm:$0xff]
        %v4634 = vld [vmem:[#allocation2 + $0xf8] sm:$0xff]
        %v4635 = vld [vmem:[#allocation2 + $0x100] sm:$0xff]
        %v4636 = vld [vmem:[#allocation2 + $0x108] sm:$0xff]
        %v4637 = vld [vmem:[#allocation2 + $0x110] sm:$0xff]
        %v4638 = vld [vmem:[#allocation2 + $0x118] sm:$0xff]
        %v4639 = vld [vmem:[#allocation2 + $0x120] sm:$0xff]
        %v4640 = vld [vmem:[#allocation2 + $0x128] sm:$0xff]
        %v4641 = vld [vmem:[#allocation2 + $0x130] sm:$0xff]
        %v4642 = vld [vmem:[#allocation2 + $0x138] sm:$0xff]
        %v4643 = vld [vmem:[#allocation2 + $0x140] sm:$0xff]
        %v4644 = vld [vmem:[#allocation2 + $0x148] sm:$0xff]
        %v4645 = vpack.c.bf16 %v4606, %v4605
        %v4646 = vpack.c.bf16 %v4608, %v4607
        %v4647 = vpack.c.bf16 %v4610, %v4609
        %v4648 = vpack.c.bf16 %v4612, %v4611
        %v4649 = vpack.c.bf16 %v4614, %v4613
        %v4650 = vpack.c.bf16 %v4616, %v4615
        %v4651 = vpack.c.bf16 %v4618, %v4617
        %v4652 = vpack.c.bf16 %v4620, %v4619
        %v4653 = vpack.c.bf16 %v4622, %v4621
        %v4654 = vpack.c.bf16 %v4624, %v4623
        %v4655 = vpack.c.bf16 %v4626, %v4625
        %v4656 = vpack.c.bf16 %v4628, %v4627
        %v4657 = vpack.c.bf16 %v4630, %v4629
        %v4658 = vpack.c.bf16 %v4632, %v4631
        %v4659 = vpack.c.bf16 %v4634, %v4633
        %v4660 = vpack.c.bf16 %v4636, %v4635
        %v4661 = vpack.c.bf16 %v4638, %v4637
        %v4662 = vpack.c.bf16 %v4640, %v4639
        %v4663 = vpack.c.bf16 %v4642, %v4641
        %v4664 = vpack.c.bf16 %v4644, %v4643
        %v4665 = vld [vmem:[#allocation2 + $0x12] sm:$0xff]
        %v4666 = vld [vmem:[#allocation2 + $0x1a] sm:$0xff]
        %v4667 = vld [vmem:[#allocation2 + $0x22] sm:$0xff]
        %v4668 = vld [vmem:[#allocation2 + $0x2a] sm:$0xff]
        %v4669 = vld [vmem:[#allocation2 + $0x32] sm:$0xff]
        %v4670 = vld [vmem:[#allocation2 + $0x3a] sm:$0xff]
        %v4671 = vld [vmem:[#allocation2 + $0x42] sm:$0xff]
        %v4672 = vld [vmem:[#allocation2 + $0x4a] sm:$0xff]
        %v4673 = vld [vmem:[#allocation2 + $0x52] sm:$0xff]
        %v4674 = vld [vmem:[#allocation2 + $0x5a] sm:$0xff]
        %v4675 = vld [vmem:[#allocation2 + $0x62] sm:$0xff]
        %v4676 = vld [vmem:[#allocation2 + $0x6a] sm:$0xff]
        %v4677 = vld [vmem:[#allocation2 + $0x72] sm:$0xff]
        %v4678 = vld [vmem:[#allocation2 + $0x7a] sm:$0xff]
        %v4679 = vld [vmem:[#allocation2 + $0x82] sm:$0xff]
        %v4680 = vld [vmem:[#allocation2 + $0x8a] sm:$0xff]
        %v4681 = vld [vmem:[#allocation2 + $0x92] sm:$0xff]
        %v4682 = vld [vmem:[#allocation2 + $0x9a] sm:$0xff]
        %v4683 = vld [vmem:[#allocation2 + $0xa2] sm:$0xff]
        %v4684 = vld [vmem:[#allocation2 + $0xaa] sm:$0xff]
        %v4685 = vld [vmem:[#allocation2 + $0xb2] sm:$0xff]
        %v4686 = vld [vmem:[#allocation2 + $0xba] sm:$0xff]
        %v4687 = vld [vmem:[#allocation2 + $0xc2] sm:$0xff]
        %v4688 = vld [vmem:[#allocation2 + $0xca] sm:$0xff]
        %v4689 = vld [vmem:[#allocation2 + $0xd2] sm:$0xff]
        %v4690 = vld [vmem:[#allocation2 + $0xda] sm:$0xff]
        %v4691 = vld [vmem:[#allocation2 + $0xe2] sm:$0xff]
        %v4692 = vld [vmem:[#allocation2 + $0xea] sm:$0xff]
        %v4693 = vld [vmem:[#allocation2 + $0xf2] sm:$0xff]
        %v4694 = vld [vmem:[#allocation2 + $0xfa] sm:$0xff]
        %v4695 = vld [vmem:[#allocation2 + $0x102] sm:$0xff]
        %v4696 = vld [vmem:[#allocation2 + $0x10a] sm:$0xff]
        %v4697 = vld [vmem:[#allocation2 + $0x112] sm:$0xff]
        %v4698 = vld [vmem:[#allocation2 + $0x11a] sm:$0xff]
        %v4699 = vld [vmem:[#allocation2 + $0x122] sm:$0xff]
        %v4700 = vld [vmem:[#allocation2 + $0x12a] sm:$0xff]
        %v4701 = vld [vmem:[#allocation2 + $0x132] sm:$0xff]
        %v4702 = vld [vmem:[#allocation2 + $0x13a] sm:$0xff]
        %v4703 = vld [vmem:[#allocation2 + $0x142] sm:$0xff]
        %v4704 = vld [vmem:[#allocation2 + $0x14a] sm:$0xff]
        %v4705 = vmul.f32 %v4665, %v2063
        %v4706 = vmul.f32 %v4666, %v2064
        %v4707 = vmul.f32 %v4667, %v2065
        %v4708 = vmul.f32 %v4668, %v2066
        %v4709 = vmul.f32 %v4669, %v2067
        %v4710 = vmul.f32 %v4670, %v2068
        %v4711 = vmul.f32 %v4671, %v2069
        %v4712 = vmul.f32 %v4672, %v2070
        %v4713 = vmul.f32 %v4673, %v2071
        %v4714 = vmul.f32 %v4674, %v2072
        %v4715 = vmul.f32 %v4675, %v2073
        %v4716 = vmul.f32 %v4676, %v2074
        %v4717 = vmul.f32 %v4677, %v2075
        %v4718 = vmul.f32 %v4678, %v2076
        %v4719 = vmul.f32 %v4679, %v2077
        %v4720 = vmul.f32 %v4680, %v2078
        %v4721 = vmul.f32 %v4681, %v2079
        %v4722 = vmul.f32 %v4682, %v2080
        %v4723 = vmul.f32 %v4683, %v2081
        %v4724 = vmul.f32 %v4684, %v2082
        %v4725 = vmul.f32 %v4685, %v2083
        %v4726 = vmul.f32 %v4686, %v2084
        %v4727 = vmul.f32 %v4687, %v2085
        %v4728 = vmul.f32 %v4688, %v2086
        %v4729 = vmul.f32 %v4689, %v2087
        %v4730 = vmul.f32 %v4690, %v2088
        %v4731 = vmul.f32 %v4691, %v2089
        %v4732 = vmul.f32 %v4692, %v2090
        %v4733 = vmul.f32 %v4693, %v2091
        %v4734 = vmul.f32 %v4694, %v2092
        %v4735 = vmul.f32 %v4695, %v2093
        %v4736 = vmul.f32 %v4696, %v2094
        %v4737 = vmul.f32 %v4697, %v2095
        %v4738 = vmul.f32 %v4698, %v2096
        %v4739 = vmul.f32 %v4699, %v2097
        %v4740 = vmul.f32 %v4700, %v2098
        %v4741 = vmul.f32 %v4701, %v2099
        %v4742 = vmul.f32 %v4702, %v2100
        %v4743 = vmul.f32 %v4703, %v2101
        %v4744 = vmul.f32 %v4704, %v2102
        %v4745 = vpack.c.bf16 %v4706, %v4705
        %v4746 = vpack.c.bf16 %v4708, %v4707
        %v4747 = vpack.c.bf16 %v4710, %v4709
        %v4748 = vpack.c.bf16 %v4712, %v4711
        %v4749 = vpack.c.bf16 %v4714, %v4713
        %v4750 = vpack.c.bf16 %v4716, %v4715
        %v4751 = vpack.c.bf16 %v4718, %v4717
        %v4752 = vpack.c.bf16 %v4720, %v4719
        %v4753 = vpack.c.bf16 %v4722, %v4721
        %v4754 = vpack.c.bf16 %v4724, %v4723
        %v4755 = vpack.c.bf16 %v4726, %v4725
        %v4756 = vpack.c.bf16 %v4728, %v4727
        %v4757 = vpack.c.bf16 %v4730, %v4729
        %v4758 = vpack.c.bf16 %v4732, %v4731
        %v4759 = vpack.c.bf16 %v4734, %v4733
        %v4760 = vpack.c.bf16 %v4736, %v4735
        %v4761 = vpack.c.bf16 %v4738, %v4737
        %v4762 = vpack.c.bf16 %v4740, %v4739
        %v4763 = vpack.c.bf16 %v4742, %v4741
        %v4764 = vpack.c.bf16 %v4744, %v4743
        %v4765 = vld [vmem:[#allocation2 + $0xe] sm:$0xff]
        %v4766 = vld [vmem:[#allocation2 + $0x16] sm:$0xff]
        %v4767 = vld [vmem:[#allocation2 + $0x1e] sm:$0xff]
        %v4768 = vld [vmem:[#allocation2 + $0x26] sm:$0xff]
        %v4769 = vld [vmem:[#allocation2 + $0x2e] sm:$0xff]
        %v4770 = vld [vmem:[#allocation2 + $0x36] sm:$0xff]
        %v4771 = vld [vmem:[#allocation2 + $0x3e] sm:$0xff]
        %v4772 = vld [vmem:[#allocation2 + $0x46] sm:$0xff]
        %v4773 = vld [vmem:[#allocation2 + $0x4e] sm:$0xff]
        %v4774 = vld [vmem:[#allocation2 + $0x56] sm:$0xff]
        %v4775 = vld [vmem:[#allocation2 + $0x5e] sm:$0xff]
        %v4776 = vld [vmem:[#allocation2 + $0x66] sm:$0xff]
        %v4777 = vld [vmem:[#allocation2 + $0x6e] sm:$0xff]
        %v4778 = vld [vmem:[#allocation2 + $0x76] sm:$0xff]
        %v4779 = vld [vmem:[#allocation2 + $0x7e] sm:$0xff]
        %v4780 = vld [vmem:[#allocation2 + $0x86] sm:$0xff]
        %v4781 = vld [vmem:[#allocation2 + $0x8e] sm:$0xff]
        %v4782 = vld [vmem:[#allocation2 + $0x96] sm:$0xff]
        %v4783 = vld [vmem:[#allocation2 + $0x9e] sm:$0xff]
        %v4784 = vld [vmem:[#allocation2 + $0xa6] sm:$0xff]
        %v4785 = vld [vmem:[#allocation2 + $0xae] sm:$0xff]
        %v4786 = vld [vmem:[#allocation2 + $0xb6] sm:$0xff]
        %v4787 = vld [vmem:[#allocation2 + $0xbe] sm:$0xff]
        %v4788 = vld [vmem:[#allocation2 + $0xc6] sm:$0xff]
        %v4789 = vld [vmem:[#allocation2 + $0xce] sm:$0xff]
        %v4790 = vld [vmem:[#allocation2 + $0xd6] sm:$0xff]
        %v4791 = vld [vmem:[#allocation2 + $0xde] sm:$0xff]
        %v4792 = vld [vmem:[#allocation2 + $0xe6] sm:$0xff]
        %v4793 = vld [vmem:[#allocation2 + $0xee] sm:$0xff]
        %v4794 = vld [vmem:[#allocation2 + $0xf6] sm:$0xff]
        %v4795 = vld [vmem:[#allocation2 + $0xfe] sm:$0xff]
        %v4796 = vld [vmem:[#allocation2 + $0x106] sm:$0xff]
        %v4797 = vld [vmem:[#allocation2 + $0x10e] sm:$0xff]
        %v4798 = vld [vmem:[#allocation2 + $0x116] sm:$0xff]
        %v4799 = vld [vmem:[#allocation2 + $0x11e] sm:$0xff]
        %v4800 = vld [vmem:[#allocation2 + $0x126] sm:$0xff]
        %v4801 = vld [vmem:[#allocation2 + $0x12e] sm:$0xff]
        %v4802 = vld [vmem:[#allocation2 + $0x136] sm:$0xff]
        %v4803 = vld [vmem:[#allocation2 + $0x13e] sm:$0xff]
        %v4804 = vld [vmem:[#allocation2 + $0x146] sm:$0xff]
        %v4805 = vmul.f32 %v4765, %v2183
        %v4806 = vmul.f32 %v4766, %v2184
        %v4807 = vmul.f32 %v4767, %v2185
        %v4808 = vmul.f32 %v4768, %v2186
        %v4809 = vmul.f32 %v4769, %v2187
        %v4810 = vmul.f32 %v4770, %v2188
        %v4811 = vmul.f32 %v4771, %v2189
        %v4812 = vmul.f32 %v4772, %v2190
        %v4813 = vmul.f32 %v4773, %v2191
        %v4814 = vmul.f32 %v4774, %v2192
        %v4815 = vmul.f32 %v4775, %v2193
        %v4816 = vmul.f32 %v4776, %v2194
        %v4817 = vmul.f32 %v4777, %v2195
        %v4818 = vmul.f32 %v4778, %v2196
        %v4819 = vmul.f32 %v4779, %v2197
        %v4820 = vmul.f32 %v4780, %v2198
        %v4821 = vmul.f32 %v4781, %v2199
        %v4822 = vmul.f32 %v4782, %v2200
        %v4823 = vmul.f32 %v4783, %v2201
        %v4824 = vmul.f32 %v4784, %v2202
        %v4825 = vmul.f32 %v4785, %v2203
        %v4826 = vmul.f32 %v4786, %v2204
        %v4827 = vmul.f32 %v4787, %v2205
        %v4828 = vmul.f32 %v4788, %v2206
        %v4829 = vmul.f32 %v4789, %v2207
        %v4830 = vmul.f32 %v4790, %v2208
        %v4831 = vmul.f32 %v4791, %v2209
        %v4832 = vmul.f32 %v4792, %v2210
        %v4833 = vmul.f32 %v4793, %v2211
        %v4834 = vmul.f32 %v4794, %v2212
        %v4835 = vmul.f32 %v4795, %v2213
        %v4836 = vmul.f32 %v4796, %v2214
        %v4837 = vmul.f32 %v4797, %v2215
        %v4838 = vmul.f32 %v4798, %v2216
        %v4839 = vmul.f32 %v4799, %v2217
        %v4840 = vmul.f32 %v4800, %v2218
        %v4841 = vmul.f32 %v4801, %v2219
        %v4842 = vmul.f32 %v4802, %v2220
        %v4843 = vmul.f32 %v4803, %v2221
        %v4844 = vmul.f32 %v4804, %v2222
        %v4845 = vpack.c.bf16 %v4806, %v4805
        %v4846 = vpack.c.bf16 %v4808, %v4807
        %v4847 = vpack.c.bf16 %v4810, %v4809
        %v4848 = vpack.c.bf16 %v4812, %v4811
        %v4849 = vpack.c.bf16 %v4814, %v4813
        %v4850 = vpack.c.bf16 %v4816, %v4815
        %v4851 = vpack.c.bf16 %v4818, %v4817
        %v4852 = vpack.c.bf16 %v4820, %v4819
        %v4853 = vpack.c.bf16 %v4822, %v4821
        %v4854 = vpack.c.bf16 %v4824, %v4823
        %v4855 = vpack.c.bf16 %v4826, %v4825
        %v4856 = vpack.c.bf16 %v4828, %v4827
        %v4857 = vpack.c.bf16 %v4830, %v4829
        %v4858 = vpack.c.bf16 %v4832, %v4831
        %v4859 = vpack.c.bf16 %v4834, %v4833
        %v4860 = vpack.c.bf16 %v4836, %v4835
        %v4861 = vpack.c.bf16 %v4838, %v4837
        %v4862 = vpack.c.bf16 %v4840, %v4839
        %v4863 = vpack.c.bf16 %v4842, %v4841
        %v4864 = vpack.c.bf16 %v4844, %v4843
        %4865 = vst.msk [vmem:[#allocation3] sm:$0xff] %vm846, %v4845
        %4866 = vst.msk [vmem:[#allocation3 + $0x8] sm:$0xff] %vm846, %v4846
        %4867 = vst.msk [vmem:[#allocation3 + $0x10] sm:$0xff] %vm846, %v4847
        %4868 = vst.msk [vmem:[#allocation3 + $0x18] sm:$0xff] %vm846, %v4848
        %4869 = vst.msk [vmem:[#allocation3 + $0x20] sm:$0xff] %vm846, %v4849
        %4870 = vst.msk [vmem:[#allocation3 + $0x28] sm:$0xff] %vm846, %v4850
        %4871 = vst.msk [vmem:[#allocation3 + $0x30] sm:$0xff] %vm846, %v4851
        %4872 = vst.msk [vmem:[#allocation3 + $0x38] sm:$0xff] %vm846, %v4852
        %4873 = vst.msk [vmem:[#allocation3 + $0x40] sm:$0xff] %vm846, %v4853
        %4874 = vst.msk [vmem:[#allocation3 + $0x48] sm:$0xff] %vm846, %v4854
        %4875 = vst.msk [vmem:[#allocation3 + $0x50] sm:$0xff] %vm846, %v4855
        %4876 = vst.msk [vmem:[#allocation3 + $0x58] sm:$0xff] %vm846, %v4856
        %4877 = vst.msk [vmem:[#allocation3 + $0x60] sm:$0xff] %vm846, %v4857
        %4878 = vst.msk [vmem:[#allocation3 + $0x68] sm:$0xff] %vm846, %v4858
        %4879 = vst.msk [vmem:[#allocation3 + $0x70] sm:$0xff] %vm846, %v4859
        %4880 = vst.msk [vmem:[#allocation3 + $0x78] sm:$0xff] %vm846, %v4860
        %4897 = vrot.lane.b32.xlu0 %v4645, 4
        %v4898 = vpop.permute.xlu0 %4897
        %4899 = vrot.lane.b32.xlu0 %v4646, 4
        %v4900 = vpop.permute.xlu0 %4899
        %4901 = vrot.lane.b32.xlu0 %v4647, 4
        %v4902 = vpop.permute.xlu0 %4901
        %4903 = vrot.lane.b32.xlu0 %v4648, 4
        %v4904 = vpop.permute.xlu0 %4903
        %4905 = vrot.lane.b32.xlu0 %v4649, 4
        %v4906 = vpop.permute.xlu0 %4905
        %4907 = vrot.lane.b32.xlu0 %v4650, 4
        %v4908 = vpop.permute.xlu0 %4907
        %4909 = vrot.lane.b32.xlu0 %v4651, 4
        %v4910 = vpop.permute.xlu0 %4909
        %4911 = vrot.lane.b32.xlu0 %v4652, 4
        %v4912 = vpop.permute.xlu0 %4911
        %4913 = vrot.lane.b32.xlu0 %v4653, 4
        %v4914 = vpop.permute.xlu0 %4913
        %4915 = vrot.lane.b32.xlu0 %v4654, 4
        %v4916 = vpop.permute.xlu0 %4915
        %4917 = vrot.lane.b32.xlu0 %v4655, 4
        %v4918 = vpop.permute.xlu0 %4917
        %4919 = vrot.lane.b32.xlu0 %v4656, 4
        %v4920 = vpop.permute.xlu0 %4919
        %4921 = vrot.lane.b32.xlu0 %v4657, 4
        %v4922 = vpop.permute.xlu0 %4921
        %4923 = vrot.lane.b32.xlu0 %v4658, 4
        %v4924 = vpop.permute.xlu0 %4923
        %4925 = vrot.lane.b32.xlu0 %v4659, 4
        %v4926 = vpop.permute.xlu0 %4925
        %4927 = vrot.lane.b32.xlu0 %v4660, 4
        %v4928 = vpop.permute.xlu0 %4927
        %4945 = vst.msk [vmem:[#allocation3] sm:$0xff] %vm2601, %v4898
        %4946 = vst.msk [vmem:[#allocation3 + $0x8] sm:$0xff] %vm2601, %v4900
        %4947 = vst.msk [vmem:[#allocation3 + $0x10] sm:$0xff] %vm2601, %v4902
        %4948 = vst.msk [vmem:[#allocation3 + $0x18] sm:$0xff] %vm2601, %v4904
        %4949 = vst.msk [vmem:[#allocation3 + $0x20] sm:$0xff] %vm2601, %v4906
        %4950 = vst.msk [vmem:[#allocation3 + $0x28] sm:$0xff] %vm2601, %v4908
        %4951 = vst.msk [vmem:[#allocation3 + $0x30] sm:$0xff] %vm2601, %v4910
        %4952 = vst.msk [vmem:[#allocation3 + $0x38] sm:$0xff] %vm2601, %v4912
        %4953 = vst.msk [vmem:[#allocation3 + $0x40] sm:$0xff] %vm2601, %v4914
        %4954 = vst.msk [vmem:[#allocation3 + $0x48] sm:$0xff] %vm2601, %v4916
        %4955 = vst.msk [vmem:[#allocation3 + $0x50] sm:$0xff] %vm2601, %v4918
        %4956 = vst.msk [vmem:[#allocation3 + $0x58] sm:$0xff] %vm2601, %v4920
        %4957 = vst.msk [vmem:[#allocation3 + $0x60] sm:$0xff] %vm2601, %v4922
        %4958 = vst.msk [vmem:[#allocation3 + $0x68] sm:$0xff] %vm2601, %v4924
        %4959 = vst.msk [vmem:[#allocation3 + $0x70] sm:$0xff] %vm2601, %v4926
        %4960 = vst.msk [vmem:[#allocation3 + $0x78] sm:$0xff] %vm2601, %v4928
        %4977 = vrot.lane.b32.xlu0 %v4745, 8
        %v4978 = vpop.permute.xlu0 %4977
        %4979 = vrot.lane.b32.xlu0 %v4746, 8
        %v4980 = vpop.permute.xlu0 %4979
        %4981 = vrot.lane.b32.xlu0 %v4747, 8
        %v4982 = vpop.permute.xlu0 %4981
        %4983 = vrot.lane.b32.xlu0 %v4748, 8
        %v4984 = vpop.permute.xlu0 %4983
        %4985 = vrot.lane.b32.xlu0 %v4749, 8
        %v4986 = vpop.permute.xlu0 %4985
        %4987 = vrot.lane.b32.xlu0 %v4750, 8
        %v4988 = vpop.permute.xlu0 %4987
        %4989 = vrot.lane.b32.xlu0 %v4751, 8
        %v4990 = vpop.permute.xlu0 %4989
        %4991 = vrot.lane.b32.xlu0 %v4752, 8
        %v4992 = vpop.permute.xlu0 %4991
        %4993 = vrot.lane.b32.xlu0 %v4753, 8
        %v4994 = vpop.permute.xlu0 %4993
        %4995 = vrot.lane.b32.xlu0 %v4754, 8
        %v4996 = vpop.permute.xlu0 %4995
        %4997 = vrot.lane.b32.xlu0 %v4755, 8
        %v4998 = vpop.permute.xlu0 %4997
        %4999 = vrot.lane.b32.xlu0 %v4756, 8
        %v5000 = vpop.permute.xlu0 %4999
        %5001 = vrot.lane.b32.xlu0 %v4757, 8
        %v5002 = vpop.permute.xlu0 %5001
        %5003 = vrot.lane.b32.xlu0 %v4758, 8
        %v5004 = vpop.permute.xlu0 %5003
        %5005 = vrot.lane.b32.xlu0 %v4759, 8
        %v5006 = vpop.permute.xlu0 %5005
        %5007 = vrot.lane.b32.xlu0 %v4760, 8
        %v5008 = vpop.permute.xlu0 %5007
        %5025 = vst.msk [vmem:[#allocation3] sm:$0xff] %vm2682, %v4978
        %5026 = vst.msk [vmem:[#allocation3 + $0x8] sm:$0xff] %vm2682, %v4980
        %5027 = vst.msk [vmem:[#allocation3 + $0x10] sm:$0xff] %vm2682, %v4982
        %5028 = vst.msk [vmem:[#allocation3 + $0x18] sm:$0xff] %vm2682, %v4984
        %5029 = vst.msk [vmem:[#allocation3 + $0x20] sm:$0xff] %vm2682, %v4986
        %5030 = vst.msk [vmem:[#allocation3 + $0x28] sm:$0xff] %vm2682, %v4988
        %5031 = vst.msk [vmem:[#allocation3 + $0x30] sm:$0xff] %vm2682, %v4990
        %5032 = vst.msk [vmem:[#allocation3 + $0x38] sm:$0xff] %vm2682, %v4992
        %5033 = vst.msk [vmem:[#allocation3 + $0x40] sm:$0xff] %vm2682, %v4994
        %5034 = vst.msk [vmem:[#allocation3 + $0x48] sm:$0xff] %vm2682, %v4996
        %5035 = vst.msk [vmem:[#allocation3 + $0x50] sm:$0xff] %vm2682, %v4998
        %5036 = vst.msk [vmem:[#allocation3 + $0x58] sm:$0xff] %vm2682, %v5000
        %5037 = vst.msk [vmem:[#allocation3 + $0x60] sm:$0xff] %vm2682, %v5002
        %5038 = vst.msk [vmem:[#allocation3 + $0x68] sm:$0xff] %vm2682, %v5004
        %5039 = vst.msk [vmem:[#allocation3 + $0x70] sm:$0xff] %vm2682, %v5006
        %5040 = vst.msk [vmem:[#allocation3 + $0x78] sm:$0xff] %vm2682, %v5008
        %5057 = vrot.lane.b32.xlu0 %v4847, 12
        %v5058 = vpop.permute.xlu0 %5057
        %5059 = vrot.lane.b32.xlu0 %v4848, 12
        %v5060 = vpop.permute.xlu0 %5059
        %5061 = vrot.lane.b32.xlu0 %v4849, 12
        %v5062 = vpop.permute.xlu0 %5061
        %5063 = vrot.lane.b32.xlu0 %v4850, 12
        %v5064 = vpop.permute.xlu0 %5063
        %5065 = vrot.lane.b32.xlu0 %v4851, 12
        %v5066 = vpop.permute.xlu0 %5065
        %5067 = vrot.lane.b32.xlu0 %v4852, 12
        %v5068 = vpop.permute.xlu0 %5067
        %5069 = vrot.lane.b32.xlu0 %v4853, 12
        %v5070 = vpop.permute.xlu0 %5069
        %5071 = vrot.lane.b32.xlu0 %v4854, 12
        %v5072 = vpop.permute.xlu0 %5071
        %5073 = vrot.lane.b32.xlu0 %v4855, 12
        %v5074 = vpop.permute.xlu0 %5073
        %5075 = vrot.lane.b32.xlu0 %v4856, 12
        %v5076 = vpop.permute.xlu0 %5075
        %5077 = vrot.lane.b32.xlu0 %v4857, 12
        %v5078 = vpop.permute.xlu0 %5077
        %5079 = vrot.lane.b32.xlu0 %v4858, 12
        %v5080 = vpop.permute.xlu0 %5079
        %5081 = vrot.lane.b32.xlu0 %v4859, 12
        %v5082 = vpop.permute.xlu0 %5081
        %5083 = vrot.lane.b32.xlu0 %v4860, 12
        %v5084 = vpop.permute.xlu0 %5083
        %5085 = vrot.lane.b32.xlu0 %v4861, 12
        %v5086 = vpop.permute.xlu0 %5085
        %5087 = vrot.lane.b32.xlu0 %v4862, 12
        %v5088 = vpop.permute.xlu0 %5087
        %5105 = vst.msk [vmem:[#allocation3] sm:$0xff] %vm2763, %v5058
        %5106 = vst.msk [vmem:[#allocation3 + $0x8] sm:$0xff] %vm2763, %v5060
        %5107 = vst.msk [vmem:[#allocation3 + $0x10] sm:$0xff] %vm2763, %v5062
        %5108 = vst.msk [vmem:[#allocation3 + $0x18] sm:$0xff] %vm2763, %v5064
        %5109 = vst.msk [vmem:[#allocation3 + $0x20] sm:$0xff] %vm2763, %v5066
        %5110 = vst.msk [vmem:[#allocation3 + $0x28] sm:$0xff] %vm2763, %v5068
        %5111 = vst.msk [vmem:[#allocation3 + $0x30] sm:$0xff] %vm2763, %v5070
        %5112 = vst.msk [vmem:[#allocation3 + $0x38] sm:$0xff] %vm2763, %v5072
        %5113 = vst.msk [vmem:[#allocation3 + $0x40] sm:$0xff] %vm2763, %v5074
        %5114 = vst.msk [vmem:[#allocation3 + $0x48] sm:$0xff] %vm2763, %v5076
        %5115 = vst.msk [vmem:[#allocation3 + $0x50] sm:$0xff] %vm2763, %v5078
        %5116 = vst.msk [vmem:[#allocation3 + $0x58] sm:$0xff] %vm2763, %v5080
        %5117 = vst.msk [vmem:[#allocation3 + $0x60] sm:$0xff] %vm2763, %v5082
        %5118 = vst.msk [vmem:[#allocation3 + $0x68] sm:$0xff] %vm2763, %v5084
        %5119 = vst.msk [vmem:[#allocation3 + $0x70] sm:$0xff] %vm2763, %v5086
        %5120 = vst.msk [vmem:[#allocation3 + $0x78] sm:$0xff] %vm2763, %v5088
        %5123 = vrot.lane.b32.xlu0 %v4647, 16
        %v5124 = vpop.permute.xlu0 %5123
        %5125 = vrot.lane.b32.xlu0 %v4648, 16
        %v5126 = vpop.permute.xlu0 %5125
        %5127 = vrot.lane.b32.xlu0 %v4649, 16
        %v5128 = vpop.permute.xlu0 %5127
        %5129 = vrot.lane.b32.xlu0 %v4650, 16
        %v5130 = vpop.permute.xlu0 %5129
        %5131 = vrot.lane.b32.xlu0 %v4651, 16
        %v5132 = vpop.permute.xlu0 %5131
        %5133 = vrot.lane.b32.xlu0 %v4652, 16
        %v5134 = vpop.permute.xlu0 %5133
        %5135 = vrot.lane.b32.xlu0 %v4653, 16
        %v5136 = vpop.permute.xlu0 %5135
        %5137 = vrot.lane.b32.xlu0 %v4654, 16
        %v5138 = vpop.permute.xlu0 %5137
        %5139 = vrot.lane.b32.xlu0 %v4655, 16
        %v5140 = vpop.permute.xlu0 %5139
        %5141 = vrot.lane.b32.xlu0 %v4656, 16
        %v5142 = vpop.permute.xlu0 %5141
        %5143 = vrot.lane.b32.xlu0 %v4657, 16
        %v5144 = vpop.permute.xlu0 %5143
        %5145 = vrot.lane.b32.xlu0 %v4658, 16
        %v5146 = vpop.permute.xlu0 %5145
        %5147 = vrot.lane.b32.xlu0 %v4659, 16
        %v5148 = vpop.permute.xlu0 %5147
        %5149 = vrot.lane.b32.xlu0 %v4660, 16
        %v5150 = vpop.permute.xlu0 %5149
        %5151 = vrot.lane.b32.xlu0 %v4661, 16
        %v5152 = vpop.permute.xlu0 %5151
        %5153 = vrot.lane.b32.xlu0 %v4662, 16
        %v5154 = vpop.permute.xlu0 %5153
        %5171 = vst.msk [vmem:[#allocation3] sm:$0xff] %vm2830, %v5124
        %5172 = vst.msk [vmem:[#allocation3 + $0x8] sm:$0xff] %vm2830, %v5126
        %5173 = vst.msk [vmem:[#allocation3 + $0x10] sm:$0xff] %vm2830, %v5128
        %5174 = vst.msk [vmem:[#allocation3 + $0x18] sm:$0xff] %vm2830, %v5130
        %5175 = vst.msk [vmem:[#allocation3 + $0x20] sm:$0xff] %vm2830, %v5132
        %5176 = vst.msk [vmem:[#allocation3 + $0x28] sm:$0xff] %vm2830, %v5134
        %5177 = vst.msk [vmem:[#allocation3 + $0x30] sm:$0xff] %vm2830, %v5136
        %5178 = vst.msk [vmem:[#allocation3 + $0x38] sm:$0xff] %vm2830, %v5138
        %5179 = vst.msk [vmem:[#allocation3 + $0x40] sm:$0xff] %vm2830, %v5140
        %5180 = vst.msk [vmem:[#allocation3 + $0x48] sm:$0xff] %vm2830, %v5142
        %5181 = vst.msk [vmem:[#allocation3 + $0x50] sm:$0xff] %vm2830, %v5144
        %5182 = vst.msk [vmem:[#allocation3 + $0x58] sm:$0xff] %vm2830, %v5146
        %5183 = vst.msk [vmem:[#allocation3 + $0x60] sm:$0xff] %vm2830, %v5148
        %5184 = vst.msk [vmem:[#allocation3 + $0x68] sm:$0xff] %vm2830, %v5150
        %5185 = vst.msk [vmem:[#allocation3 + $0x70] sm:$0xff] %vm2830, %v5152
        %5186 = vst.msk [vmem:[#allocation3 + $0x78] sm:$0xff] %vm2830, %v5154
        %5189 = vrot.lane.b32.xlu0 %v4747, 20
        %v5190 = vpop.permute.xlu0 %5189
        %5191 = vrot.lane.b32.xlu0 %v4748, 20
        %v5192 = vpop.permute.xlu0 %5191
        %5193 = vrot.lane.b32.xlu0 %v4749, 20
        %v5194 = vpop.permute.xlu0 %5193
        %5195 = vrot.lane.b32.xlu0 %v4750, 20
        %v5196 = vpop.permute.xlu0 %5195
        %5197 = vrot.lane.b32.xlu0 %v4751, 20
        %v5198 = vpop.permute.xlu0 %5197
        %5199 = vrot.lane.b32.xlu0 %v4752, 20
        %v5200 = vpop.permute.xlu0 %5199
        %5201 = vrot.lane.b32.xlu0 %v4753, 20
        %v5202 = vpop.permute.xlu0 %5201
        %5203 = vrot.lane.b32.xlu0 %v4754, 20
        %v5204 = vpop.permute.xlu0 %5203
        %5205 = vrot.lane.b32.xlu0 %v4755, 20
        %v5206 = vpop.permute.xlu0 %5205
        %5207 = vrot.lane.b32.xlu0 %v4756, 20
        %v5208 = vpop.permute.xlu0 %5207
        %5209 = vrot.lane.b32.xlu0 %v4757, 20
        %v5210 = vpop.permute.xlu0 %5209
        %5211 = vrot.lane.b32.xlu0 %v4758, 20
        %v5212 = vpop.permute.xlu0 %5211
        %5213 = vrot.lane.b32.xlu0 %v4759, 20
        %v5214 = vpop.permute.xlu0 %5213
        %5215 = vrot.lane.b32.xlu0 %v4760, 20
        %v5216 = vpop.permute.xlu0 %5215
        %5217 = vrot.lane.b32.xlu0 %v4761, 20
        %v5218 = vpop.permute.xlu0 %5217
        %5219 = vrot.lane.b32.xlu0 %v4762, 20
        %v5220 = vpop.permute.xlu0 %5219
        %5237 = vst.msk [vmem:[#allocation3] sm:$0xff] %vm2897, %v5190
        %5238 = vst.msk [vmem:[#allocation3 + $0x8] sm:$0xff] %vm2897, %v5192
        %5239 = vst.msk [vmem:[#allocation3 + $0x10] sm:$0xff] %vm2897, %v5194
        %5240 = vst.msk [vmem:[#allocation3 + $0x18] sm:$0xff] %vm2897, %v5196
        %5241 = vst.msk [vmem:[#allocation3 + $0x20] sm:$0xff] %vm2897, %v5198
        %5242 = vst.msk [vmem:[#allocation3 + $0x28] sm:$0xff] %vm2897, %v5200
        %5243 = vst.msk [vmem:[#allocation3 + $0x30] sm:$0xff] %vm2897, %v5202
        %5244 = vst.msk [vmem:[#allocation3 + $0x38] sm:$0xff] %vm2897, %v5204
        %5245 = vst.msk [vmem:[#allocation3 + $0x40] sm:$0xff] %vm2897, %v5206
        %5246 = vst.msk [vmem:[#allocation3 + $0x48] sm:$0xff] %vm2897, %v5208
        %5247 = vst.msk [vmem:[#allocation3 + $0x50] sm:$0xff] %vm2897, %v5210
        %5248 = vst.msk [vmem:[#allocation3 + $0x58] sm:$0xff] %vm2897, %v5212
        %5249 = vst.msk [vmem:[#allocation3 + $0x60] sm:$0xff] %vm2897, %v5214
        %5250 = vst.msk [vmem:[#allocation3 + $0x68] sm:$0xff] %vm2897, %v5216
        %5251 = vst.msk [vmem:[#allocation3 + $0x70] sm:$0xff] %vm2897, %v5218
        %5252 = vst.msk [vmem:[#allocation3 + $0x78] sm:$0xff] %vm2897, %v5220
        %5255 = vrot.lane.b32.xlu0 %v4849, 24
        %v5256 = vpop.permute.xlu0 %5255
        %5257 = vrot.lane.b32.xlu0 %v4850, 24
        %v5258 = vpop.permute.xlu0 %5257
        %5259 = vrot.lane.b32.xlu0 %v4851, 24
        %v5260 = vpop.permute.xlu0 %5259
        %5261 = vrot.lane.b32.xlu0 %v4852, 24
        %v5262 = vpop.permute.xlu0 %5261
        %5263 = vrot.lane.b32.xlu0 %v4853, 24
        %v5264 = vpop.permute.xlu0 %5263
        %5265 = vrot.lane.b32.xlu0 %v4854, 24
        %v5266 = vpop.permute.xlu0 %5265
        %5267 = vrot.lane.b32.xlu0 %v4855, 24
        %v5268 = vpop.permute.xlu0 %5267
        %5269 = vrot.lane.b32.xlu0 %v4856, 24
        %v5270 = vpop.permute.xlu0 %5269
        %5271 = vrot.lane.b32.xlu0 %v4857, 24
        %v5272 = vpop.permute.xlu0 %5271
        %5273 = vrot.lane.b32.xlu0 %v4858, 24
        %v5274 = vpop.permute.xlu0 %5273
        %5275 = vrot.lane.b32.xlu0 %v4859, 24
        %v5276 = vpop.permute.xlu0 %5275
        %5277 = vrot.lane.b32.xlu0 %v4860, 24
        %v5278 = vpop.permute.xlu0 %5277
        %5279 = vrot.lane.b32.xlu0 %v4861, 24
        %v5280 = vpop.permute.xlu0 %5279
        %5281 = vrot.lane.b32.xlu0 %v4862, 24
        %v5282 = vpop.permute.xlu0 %5281
        %5283 = vrot.lane.b32.xlu0 %v4863, 24
        %v5284 = vpop.permute.xlu0 %5283
        %5285 = vrot.lane.b32.xlu0 %v4864, 24
        %v5286 = vpop.permute.xlu0 %5285
        %5303 = vst.msk [vmem:[#allocation3] sm:$0xff] %vm2964, %v5256
        %5304 = vst.msk [vmem:[#allocation3 + $0x8] sm:$0xff] %vm2964, %v5258
        %5305 = vst.msk [vmem:[#allocation3 + $0x10] sm:$0xff] %vm2964, %v5260
        %5306 = vst.msk [vmem:[#allocation3 + $0x18] sm:$0xff] %vm2964, %v5262
        %5307 = vst.msk [vmem:[#allocation3 + $0x20] sm:$0xff] %vm2964, %v5264
        %5308 = vst.msk [vmem:[#allocation3 + $0x28] sm:$0xff] %vm2964, %v5266
        %5309 = vst.msk [vmem:[#allocation3 + $0x30] sm:$0xff] %vm2964, %v5268
        %5310 = vst.msk [vmem:[#allocation3 + $0x38] sm:$0xff] %vm2964, %v5270
        %5311 = vst.msk [vmem:[#allocation3 + $0x40] sm:$0xff] %vm2964, %v5272
        %5312 = vst.msk [vmem:[#allocation3 + $0x48] sm:$0xff] %vm2964, %v5274
        %5313 = vst.msk [vmem:[#allocation3 + $0x50] sm:$0xff] %vm2964, %v5276
        %5314 = vst.msk [vmem:[#allocation3 + $0x58] sm:$0xff] %vm2964, %v5278
        %5315 = vst.msk [vmem:[#allocation3 + $0x60] sm:$0xff] %vm2964, %v5280
        %5316 = vst.msk [vmem:[#allocation3 + $0x68] sm:$0xff] %vm2964, %v5282
        %5317 = vst.msk [vmem:[#allocation3 + $0x70] sm:$0xff] %vm2964, %v5284
        %5318 = vst.msk [vmem:[#allocation3 + $0x78] sm:$0xff] %vm2964, %v5286
        %5321 = vrot.lane.b32.xlu0 %v4649, 28
        %v5322 = vpop.permute.xlu0 %5321
        %5323 = vrot.lane.b32.xlu0 %v4650, 28
        %v5324 = vpop.permute.xlu0 %5323
        %5325 = vrot.lane.b32.xlu0 %v4651, 28
        %v5326 = vpop.permute.xlu0 %5325
        %5327 = vrot.lane.b32.xlu0 %v4652, 28
        %v5328 = vpop.permute.xlu0 %5327
        %5329 = vrot.lane.b32.xlu0 %v4653, 28
        %v5330 = vpop.permute.xlu0 %5329
        %5331 = vrot.lane.b32.xlu0 %v4654, 28
        %v5332 = vpop.permute.xlu0 %5331
        %5333 = vrot.lane.b32.xlu0 %v4655, 28
        %v5334 = vpop.permute.xlu0 %5333
        %5335 = vrot.lane.b32.xlu0 %v4656, 28
        %v5336 = vpop.permute.xlu0 %5335
        %5337 = vrot.lane.b32.xlu0 %v4657, 28
        %v5338 = vpop.permute.xlu0 %5337
        %5339 = vrot.lane.b32.xlu0 %v4658, 28
        %v5340 = vpop.permute.xlu0 %5339
        %5341 = vrot.lane.b32.xlu0 %v4659, 28
        %v5342 = vpop.permute.xlu0 %5341
        %5343 = vrot.lane.b32.xlu0 %v4660, 28
        %v5344 = vpop.permute.xlu0 %5343
        %5345 = vrot.lane.b32.xlu0 %v4661, 28
        %v5346 = vpop.permute.xlu0 %5345
        %5347 = vrot.lane.b32.xlu0 %v4662, 28
        %v5348 = vpop.permute.xlu0 %5347
        %5349 = vrot.lane.b32.xlu0 %v4663, 28
        %v5350 = vpop.permute.xlu0 %5349
        %5351 = vrot.lane.b32.xlu0 %v4664, 28
        %v5352 = vpop.permute.xlu0 %5351
        %5369 = vst.msk [vmem:[#allocation3] sm:$0xff] %vm3031, %v5322
        %5370 = vst.msk [vmem:[#allocation3 + $0x8] sm:$0xff] %vm3031, %v5324
        %5371 = vst.msk [vmem:[#allocation3 + $0x10] sm:$0xff] %vm3031, %v5326
        %5372 = vst.msk [vmem:[#allocation3 + $0x18] sm:$0xff] %vm3031, %v5328
        %5373 = vst.msk [vmem:[#allocation3 + $0x20] sm:$0xff] %vm3031, %v5330
        %5374 = vst.msk [vmem:[#allocation3 + $0x28] sm:$0xff] %vm3031, %v5332
        %5375 = vst.msk [vmem:[#allocation3 + $0x30] sm:$0xff] %vm3031, %v5334
        %5376 = vst.msk [vmem:[#allocation3 + $0x38] sm:$0xff] %vm3031, %v5336
        %5377 = vst.msk [vmem:[#allocation3 + $0x40] sm:$0xff] %vm3031, %v5338
        %5378 = vst.msk [vmem:[#allocation3 + $0x48] sm:$0xff] %vm3031, %v5340
        %5379 = vst.msk [vmem:[#allocation3 + $0x50] sm:$0xff] %vm3031, %v5342
        %5380 = vst.msk [vmem:[#allocation3 + $0x58] sm:$0xff] %vm3031, %v5344
        %5381 = vst.msk [vmem:[#allocation3 + $0x60] sm:$0xff] %vm3031, %v5346
        %5382 = vst.msk [vmem:[#allocation3 + $0x68] sm:$0xff] %vm3031, %v5348
        %5383 = vst.msk [vmem:[#allocation3 + $0x70] sm:$0xff] %vm3031, %v5350
        %5384 = vst.msk [vmem:[#allocation3 + $0x78] sm:$0xff] %vm3031, %v5352
        %5387 = vrot.lane.b32.xlu0 %v4749, 32
        %v5388 = vpop.permute.xlu0 %5387
        %5389 = vrot.lane.b32.xlu0 %v4750, 32
        %v5390 = vpop.permute.xlu0 %5389
        %5391 = vrot.lane.b32.xlu0 %v4751, 32
        %v5392 = vpop.permute.xlu0 %5391
        %5393 = vrot.lane.b32.xlu0 %v4752, 32
        %v5394 = vpop.permute.xlu0 %5393
        %5395 = vrot.lane.b32.xlu0 %v4753, 32
        %v5396 = vpop.permute.xlu0 %5395
        %5397 = vrot.lane.b32.xlu0 %v4754, 32
        %v5398 = vpop.permute.xlu0 %5397
        %5399 = vrot.lane.b32.xlu0 %v4755, 32
        %v5400 = vpop.permute.xlu0 %5399
        %5401 = vrot.lane.b32.xlu0 %v4756, 32
        %v5402 = vpop.permute.xlu0 %5401
        %5403 = vrot.lane.b32.xlu0 %v4757, 32
        %v5404 = vpop.permute.xlu0 %5403
        %5405 = vrot.lane.b32.xlu0 %v4758, 32
        %v5406 = vpop.permute.xlu0 %5405
        %5407 = vrot.lane.b32.xlu0 %v4759, 32
        %v5408 = vpop.permute.xlu0 %5407
        %5409 = vrot.lane.b32.xlu0 %v4760, 32
        %v5410 = vpop.permute.xlu0 %5409
        %5411 = vrot.lane.b32.xlu0 %v4761, 32
        %v5412 = vpop.permute.xlu0 %5411
        %5413 = vrot.lane.b32.xlu0 %v4762, 32
        %v5414 = vpop.permute.xlu0 %5413
        %5415 = vrot.lane.b32.xlu0 %v4763, 32
        %v5416 = vpop.permute.xlu0 %5415
        %5417 = vrot.lane.b32.xlu0 %v4764, 32
        %v5418 = vpop.permute.xlu0 %5417
        %5435 = vst.msk [vmem:[#allocation3] sm:$0xff] %vm3098, %v5388
        %5436 = vst.msk [vmem:[#allocation3 + $0x8] sm:$0xff] %vm3098, %v5390
        %5437 = vst.msk [vmem:[#allocation3 + $0x10] sm:$0xff] %vm3098, %v5392
        %5438 = vst.msk [vmem:[#allocation3 + $0x18] sm:$0xff] %vm3098, %v5394
        %5439 = vst.msk [vmem:[#allocation3 + $0x20] sm:$0xff] %vm3098, %v5396
        %5440 = vst.msk [vmem:[#allocation3 + $0x28] sm:$0xff] %vm3098, %v5398
        %5441 = vst.msk [vmem:[#allocation3 + $0x30] sm:$0xff] %vm3098, %v5400
        %5442 = vst.msk [vmem:[#allocation3 + $0x38] sm:$0xff] %vm3098, %v5402
        %5443 = vst.msk [vmem:[#allocation3 + $0x40] sm:$0xff] %vm3098, %v5404
        %5444 = vst.msk [vmem:[#allocation3 + $0x48] sm:$0xff] %vm3098, %v5406
        %5445 = vst.msk [vmem:[#allocation3 + $0x50] sm:$0xff] %vm3098, %v5408
        %5446 = vst.msk [vmem:[#allocation3 + $0x58] sm:$0xff] %vm3098, %v5410
        %5447 = vst.msk [vmem:[#allocation3 + $0x60] sm:$0xff] %vm3098, %v5412
        %5448 = vst.msk [vmem:[#allocation3 + $0x68] sm:$0xff] %vm3098, %v5414
        %5449 = vst.msk [vmem:[#allocation3 + $0x70] sm:$0xff] %vm3098, %v5416
        %5450 = vst.msk [vmem:[#allocation3 + $0x78] sm:$0xff] %vm3098, %v5418
        %v5451 = vld [vmem:[#allocation3] sm:$0xff]
        %v5452 = vld [vmem:[#allocation3 + $0x8] sm:$0xff]
        %v5453 = vld [vmem:[#allocation3 + $0x10] sm:$0xff]
        %v5454 = vld [vmem:[#allocation3 + $0x18] sm:$0xff]
        %v5455 = vld [vmem:[#allocation3 + $0x20] sm:$0xff]
        %v5456 = vld [vmem:[#allocation3 + $0x28] sm:$0xff]
        %v5457 = vld [vmem:[#allocation3 + $0x30] sm:$0xff]
        %v5458 = vld [vmem:[#allocation3 + $0x38] sm:$0xff]
        %v5459 = vld [vmem:[#allocation3 + $0x40] sm:$0xff]
        %v5460 = vld [vmem:[#allocation3 + $0x48] sm:$0xff]
        %v5461 = vld [vmem:[#allocation3 + $0x50] sm:$0xff]
        %v5462 = vld [vmem:[#allocation3 + $0x58] sm:$0xff]
        %v5463 = vld [vmem:[#allocation3 + $0x60] sm:$0xff]
        %v5464 = vld [vmem:[#allocation3 + $0x68] sm:$0xff]
        %v5465 = vld [vmem:[#allocation3 + $0x70] sm:$0xff]
        %v5466 = vld [vmem:[#allocation3 + $0x78] sm:$0xff]
        %v5468 = vlaneseq
        %v5469 = vshrl.u32 %v5468, 7
        %v5470 = vsub.s32 0, %v5469
        %v5471 = vrot.slane %v4604, %v5470
        %v5478 = vunpack.c.l.b16 %v4598
        %v5479 = vunpack.c.l.b16 %v4599
        %v5480 = vunpack.c.l.b16 %v4600
        %v5481 = vunpack.c.l.b16 %v4601
        %v5482 = vunpack.c.l.b16 %v4602
        %v5483 = vpack.c.b16 %v5479, %v5478
        %v5484 = vpack.c.b16 %v5481, %v5480
        %v5485 = vpack.c.b16 %v5482, %v5482
        %v5489 = vsel %vm3152, %v5451, 0
        %v5492 = vsel %vm3152, %v5452, 0
        %v5495 = vsel %vm3152, %v5453, 0
        %v5498 = vsel %vm3152, %v5454, 0
        %v5501 = vsel %vm3152, %v5455, 0
        %v5504 = vsel %vm3152, %v5456, 0
        %v5507 = vsel %vm3152, %v5457, 0
        %v5510 = vsel %vm3152, %v5458, 0
        %v5513 = vsel %vm3152, %v5459, 0
        %v5516 = vsel %vm3152, %v5460, 0
        %v5519 = vsel %vm3152, %v5461, 0
        %v5522 = vsel %vm3152, %v5462, 0
        %v5525 = vsel %vm3152, %v5463, 0
        %v5528 = vsel %vm3152, %v5464, 0
        %v5531 = vsel %vm3152, %v5465, 0
        %v5534 = vsel %vm3152, %v5466, 0
        %v5537 = vsel %vm3201, %v5485, 0
        %5539 = vmatprep.subr.bf16.mxu0 0
        %5540 = vmatpush1.bf16.msra.mxu0 %v5483
        %5541 = vmatprep.subr.bf16.mxu0 0
        %5542 = vmatpush1.bf16.msra.mxu0 %v5484
        %5543 = vmatprep.subr.bf16.mxu0 0
        %5544 = vmatpush1.bf16.msra.mxu0 %v5537
        %5545 = vmatprep.subr.bf16.mxu0 0
        %5546 = vmatpush1.bf16.msra.mxu0 0
        %5547 = vmatprep.subr.bf16.mxu0 0
        %5548 = vmatpush1.bf16.msra.mxu0 0
        %5549 = vmatprep.subr.bf16.mxu0 0
        %5550 = vmatpush1.bf16.msra.mxu0 0
        %5551 = vmatprep.subr.bf16.mxu0 0
        %5552 = vmatpush1.bf16.msra.mxu0 0
        %5553 = vmatprep.subr.bf16.mxu0 0
        %5554 = vmatpush1.bf16.msra.mxu0 0
        %5555 = vmatprep.subr.bf16.mxu0 0
        %5556 = vmatpush1.bf16.msra.mxu0 0
        %5557 = vmatprep.subr.bf16.mxu0 0
        %5558 = vmatpush1.bf16.msra.mxu0 0
        %5559 = vmatprep.subr.bf16.mxu0 0
        %5560 = vmatpush1.bf16.msra.mxu0 0
        %5561 = vmatprep.subr.bf16.mxu0 0
        %5562 = vmatpush1.bf16.msra.mxu0 0
        %5563 = vmatprep.subr.bf16.mxu0 0
        %5564 = vmatpush1.bf16.msra.mxu0 0
        %5565 = vmatprep.subr.bf16.mxu0 0
        %5566 = vmatpush1.bf16.msra.mxu0 0
        %5567 = vmatprep.subr.bf16.mxu0 0
        %5568 = vmatpush1.bf16.msra.mxu0 0
        %5569 = vmatprep.subr.bf16.mxu0 0
        %5570 = vmatpush1.bf16.msra.mxu0 0
        %5571 = vmatprep.mubr.bf16.mxu0 0
        %5572 = vmatmul.mubr.bf16.gmra.mrb[0].mxu0 %v5489
        %v5573 = vpop.f32.mrb[0].mxu0
        %v5574 = vadd.f32 %v5471, %v5573
        %v5575 = vpop.f32.mrb[0].mxu0
        %v5576 = vpop.f32.mrb[0].mxu0
        %v5577 = vadd.f32 %v5471, %v5576
        %v5578 = vpop.f32.mrb[0].mxu0
        %5579 = vmatprep.mubr.bf16.mxu0 0
        %5580 = vmatmul.mubr.bf16.gmra.mrb[0].mxu0 %v5492
        %v5581 = vpop.f32.mrb[0].mxu0
        %v5582 = vadd.f32 %v5471, %v5581
        %v5583 = vpop.f32.mrb[0].mxu0
        %v5584 = vpop.f32.mrb[0].mxu0
        %v5585 = vadd.f32 %v5471, %v5584
        %v5586 = vpop.f32.mrb[0].mxu0
        %5587 = vmatprep.mubr.bf16.mxu0 0
        %5588 = vmatmul.mubr.bf16.gmra.mrb[0].mxu0 %v5495
        %v5589 = vpop.f32.mrb[0].mxu0
        %v5590 = vadd.f32 %v5471, %v5589
        %v5591 = vpop.f32.mrb[0].mxu0
        %v5592 = vpop.f32.mrb[0].mxu0
        %v5593 = vadd.f32 %v5471, %v5592
        %v5594 = vpop.f32.mrb[0].mxu0
        %5595 = vmatprep.mubr.bf16.mxu0 0
        %5596 = vmatmul.mubr.bf16.gmra.mrb[0].mxu0 %v5498
        %v5597 = vpop.f32.mrb[0].mxu0
        %v5598 = vadd.f32 %v5471, %v5597
        %v5599 = vpop.f32.mrb[0].mxu0
        %v5600 = vpop.f32.mrb[0].mxu0
        %v5601 = vadd.f32 %v5471, %v5600
        %v5602 = vpop.f32.mrb[0].mxu0
        %5603 = vmatprep.mubr.bf16.mxu0 0
        %5604 = vmatmul.mubr.bf16.gmra.mrb[0].mxu0 %v5501
        %v5605 = vpop.f32.mrb[0].mxu0
        %v5606 = vadd.f32 %v5471, %v5605
        %v5607 = vpop.f32.mrb[0].mxu0
        %v5608 = vpop.f32.mrb[0].mxu0
        %v5609 = vadd.f32 %v5471, %v5608
        %v5610 = vpop.f32.mrb[0].mxu0
        %5611 = vmatprep.mubr.bf16.mxu0 0
        %5612 = vmatmul.mubr.bf16.gmra.mrb[0].mxu0 %v5504
        %v5613 = vpop.f32.mrb[0].mxu0
        %v5614 = vadd.f32 %v5471, %v5613
        %v5615 = vpop.f32.mrb[0].mxu0
        %v5616 = vpop.f32.mrb[0].mxu0
        %v5617 = vadd.f32 %v5471, %v5616
        %v5618 = vpop.f32.mrb[0].mxu0
        %5619 = vmatprep.mubr.bf16.mxu0 0
        %5620 = vmatmul.mubr.bf16.gmra.mrb[0].mxu0 %v5507
        %v5621 = vpop.f32.mrb[0].mxu0
        %v5622 = vadd.f32 %v5471, %v5621
        %v5623 = vpop.f32.mrb[0].mxu0
        %v5624 = vpop.f32.mrb[0].mxu0
        %v5625 = vadd.f32 %v5471, %v5624
        %v5626 = vpop.f32.mrb[0].mxu0
        %5627 = vmatprep.mubr.bf16.mxu0 0
        %5628 = vmatmul.mubr.bf16.gmra.mrb[0].mxu0 %v5510
        %v5629 = vpop.f32.mrb[0].mxu0
        %v5630 = vadd.f32 %v5471, %v5629
        %v5631 = vpop.f32.mrb[0].mxu0
        %v5632 = vpop.f32.mrb[0].mxu0
        %v5633 = vadd.f32 %v5471, %v5632
        %v5634 = vpop.f32.mrb[0].mxu0
        %5635 = vmatprep.mubr.bf16.mxu0 0
        %5636 = vmatmul.mubr.bf16.gmra.mrb[0].mxu0 %v5513
        %v5637 = vpop.f32.mrb[0].mxu0
        %v5638 = vadd.f32 %v5471, %v5637
        %v5639 = vpop.f32.mrb[0].mxu0
        %v5640 = vpop.f32.mrb[0].mxu0
        %v5641 = vadd.f32 %v5471, %v5640
        %v5642 = vpop.f32.mrb[0].mxu0
        %5643 = vmatprep.mubr.bf16.mxu0 0
        %5644 = vmatmul.mubr.bf16.gmra.mrb[0].mxu0 %v5516
        %v5645 = vpop.f32.mrb[0].mxu0
        %v5646 = vadd.f32 %v5471, %v5645
        %v5647 = vpop.f32.mrb[0].mxu0
        %v5648 = vpop.f32.mrb[0].mxu0
        %v5649 = vadd.f32 %v5471, %v5648
        %v5650 = vpop.f32.mrb[0].mxu0
        %5651 = vmatprep.mubr.bf16.mxu0 0
        %5652 = vmatmul.mubr.bf16.gmra.mrb[0].mxu0 %v5519
        %v5653 = vpop.f32.mrb[0].mxu0
        %v5654 = vadd.f32 %v5471, %v5653
        %v5655 = vpop.f32.mrb[0].mxu0
        %v5656 = vpop.f32.mrb[0].mxu0
        %v5657 = vadd.f32 %v5471, %v5656
        %v5658 = vpop.f32.mrb[0].mxu0
        %5659 = vmatprep.mubr.bf16.mxu0 0
        %5660 = vmatmul.mubr.bf16.gmra.mrb[0].mxu0 %v5522
        %v5661 = vpop.f32.mrb[0].mxu0
        %v5662 = vadd.f32 %v5471, %v5661
        %v5663 = vpop.f32.mrb[0].mxu0
        %v5664 = vpop.f32.mrb[0].mxu0
        %v5665 = vadd.f32 %v5471, %v5664
        %v5666 = vpop.f32.mrb[0].mxu0
        %5667 = vmatprep.mubr.bf16.mxu0 0
        %5668 = vmatmul.mubr.bf16.gmra.mrb[0].mxu0 %v5525
        %v5669 = vpop.f32.mrb[0].mxu0
        %v5670 = vadd.f32 %v5471, %v5669
        %v5671 = vpop.f32.mrb[0].mxu0
        %v5672 = vpop.f32.mrb[0].mxu0
        %v5673 = vadd.f32 %v5471, %v5672
        %v5674 = vpop.f32.mrb[0].mxu0
        %5675 = vmatprep.mubr.bf16.mxu0 0
        %5676 = vmatmul.mubr.bf16.gmra.mrb[0].mxu0 %v5528
        %v5677 = vpop.f32.mrb[0].mxu0
        %v5678 = vadd.f32 %v5471, %v5677
        %v5679 = vpop.f32.mrb[0].mxu0
        %v5680 = vpop.f32.mrb[0].mxu0
        %v5681 = vadd.f32 %v5471, %v5680
        %v5682 = vpop.f32.mrb[0].mxu0
        %5683 = vmatprep.mubr.bf16.mxu0 0
        %5684 = vmatmul.mubr.bf16.gmra.mrb[0].mxu0 %v5531
        %v5685 = vpop.f32.mrb[0].mxu0
        %v5686 = vadd.f32 %v5471, %v5685
        %v5687 = vpop.f32.mrb[0].mxu0
        %v5688 = vpop.f32.mrb[0].mxu0
        %v5689 = vadd.f32 %v5471, %v5688
        %v5690 = vpop.f32.mrb[0].mxu0
        %5691 = vmatprep.mubr.bf16.mxu0 0
        %5692 = vmatmul.mubr.bf16.gmra.mrb[0].mxu0 %v5534
        %v5693 = vpop.f32.mrb[0].mxu0
        %v5694 = vadd.f32 %v5471, %v5693
        %v5695 = vpop.f32.mrb[0].mxu0
        %v5696 = vpop.f32.mrb[0].mxu0
        %v5697 = vadd.f32 %v5471, %v5696
        %v5698 = vpop.f32.mrb[0].mxu0
        %5699 = vdwg.mxu0
        %v5700 = vmax.f32 %v5574, 0.0
        %v5701 = vmax.f32 %v5577, 0.0
        %v5702 = vmax.f32 %v5582, 0.0
        %v5703 = vmax.f32 %v5585, 0.0
        %v5704 = vmax.f32 %v5590, 0.0
        %v5705 = vmax.f32 %v5593, 0.0
        %v5706 = vmax.f32 %v5598, 0.0
        %v5707 = vmax.f32 %v5601, 0.0
        %v5708 = vmax.f32 %v5606, 0.0
        %v5709 = vmax.f32 %v5609, 0.0
        %v5710 = vmax.f32 %v5614, 0.0
        %v5711 = vmax.f32 %v5617, 0.0
        %v5712 = vmax.f32 %v5622, 0.0
        %v5713 = vmax.f32 %v5625, 0.0
        %v5714 = vmax.f32 %v5630, 0.0
        %v5715 = vmax.f32 %v5633, 0.0
        %v5716 = vmax.f32 %v5638, 0.0
        %v5717 = vmax.f32 %v5641, 0.0
        %v5718 = vmax.f32 %v5646, 0.0
        %v5719 = vmax.f32 %v5649, 0.0
        %v5720 = vmax.f32 %v5654, 0.0
        %v5721 = vmax.f32 %v5657, 0.0
        %v5722 = vmax.f32 %v5662, 0.0
        %v5723 = vmax.f32 %v5665, 0.0
        %v5724 = vmax.f32 %v5670, 0.0
        %v5725 = vmax.f32 %v5673, 0.0
        %v5726 = vmax.f32 %v5678, 0.0
        %v5727 = vmax.f32 %v5681, 0.0
        %v5728 = vmax.f32 %v5686, 0.0
        %v5729 = vmax.f32 %v5689, 0.0
        %v5730 = vmax.f32 %v5694, 0.0
        %v5731 = vmax.f32 %v5697, 0.0
        %v5732 = vpack.c.bf16 %v5701, %v5700
        %v5733 = vpack.c.bf16 %v5703, %v5702
        %v5734 = vpack.c.bf16 %v5705, %v5704
        %v5735 = vpack.c.bf16 %v5707, %v5706
        %v5736 = vpack.c.bf16 %v5709, %v5708
        %v5737 = vpack.c.bf16 %v5711, %v5710
        %v5738 = vpack.c.bf16 %v5713, %v5712
        %v5739 = vpack.c.bf16 %v5715, %v5714
        %v5740 = vpack.c.bf16 %v5717, %v5716
        %v5741 = vpack.c.bf16 %v5719, %v5718
        %v5742 = vpack.c.bf16 %v5721, %v5720
        %v5743 = vpack.c.bf16 %v5723, %v5722
        %v5744 = vpack.c.bf16 %v5725, %v5724
        %v5745 = vpack.c.bf16 %v5727, %v5726
        %v5746 = vpack.c.bf16 %v5729, %v5728
        %v5747 = vpack.c.bf16 %v5731, %v5730
        %v5748 = vld [vmem:[%s5] sm:$0x3]
        %v5749 = vld [vmem:[#allocation6] sm:$0x1]
        %v5751 = vlaneseq
        %v5752 = vshrl.u32 %v5751, 7
        %v5753 = vsub.s32 0, %v5752
        %v5754 = vrot.slane %v5749, %v5753
        %v5757 = vsel %vm846, %v5732, 0
        %v5760 = vsel %vm846, %v5733, 0
        %v5763 = vsel %vm846, %v5734, 0
        %v5766 = vsel %vm846, %v5735, 0
        %v5769 = vsel %vm846, %v5736, 0
        %v5772 = vsel %vm846, %v5737, 0
        %v5775 = vsel %vm846, %v5738, 0
        %v5778 = vsel %vm846, %v5739, 0
        %v5781 = vsel %vm846, %v5740, 0
        %v5784 = vsel %vm846, %v5741, 0
        %v5787 = vsel %vm846, %v5742, 0
        %v5790 = vsel %vm846, %v5743, 0
        %v5793 = vsel %vm846, %v5744, 0
        %v5796 = vsel %vm846, %v5745, 0
        %v5799 = vsel %vm846, %v5746, 0
        %v5802 = vsel %vm846, %v5747, 0
        %v5805 = vsel %vm3201, %v5748, 0
        %5807 = vmatprep.subr.bf16.mxu0 0
        %5808 = vmatpush1.bf16.msra.mxu0 %v5805
        %5809 = vmatprep.subr.bf16.mxu0 0
        %5810 = vmatpush1.bf16.msra.mxu0 0
        %5811 = vmatprep.subr.bf16.mxu0 0
        %5812 = vmatpush1.bf16.msra.mxu0 0
        %5813 = vmatprep.subr.bf16.mxu0 0
        %5814 = vmatpush1.bf16.msra.mxu0 0
        %5815 = vmatprep.subr.bf16.mxu0 0
        %5816 = vmatpush1.bf16.msra.mxu0 0
        %5817 = vmatprep.subr.bf16.mxu0 0
        %5818 = vmatpush1.bf16.msra.mxu0 0
        %5819 = vmatprep.subr.bf16.mxu0 0
        %5820 = vmatpush1.bf16.msra.mxu0 0
        %5821 = vmatprep.subr.bf16.mxu0 0
        %5822 = vmatpush1.bf16.msra.mxu0 0
        %5823 = vmatprep.subr.bf16.mxu0 0
        %5824 = vmatpush1.bf16.msra.mxu0 0
        %5825 = vmatprep.subr.bf16.mxu0 0
        %5826 = vmatpush1.bf16.msra.mxu0 0
        %5827 = vmatprep.subr.bf16.mxu0 0
        %5828 = vmatpush1.bf16.msra.mxu0 0
        %5829 = vmatprep.subr.bf16.mxu0 0
        %5830 = vmatpush1.bf16.msra.mxu0 0
        %5831 = vmatprep.subr.bf16.mxu0 0
        %5832 = vmatpush1.bf16.msra.mxu0 0
        %5833 = vmatprep.subr.bf16.mxu0 0
        %5834 = vmatpush1.bf16.msra.mxu0 0
        %5835 = vmatprep.subr.bf16.mxu0 0
        %5836 = vmatpush1.bf16.msra.mxu0 0
        %5837 = vmatprep.subr.bf16.mxu0 0
        %5838 = vmatpush1.bf16.msra.mxu0 0
        %5839 = vmatprep.mubr.bf16.mxu0 0
        %5840 = vmatmul.mubr.bf16.gmra.mrb[0].mxu0 %v5757
        %v5841 = vpop.f32.mrb[0].mxu0
        %v5842 = vadd.f32 %v5754, %v5841
        %v5843 = vpop.f32.mrb[0].mxu0
        %v5844 = vpop.f32.mrb[0].mxu0
        %v5845 = vadd.f32 %v5754, %v5844
        %v5846 = vpop.f32.mrb[0].mxu0
        %5847 = vmatprep.mubr.bf16.mxu0 0
        %5848 = vmatmul.mubr.bf16.gmra.mrb[0].mxu0 %v5760
        %v5849 = vpop.f32.mrb[0].mxu0
        %v5850 = vadd.f32 %v5754, %v5849
        %v5851 = vpop.f32.mrb[0].mxu0
        %v5852 = vpop.f32.mrb[0].mxu0
        %v5853 = vadd.f32 %v5754, %v5852
        %v5854 = vpop.f32.mrb[0].mxu0
        %5855 = vmatprep.mubr.bf16.mxu0 0
        %5856 = vmatmul.mubr.bf16.gmra.mrb[0].mxu0 %v5763
        %v5857 = vpop.f32.mrb[0].mxu0
        %v5858 = vadd.f32 %v5754, %v5857
        %v5859 = vpop.f32.mrb[0].mxu0
        %v5860 = vpop.f32.mrb[0].mxu0
        %v5861 = vadd.f32 %v5754, %v5860
        %v5862 = vpop.f32.mrb[0].mxu0
        %5863 = vmatprep.mubr.bf16.mxu0 0
        %5864 = vmatmul.mubr.bf16.gmra.mrb[0].mxu0 %v5766
        %v5865 = vpop.f32.mrb[0].mxu0
        %v5866 = vadd.f32 %v5754, %v5865
        %v5867 = vpop.f32.mrb[0].mxu0
        %v5868 = vpop.f32.mrb[0].mxu0
        %v5869 = vadd.f32 %v5754, %v5868
        %v5870 = vpop.f32.mrb[0].mxu0
        %5871 = vmatprep.mubr.bf16.mxu0 0
        %5872 = vmatmul.mubr.bf16.gmra.mrb[0].mxu0 %v5769
        %v5873 = vpop.f32.mrb[0].mxu0
        %v5874 = vadd.f32 %v5754, %v5873
        %v5875 = vpop.f32.mrb[0].mxu0
        %v5876 = vpop.f32.mrb[0].mxu0
        %v5877 = vadd.f32 %v5754, %v5876
        %v5878 = vpop.f32.mrb[0].mxu0
        %5879 = vmatprep.mubr.bf16.mxu0 0
        %5880 = vmatmul.mubr.bf16.gmra.mrb[0].mxu0 %v5772
        %v5881 = vpop.f32.mrb[0].mxu0
        %v5882 = vadd.f32 %v5754, %v5881
        %v5883 = vpop.f32.mrb[0].mxu0
        %v5884 = vpop.f32.mrb[0].mxu0
        %v5885 = vadd.f32 %v5754, %v5884
        %v5886 = vpop.f32.mrb[0].mxu0
        %5887 = vmatprep.mubr.bf16.mxu0 0
        %5888 = vmatmul.mubr.bf16.gmra.mrb[0].mxu0 %v5775
        %v5889 = vpop.f32.mrb[0].mxu0
        %v5890 = vadd.f32 %v5754, %v5889
        %v5891 = vpop.f32.mrb[0].mxu0
        %v5892 = vpop.f32.mrb[0].mxu0
        %v5893 = vadd.f32 %v5754, %v5892
        %v5894 = vpop.f32.mrb[0].mxu0
        %5895 = vmatprep.mubr.bf16.mxu0 0
        %5896 = vmatmul.mubr.bf16.gmra.mrb[0].mxu0 %v5778
        %v5897 = vpop.f32.mrb[0].mxu0
        %v5898 = vadd.f32 %v5754, %v5897
        %v5899 = vpop.f32.mrb[0].mxu0
        %v5900 = vpop.f32.mrb[0].mxu0
        %v5901 = vadd.f32 %v5754, %v5900
        %v5902 = vpop.f32.mrb[0].mxu0
        %5903 = vmatprep.mubr.bf16.mxu0 0
        %5904 = vmatmul.mubr.bf16.gmra.mrb[0].mxu0 %v5781
        %v5905 = vpop.f32.mrb[0].mxu0
        %v5906 = vadd.f32 %v5754, %v5905
        %v5907 = vpop.f32.mrb[0].mxu0
        %v5908 = vpop.f32.mrb[0].mxu0
        %v5909 = vadd.f32 %v5754, %v5908
        %v5910 = vpop.f32.mrb[0].mxu0
        %5911 = vmatprep.mubr.bf16.mxu0 0
        %5912 = vmatmul.mubr.bf16.gmra.mrb[0].mxu0 %v5784
        %v5913 = vpop.f32.mrb[0].mxu0
        %v5914 = vadd.f32 %v5754, %v5913
        %v5915 = vpop.f32.mrb[0].mxu0
        %v5916 = vpop.f32.mrb[0].mxu0
        %v5917 = vadd.f32 %v5754, %v5916
        %v5918 = vpop.f32.mrb[0].mxu0
        %5919 = vmatprep.mubr.bf16.mxu0 0
        %5920 = vmatmul.mubr.bf16.gmra.mrb[0].mxu0 %v5787
        %v5921 = vpop.f32.mrb[0].mxu0
        %v5922 = vadd.f32 %v5754, %v5921
        %v5923 = vpop.f32.mrb[0].mxu0
        %v5924 = vpop.f32.mrb[0].mxu0
        %v5925 = vadd.f32 %v5754, %v5924
        %v5926 = vpop.f32.mrb[0].mxu0
        %5927 = vmatprep.mubr.bf16.mxu0 0
        %5928 = vmatmul.mubr.bf16.gmra.mrb[0].mxu0 %v5790
        %v5929 = vpop.f32.mrb[0].mxu0
        %v5930 = vadd.f32 %v5754, %v5929
        %v5931 = vpop.f32.mrb[0].mxu0
        %v5932 = vpop.f32.mrb[0].mxu0
        %v5933 = vadd.f32 %v5754, %v5932
        %v5934 = vpop.f32.mrb[0].mxu0
        %5935 = vmatprep.mubr.bf16.mxu0 0
        %5936 = vmatmul.mubr.bf16.gmra.mrb[0].mxu0 %v5793
        %v5937 = vpop.f32.mrb[0].mxu0
        %v5938 = vadd.f32 %v5754, %v5937
        %v5939 = vpop.f32.mrb[0].mxu0
        %v5940 = vpop.f32.mrb[0].mxu0
        %v5941 = vadd.f32 %v5754, %v5940
        %v5942 = vpop.f32.mrb[0].mxu0
        %5943 = vmatprep.mubr.bf16.mxu0 0
        %5944 = vmatmul.mubr.bf16.gmra.mrb[0].mxu0 %v5796
        %v5945 = vpop.f32.mrb[0].mxu0
        %v5946 = vadd.f32 %v5754, %v5945
        %v5947 = vpop.f32.mrb[0].mxu0
        %v5948 = vpop.f32.mrb[0].mxu0
        %v5949 = vadd.f32 %v5754, %v5948
        %v5950 = vpop.f32.mrb[0].mxu0
        %5951 = vmatprep.mubr.bf16.mxu0 0
        %5952 = vmatmul.mubr.bf16.gmra.mrb[0].mxu0 %v5799
        %v5953 = vpop.f32.mrb[0].mxu0
        %v5954 = vadd.f32 %v5754, %v5953
        %v5955 = vpop.f32.mrb[0].mxu0
        %v5956 = vpop.f32.mrb[0].mxu0
        %v5957 = vadd.f32 %v5754, %v5956
        %v5958 = vpop.f32.mrb[0].mxu0
        %5959 = vmatprep.mubr.bf16.mxu0 0
        %5960 = vmatmul.mubr.bf16.gmra.mrb[0].mxu0 %v5802
        %v5961 = vpop.f32.mrb[0].mxu0
        %v5962 = vadd.f32 %v5754, %v5961
        %v5963 = vpop.f32.mrb[0].mxu0
        %v5964 = vpop.f32.mrb[0].mxu0
        %v5965 = vadd.f32 %v5754, %v5964
        %v5966 = vpop.f32.mrb[0].mxu0
        %5967 = vdwg.mxu0
        %vm5968 = vcmask 7168
        %5969 = vst.msk [vmem:[#allocation5] sm:$0xff] %vm5968, %v5842
        %5970 = vst.msk [vmem:[#allocation5 + $0x8] sm:$0xff] %vm5968, %v5845
        %5971 = vst.msk [vmem:[#allocation5 + $0x10] sm:$0xff] %vm5968, %v5850
        %5972 = vst.msk [vmem:[#allocation5 + $0x18] sm:$0xff] %vm5968, %v5853
        %5973 = vst.msk [vmem:[#allocation5 + $0x20] sm:$0xff] %vm5968, %v5858
        %5974 = vst.msk [vmem:[#allocation5 + $0x28] sm:$0xff] %vm5968, %v5861
        %5975 = vst.msk [vmem:[#allocation5 + $0x30] sm:$0xff] %vm5968, %v5866
        %5976 = vst.msk [vmem:[#allocation5 + $0x38] sm:$0xff] %vm5968, %v5869
        %5977 = vst.msk [vmem:[#allocation5 + $0x40] sm:$0xff] %vm5968, %v5874
        %5978 = vst.msk [vmem:[#allocation5 + $0x48] sm:$0xff] %vm5968, %v5877
        %5979 = vst.msk [vmem:[#allocation5 + $0x50] sm:$0xff] %vm5968, %v5882
        %5980 = vst.msk [vmem:[#allocation5 + $0x58] sm:$0xff] %vm5968, %v5885
        %5981 = vst.msk [vmem:[#allocation5 + $0x60] sm:$0xff] %vm5968, %v5890
        %5982 = vst.msk [vmem:[#allocation5 + $0x68] sm:$0xff] %vm5968, %v5893
        %5983 = vst.msk [vmem:[#allocation5 + $0x70] sm:$0xff] %vm5968, %v5898
        %5984 = vst.msk [vmem:[#allocation5 + $0x78] sm:$0xff] %vm5968, %v5901
        %5985 = vst.msk [vmem:[#allocation5 + $0x80] sm:$0xff] %vm5968, %v5906
        %5986 = vst.msk [vmem:[#allocation5 + $0x88] sm:$0xff] %vm5968, %v5909
        %5987 = vst.msk [vmem:[#allocation5 + $0x90] sm:$0xff] %vm5968, %v5914
        %5988 = vst.msk [vmem:[#allocation5 + $0x98] sm:$0xff] %vm5968, %v5917
        %5989 = vst.msk [vmem:[#allocation5 + $0xa0] sm:$0xff] %vm5968, %v5922
        %5990 = vst.msk [vmem:[#allocation5 + $0xa8] sm:$0xff] %vm5968, %v5925
        %5991 = vst.msk [vmem:[#allocation5 + $0xb0] sm:$0xff] %vm5968, %v5930
        %5992 = vst.msk [vmem:[#allocation5 + $0xb8] sm:$0xff] %vm5968, %v5933
        %5993 = vst.msk [vmem:[#allocation5 + $0xc0] sm:$0xff] %vm5968, %v5938
        %5994 = vst.msk [vmem:[#allocation5 + $0xc8] sm:$0xff] %vm5968, %v5941
        %5995 = vst.msk [vmem:[#allocation5 + $0xd0] sm:$0xff] %vm5968, %v5946
        %5996 = vst.msk [vmem:[#allocation5 + $0xd8] sm:$0xff] %vm5968, %v5949
        %5997 = vst.msk [vmem:[#allocation5 + $0xe0] sm:$0xff] %vm5968, %v5954
        %5998 = vst.msk [vmem:[#allocation5 + $0xe8] sm:$0xff] %vm5968, %v5957
        %5999 = vst.msk [vmem:[#allocation5 + $0xf0] sm:$0xff] %vm5968, %v5962
        %6000 = vst.msk [vmem:[#allocation5 + $0xf8] sm:$0xff] %vm5968, %v5965
        %v6001 = vld [vmem:[%s15] sm:$0xf]
        %v6002 = vld [vmem:[%s15 + $0x4] sm:$0xf]
        %v6003 = vld [vmem:[%s15 + $0x8] sm:$0xf]
        %v6004 = vld [vmem:[%s15 + $0xc] sm:$0xf]
        %v6005 = vld [vmem:[%s15 + $0x10] sm:$0xf]
        %v6006 = vld [vmem:[%s15 + $0x14] sm:$0xf]
        %v6007 = vld [vmem:[%s15 + $0x18] sm:$0xf]
        %v6008 = vld [vmem:[%s15 + $0x1c] sm:$0xf]
        %v6009 = vld [vmem:[%s15 + $0x20] sm:$0xf]
        %v6010 = vld [vmem:[%s15 + $0x24] sm:$0xf]
        %v6011 = vld [vmem:[%s15 + $0x28] sm:$0xf]
        %v6012 = vld [vmem:[%s15 + $0x2c] sm:$0xf]
        %v6013 = vld [vmem:[%s15 + $0x30] sm:$0xf]
        %v6014 = vld [vmem:[%s15 + $0x34] sm:$0xf]
        %v6015 = vld [vmem:[%s15 + $0x38] sm:$0xf]
        %v6016 = vld [vmem:[%s15 + $0x3c] sm:$0xf]
        %v6017 = vld [vmem:[%s15 + $0x40] sm:$0xf]
        %v6018 = vld [vmem:[%s15 + $0x44] sm:$0xf]
        %v6019 = vld [vmem:[%s15 + $0x48] sm:$0xf]
        %v6020 = vld [vmem:[%s15 + $0x4c] sm:$0xf]
        %v6021 = vld [vmem:[%s15 + $0x50] sm:$0xf]
        %v6022 = vld [vmem:[%s15 + $0x54] sm:$0xf]
        %v6023 = vld [vmem:[%s15 + $0x58] sm:$0xf]
        %v6024 = vld [vmem:[%s15 + $0x5c] sm:$0xf]
        %v6025 = vld [vmem:[%s15 + $0x60] sm:$0xf]
        %v6026 = vld [vmem:[%s15 + $0x64] sm:$0xf]
        %v6027 = vld [vmem:[%s15 + $0x68] sm:$0xf]
        %v6028 = vld [vmem:[%s15 + $0x6c] sm:$0xf]
        %v6029 = vld [vmem:[%s15 + $0x70] sm:$0xf]
        %v6030 = vld [vmem:[%s15 + $0x74] sm:$0xf]
        %v6031 = vld [vmem:[%s15 + $0x78] sm:$0xf]
        %v6032 = vld [vmem:[%s15 + $0x7c] sm:$0xf]
        %v6033 = vld [vmem:[%s15 + $0x80] sm:$0xf]
        %v6034 = vld [vmem:[%s15 + $0x84] sm:$0xf]
        %v6035 = vld [vmem:[%s15 + $0x88] sm:$0xf]
        %v6036 = vld [vmem:[%s15 + $0x8c] sm:$0xf]
        %v6037 = vld [vmem:[%s15 + $0x90] sm:$0xf]
        %v6038 = vld [vmem:[%s15 + $0x94] sm:$0xf]
        %v6039 = vld [vmem:[%s15 + $0x98] sm:$0xf]
        %v6040 = vld [vmem:[%s15 + $0x9c] sm:$0xf]
        %v6041 = vld [vmem:[%s15 + $0xa0] sm:$0xf]
        %v6042 = vld [vmem:[%s15 + $0xa4] sm:$0xf]
        %v6043 = vld [vmem:[%s15 + $0xa8] sm:$0xf]
        %v6044 = vld [vmem:[%s15 + $0xac] sm:$0xf]
        %v6045 = vld [vmem:[%s15 + $0xb0] sm:$0xf]
        %v6046 = vld [vmem:[%s15 + $0xb4] sm:$0xf]
        %v6047 = vld [vmem:[%s15 + $0xb8] sm:$0xf]
        %v6048 = vld [vmem:[%s15 + $0xbc] sm:$0xf]
        %v6049 = vld [vmem:[%s15 + $0xc0] sm:$0xf]
        %v6050 = vld [vmem:[%s15 + $0xc4] sm:$0xf]
        %v6051 = vld [vmem:[%s15 + $0xc8] sm:$0xf]
        %v6052 = vld [vmem:[%s15 + $0xcc] sm:$0xf]
        %v6053 = vld [vmem:[%s15 + $0xd0] sm:$0xf]
        %v6054 = vld [vmem:[%s15 + $0xd4] sm:$0xf]
        %v6055 = vld [vmem:[%s15 + $0xd8] sm:$0xf]
        %v6056 = vld [vmem:[%s15 + $0xdc] sm:$0xf]
        %v6057 = vld [vmem:[%s15 + $0xe0] sm:$0xf]
        %v6058 = vld [vmem:[%s15 + $0xe4] sm:$0xf]
        %v6059 = vld [vmem:[%s15 + $0xe8] sm:$0xf]
        %v6060 = vld [vmem:[%s15 + $0xec] sm:$0xf]
        %v6061 = vld [vmem:[%s15 + $0xf0] sm:$0xf]
        %v6062 = vld [vmem:[%s15 + $0xf4] sm:$0xf]
        %v6063 = vld [vmem:[%s15 + $0xf8] sm:$0xf]
        %v6064 = vld [vmem:[%s15 + $0xfc] sm:$0xf]
        %v6065 = vld [vmem:[%s15 + $0x100] sm:$0xf]
        %v6066 = vld [vmem:[%s15 + $0x104] sm:$0xf]
        %v6067 = vld [vmem:[%s15 + $0x108] sm:$0xf]
        %v6068 = vld [vmem:[%s15 + $0x10c] sm:$0xf]
        %v6069 = vld [vmem:[%s15 + $0x110] sm:$0xf]
        %v6070 = vld [vmem:[%s15 + $0x114] sm:$0xf]
        %v6071 = vld [vmem:[%s15 + $0x118] sm:$0xf]
        %v6072 = vld [vmem:[%s15 + $0x11c] sm:$0xf]
        %v6073 = vld [vmem:[%s16] sm:$0x1]
        %v6074 = vadd.s32 %v1903, 1
        %v6075 = vadd.s32 %v1904, 1
        %v6076 = vadd.s32 %v1905, 1
        %v6077 = vadd.s32 %v1906, 1
        %v6078 = vadd.s32 %v1907, 1
        %v6079 = vadd.s32 %v1908, 1
        %v6080 = vadd.s32 %v1909, 1
        %v6081 = vadd.s32 %v1910, 1
        %v6082 = vadd.s32 %v1911, 1
        %v6083 = vadd.s32 %v1912, 1
        %v6084 = vadd.s32 %v1913, 1
        %v6085 = vadd.s32 %v1914, 1
        %v6086 = vadd.s32 %v1915, 1
        %v6087 = vadd.s32 %v1916, 1
        %v6088 = vadd.s32 %v1917, 1
        %v6089 = vadd.s32 %v1918, 1
        %v6090 = vadd.s32 %v1919, 1
        %v6091 = vadd.s32 %v1920, 1
        %v6092 = vadd.s32 %v1921, 1
        %v6093 = vadd.s32 %v1922, 1
        %v6094 = vadd.s32 %v1923, 1
        %v6095 = vadd.s32 %v1924, 1
        %v6096 = vadd.s32 %v1925, 1
        %v6097 = vadd.s32 %v1926, 1
        %v6098 = vadd.s32 %v1927, 1
        %v6099 = vadd.s32 %v1928, 1
        %v6100 = vadd.s32 %v1929, 1
        %v6101 = vadd.s32 %v1930, 1
        %v6102 = vadd.s32 %v1931, 1
        %v6103 = vadd.s32 %v1932, 1
        %v6104 = vadd.s32 %v1933, 1
        %v6105 = vadd.s32 %v1934, 1
        %v6106 = vadd.s32 %v1935, 1
        %v6107 = vadd.s32 %v1936, 1
        %v6108 = vadd.s32 %v1937, 1
        %v6109 = vadd.s32 %v1938, 1
        %vm6110 = vcmp.lt.s32.totalorder %v6074, 16
        %vm6111 = vcmp.lt.s32.totalorder %v6075, 16
        %vm6112 = vcmp.lt.s32.totalorder %v6076, 16
        %vm6113 = vcmp.lt.s32.totalorder %v6077, 16
        %vm6114 = vcmp.lt.s32.totalorder %v6078, 16
        %vm6115 = vcmp.lt.s32.totalorder %v6079, 16
        %vm6116 = vcmp.lt.s32.totalorder %v6080, 16
        %vm6117 = vcmp.lt.s32.totalorder %v6081, 16
        %vm6118 = vcmp.lt.s32.totalorder %v6082, 16
        %vm6119 = vcmp.lt.s32.totalorder %v6083, 16
        %vm6120 = vcmp.lt.s32.totalorder %v6084, 16
        %vm6121 = vcmp.lt.s32.totalorder %v6085, 16
        %vm6122 = vcmp.lt.s32.totalorder %v6086, 16
        %vm6123 = vcmp.lt.s32.totalorder %v6087, 16
        %vm6124 = vcmp.lt.s32.totalorder %v6088, 16
        %vm6125 = vcmp.lt.s32.totalorder %v6089, 16
        %vm6126 = vcmp.lt.s32.totalorder %v6090, 16
        %vm6127 = vcmp.lt.s32.totalorder %v6091, 16
        %vm6128 = vcmp.lt.s32.totalorder %v6092, 16
        %vm6129 = vcmp.lt.s32.totalorder %v6093, 16
        %vm6130 = vcmp.lt.s32.totalorder %v6094, 16
        %vm6131 = vcmp.lt.s32.totalorder %v6095, 16
        %vm6132 = vcmp.lt.s32.totalorder %v6096, 16
        %vm6133 = vcmp.lt.s32.totalorder %v6097, 16
        %vm6134 = vcmp.lt.s32.totalorder %v6098, 16
        %vm6135 = vcmp.lt.s32.totalorder %v6099, 16
        %vm6136 = vcmp.lt.s32.totalorder %v6100, 16
        %vm6137 = vcmp.lt.s32.totalorder %v6101, 16
        %vm6138 = vcmp.lt.s32.totalorder %v6102, 16
        %vm6139 = vcmp.lt.s32.totalorder %v6103, 16
        %vm6140 = vcmp.lt.s32.totalorder %v6104, 16
        %vm6141 = vcmp.lt.s32.totalorder %v6105, 16
        %vm6142 = vcmp.lt.s32.totalorder %v6106, 16
        %vm6143 = vcmp.lt.s32.totalorder %v6107, 16
        %vm6144 = vcmp.lt.s32.totalorder %v6108, 16
        %vm6145 = vcmp.lt.s32.totalorder %v6109, 16
        %v6146 = vsel %vm6110, 1, 0
        %v6147 = vsel %vm6111, 1, 0
        %v6148 = vsel %vm6112, 1, 0
        %v6149 = vsel %vm6113, 1, 0
        %v6150 = vsel %vm6114, 1, 0
        %v6151 = vsel %vm6115, 1, 0
        %v6152 = vsel %vm6116, 1, 0
        %v6153 = vsel %vm6117, 1, 0
        %v6154 = vsel %vm6118, 1, 0
        %v6155 = vsel %vm6119, 1, 0
        %v6156 = vsel %vm6120, 1, 0
        %v6157 = vsel %vm6121, 1, 0
        %v6158 = vsel %vm6122, 1, 0
        %v6159 = vsel %vm6123, 1, 0
        %v6160 = vsel %vm6124, 1, 0
        %v6161 = vsel %vm6125, 1, 0
        %v6162 = vsel %vm6126, 1, 0
        %v6163 = vsel %vm6127, 1, 0
        %v6164 = vsel %vm6128, 1, 0
        %v6165 = vsel %vm6129, 1, 0
        %v6166 = vsel %vm6130, 1, 0
        %v6167 = vsel %vm6131, 1, 0
        %v6168 = vsel %vm6132, 1, 0
        %v6169 = vsel %vm6133, 1, 0
        %v6170 = vsel %vm6134, 1, 0
        %v6171 = vsel %vm6135, 1, 0
        %v6172 = vsel %vm6136, 1, 0
        %v6173 = vsel %vm6137, 1, 0
        %v6174 = vsel %vm6138, 1, 0
        %v6175 = vsel %vm6139, 1, 0
        %v6176 = vsel %vm6140, 1, 0
        %v6177 = vsel %vm6141, 1, 0
        %v6178 = vsel %vm6142, 1, 0
        %v6179 = vsel %vm6143, 1, 0
        %v6180 = vsel %vm6144, 1, 0
        %v6181 = vsel %vm6145, 1, 0
        %v6182 = vcvt.s32.f32 %v6146
        %v6183 = vcvt.s32.f32 %v6147
        %v6184 = vcvt.s32.f32 %v6148
        %v6185 = vcvt.s32.f32 %v6149
        %v6186 = vcvt.s32.f32 %v6150
        %v6187 = vcvt.s32.f32 %v6151
        %v6188 = vcvt.s32.f32 %v6152
        %v6189 = vcvt.s32.f32 %v6153
        %v6190 = vcvt.s32.f32 %v6154
        %v6191 = vcvt.s32.f32 %v6155
        %v6192 = vcvt.s32.f32 %v6156
        %v6193 = vcvt.s32.f32 %v6157
        %v6194 = vcvt.s32.f32 %v6158
        %v6195 = vcvt.s32.f32 %v6159
        %v6196 = vcvt.s32.f32 %v6160
        %v6197 = vcvt.s32.f32 %v6161
        %v6198 = vcvt.s32.f32 %v6162
        %v6199 = vcvt.s32.f32 %v6163
        %v6200 = vcvt.s32.f32 %v6164
        %v6201 = vcvt.s32.f32 %v6165
        %v6202 = vcvt.s32.f32 %v6166
        %v6203 = vcvt.s32.f32 %v6167
        %v6204 = vcvt.s32.f32 %v6168
        %v6205 = vcvt.s32.f32 %v6169
        %v6206 = vcvt.s32.f32 %v6170
        %v6207 = vcvt.s32.f32 %v6171
        %v6208 = vcvt.s32.f32 %v6172
        %v6209 = vcvt.s32.f32 %v6173
        %v6210 = vcvt.s32.f32 %v6174
        %v6211 = vcvt.s32.f32 %v6175
        %v6212 = vcvt.s32.f32 %v6176
        %v6213 = vcvt.s32.f32 %v6177
        %v6214 = vcvt.s32.f32 %v6178
        %v6215 = vcvt.s32.f32 %v6179
        %v6216 = vcvt.s32.f32 %v6180
        %v6217 = vcvt.s32.f32 %v6181
        %vm6218 = vcmp.ge.s32.totalorder %v1903, 1
        %vm6219 = vcmp.ge.s32.totalorder %v1904, 1
        %vm6220 = vcmp.ge.s32.totalorder %v1905, 1
        %vm6221 = vcmp.ge.s32.totalorder %v1906, 1
        %vm6222 = vcmp.ge.s32.totalorder %v1907, 1
        %vm6223 = vcmp.ge.s32.totalorder %v1908, 1
        %vm6224 = vcmp.ge.s32.totalorder %v1909, 1
        %vm6225 = vcmp.ge.s32.totalorder %v1910, 1
        %vm6226 = vcmp.ge.s32.totalorder %v1911, 1
        %vm6227 = vcmp.ge.s32.totalorder %v1912, 1
        %vm6228 = vcmp.ge.s32.totalorder %v1913, 1
        %vm6229 = vcmp.ge.s32.totalorder %v1914, 1
        %vm6230 = vcmp.ge.s32.totalorder %v1915, 1
        %vm6231 = vcmp.ge.s32.totalorder %v1916, 1
        %vm6232 = vcmp.ge.s32.totalorder %v1917, 1
        %vm6233 = vcmp.ge.s32.totalorder %v1918, 1
        %vm6234 = vcmp.ge.s32.totalorder %v1919, 1
        %vm6235 = vcmp.ge.s32.totalorder %v1920, 1
        %vm6236 = vcmp.ge.s32.totalorder %v1921, 1
        %vm6237 = vcmp.ge.s32.totalorder %v1922, 1
        %vm6238 = vcmp.ge.s32.totalorder %v1923, 1
        %vm6239 = vcmp.ge.s32.totalorder %v1924, 1
        %vm6240 = vcmp.ge.s32.totalorder %v1925, 1
        %vm6241 = vcmp.ge.s32.totalorder %v1926, 1
        %vm6242 = vcmp.ge.s32.totalorder %v1927, 1
        %vm6243 = vcmp.ge.s32.totalorder %v1928, 1
        %vm6244 = vcmp.ge.s32.totalorder %v1929, 1
        %vm6245 = vcmp.ge.s32.totalorder %v1930, 1
        %vm6246 = vcmp.ge.s32.totalorder %v1931, 1
        %vm6247 = vcmp.ge.s32.totalorder %v1932, 1
        %vm6248 = vcmp.ge.s32.totalorder %v1933, 1
        %vm6249 = vcmp.ge.s32.totalorder %v1934, 1
        %vm6250 = vcmp.ge.s32.totalorder %v1935, 1
        %vm6251 = vcmp.ge.s32.totalorder %v1936, 1
        %vm6252 = vcmp.ge.s32.totalorder %v1937, 1
        %vm6253 = vcmp.ge.s32.totalorder %v1938, 1
        %v6254 = vsel %vm6218, 1, 0
        %v6255 = vsel %vm6219, 1, 0
        %v6256 = vsel %vm6220, 1, 0
        %v6257 = vsel %vm6221, 1, 0
        %v6258 = vsel %vm6222, 1, 0
        %v6259 = vsel %vm6223, 1, 0
        %v6260 = vsel %vm6224, 1, 0
        %v6261 = vsel %vm6225, 1, 0
        %v6262 = vsel %vm6226, 1, 0
        %v6263 = vsel %vm6227, 1, 0
        %v6264 = vsel %vm6228, 1, 0
        %v6265 = vsel %vm6229, 1, 0
        %v6266 = vsel %vm6230, 1, 0
        %v6267 = vsel %vm6231, 1, 0
        %v6268 = vsel %vm6232, 1, 0
        %v6269 = vsel %vm6233, 1, 0
        %v6270 = vsel %vm6234, 1, 0
        %v6271 = vsel %vm6235, 1, 0
        %v6272 = vsel %vm6236, 1, 0
        %v6273 = vsel %vm6237, 1, 0
        %v6274 = vsel %vm6238, 1, 0
        %v6275 = vsel %vm6239, 1, 0
        %v6276 = vsel %vm6240, 1, 0
        %v6277 = vsel %vm6241, 1, 0
        %v6278 = vsel %vm6242, 1, 0
        %v6279 = vsel %vm6243, 1, 0
        %v6280 = vsel %vm6244, 1, 0
        %v6281 = vsel %vm6245, 1, 0
        %v6282 = vsel %vm6246, 1, 0
        %v6283 = vsel %vm6247, 1, 0
        %v6284 = vsel %vm6248, 1, 0
        %v6285 = vsel %vm6249, 1, 0
        %v6286 = vsel %vm6250, 1, 0
        %v6287 = vsel %vm6251, 1, 0
        %v6288 = vsel %vm6252, 1, 0
        %v6289 = vsel %vm6253, 1, 0
        %v6290 = vcvt.s32.f32 %v6254
        %v6291 = vcvt.s32.f32 %v6255
        %v6292 = vcvt.s32.f32 %v6256
        %v6293 = vcvt.s32.f32 %v6257
        %v6294 = vcvt.s32.f32 %v6258
        %v6295 = vcvt.s32.f32 %v6259
        %v6296 = vcvt.s32.f32 %v6260
        %v6297 = vcvt.s32.f32 %v6261
        %v6298 = vcvt.s32.f32 %v6262
        %v6299 = vcvt.s32.f32 %v6263
        %v6300 = vcvt.s32.f32 %v6264
        %v6301 = vcvt.s32.f32 %v6265
        %v6302 = vcvt.s32.f32 %v6266
        %v6303 = vcvt.s32.f32 %v6267
        %v6304 = vcvt.s32.f32 %v6268
        %v6305 = vcvt.s32.f32 %v6269
        %v6306 = vcvt.s32.f32 %v6270
        %v6307 = vcvt.s32.f32 %v6271
        %v6308 = vcvt.s32.f32 %v6272
        %v6309 = vcvt.s32.f32 %v6273
        %v6310 = vcvt.s32.f32 %v6274
        %v6311 = vcvt.s32.f32 %v6275
        %v6312 = vcvt.s32.f32 %v6276
        %v6313 = vcvt.s32.f32 %v6277
        %v6314 = vcvt.s32.f32 %v6278
        %v6315 = vcvt.s32.f32 %v6279
        %v6316 = vcvt.s32.f32 %v6280
        %v6317 = vcvt.s32.f32 %v6281
        %v6318 = vcvt.s32.f32 %v6282
        %v6319 = vcvt.s32.f32 %v6283
        %v6320 = vcvt.s32.f32 %v6284
        %v6321 = vcvt.s32.f32 %v6285
        %v6322 = vcvt.s32.f32 %v6286
        %v6323 = vcvt.s32.f32 %v6287
        %v6324 = vcvt.s32.f32 %v6288
        %v6325 = vcvt.s32.f32 %v6289
        %v6326 = vld [vmem:[%s656 + $0x10] sm:$0xff]
        %v6327 = vld [vmem:[%s656 + $0x18] sm:$0xff]
        %v6328 = vld [vmem:[%s656 + $0x20] sm:$0xff]
        %v6329 = vld [vmem:[%s656 + $0x28] sm:$0xff]
        %v6330 = vld [vmem:[%s656 + $0x30] sm:$0xff]
        %v6331 = vld [vmem:[%s656 + $0x38] sm:$0xff]
        %v6332 = vld [vmem:[%s656 + $0x40] sm:$0xff]
        %v6333 = vld [vmem:[%s656 + $0x48] sm:$0xff]
        %v6334 = vld [vmem:[%s656 + $0x50] sm:$0xff]
        %v6335 = vld [vmem:[%s656 + $0x58] sm:$0xff]
        %v6336 = vld [vmem:[%s656 + $0x60] sm:$0xff]
        %v6337 = vld [vmem:[%s656 + $0x68] sm:$0xff]
        %v6338 = vld [vmem:[%s656 + $0x70] sm:$0xff]
        %v6339 = vld [vmem:[%s656 + $0x78] sm:$0xff]
        %v6340 = vld [vmem:[%s656 + $0x80] sm:$0xff]
        %v6341 = vld [vmem:[%s656 + $0x88] sm:$0xff]
        %v6342 = vld [vmem:[%s656 + $0x90] sm:$0xff]
        %v6343 = vld [vmem:[%s656 + $0x98] sm:$0xff]
        %v6344 = vld [vmem:[%s656 + $0xa0] sm:$0xff]
        %v6345 = vld [vmem:[%s656 + $0xa8] sm:$0xff]
        %v6346 = vld [vmem:[%s656 + $0xb0] sm:$0xff]
        %v6347 = vld [vmem:[%s656 + $0xb8] sm:$0xff]
        %v6348 = vld [vmem:[%s656 + $0xc0] sm:$0xff]
        %v6349 = vld [vmem:[%s656 + $0xc8] sm:$0xff]
        %v6350 = vld [vmem:[%s656 + $0xd0] sm:$0xff]
        %v6351 = vld [vmem:[%s656 + $0xd8] sm:$0xff]
        %v6352 = vld [vmem:[%s656 + $0xe0] sm:$0xff]
        %v6353 = vld [vmem:[%s656 + $0xe8] sm:$0xff]
        %v6354 = vld [vmem:[%s656 + $0xf0] sm:$0xff]
        %v6355 = vld [vmem:[%s656 + $0xf8] sm:$0xff]
        %v6356 = vld [vmem:[%s656 + $0x100] sm:$0xff]
        %v6357 = vld [vmem:[%s656 + $0x108] sm:$0xff]
        %v6358 = vld [vmem:[%s656 + $0x110] sm:$0xff]
        %v6359 = vld [vmem:[%s656 + $0x118] sm:$0xff]
        %v6360 = vld [vmem:[%s656 + $0x120] sm:$0xff]
        %v6361 = vld [vmem:[%s656 + $0x128] sm:$0xff]
        %v6362 = vpack.c.bf16 %v6327, %v6326
        %v6363 = vpack.c.bf16 %v6329, %v6328
        %v6364 = vpack.c.bf16 %v6331, %v6330
        %v6365 = vpack.c.bf16 %v6333, %v6332
        %v6366 = vpack.c.bf16 %v6335, %v6334
        %v6367 = vpack.c.bf16 %v6337, %v6336
        %v6368 = vpack.c.bf16 %v6339, %v6338
        %v6369 = vpack.c.bf16 %v6341, %v6340
        %v6370 = vpack.c.bf16 %v6343, %v6342
        %v6371 = vpack.c.bf16 %v6345, %v6344
        %v6372 = vpack.c.bf16 %v6347, %v6346
        %v6373 = vpack.c.bf16 %v6349, %v6348
        %v6374 = vpack.c.bf16 %v6351, %v6350
        %v6375 = vpack.c.bf16 %v6353, %v6352
        %v6376 = vpack.c.bf16 %v6355, %v6354
        %v6377 = vpack.c.bf16 %v6357, %v6356
        %v6378 = vpack.c.bf16 %v6359, %v6358
        %v6379 = vpack.c.bf16 %v6361, %v6360
        %v6380 = vld [vmem:[%s656 + $0x11] sm:$0xff]
        %v6381 = vld [vmem:[%s656 + $0x19] sm:$0xff]
        %v6382 = vld [vmem:[%s656 + $0x21] sm:$0xff]
        %v6383 = vld [vmem:[%s656 + $0x29] sm:$0xff]
        %v6384 = vld [vmem:[%s656 + $0x31] sm:$0xff]
        %v6385 = vld [vmem:[%s656 + $0x39] sm:$0xff]
        %v6386 = vld [vmem:[%s656 + $0x41] sm:$0xff]
        %v6387 = vld [vmem:[%s656 + $0x49] sm:$0xff]
        %v6388 = vld [vmem:[%s656 + $0x51] sm:$0xff]
        %v6389 = vld [vmem:[%s656 + $0x59] sm:$0xff]
        %v6390 = vld [vmem:[%s656 + $0x61] sm:$0xff]
        %v6391 = vld [vmem:[%s656 + $0x69] sm:$0xff]
        %v6392 = vld [vmem:[%s656 + $0x71] sm:$0xff]
        %v6393 = vld [vmem:[%s656 + $0x79] sm:$0xff]
        %v6394 = vld [vmem:[%s656 + $0x81] sm:$0xff]
        %v6395 = vld [vmem:[%s656 + $0x89] sm:$0xff]
        %v6396 = vld [vmem:[%s656 + $0x91] sm:$0xff]
        %v6397 = vld [vmem:[%s656 + $0x99] sm:$0xff]
        %v6398 = vld [vmem:[%s656 + $0xa1] sm:$0xff]
        %v6399 = vld [vmem:[%s656 + $0xa9] sm:$0xff]
        %v6400 = vld [vmem:[%s656 + $0xb1] sm:$0xff]
        %v6401 = vld [vmem:[%s656 + $0xb9] sm:$0xff]
        %v6402 = vld [vmem:[%s656 + $0xc1] sm:$0xff]
        %v6403 = vld [vmem:[%s656 + $0xc9] sm:$0xff]
        %v6404 = vld [vmem:[%s656 + $0xd1] sm:$0xff]
        %v6405 = vld [vmem:[%s656 + $0xd9] sm:$0xff]
        %v6406 = vld [vmem:[%s656 + $0xe1] sm:$0xff]
        %v6407 = vld [vmem:[%s656 + $0xe9] sm:$0xff]
        %v6408 = vld [vmem:[%s656 + $0xf1] sm:$0xff]
        %v6409 = vld [vmem:[%s656 + $0xf9] sm:$0xff]
        %v6410 = vld [vmem:[%s656 + $0x101] sm:$0xff]
        %v6411 = vld [vmem:[%s656 + $0x109] sm:$0xff]
        %v6412 = vld [vmem:[%s656 + $0x111] sm:$0xff]
        %v6413 = vld [vmem:[%s656 + $0x119] sm:$0xff]
        %v6414 = vld [vmem:[%s656 + $0x121] sm:$0xff]
        %v6415 = vld [vmem:[%s656 + $0x129] sm:$0xff]
        %v6416 = vmul.f32 %v6380, %v6182
        %v6417 = vmul.f32 %v6381, %v6183
        %v6418 = vmul.f32 %v6382, %v6184
        %v6419 = vmul.f32 %v6383, %v6185
        %v6420 = vmul.f32 %v6384, %v6186
        %v6421 = vmul.f32 %v6385, %v6187
        %v6422 = vmul.f32 %v6386, %v6188
        %v6423 = vmul.f32 %v6387, %v6189
        %v6424 = vmul.f32 %v6388, %v6190
        %v6425 = vmul.f32 %v6389, %v6191
        %v6426 = vmul.f32 %v6390, %v6192
        %v6427 = vmul.f32 %v6391, %v6193
        %v6428 = vmul.f32 %v6392, %v6194
        %v6429 = vmul.f32 %v6393, %v6195
        %v6430 = vmul.f32 %v6394, %v6196
        %v6431 = vmul.f32 %v6395, %v6197
        %v6432 = vmul.f32 %v6396, %v6198
        %v6433 = vmul.f32 %v6397, %v6199
        %v6434 = vmul.f32 %v6398, %v6200
        %v6435 = vmul.f32 %v6399, %v6201
        %v6436 = vmul.f32 %v6400, %v6202
        %v6437 = vmul.f32 %v6401, %v6203
        %v6438 = vmul.f32 %v6402, %v6204
        %v6439 = vmul.f32 %v6403, %v6205
        %v6440 = vmul.f32 %v6404, %v6206
        %v6441 = vmul.f32 %v6405, %v6207
        %v6442 = vmul.f32 %v6406, %v6208
        %v6443 = vmul.f32 %v6407, %v6209
        %v6444 = vmul.f32 %v6408, %v6210
        %v6445 = vmul.f32 %v6409, %v6211
        %v6446 = vmul.f32 %v6410, %v6212
        %v6447 = vmul.f32 %v6411, %v6213
        %v6448 = vmul.f32 %v6412, %v6214
        %v6449 = vmul.f32 %v6413, %v6215
        %v6450 = vmul.f32 %v6414, %v6216
        %v6451 = vmul.f32 %v6415, %v6217
        %v6452 = vpack.c.bf16 %v6417, %v6416
        %v6453 = vpack.c.bf16 %v6419, %v6418
        %v6454 = vpack.c.bf16 %v6421, %v6420
        %v6455 = vpack.c.bf16 %v6423, %v6422
        %v6456 = vpack.c.bf16 %v6425, %v6424
        %v6457 = vpack.c.bf16 %v6427, %v6426
        %v6458 = vpack.c.bf16 %v6429, %v6428
        %v6459 = vpack.c.bf16 %v6431, %v6430
        %v6460 = vpack.c.bf16 %v6433, %v6432
        %v6461 = vpack.c.bf16 %v6435, %v6434
        %v6462 = vpack.c.bf16 %v6437, %v6436
        %v6463 = vpack.c.bf16 %v6439, %v6438
        %v6464 = vpack.c.bf16 %v6441, %v6440
        %v6465 = vpack.c.bf16 %v6443, %v6442
        %v6466 = vpack.c.bf16 %v6445, %v6444
        %v6467 = vpack.c.bf16 %v6447, %v6446
        %v6468 = vpack.c.bf16 %v6449, %v6448
        %v6469 = vpack.c.bf16 %v6451, %v6450
        %v6470 = vld [vmem:[%s656 + $0xf] sm:$0xff]
        %v6471 = vld [vmem:[%s656 + $0x17] sm:$0xff]
        %v6472 = vld [vmem:[%s656 + $0x1f] sm:$0xff]
        %v6473 = vld [vmem:[%s656 + $0x27] sm:$0xff]
        %v6474 = vld [vmem:[%s656 + $0x2f] sm:$0xff]
        %v6475 = vld [vmem:[%s656 + $0x37] sm:$0xff]
        %v6476 = vld [vmem:[%s656 + $0x3f] sm:$0xff]
        %v6477 = vld [vmem:[%s656 + $0x47] sm:$0xff]
        %v6478 = vld [vmem:[%s656 + $0x4f] sm:$0xff]
        %v6479 = vld [vmem:[%s656 + $0x57] sm:$0xff]
        %v6480 = vld [vmem:[%s656 + $0x5f] sm:$0xff]
        %v6481 = vld [vmem:[%s656 + $0x67] sm:$0xff]
        %v6482 = vld [vmem:[%s656 + $0x6f] sm:$0xff]
        %v6483 = vld [vmem:[%s656 + $0x77] sm:$0xff]
        %v6484 = vld [vmem:[%s656 + $0x7f] sm:$0xff]
        %v6485 = vld [vmem:[%s656 + $0x87] sm:$0xff]
        %v6486 = vld [vmem:[%s656 + $0x8f] sm:$0xff]
        %v6487 = vld [vmem:[%s656 + $0x97] sm:$0xff]
        %v6488 = vld [vmem:[%s656 + $0x9f] sm:$0xff]
        %v6489 = vld [vmem:[%s656 + $0xa7] sm:$0xff]
        %v6490 = vld [vmem:[%s656 + $0xaf] sm:$0xff]
        %v6491 = vld [vmem:[%s656 + $0xb7] sm:$0xff]
        %v6492 = vld [vmem:[%s656 + $0xbf] sm:$0xff]
        %v6493 = vld [vmem:[%s656 + $0xc7] sm:$0xff]
        %v6494 = vld [vmem:[%s656 + $0xcf] sm:$0xff]
        %v6495 = vld [vmem:[%s656 + $0xd7] sm:$0xff]
        %v6496 = vld [vmem:[%s656 + $0xdf] sm:$0xff]
        %v6497 = vld [vmem:[%s656 + $0xe7] sm:$0xff]
        %v6498 = vld [vmem:[%s656 + $0xef] sm:$0xff]
        %v6499 = vld [vmem:[%s656 + $0xf7] sm:$0xff]
        %v6500 = vld [vmem:[%s656 + $0xff] sm:$0xff]
        %v6501 = vld [vmem:[%s656 + $0x107] sm:$0xff]
        %v6502 = vld [vmem:[%s656 + $0x10f] sm:$0xff]
        %v6503 = vld [vmem:[%s656 + $0x117] sm:$0xff]
        %v6504 = vld [vmem:[%s656 + $0x11f] sm:$0xff]
        %v6505 = vld [vmem:[%s656 + $0x127] sm:$0xff]
        %v6506 = vmul.f32 %v6470, %v6290
        %v6507 = vmul.f32 %v6471, %v6291
        %v6508 = vmul.f32 %v6472, %v6292
        %v6509 = vmul.f32 %v6473, %v6293
        %v6510 = vmul.f32 %v6474, %v6294
        %v6511 = vmul.f32 %v6475, %v6295
        %v6512 = vmul.f32 %v6476, %v6296
        %v6513 = vmul.f32 %v6477, %v6297
        %v6514 = vmul.f32 %v6478, %v6298
        %v6515 = vmul.f32 %v6479, %v6299
        %v6516 = vmul.f32 %v6480, %v6300
        %v6517 = vmul.f32 %v6481, %v6301
        %v6518 = vmul.f32 %v6482, %v6302
        %v6519 = vmul.f32 %v6483, %v6303
        %v6520 = vmul.f32 %v6484, %v6304
        %v6521 = vmul.f32 %v6485, %v6305
        %v6522 = vmul.f32 %v6486, %v6306
        %v6523 = vmul.f32 %v6487, %v6307
        %v6524 = vmul.f32 %v6488, %v6308
        %v6525 = vmul.f32 %v6489, %v6309
        %v6526 = vmul.f32 %v6490, %v6310
        %v6527 = vmul.f32 %v6491, %v6311
        %v6528 = vmul.f32 %v6492, %v6312
        %v6529 = vmul.f32 %v6493, %v6313
        %v6530 = vmul.f32 %v6494, %v6314
        %v6531 = vmul.f32 %v6495, %v6315
        %v6532 = vmul.f32 %v6496, %v6316
        %v6533 = vmul.f32 %v6497, %v6317
        %v6534 = vmul.f32 %v6498, %v6318
        %v6535 = vmul.f32 %v6499, %v6319
        %v6536 = vmul.f32 %v6500, %v6320
        %v6537 = vmul.f32 %v6501, %v6321
        %v6538 = vmul.f32 %v6502, %v6322
        %v6539 = vmul.f32 %v6503, %v6323
        %v6540 = vmul.f32 %v6504, %v6324
        %v6541 = vmul.f32 %v6505, %v6325
        %v6542 = vpack.c.bf16 %v6507, %v6506
        %v6543 = vpack.c.bf16 %v6509, %v6508
        %v6544 = vpack.c.bf16 %v6511, %v6510
        %v6545 = vpack.c.bf16 %v6513, %v6512
        %v6546 = vpack.c.bf16 %v6515, %v6514
        %v6547 = vpack.c.bf16 %v6517, %v6516
        %v6548 = vpack.c.bf16 %v6519, %v6518
        %v6549 = vpack.c.bf16 %v6521, %v6520
        %v6550 = vpack.c.bf16 %v6523, %v6522
        %v6551 = vpack.c.bf16 %v6525, %v6524
        %v6552 = vpack.c.bf16 %v6527, %v6526
        %v6553 = vpack.c.bf16 %v6529, %v6528
        %v6554 = vpack.c.bf16 %v6531, %v6530
        %v6555 = vpack.c.bf16 %v6533, %v6532
        %v6556 = vpack.c.bf16 %v6535, %v6534
        %v6557 = vpack.c.bf16 %v6537, %v6536
        %v6558 = vpack.c.bf16 %v6539, %v6538
        %v6559 = vpack.c.bf16 %v6541, %v6540
        %6560 = vst.msk [vmem:[#allocation4] sm:$0xff] %vm690, %v6542
        %6561 = vst.msk [vmem:[#allocation4 + $0x28] sm:$0xff] %vm690, %v6543
        %6562 = vst.msk [vmem:[#allocation4 + $0x50] sm:$0xff] %vm690, %v6544
        %6563 = vst.msk [vmem:[#allocation4 + $0x78] sm:$0xff] %vm690, %v6545
        %6564 = vst.msk [vmem:[#allocation4 + $0xa0] sm:$0xff] %vm690, %v6546
        %6565 = vst.msk [vmem:[#allocation4 + $0xc8] sm:$0xff] %vm690, %v6547
        %6566 = vst.msk [vmem:[#allocation4 + $0xf0] sm:$0xff] %vm690, %v6548
        %6567 = vst.msk [vmem:[#allocation4 + $0x118] sm:$0xff] %vm690, %v6549
        %6568 = vst.msk [vmem:[#allocation4 + $0x140] sm:$0xff] %vm690, %v6550
        %6569 = vst.msk [vmem:[#allocation4 + $0x168] sm:$0xff] %vm690, %v6551
        %6570 = vst.msk [vmem:[#allocation4 + $0x190] sm:$0xff] %vm690, %v6552
        %6571 = vst.msk [vmem:[#allocation4 + $0x1b8] sm:$0xff] %vm690, %v6553
        %6572 = vst.msk [vmem:[#allocation4 + $0x1e0] sm:$0xff] %vm690, %v6554
        %6573 = vst.msk [vmem:[#allocation4 + $0x208] sm:$0xff] %vm690, %v6555
        %6574 = vst.msk [vmem:[#allocation4 + $0x230] sm:$0xff] %vm690, %v6556
        %6575 = vst.msk [vmem:[#allocation4 + $0x258] sm:$0xff] %vm690, %v6557
        %6592 = vrot.lane.b32.xlu0 %v6362, 64
        %v6593 = vpop.permute.xlu0 %6592
        %6594 = vrot.lane.b32.xlu0 %v6363, 64
        %v6595 = vpop.permute.xlu0 %6594
        %6596 = vrot.lane.b32.xlu0 %v6364, 64
        %v6597 = vpop.permute.xlu0 %6596
        %6598 = vrot.lane.b32.xlu0 %v6365, 64
        %v6599 = vpop.permute.xlu0 %6598
        %6600 = vrot.lane.b32.xlu0 %v6366, 64
        %v6601 = vpop.permute.xlu0 %6600
        %6602 = vrot.lane.b32.xlu0 %v6367, 64
        %v6603 = vpop.permute.xlu0 %6602
        %6604 = vrot.lane.b32.xlu0 %v6368, 64
        %v6605 = vpop.permute.xlu0 %6604
        %6606 = vrot.lane.b32.xlu0 %v6369, 64
        %v6607 = vpop.permute.xlu0 %6606
        %6608 = vrot.lane.b32.xlu0 %v6370, 64
        %v6609 = vpop.permute.xlu0 %6608
        %6610 = vrot.lane.b32.xlu0 %v6371, 64
        %v6611 = vpop.permute.xlu0 %6610
        %6612 = vrot.lane.b32.xlu0 %v6372, 64
        %v6613 = vpop.permute.xlu0 %6612
        %6614 = vrot.lane.b32.xlu0 %v6373, 64
        %v6615 = vpop.permute.xlu0 %6614
        %6616 = vrot.lane.b32.xlu0 %v6374, 64
        %v6617 = vpop.permute.xlu0 %6616
        %6618 = vrot.lane.b32.xlu0 %v6375, 64
        %v6619 = vpop.permute.xlu0 %6618
        %6620 = vrot.lane.b32.xlu0 %v6376, 64
        %v6621 = vpop.permute.xlu0 %6620
        %6622 = vrot.lane.b32.xlu0 %v6377, 64
        %v6623 = vpop.permute.xlu0 %6622
        %vm6640 = vcmask 1048064
        %6641 = vst.msk [vmem:[#allocation4] sm:$0xff] %vm6640, %v6593
        %6642 = vst.msk [vmem:[#allocation4 + $0x28] sm:$0xff] %vm6640, %v6595
        %6643 = vst.msk [vmem:[#allocation4 + $0x50] sm:$0xff] %vm6640, %v6597
        %6644 = vst.msk [vmem:[#allocation4 + $0x78] sm:$0xff] %vm6640, %v6599
        %6645 = vst.msk [vmem:[#allocation4 + $0xa0] sm:$0xff] %vm6640, %v6601
        %6646 = vst.msk [vmem:[#allocation4 + $0xc8] sm:$0xff] %vm6640, %v6603
        %6647 = vst.msk [vmem:[#allocation4 + $0xf0] sm:$0xff] %vm6640, %v6605
        %6648 = vst.msk [vmem:[#allocation4 + $0x118] sm:$0xff] %vm6640, %v6607
        %6649 = vst.msk [vmem:[#allocation4 + $0x140] sm:$0xff] %vm6640, %v6609
        %6650 = vst.msk [vmem:[#allocation4 + $0x168] sm:$0xff] %vm6640, %v6611
        %6651 = vst.msk [vmem:[#allocation4 + $0x190] sm:$0xff] %vm6640, %v6613
        %6652 = vst.msk [vmem:[#allocation4 + $0x1b8] sm:$0xff] %vm6640, %v6615
        %6653 = vst.msk [vmem:[#allocation4 + $0x1e0] sm:$0xff] %vm6640, %v6617
        %6654 = vst.msk [vmem:[#allocation4 + $0x208] sm:$0xff] %vm6640, %v6619
        %6655 = vst.msk [vmem:[#allocation4 + $0x230] sm:$0xff] %vm6640, %v6621
        %6656 = vst.msk [vmem:[#allocation4 + $0x258] sm:$0xff] %vm6640, %v6623
        %6657 = vst.msk [vmem:[#allocation4 + $0x8] sm:$0xff] %vm690, %v6452
        %6658 = vst.msk [vmem:[#allocation4 + $0x30] sm:$0xff] %vm690, %v6453
        %6659 = vst.msk [vmem:[#allocation4 + $0x58] sm:$0xff] %vm690, %v6454
        %6660 = vst.msk [vmem:[#allocation4 + $0x80] sm:$0xff] %vm690, %v6455
        %6661 = vst.msk [vmem:[#allocation4 + $0xa8] sm:$0xff] %vm690, %v6456
        %6662 = vst.msk [vmem:[#allocation4 + $0xd0] sm:$0xff] %vm690, %v6457
        %6663 = vst.msk [vmem:[#allocation4 + $0xf8] sm:$0xff] %vm690, %v6458
        %6664 = vst.msk [vmem:[#allocation4 + $0x120] sm:$0xff] %vm690, %v6459
        %6665 = vst.msk [vmem:[#allocation4 + $0x148] sm:$0xff] %vm690, %v6460
        %6666 = vst.msk [vmem:[#allocation4 + $0x170] sm:$0xff] %vm690, %v6461
        %6667 = vst.msk [vmem:[#allocation4 + $0x198] sm:$0xff] %vm690, %v6462
        %6668 = vst.msk [vmem:[#allocation4 + $0x1c0] sm:$0xff] %vm690, %v6463
        %6669 = vst.msk [vmem:[#allocation4 + $0x1e8] sm:$0xff] %vm690, %v6464
        %6670 = vst.msk [vmem:[#allocation4 + $0x210] sm:$0xff] %vm690, %v6465
        %6671 = vst.msk [vmem:[#allocation4 + $0x238] sm:$0xff] %vm690, %v6466
        %6672 = vst.msk [vmem:[#allocation4 + $0x260] sm:$0xff] %vm690, %v6467
        %6689 = vrot.lane.b32.xlu0 %v6543, 64
        %v6690 = vpop.permute.xlu0 %6689
        %6691 = vrot.lane.b32.xlu0 %v6544, 64
        %v6692 = vpop.permute.xlu0 %6691
        %6693 = vrot.lane.b32.xlu0 %v6545, 64
        %v6694 = vpop.permute.xlu0 %6693
        %6695 = vrot.lane.b32.xlu0 %v6546, 64
        %v6696 = vpop.permute.xlu0 %6695
        %6697 = vrot.lane.b32.xlu0 %v6547, 64
        %v6698 = vpop.permute.xlu0 %6697
        %6699 = vrot.lane.b32.xlu0 %v6548, 64
        %v6700 = vpop.permute.xlu0 %6699
        %6701 = vrot.lane.b32.xlu0 %v6549, 64
        %v6702 = vpop.permute.xlu0 %6701
        %6703 = vrot.lane.b32.xlu0 %v6550, 64
        %v6704 = vpop.permute.xlu0 %6703
        %6705 = vrot.lane.b32.xlu0 %v6551, 64
        %v6706 = vpop.permute.xlu0 %6705
        %6707 = vrot.lane.b32.xlu0 %v6552, 64
        %v6708 = vpop.permute.xlu0 %6707
        %6709 = vrot.lane.b32.xlu0 %v6553, 64
        %v6710 = vpop.permute.xlu0 %6709
        %6711 = vrot.lane.b32.xlu0 %v6554, 64
        %v6712 = vpop.permute.xlu0 %6711
        %6713 = vrot.lane.b32.xlu0 %v6555, 64
        %v6714 = vpop.permute.xlu0 %6713
        %6715 = vrot.lane.b32.xlu0 %v6556, 64
        %v6716 = vpop.permute.xlu0 %6715
        %6717 = vrot.lane.b32.xlu0 %v6557, 64
        %v6718 = vpop.permute.xlu0 %6717
        %6719 = vrot.lane.b32.xlu0 %v6558, 64
        %v6720 = vpop.permute.xlu0 %6719
        %6737 = vst.msk [vmem:[#allocation4 + $0x8] sm:$0xff] %vm6640, %v6690
        %6738 = vst.msk [vmem:[#allocation4 + $0x30] sm:$0xff] %vm6640, %v6692
        %6739 = vst.msk [vmem:[#allocation4 + $0x58] sm:$0xff] %vm6640, %v6694
        %6740 = vst.msk [vmem:[#allocation4 + $0x80] sm:$0xff] %vm6640, %v6696
        %6741 = vst.msk [vmem:[#allocation4 + $0xa8] sm:$0xff] %vm6640, %v6698
        %6742 = vst.msk [vmem:[#allocation4 + $0xd0] sm:$0xff] %vm6640, %v6700
        %6743 = vst.msk [vmem:[#allocation4 + $0xf8] sm:$0xff] %vm6640, %v6702
        %6744 = vst.msk [vmem:[#allocation4 + $0x120] sm:$0xff] %vm6640, %v6704
        %6745 = vst.msk [vmem:[#allocation4 + $0x148] sm:$0xff] %vm6640, %v6706
        %6746 = vst.msk [vmem:[#allocation4 + $0x170] sm:$0xff] %vm6640, %v6708
        %6747 = vst.msk [vmem:[#allocation4 + $0x198] sm:$0xff] %vm6640, %v6710
        %6748 = vst.msk [vmem:[#allocation4 + $0x1c0] sm:$0xff] %vm6640, %v6712
        %6749 = vst.msk [vmem:[#allocation4 + $0x1e8] sm:$0xff] %vm6640, %v6714
        %6750 = vst.msk [vmem:[#allocation4 + $0x210] sm:$0xff] %vm6640, %v6716
        %6751 = vst.msk [vmem:[#allocation4 + $0x238] sm:$0xff] %vm6640, %v6718
        %6752 = vst.msk [vmem:[#allocation4 + $0x260] sm:$0xff] %vm6640, %v6720
        %6753 = vst.msk [vmem:[#allocation4 + $0x10] sm:$0xff] %vm690, %v6363
        %6754 = vst.msk [vmem:[#allocation4 + $0x38] sm:$0xff] %vm690, %v6364
        %6755 = vst.msk [vmem:[#allocation4 + $0x60] sm:$0xff] %vm690, %v6365
        %6756 = vst.msk [vmem:[#allocation4 + $0x88] sm:$0xff] %vm690, %v6366
        %6757 = vst.msk [vmem:[#allocation4 + $0xb0] sm:$0xff] %vm690, %v6367
        %6758 = vst.msk [vmem:[#allocation4 + $0xd8] sm:$0xff] %vm690, %v6368
        %6759 = vst.msk [vmem:[#allocation4 + $0x100] sm:$0xff] %vm690, %v6369
        %6760 = vst.msk [vmem:[#allocation4 + $0x128] sm:$0xff] %vm690, %v6370
        %6761 = vst.msk [vmem:[#allocation4 + $0x150] sm:$0xff] %vm690, %v6371
        %6762 = vst.msk [vmem:[#allocation4 + $0x178] sm:$0xff] %vm690, %v6372
        %6763 = vst.msk [vmem:[#allocation4 + $0x1a0] sm:$0xff] %vm690, %v6373
        %6764 = vst.msk [vmem:[#allocation4 + $0x1c8] sm:$0xff] %vm690, %v6374
        %6765 = vst.msk [vmem:[#allocation4 + $0x1f0] sm:$0xff] %vm690, %v6375
        %6766 = vst.msk [vmem:[#allocation4 + $0x218] sm:$0xff] %vm690, %v6376
        %6767 = vst.msk [vmem:[#allocation4 + $0x240] sm:$0xff] %vm690, %v6377
        %6768 = vst.msk [vmem:[#allocation4 + $0x268] sm:$0xff] %vm690, %v6378
        %6785 = vrot.lane.b32.xlu0 %v6453, 64
        %v6786 = vpop.permute.xlu0 %6785
        %6787 = vrot.lane.b32.xlu0 %v6454, 64
        %v6788 = vpop.permute.xlu0 %6787
        %6789 = vrot.lane.b32.xlu0 %v6455, 64
        %v6790 = vpop.permute.xlu0 %6789
        %6791 = vrot.lane.b32.xlu0 %v6456, 64
        %v6792 = vpop.permute.xlu0 %6791
        %6793 = vrot.lane.b32.xlu0 %v6457, 64
        %v6794 = vpop.permute.xlu0 %6793
        %6795 = vrot.lane.b32.xlu0 %v6458, 64
        %v6796 = vpop.permute.xlu0 %6795
        %6797 = vrot.lane.b32.xlu0 %v6459, 64
        %v6798 = vpop.permute.xlu0 %6797
        %6799 = vrot.lane.b32.xlu0 %v6460, 64
        %v6800 = vpop.permute.xlu0 %6799
        %6801 = vrot.lane.b32.xlu0 %v6461, 64
        %v6802 = vpop.permute.xlu0 %6801
        %6803 = vrot.lane.b32.xlu0 %v6462, 64
        %v6804 = vpop.permute.xlu0 %6803
        %6805 = vrot.lane.b32.xlu0 %v6463, 64
        %v6806 = vpop.permute.xlu0 %6805
        %6807 = vrot.lane.b32.xlu0 %v6464, 64
        %v6808 = vpop.permute.xlu0 %6807
        %6809 = vrot.lane.b32.xlu0 %v6465, 64
        %v6810 = vpop.permute.xlu0 %6809
        %6811 = vrot.lane.b32.xlu0 %v6466, 64
        %v6812 = vpop.permute.xlu0 %6811
        %6813 = vrot.lane.b32.xlu0 %v6467, 64
        %v6814 = vpop.permute.xlu0 %6813
        %6815 = vrot.lane.b32.xlu0 %v6468, 64
        %v6816 = vpop.permute.xlu0 %6815
        %6833 = vst.msk [vmem:[#allocation4 + $0x10] sm:$0xff] %vm6640, %v6786
        %6834 = vst.msk [vmem:[#allocation4 + $0x38] sm:$0xff] %vm6640, %v6788
        %6835 = vst.msk [vmem:[#allocation4 + $0x60] sm:$0xff] %vm6640, %v6790
        %6836 = vst.msk [vmem:[#allocation4 + $0x88] sm:$0xff] %vm6640, %v6792
        %6837 = vst.msk [vmem:[#allocation4 + $0xb0] sm:$0xff] %vm6640, %v6794
        %6838 = vst.msk [vmem:[#allocation4 + $0xd8] sm:$0xff] %vm6640, %v6796
        %6839 = vst.msk [vmem:[#allocation4 + $0x100] sm:$0xff] %vm6640, %v6798
        %6840 = vst.msk [vmem:[#allocation4 + $0x128] sm:$0xff] %vm6640, %v6800
        %6841 = vst.msk [vmem:[#allocation4 + $0x150] sm:$0xff] %vm6640, %v6802
        %6842 = vst.msk [vmem:[#allocation4 + $0x178] sm:$0xff] %vm6640, %v6804
        %6843 = vst.msk [vmem:[#allocation4 + $0x1a0] sm:$0xff] %vm6640, %v6806
        %6844 = vst.msk [vmem:[#allocation4 + $0x1c8] sm:$0xff] %vm6640, %v6808
        %6845 = vst.msk [vmem:[#allocation4 + $0x1f0] sm:$0xff] %vm6640, %v6810
        %6846 = vst.msk [vmem:[#allocation4 + $0x218] sm:$0xff] %vm6640, %v6812
        %6847 = vst.msk [vmem:[#allocation4 + $0x240] sm:$0xff] %vm6640, %v6814
        %6848 = vst.msk [vmem:[#allocation4 + $0x268] sm:$0xff] %vm6640, %v6816
        %6849 = vst.msk [vmem:[#allocation4 + $0x18] sm:$0xff] %vm690, %v6544
        %6850 = vst.msk [vmem:[#allocation4 + $0x40] sm:$0xff] %vm690, %v6545
        %6851 = vst.msk [vmem:[#allocation4 + $0x68] sm:$0xff] %vm690, %v6546
        %6852 = vst.msk [vmem:[#allocation4 + $0x90] sm:$0xff] %vm690, %v6547
        %6853 = vst.msk [vmem:[#allocation4 + $0xb8] sm:$0xff] %vm690, %v6548
        %6854 = vst.msk [vmem:[#allocation4 + $0xe0] sm:$0xff] %vm690, %v6549
        %6855 = vst.msk [vmem:[#allocation4 + $0x108] sm:$0xff] %vm690, %v6550
        %6856 = vst.msk [vmem:[#allocation4 + $0x130] sm:$0xff] %vm690, %v6551
        %6857 = vst.msk [vmem:[#allocation4 + $0x158] sm:$0xff] %vm690, %v6552
        %6858 = vst.msk [vmem:[#allocation4 + $0x180] sm:$0xff] %vm690, %v6553
        %6859 = vst.msk [vmem:[#allocation4 + $0x1a8] sm:$0xff] %vm690, %v6554
        %6860 = vst.msk [vmem:[#allocation4 + $0x1d0] sm:$0xff] %vm690, %v6555
        %6861 = vst.msk [vmem:[#allocation4 + $0x1f8] sm:$0xff] %vm690, %v6556
        %6862 = vst.msk [vmem:[#allocation4 + $0x220] sm:$0xff] %vm690, %v6557
        %6863 = vst.msk [vmem:[#allocation4 + $0x248] sm:$0xff] %vm690, %v6558
        %6864 = vst.msk [vmem:[#allocation4 + $0x270] sm:$0xff] %vm690, %v6559
        %6867 = vrot.lane.b32.xlu0 %v6378, 64
        %v6868 = vpop.permute.xlu0 %6867
        %6869 = vrot.lane.b32.xlu0 %v6379, 64
        %v6870 = vpop.permute.xlu0 %6869
        %6873 = vst.msk [vmem:[#allocation4 + $0x18] sm:$0xff] %vm6640, %v6597
        %6874 = vst.msk [vmem:[#allocation4 + $0x40] sm:$0xff] %vm6640, %v6599
        %6875 = vst.msk [vmem:[#allocation4 + $0x68] sm:$0xff] %vm6640, %v6601
        %6876 = vst.msk [vmem:[#allocation4 + $0x90] sm:$0xff] %vm6640, %v6603
        %6877 = vst.msk [vmem:[#allocation4 + $0xb8] sm:$0xff] %vm6640, %v6605
        %6878 = vst.msk [vmem:[#allocation4 + $0xe0] sm:$0xff] %vm6640, %v6607
        %6879 = vst.msk [vmem:[#allocation4 + $0x108] sm:$0xff] %vm6640, %v6609
        %6880 = vst.msk [vmem:[#allocation4 + $0x130] sm:$0xff] %vm6640, %v6611
        %6881 = vst.msk [vmem:[#allocation4 + $0x158] sm:$0xff] %vm6640, %v6613
        %6882 = vst.msk [vmem:[#allocation4 + $0x180] sm:$0xff] %vm6640, %v6615
        %6883 = vst.msk [vmem:[#allocation4 + $0x1a8] sm:$0xff] %vm6640, %v6617
        %6884 = vst.msk [vmem:[#allocation4 + $0x1d0] sm:$0xff] %vm6640, %v6619
        %6885 = vst.msk [vmem:[#allocation4 + $0x1f8] sm:$0xff] %vm6640, %v6621
        %6886 = vst.msk [vmem:[#allocation4 + $0x220] sm:$0xff] %vm6640, %v6623
        %6887 = vst.msk [vmem:[#allocation4 + $0x248] sm:$0xff] %vm6640, %v6868
        %6888 = vst.msk [vmem:[#allocation4 + $0x270] sm:$0xff] %vm6640, %v6870
        %6889 = vst.msk [vmem:[#allocation4 + $0x20] sm:$0xff] %vm690, %v6454
        %6890 = vst.msk [vmem:[#allocation4 + $0x48] sm:$0xff] %vm690, %v6455
        %6891 = vst.msk [vmem:[#allocation4 + $0x70] sm:$0xff] %vm690, %v6456
        %6892 = vst.msk [vmem:[#allocation4 + $0x98] sm:$0xff] %vm690, %v6457
        %6893 = vst.msk [vmem:[#allocation4 + $0xc0] sm:$0xff] %vm690, %v6458
        %6894 = vst.msk [vmem:[#allocation4 + $0xe8] sm:$0xff] %vm690, %v6459
        %6895 = vst.msk [vmem:[#allocation4 + $0x110] sm:$0xff] %vm690, %v6460
        %6896 = vst.msk [vmem:[#allocation4 + $0x138] sm:$0xff] %vm690, %v6461
        %6897 = vst.msk [vmem:[#allocation4 + $0x160] sm:$0xff] %vm690, %v6462
        %6898 = vst.msk [vmem:[#allocation4 + $0x188] sm:$0xff] %vm690, %v6463
        %6899 = vst.msk [vmem:[#allocation4 + $0x1b0] sm:$0xff] %vm690, %v6464
        %6900 = vst.msk [vmem:[#allocation4 + $0x1d8] sm:$0xff] %vm690, %v6465
        %6901 = vst.msk [vmem:[#allocation4 + $0x200] sm:$0xff] %vm690, %v6466
        %6902 = vst.msk [vmem:[#allocation4 + $0x228] sm:$0xff] %vm690, %v6467
        %6903 = vst.msk [vmem:[#allocation4 + $0x250] sm:$0xff] %vm690, %v6468
        %6904 = vst.msk [vmem:[#allocation4 + $0x278] sm:$0xff] %vm690, %v6469
        %v6905 = vld [vmem:[#allocation4] sm:$0xff]
        %v6906 = vld [vmem:[#allocation4 + $0x8] sm:$0xff]
        %v6907 = vld [vmem:[#allocation4 + $0x10] sm:$0xff]
        %v6908 = vld [vmem:[#allocation4 + $0x18] sm:$0xff]
        %v6909 = vld [vmem:[#allocation4 + $0x20] sm:$0xff]
        %v6910 = vld [vmem:[#allocation4 + $0x28] sm:$0xff]
        %v6911 = vld [vmem:[#allocation4 + $0x30] sm:$0xff]
        %v6912 = vld [vmem:[#allocation4 + $0x38] sm:$0xff]
        %v6913 = vld [vmem:[#allocation4 + $0x40] sm:$0xff]
        %v6914 = vld [vmem:[#allocation4 + $0x48] sm:$0xff]
        %v6915 = vld [vmem:[#allocation4 + $0x50] sm:$0xff]
        %v6916 = vld [vmem:[#allocation4 + $0x58] sm:$0xff]
        %v6917 = vld [vmem:[#allocation4 + $0x60] sm:$0xff]
        %v6918 = vld [vmem:[#allocation4 + $0x68] sm:$0xff]
        %v6919 = vld [vmem:[#allocation4 + $0x70] sm:$0xff]
        %v6920 = vld [vmem:[#allocation4 + $0x78] sm:$0xff]
        %v6921 = vld [vmem:[#allocation4 + $0x80] sm:$0xff]
        %v6922 = vld [vmem:[#allocation4 + $0x88] sm:$0xff]
        %v6923 = vld [vmem:[#allocation4 + $0x90] sm:$0xff]
        %v6924 = vld [vmem:[#allocation4 + $0x98] sm:$0xff]
        %v6925 = vld [vmem:[#allocation4 + $0xa0] sm:$0xff]
        %v6926 = vld [vmem:[#allocation4 + $0xa8] sm:$0xff]
        %v6927 = vld [vmem:[#allocation4 + $0xb0] sm:$0xff]
        %v6928 = vld [vmem:[#allocation4 + $0xb8] sm:$0xff]
        %v6929 = vld [vmem:[#allocation4 + $0xc0] sm:$0xff]
        %v6930 = vld [vmem:[#allocation4 + $0xc8] sm:$0xff]
        %v6931 = vld [vmem:[#allocation4 + $0xd0] sm:$0xff]
        %v6932 = vld [vmem:[#allocation4 + $0xd8] sm:$0xff]
        %v6933 = vld [vmem:[#allocation4 + $0xe0] sm:$0xff]
        %v6934 = vld [vmem:[#allocation4 + $0xe8] sm:$0xff]
        %v6935 = vld [vmem:[#allocation4 + $0xf0] sm:$0xff]
        %v6936 = vld [vmem:[#allocation4 + $0xf8] sm:$0xff]
        %v6937 = vld [vmem:[#allocation4 + $0x100] sm:$0xff]
        %v6938 = vld [vmem:[#allocation4 + $0x108] sm:$0xff]
        %v6939 = vld [vmem:[#allocation4 + $0x110] sm:$0xff]
        %v6940 = vld [vmem:[#allocation4 + $0x118] sm:$0xff]
        %v6941 = vld [vmem:[#allocation4 + $0x120] sm:$0xff]
        %v6942 = vld [vmem:[#allocation4 + $0x128] sm:$0xff]
        %v6943 = vld [vmem:[#allocation4 + $0x130] sm:$0xff]
        %v6944 = vld [vmem:[#allocation4 + $0x138] sm:$0xff]
        %v6945 = vld [vmem:[#allocation4 + $0x140] sm:$0xff]
        %v6946 = vld [vmem:[#allocation4 + $0x148] sm:$0xff]
        %v6947 = vld [vmem:[#allocation4 + $0x150] sm:$0xff]
        %v6948 = vld [vmem:[#allocation4 + $0x158] sm:$0xff]
        %v6949 = vld [vmem:[#allocation4 + $0x160] sm:$0xff]
        %v6950 = vld [vmem:[#allocation4 + $0x168] sm:$0xff]
        %v6951 = vld [vmem:[#allocation4 + $0x170] sm:$0xff]
        %v6952 = vld [vmem:[#allocation4 + $0x178] sm:$0xff]
        %v6953 = vld [vmem:[#allocation4 + $0x180] sm:$0xff]
        %v6954 = vld [vmem:[#allocation4 + $0x188] sm:$0xff]
        %v6955 = vld [vmem:[#allocation4 + $0x190] sm:$0xff]
        %v6956 = vld [vmem:[#allocation4 + $0x198] sm:$0xff]
        %v6957 = vld [vmem:[#allocation4 + $0x1a0] sm:$0xff]
        %v6958 = vld [vmem:[#allocation4 + $0x1a8] sm:$0xff]
        %v6959 = vld [vmem:[#allocation4 + $0x1b0] sm:$0xff]
        %v6960 = vld [vmem:[#allocation4 + $0x1b8] sm:$0xff]
        %v6961 = vld [vmem:[#allocation4 + $0x1c0] sm:$0xff]
        %v6962 = vld [vmem:[#allocation4 + $0x1c8] sm:$0xff]
        %v6963 = vld [vmem:[#allocation4 + $0x1d0] sm:$0xff]
        %v6964 = vld [vmem:[#allocation4 + $0x1d8] sm:$0xff]
        %v6965 = vld [vmem:[#allocation4 + $0x1e0] sm:$0xff]
        %v6966 = vld [vmem:[#allocation4 + $0x1e8] sm:$0xff]
        %v6967 = vld [vmem:[#allocation4 + $0x1f0] sm:$0xff]
        %v6968 = vld [vmem:[#allocation4 + $0x1f8] sm:$0xff]
        %v6969 = vld [vmem:[#allocation4 + $0x200] sm:$0xff]
        %v6970 = vld [vmem:[#allocation4 + $0x208] sm:$0xff]
        %v6971 = vld [vmem:[#allocation4 + $0x210] sm:$0xff]
        %v6972 = vld [vmem:[#allocation4 + $0x218] sm:$0xff]
        %v6973 = vld [vmem:[#allocation4 + $0x220] sm:$0xff]
        %v6974 = vld [vmem:[#allocation4 + $0x228] sm:$0xff]
        %v6975 = vld [vmem:[#allocation4 + $0x230] sm:$0xff]
        %v6976 = vld [vmem:[#allocation4 + $0x238] sm:$0xff]
        %v6977 = vld [vmem:[#allocation4 + $0x240] sm:$0xff]
        %v6978 = vld [vmem:[#allocation4 + $0x248] sm:$0xff]
        %v6979 = vld [vmem:[#allocation4 + $0x250] sm:$0xff]
        %v6980 = vld [vmem:[#allocation4 + $0x258] sm:$0xff]
        %v6981 = vld [vmem:[#allocation4 + $0x260] sm:$0xff]
        %v6982 = vld [vmem:[#allocation4 + $0x268] sm:$0xff]
        %v6983 = vld [vmem:[#allocation4 + $0x270] sm:$0xff]
        %v6984 = vld [vmem:[#allocation4 + $0x278] sm:$0xff]
        %v6986 = vlaneseq
        %v6987 = vshrl.u32 %v6986, 7
        %v6988 = vsub.s32 0, %v6987
        %v6989 = vrot.slane %v6073, %v6988
        %v7063 = vunpack.c.l.b16 %v6001
        %v7064 = vunpack.c.l.b16 %v6002
        %v7065 = vunpack.c.l.b16 %v6003
        %v7066 = vunpack.c.l.b16 %v6004
        %v7067 = vunpack.c.l.b16 %v6005
        %v7068 = vunpack.c.l.b16 %v6006
        %v7069 = vunpack.c.l.b16 %v6007
        %v7070 = vunpack.c.l.b16 %v6008
        %v7071 = vunpack.c.l.b16 %v6009
        %v7072 = vunpack.c.l.b16 %v6010
        %v7073 = vunpack.c.l.b16 %v6011
        %v7074 = vunpack.c.l.b16 %v6012
        %v7075 = vunpack.c.l.b16 %v6013
        %v7076 = vunpack.c.l.b16 %v6014
        %v7077 = vunpack.c.l.b16 %v6015
        %v7078 = vunpack.c.l.b16 %v6016
        %v7079 = vunpack.c.l.b16 %v6017
        %v7080 = vunpack.c.l.b16 %v6018
        %v7081 = vunpack.c.l.b16 %v6019
        %v7082 = vunpack.c.l.b16 %v6020
        %v7083 = vunpack.c.l.b16 %v6021
        %v7084 = vunpack.c.l.b16 %v6022
        %v7085 = vunpack.c.l.b16 %v6023
        %v7086 = vunpack.c.l.b16 %v6024
        %v7087 = vunpack.c.l.b16 %v6025
        %v7088 = vunpack.c.l.b16 %v6026
        %v7089 = vunpack.c.l.b16 %v6027
        %v7090 = vunpack.c.l.b16 %v6028
        %v7091 = vunpack.c.l.b16 %v6029
        %v7092 = vunpack.c.l.b16 %v6030
        %v7093 = vunpack.c.l.b16 %v6031
        %v7094 = vunpack.c.l.b16 %v6032
        %v7095 = vunpack.c.l.b16 %v6033
        %v7096 = vunpack.c.l.b16 %v6034
        %v7097 = vunpack.c.l.b16 %v6035
        %v7098 = vunpack.c.l.b16 %v6036
        %v7099 = vunpack.c.l.b16 %v6037
        %v7100 = vunpack.c.l.b16 %v6038
        %v7101 = vunpack.c.l.b16 %v6039
        %v7102 = vunpack.c.l.b16 %v6040
        %v7103 = vunpack.c.l.b16 %v6041
        %v7104 = vunpack.c.l.b16 %v6042
        %v7105 = vunpack.c.l.b16 %v6043
        %v7106 = vunpack.c.l.b16 %v6044
        %v7107 = vunpack.c.l.b16 %v6045
        %v7108 = vunpack.c.l.b16 %v6046
        %v7109 = vunpack.c.l.b16 %v6047
        %v7110 = vunpack.c.l.b16 %v6048
        %v7111 = vunpack.c.l.b16 %v6049
        %v7112 = vunpack.c.l.b16 %v6050
        %v7113 = vunpack.c.l.b16 %v6051
        %v7114 = vunpack.c.l.b16 %v6052
        %v7115 = vunpack.c.l.b16 %v6053
        %v7116 = vunpack.c.l.b16 %v6054
        %v7117 = vunpack.c.l.b16 %v6055
        %v7118 = vunpack.c.l.b16 %v6056
        %v7119 = vunpack.c.l.b16 %v6057
        %v7120 = vunpack.c.l.b16 %v6058
        %v7121 = vunpack.c.l.b16 %v6059
        %v7122 = vunpack.c.l.b16 %v6060
        %v7123 = vunpack.c.l.b16 %v6061
        %v7124 = vunpack.c.l.b16 %v6062
        %v7125 = vunpack.c.l.b16 %v6063
        %v7126 = vunpack.c.l.b16 %v6064
        %v7127 = vunpack.c.l.b16 %v6065
        %v7128 = vunpack.c.l.b16 %v6066
        %v7129 = vunpack.c.l.b16 %v6067
        %v7130 = vunpack.c.l.b16 %v6068
        %v7131 = vunpack.c.l.b16 %v6069
        %v7132 = vunpack.c.l.b16 %v6070
        %v7133 = vunpack.c.l.b16 %v6071
        %v7134 = vunpack.c.l.b16 %v6072
        %v7135 = vpack.c.b16 %v7064, %v7063
        %v7136 = vpack.c.b16 %v7066, %v7065
        %v7137 = vpack.c.b16 %v7068, %v7067
        %v7138 = vpack.c.b16 %v7070, %v7069
        %v7139 = vpack.c.b16 %v7072, %v7071
        %v7140 = vpack.c.b16 %v7074, %v7073
        %v7141 = vpack.c.b16 %v7076, %v7075
        %v7142 = vpack.c.b16 %v7078, %v7077
        %v7143 = vpack.c.b16 %v7080, %v7079
        %v7144 = vpack.c.b16 %v7082, %v7081
        %v7145 = vpack.c.b16 %v7084, %v7083
        %v7146 = vpack.c.b16 %v7086, %v7085
        %v7147 = vpack.c.b16 %v7088, %v7087
        %v7148 = vpack.c.b16 %v7090, %v7089
        %v7149 = vpack.c.b16 %v7092, %v7091
        %v7150 = vpack.c.b16 %v7094, %v7093
        %v7151 = vpack.c.b16 %v7096, %v7095
        %v7152 = vpack.c.b16 %v7098, %v7097
        %v7153 = vpack.c.b16 %v7100, %v7099
        %v7154 = vpack.c.b16 %v7102, %v7101
        %v7155 = vpack.c.b16 %v7104, %v7103
        %v7156 = vpack.c.b16 %v7106, %v7105
        %v7157 = vpack.c.b16 %v7108, %v7107
        %v7158 = vpack.c.b16 %v7110, %v7109
        %v7159 = vpack.c.b16 %v7112, %v7111
        %v7160 = vpack.c.b16 %v7114, %v7113
        %v7161 = vpack.c.b16 %v7116, %v7115
        %v7162 = vpack.c.b16 %v7118, %v7117
        %v7163 = vpack.c.b16 %v7120, %v7119
        %v7164 = vpack.c.b16 %v7122, %v7121
        %v7165 = vpack.c.b16 %v7124, %v7123
        %v7166 = vpack.c.b16 %v7126, %v7125
        %v7167 = vpack.c.b16 %v7128, %v7127
        %v7168 = vpack.c.b16 %v7130, %v7129
        %v7169 = vpack.c.b16 %v7132, %v7131
        %v7170 = vpack.c.b16 %v7134, %v7133
        %v7208 = vsel %vm690, %v6909, 0
        %v7211 = vsel %vm690, %v6914, 0
        %v7214 = vsel %vm690, %v6919, 0
        %v7217 = vsel %vm690, %v6924, 0
        %v7220 = vsel %vm690, %v6929, 0
        %v7223 = vsel %vm690, %v6934, 0
        %v7226 = vsel %vm690, %v6939, 0
        %v7229 = vsel %vm690, %v6944, 0
        %v7232 = vsel %vm690, %v6949, 0
        %v7235 = vsel %vm690, %v6954, 0
        %v7238 = vsel %vm690, %v6959, 0
        %v7241 = vsel %vm690, %v6964, 0
        %v7244 = vsel %vm690, %v6969, 0
        %v7247 = vsel %vm690, %v6974, 0
        %v7250 = vsel %vm690, %v6979, 0
        %v7253 = vsel %vm690, %v6984, 0
        %7255 = vmatprep.subr.bf16.mxu0 0
        %7256 = vmatpush1.bf16.msra.mxu0 %v7135
        %7257 = vmatprep.subr.bf16.mxu0 0
        %7258 = vmatpush1.bf16.msra.mxu0 %v7136
        %7259 = vmatprep.subr.bf16.mxu0 0
        %7260 = vmatpush1.bf16.msra.mxu0 %v7137
        %7261 = vmatprep.subr.bf16.mxu0 0
        %7262 = vmatpush1.bf16.msra.mxu0 %v7138
        %7263 = vmatprep.subr.bf16.mxu0 0
        %7264 = vmatpush1.bf16.msra.mxu0 %v7139
        %7265 = vmatprep.subr.bf16.mxu0 0
        %7266 = vmatpush1.bf16.msra.mxu0 %v7140
        %7267 = vmatprep.subr.bf16.mxu0 0
        %7268 = vmatpush1.bf16.msra.mxu0 %v7141
        %7269 = vmatprep.subr.bf16.mxu0 0
        %7270 = vmatpush1.bf16.msra.mxu0 %v7142
        %7271 = vmatprep.subr.bf16.mxu0 0
        %7272 = vmatpush1.bf16.msra.mxu0 %v7143
        %7273 = vmatprep.subr.bf16.mxu0 0
        %7274 = vmatpush1.bf16.msra.mxu0 %v7144
        %7275 = vmatprep.subr.bf16.mxu0 0
        %7276 = vmatpush1.bf16.msra.mxu0 %v7145
        %7277 = vmatprep.subr.bf16.mxu0 0
        %7278 = vmatpush1.bf16.msra.mxu0 %v7146
        %7279 = vmatprep.subr.bf16.mxu0 0
        %7280 = vmatpush1.bf16.msra.mxu0 %v7147
        %7281 = vmatprep.subr.bf16.mxu0 0
        %7282 = vmatpush1.bf16.msra.mxu0 %v7148
        %7283 = vmatprep.subr.bf16.mxu0 0
        %7284 = vmatpush1.bf16.msra.mxu0 %v7149
        %7285 = vmatprep.subr.bf16.mxu0 0
        %7286 = vmatpush1.bf16.msra.mxu0 %v7150
        %7287 = vmatprep.mubr.bf16.mxu0 %v6906
        %7288 = vmatmul.mubr.bf16.gmra.mrb[0].mxu0 %v6905
        %v7289 = vpop.f32.mrb[0].mxu0
        %v7290 = vadd.f32 %v6989, %v7289
        %v7291 = vpop.f32.mrb[0].mxu0
        %v7292 = vpop.f32.mrb[0].mxu0
        %v7293 = vadd.f32 %v6989, %v7292
        %v7294 = vpop.f32.mrb[0].mxu0
        %7295 = vmatprep.mubr.bf16.mxu0 %v6911
        %7296 = vmatmul.mubr.bf16.gmra.mrb[0].mxu0 %v6910
        %v7297 = vpop.f32.mrb[0].mxu0
        %v7298 = vadd.f32 %v6989, %v7297
        %v7299 = vpop.f32.mrb[0].mxu0
        %v7300 = vpop.f32.mrb[0].mxu0
        %v7301 = vadd.f32 %v6989, %v7300
        %v7302 = vpop.f32.mrb[0].mxu0
        %7303 = vmatprep.mubr.bf16.mxu0 %v6916
        %7304 = vmatmul.mubr.bf16.gmra.mrb[0].mxu0 %v6915
        %v7305 = vpop.f32.mrb[0].mxu0
        %v7306 = vadd.f32 %v6989, %v7305
        %v7307 = vpop.f32.mrb[0].mxu0
        %v7308 = vpop.f32.mrb[0].mxu0
        %v7309 = vadd.f32 %v6989, %v7308
        %v7310 = vpop.f32.mrb[0].mxu0
        %7311 = vmatprep.mubr.bf16.mxu0 %v6921
        %7312 = vmatmul.mubr.bf16.gmra.mrb[0].mxu0 %v6920
        %v7313 = vpop.f32.mrb[0].mxu0
        %v7314 = vadd.f32 %v6989, %v7313
        %v7315 = vpop.f32.mrb[0].mxu0
        %v7316 = vpop.f32.mrb[0].mxu0
        %v7317 = vadd.f32 %v6989, %v7316
        %v7318 = vpop.f32.mrb[0].mxu0
        %7319 = vmatprep.mubr.bf16.mxu0 %v6926
        %7320 = vmatmul.mubr.bf16.gmra.mrb[0].mxu0 %v6925
        %v7321 = vpop.f32.mrb[0].mxu0
        %v7322 = vadd.f32 %v6989, %v7321
        %v7323 = vpop.f32.mrb[0].mxu0
        %v7324 = vpop.f32.mrb[0].mxu0
        %v7325 = vadd.f32 %v6989, %v7324
        %v7326 = vpop.f32.mrb[0].mxu0
        %7327 = vmatprep.mubr.bf16.mxu0 %v6931
        %7328 = vmatmul.mubr.bf16.gmra.mrb[0].mxu0 %v6930
        %v7329 = vpop.f32.mrb[0].mxu0
        %v7330 = vadd.f32 %v6989, %v7329
        %v7331 = vpop.f32.mrb[0].mxu0
        %v7332 = vpop.f32.mrb[0].mxu0
        %v7333 = vadd.f32 %v6989, %v7332
        %v7334 = vpop.f32.mrb[0].mxu0
        %7335 = vmatprep.mubr.bf16.mxu0 %v6936
        %7336 = vmatmul.mubr.bf16.gmra.mrb[0].mxu0 %v6935
        %v7337 = vpop.f32.mrb[0].mxu0
        %v7338 = vadd.f32 %v6989, %v7337
        %v7339 = vpop.f32.mrb[0].mxu0
        %v7340 = vpop.f32.mrb[0].mxu0
        %v7341 = vadd.f32 %v6989, %v7340
        %v7342 = vpop.f32.mrb[0].mxu0
        %7343 = vmatprep.mubr.bf16.mxu0 %v6941
        %7344 = vmatmul.mubr.bf16.gmra.mrb[0].mxu0 %v6940
        %v7345 = vpop.f32.mrb[0].mxu0
        %v7346 = vadd.f32 %v6989, %v7345
        %v7347 = vpop.f32.mrb[0].mxu0
        %v7348 = vpop.f32.mrb[0].mxu0
        %v7349 = vadd.f32 %v6989, %v7348
        %v7350 = vpop.f32.mrb[0].mxu0
        %7351 = vmatprep.mubr.bf16.mxu0 %v6946
        %7352 = vmatmul.mubr.bf16.gmra.mrb[0].mxu0 %v6945
        %v7353 = vpop.f32.mrb[0].mxu0
        %v7354 = vadd.f32 %v6989, %v7353
        %v7355 = vpop.f32.mrb[0].mxu0
        %v7356 = vpop.f32.mrb[0].mxu0
        %v7357 = vadd.f32 %v6989, %v7356
        %v7358 = vpop.f32.mrb[0].mxu0
        %7359 = vmatprep.mubr.bf16.mxu0 %v6951
        %7360 = vmatmul.mubr.bf16.gmra.mrb[0].mxu0 %v6950
        %v7361 = vpop.f32.mrb[0].mxu0
        %v7362 = vadd.f32 %v6989, %v7361
        %v7363 = vpop.f32.mrb[0].mxu0
        %v7364 = vpop.f32.mrb[0].mxu0
        %v7365 = vadd.f32 %v6989, %v7364
        %v7366 = vpop.f32.mrb[0].mxu0
        %7367 = vmatprep.mubr.bf16.mxu0 %v6956
        %7368 = vmatmul.mubr.bf16.gmra.mrb[0].mxu0 %v6955
        %v7369 = vpop.f32.mrb[0].mxu0
        %v7370 = vadd.f32 %v6989, %v7369
        %v7371 = vpop.f32.mrb[0].mxu0
        %v7372 = vpop.f32.mrb[0].mxu0
        %v7373 = vadd.f32 %v6989, %v7372
        %v7374 = vpop.f32.mrb[0].mxu0
        %7375 = vmatprep.mubr.bf16.mxu0 %v6961
        %7376 = vmatmul.mubr.bf16.gmra.mrb[0].mxu0 %v6960
        %v7377 = vpop.f32.mrb[0].mxu0
        %v7378 = vadd.f32 %v6989, %v7377
        %v7379 = vpop.f32.mrb[0].mxu0
        %v7380 = vpop.f32.mrb[0].mxu0
        %v7381 = vadd.f32 %v6989, %v7380
        %v7382 = vpop.f32.mrb[0].mxu0
        %7383 = vmatprep.mubr.bf16.mxu0 %v6966
        %7384 = vmatmul.mubr.bf16.gmra.mrb[0].mxu0 %v6965
        %v7385 = vpop.f32.mrb[0].mxu0
        %v7386 = vadd.f32 %v6989, %v7385
        %v7387 = vpop.f32.mrb[0].mxu0
        %v7388 = vpop.f32.mrb[0].mxu0
        %v7389 = vadd.f32 %v6989, %v7388
        %v7390 = vpop.f32.mrb[0].mxu0
        %7391 = vmatprep.mubr.bf16.mxu0 %v6971
        %7392 = vmatmul.mubr.bf16.gmra.mrb[0].mxu0 %v6970
        %v7393 = vpop.f32.mrb[0].mxu0
        %v7394 = vadd.f32 %v6989, %v7393
        %v7395 = vpop.f32.mrb[0].mxu0
        %v7396 = vpop.f32.mrb[0].mxu0
        %v7397 = vadd.f32 %v6989, %v7396
        %v7398 = vpop.f32.mrb[0].mxu0
        %7399 = vmatprep.mubr.bf16.mxu0 %v6976
        %7400 = vmatmul.mubr.bf16.gmra.mrb[0].mxu0 %v6975
        %v7401 = vpop.f32.mrb[0].mxu0
        %v7402 = vadd.f32 %v6989, %v7401
        %v7403 = vpop.f32.mrb[0].mxu0
        %v7404 = vpop.f32.mrb[0].mxu0
        %v7405 = vadd.f32 %v6989, %v7404
        %v7406 = vpop.f32.mrb[0].mxu0
        %7407 = vmatprep.mubr.bf16.mxu0 %v6981
        %7408 = vmatmul.mubr.bf16.gmra.mrb[0].mxu0 %v6980
        %v7409 = vpop.f32.mrb[0].mxu0
        %v7410 = vadd.f32 %v6989, %v7409
        %v7411 = vpop.f32.mrb[0].mxu0
        %v7412 = vpop.f32.mrb[0].mxu0
        %v7413 = vadd.f32 %v6989, %v7412
        %v7414 = vpop.f32.mrb[0].mxu0
        %7415 = vdwg.mxu0
        %7416 = vmatprep.subr.bf16.mxu0 0
        %7417 = vmatpush1.bf16.msra.mxu0 %v7151
        %7418 = vmatprep.subr.bf16.mxu0 0
        %7419 = vmatpush1.bf16.msra.mxu0 %v7152
        %7420 = vmatprep.subr.bf16.mxu0 0
        %7421 = vmatpush1.bf16.msra.mxu0 %v7153
        %7422 = vmatprep.subr.bf16.mxu0 0
        %7423 = vmatpush1.bf16.msra.mxu0 %v7154
        %7424 = vmatprep.subr.bf16.mxu0 0
        %7425 = vmatpush1.bf16.msra.mxu0 %v7155
        %7426 = vmatprep.subr.bf16.mxu0 0
        %7427 = vmatpush1.bf16.msra.mxu0 %v7156
        %7428 = vmatprep.subr.bf16.mxu0 0
        %7429 = vmatpush1.bf16.msra.mxu0 %v7157
        %7430 = vmatprep.subr.bf16.mxu0 0
        %7431 = vmatpush1.bf16.msra.mxu0 %v7158
        %7432 = vmatprep.subr.bf16.mxu0 0
        %7433 = vmatpush1.bf16.msra.mxu0 %v7159
        %7434 = vmatprep.subr.bf16.mxu0 0
        %7435 = vmatpush1.bf16.msra.mxu0 %v7160
        %7436 = vmatprep.subr.bf16.mxu0 0
        %7437 = vmatpush1.bf16.msra.mxu0 %v7161
        %7438 = vmatprep.subr.bf16.mxu0 0
        %7439 = vmatpush1.bf16.msra.mxu0 %v7162
        %7440 = vmatprep.subr.bf16.mxu0 0
        %7441 = vmatpush1.bf16.msra.mxu0 %v7163
        %7442 = vmatprep.subr.bf16.mxu0 0
        %7443 = vmatpush1.bf16.msra.mxu0 %v7164
        %7444 = vmatprep.subr.bf16.mxu0 0
        %7445 = vmatpush1.bf16.msra.mxu0 %v7165
        %7446 = vmatprep.subr.bf16.mxu0 0
        %7447 = vmatpush1.bf16.msra.mxu0 %v7166
        %7448 = vmatprep.mubr.bf16.mxu0 %v6908
        %7449 = vmatmul.mubr.bf16.gmra.mrb[0].mxu0 %v6907
        %v7450 = vpop.f32.mrb[0].mxu0
        %v7451 = vadd.f32 %v7290, %v7450
        %v7452 = vpop.f32.mrb[0].mxu0
        %v7453 = vpop.f32.mrb[0].mxu0
        %v7454 = vadd.f32 %v7293, %v7453
        %v7455 = vpop.f32.mrb[0].mxu0
        %7456 = vmatprep.mubr.bf16.mxu0 %v6913
        %7457 = vmatmul.mubr.bf16.gmra.mrb[0].mxu0 %v6912
        %v7458 = vpop.f32.mrb[0].mxu0
        %v7459 = vadd.f32 %v7298, %v7458
        %v7460 = vpop.f32.mrb[0].mxu0
        %v7461 = vpop.f32.mrb[0].mxu0
        %v7462 = vadd.f32 %v7301, %v7461
        %v7463 = vpop.f32.mrb[0].mxu0
        %7464 = vmatprep.mubr.bf16.mxu0 %v6918
        %7465 = vmatmul.mubr.bf16.gmra.mrb[0].mxu0 %v6917
        %v7466 = vpop.f32.mrb[0].mxu0
        %v7467 = vadd.f32 %v7306, %v7466
        %v7468 = vpop.f32.mrb[0].mxu0
        %v7469 = vpop.f32.mrb[0].mxu0
        %v7470 = vadd.f32 %v7309, %v7469
        %v7471 = vpop.f32.mrb[0].mxu0
        %7472 = vmatprep.mubr.bf16.mxu0 %v6923
        %7473 = vmatmul.mubr.bf16.gmra.mrb[0].mxu0 %v6922
        %v7474 = vpop.f32.mrb[0].mxu0
        %v7475 = vadd.f32 %v7314, %v7474
        %v7476 = vpop.f32.mrb[0].mxu0
        %v7477 = vpop.f32.mrb[0].mxu0
        %v7478 = vadd.f32 %v7317, %v7477
        %v7479 = vpop.f32.mrb[0].mxu0
        %7480 = vmatprep.mubr.bf16.mxu0 %v6928
        %7481 = vmatmul.mubr.bf16.gmra.mrb[0].mxu0 %v6927
        %v7482 = vpop.f32.mrb[0].mxu0
        %v7483 = vadd.f32 %v7322, %v7482
        %v7484 = vpop.f32.mrb[0].mxu0
        %v7485 = vpop.f32.mrb[0].mxu0
        %v7486 = vadd.f32 %v7325, %v7485
        %v7487 = vpop.f32.mrb[0].mxu0
        %7488 = vmatprep.mubr.bf16.mxu0 %v6933
        %7489 = vmatmul.mubr.bf16.gmra.mrb[0].mxu0 %v6932
        %v7490 = vpop.f32.mrb[0].mxu0
        %v7491 = vadd.f32 %v7330, %v7490
        %v7492 = vpop.f32.mrb[0].mxu0
        %v7493 = vpop.f32.mrb[0].mxu0
        %v7494 = vadd.f32 %v7333, %v7493
        %v7495 = vpop.f32.mrb[0].mxu0
        %7496 = vmatprep.mubr.bf16.mxu0 %v6938
        %7497 = vmatmul.mubr.bf16.gmra.mrb[0].mxu0 %v6937
        %v7498 = vpop.f32.mrb[0].mxu0
        %v7499 = vadd.f32 %v7338, %v7498
        %v7500 = vpop.f32.mrb[0].mxu0
        %v7501 = vpop.f32.mrb[0].mxu0
        %v7502 = vadd.f32 %v7341, %v7501
        %v7503 = vpop.f32.mrb[0].mxu0
        %7504 = vmatprep.mubr.bf16.mxu0 %v6943
        %7505 = vmatmul.mubr.bf16.gmra.mrb[0].mxu0 %v6942
        %v7506 = vpop.f32.mrb[0].mxu0
        %v7507 = vadd.f32 %v7346, %v7506
        %v7508 = vpop.f32.mrb[0].mxu0
        %v7509 = vpop.f32.mrb[0].mxu0
        %v7510 = vadd.f32 %v7349, %v7509
        %v7511 = vpop.f32.mrb[0].mxu0
        %7512 = vmatprep.mubr.bf16.mxu0 %v6948
        %7513 = vmatmul.mubr.bf16.gmra.mrb[0].mxu0 %v6947
        %v7514 = vpop.f32.mrb[0].mxu0
        %v7515 = vadd.f32 %v7354, %v7514
        %v7516 = vpop.f32.mrb[0].mxu0
        %v7517 = vpop.f32.mrb[0].mxu0
        %v7518 = vadd.f32 %v7357, %v7517
        %v7519 = vpop.f32.mrb[0].mxu0
        %7520 = vmatprep.mubr.bf16.mxu0 %v6953
        %7521 = vmatmul.mubr.bf16.gmra.mrb[0].mxu0 %v6952
        %v7522 = vpop.f32.mrb[0].mxu0
        %v7523 = vadd.f32 %v7362, %v7522
        %v7524 = vpop.f32.mrb[0].mxu0
        %v7525 = vpop.f32.mrb[0].mxu0
        %v7526 = vadd.f32 %v7365, %v7525
        %v7527 = vpop.f32.mrb[0].mxu0
        %7528 = vmatprep.mubr.bf16.mxu0 %v6958
        %7529 = vmatmul.mubr.bf16.gmra.mrb[0].mxu0 %v6957
        %v7530 = vpop.f32.mrb[0].mxu0
        %v7531 = vadd.f32 %v7370, %v7530
        %v7532 = vpop.f32.mrb[0].mxu0
        %v7533 = vpop.f32.mrb[0].mxu0
        %v7534 = vadd.f32 %v7373, %v7533
        %v7535 = vpop.f32.mrb[0].mxu0
        %7536 = vmatprep.mubr.bf16.mxu0 %v6963
        %7537 = vmatmul.mubr.bf16.gmra.mrb[0].mxu0 %v6962
        %v7538 = vpop.f32.mrb[0].mxu0
        %v7539 = vadd.f32 %v7378, %v7538
        %v7540 = vpop.f32.mrb[0].mxu0
        %v7541 = vpop.f32.mrb[0].mxu0
        %v7542 = vadd.f32 %v7381, %v7541
        %v7543 = vpop.f32.mrb[0].mxu0
        %7544 = vmatprep.mubr.bf16.mxu0 %v6968
        %7545 = vmatmul.mubr.bf16.gmra.mrb[0].mxu0 %v6967
        %v7546 = vpop.f32.mrb[0].mxu0
        %v7547 = vadd.f32 %v7386, %v7546
        %v7548 = vpop.f32.mrb[0].mxu0
        %v7549 = vpop.f32.mrb[0].mxu0
        %v7550 = vadd.f32 %v7389, %v7549
        %v7551 = vpop.f32.mrb[0].mxu0
        %7552 = vmatprep.mubr.bf16.mxu0 %v6973
        %7553 = vmatmul.mubr.bf16.gmra.mrb[0].mxu0 %v6972
        %v7554 = vpop.f32.mrb[0].mxu0
        %v7555 = vadd.f32 %v7394, %v7554
        %v7556 = vpop.f32.mrb[0].mxu0
        %v7557 = vpop.f32.mrb[0].mxu0
        %v7558 = vadd.f32 %v7397, %v7557
        %v7559 = vpop.f32.mrb[0].mxu0
        %7560 = vmatprep.mubr.bf16.mxu0 %v6978
        %7561 = vmatmul.mubr.bf16.gmra.mrb[0].mxu0 %v6977
        %v7562 = vpop.f32.mrb[0].mxu0
        %v7563 = vadd.f32 %v7402, %v7562
        %v7564 = vpop.f32.mrb[0].mxu0
        %v7565 = vpop.f32.mrb[0].mxu0
        %v7566 = vadd.f32 %v7405, %v7565
        %v7567 = vpop.f32.mrb[0].mxu0
        %7568 = vmatprep.mubr.bf16.mxu0 %v6983
        %7569 = vmatmul.mubr.bf16.gmra.mrb[0].mxu0 %v6982
        %v7570 = vpop.f32.mrb[0].mxu0
        %v7571 = vadd.f32 %v7410, %v7570
        %v7572 = vpop.f32.mrb[0].mxu0
        %v7573 = vpop.f32.mrb[0].mxu0
        %v7574 = vadd.f32 %v7413, %v7573
        %v7575 = vpop.f32.mrb[0].mxu0
        %7576 = vdwg.mxu0
        %7577 = vmatprep.subr.bf16.mxu0 0
        %7578 = vmatpush1.bf16.msra.mxu0 %v7167
        %7579 = vmatprep.subr.bf16.mxu0 0
        %7580 = vmatpush1.bf16.msra.mxu0 %v7168
        %7581 = vmatprep.subr.bf16.mxu0 0
        %7582 = vmatpush1.bf16.msra.mxu0 %v7169
        %7583 = vmatprep.subr.bf16.mxu0 0
        %7584 = vmatpush1.bf16.msra.mxu0 %v7170
        %7585 = vmatprep.subr.bf16.mxu0 0
        %7586 = vmatpush1.bf16.msra.mxu0 0
        %7587 = vmatprep.subr.bf16.mxu0 0
        %7588 = vmatpush1.bf16.msra.mxu0 0
        %7589 = vmatprep.subr.bf16.mxu0 0
        %7590 = vmatpush1.bf16.msra.mxu0 0
        %7591 = vmatprep.subr.bf16.mxu0 0
        %7592 = vmatpush1.bf16.msra.mxu0 0
        %7593 = vmatprep.subr.bf16.mxu0 0
        %7594 = vmatpush1.bf16.msra.mxu0 0
        %7595 = vmatprep.subr.bf16.mxu0 0
        %7596 = vmatpush1.bf16.msra.mxu0 0
        %7597 = vmatprep.subr.bf16.mxu0 0
        %7598 = vmatpush1.bf16.msra.mxu0 0
        %7599 = vmatprep.subr.bf16.mxu0 0
        %7600 = vmatpush1.bf16.msra.mxu0 0
        %7601 = vmatprep.subr.bf16.mxu0 0
        %7602 = vmatpush1.bf16.msra.mxu0 0
        %7603 = vmatprep.subr.bf16.mxu0 0
        %7604 = vmatpush1.bf16.msra.mxu0 0
        %7605 = vmatprep.subr.bf16.mxu0 0
        %7606 = vmatpush1.bf16.msra.mxu0 0
        %7607 = vmatprep.subr.bf16.mxu0 0
        %7608 = vmatpush1.bf16.msra.mxu0 0
        %7609 = vmatprep.mubr.bf16.mxu0 0
        %7610 = vmatmul.mubr.bf16.gmra.mrb[0].mxu0 %v7208
        %v7611 = vpop.f32.mrb[0].mxu0
        %v7612 = vadd.f32 %v7451, %v7611
        %v7613 = vpop.f32.mrb[0].mxu0
        %v7614 = vpop.f32.mrb[0].mxu0
        %v7615 = vadd.f32 %v7454, %v7614
        %v7616 = vpop.f32.mrb[0].mxu0
        %7617 = vmatprep.mubr.bf16.mxu0 0
        %7618 = vmatmul.mubr.bf16.gmra.mrb[0].mxu0 %v7211
        %v7619 = vpop.f32.mrb[0].mxu0
        %v7620 = vadd.f32 %v7459, %v7619
        %v7621 = vpop.f32.mrb[0].mxu0
        %v7622 = vpop.f32.mrb[0].mxu0
        %v7623 = vadd.f32 %v7462, %v7622
        %v7624 = vpop.f32.mrb[0].mxu0
        %7625 = vmatprep.mubr.bf16.mxu0 0
        %7626 = vmatmul.mubr.bf16.gmra.mrb[0].mxu0 %v7214
        %v7627 = vpop.f32.mrb[0].mxu0
        %v7628 = vadd.f32 %v7467, %v7627
        %v7629 = vpop.f32.mrb[0].mxu0
        %v7630 = vpop.f32.mrb[0].mxu0
        %v7631 = vadd.f32 %v7470, %v7630
        %v7632 = vpop.f32.mrb[0].mxu0
        %7633 = vmatprep.mubr.bf16.mxu0 0
        %7634 = vmatmul.mubr.bf16.gmra.mrb[0].mxu0 %v7217
        %v7635 = vpop.f32.mrb[0].mxu0
        %v7636 = vadd.f32 %v7475, %v7635
        %v7637 = vpop.f32.mrb[0].mxu0
        %v7638 = vpop.f32.mrb[0].mxu0
        %v7639 = vadd.f32 %v7478, %v7638
        %v7640 = vpop.f32.mrb[0].mxu0
        %7641 = vmatprep.mubr.bf16.mxu0 0
        %7642 = vmatmul.mubr.bf16.gmra.mrb[0].mxu0 %v7220
        %v7643 = vpop.f32.mrb[0].mxu0
        %v7644 = vadd.f32 %v7483, %v7643
        %v7645 = vpop.f32.mrb[0].mxu0
        %v7646 = vpop.f32.mrb[0].mxu0
        %v7647 = vadd.f32 %v7486, %v7646
        %v7648 = vpop.f32.mrb[0].mxu0
        %7649 = vmatprep.mubr.bf16.mxu0 0
        %7650 = vmatmul.mubr.bf16.gmra.mrb[0].mxu0 %v7223
        %v7651 = vpop.f32.mrb[0].mxu0
        %v7652 = vadd.f32 %v7491, %v7651
        %v7653 = vpop.f32.mrb[0].mxu0
        %v7654 = vpop.f32.mrb[0].mxu0
        %v7655 = vadd.f32 %v7494, %v7654
        %v7656 = vpop.f32.mrb[0].mxu0
        %7657 = vmatprep.mubr.bf16.mxu0 0
        %7658 = vmatmul.mubr.bf16.gmra.mrb[0].mxu0 %v7226
        %v7659 = vpop.f32.mrb[0].mxu0
        %v7660 = vadd.f32 %v7499, %v7659
        %v7661 = vpop.f32.mrb[0].mxu0
        %v7662 = vpop.f32.mrb[0].mxu0
        %v7663 = vadd.f32 %v7502, %v7662
        %v7664 = vpop.f32.mrb[0].mxu0
        %7665 = vmatprep.mubr.bf16.mxu0 0
        %7666 = vmatmul.mubr.bf16.gmra.mrb[0].mxu0 %v7229
        %v7667 = vpop.f32.mrb[0].mxu0
        %v7668 = vadd.f32 %v7507, %v7667
        %v7669 = vpop.f32.mrb[0].mxu0
        %v7670 = vpop.f32.mrb[0].mxu0
        %v7671 = vadd.f32 %v7510, %v7670
        %v7672 = vpop.f32.mrb[0].mxu0
        %7673 = vmatprep.mubr.bf16.mxu0 0
        %7674 = vmatmul.mubr.bf16.gmra.mrb[0].mxu0 %v7232
        %v7675 = vpop.f32.mrb[0].mxu0
        %v7676 = vadd.f32 %v7515, %v7675
        %v7677 = vpop.f32.mrb[0].mxu0
        %v7678 = vpop.f32.mrb[0].mxu0
        %v7679 = vadd.f32 %v7518, %v7678
        %v7680 = vpop.f32.mrb[0].mxu0
        %7681 = vmatprep.mubr.bf16.mxu0 0
        %7682 = vmatmul.mubr.bf16.gmra.mrb[0].mxu0 %v7235
        %v7683 = vpop.f32.mrb[0].mxu0
        %v7684 = vadd.f32 %v7523, %v7683
        %v7685 = vpop.f32.mrb[0].mxu0
        %v7686 = vpop.f32.mrb[0].mxu0
        %v7687 = vadd.f32 %v7526, %v7686
        %v7688 = vpop.f32.mrb[0].mxu0
        %7689 = vmatprep.mubr.bf16.mxu0 0
        %7690 = vmatmul.mubr.bf16.gmra.mrb[0].mxu0 %v7238
        %v7691 = vpop.f32.mrb[0].mxu0
        %v7692 = vadd.f32 %v7531, %v7691
        %v7693 = vpop.f32.mrb[0].mxu0
        %v7694 = vpop.f32.mrb[0].mxu0
        %v7695 = vadd.f32 %v7534, %v7694
        %v7696 = vpop.f32.mrb[0].mxu0
        %7697 = vmatprep.mubr.bf16.mxu0 0
        %7698 = vmatmul.mubr.bf16.gmra.mrb[0].mxu0 %v7241
        %v7699 = vpop.f32.mrb[0].mxu0
        %v7700 = vadd.f32 %v7539, %v7699
        %v7701 = vpop.f32.mrb[0].mxu0
        %v7702 = vpop.f32.mrb[0].mxu0
        %v7703 = vadd.f32 %v7542, %v7702
        %v7704 = vpop.f32.mrb[0].mxu0
        %7705 = vmatprep.mubr.bf16.mxu0 0
        %7706 = vmatmul.mubr.bf16.gmra.mrb[0].mxu0 %v7244
        %v7707 = vpop.f32.mrb[0].mxu0
        %v7708 = vadd.f32 %v7547, %v7707
        %v7709 = vpop.f32.mrb[0].mxu0
        %v7710 = vpop.f32.mrb[0].mxu0
        %v7711 = vadd.f32 %v7550, %v7710
        %v7712 = vpop.f32.mrb[0].mxu0
        %7713 = vmatprep.mubr.bf16.mxu0 0
        %7714 = vmatmul.mubr.bf16.gmra.mrb[0].mxu0 %v7247
        %v7715 = vpop.f32.mrb[0].mxu0
        %v7716 = vadd.f32 %v7555, %v7715
        %v7717 = vpop.f32.mrb[0].mxu0
        %v7718 = vpop.f32.mrb[0].mxu0
        %v7719 = vadd.f32 %v7558, %v7718
        %v7720 = vpop.f32.mrb[0].mxu0
        %7721 = vmatprep.mubr.bf16.mxu0 0
        %7722 = vmatmul.mubr.bf16.gmra.mrb[0].mxu0 %v7250
        %v7723 = vpop.f32.mrb[0].mxu0
        %v7724 = vadd.f32 %v7563, %v7723
        %v7725 = vpop.f32.mrb[0].mxu0
        %v7726 = vpop.f32.mrb[0].mxu0
        %v7727 = vadd.f32 %v7566, %v7726
        %v7728 = vpop.f32.mrb[0].mxu0
        %7729 = vmatprep.mubr.bf16.mxu0 0
        %7730 = vmatmul.mubr.bf16.gmra.mrb[0].mxu0 %v7253
        %v7731 = vpop.f32.mrb[0].mxu0
        %v7732 = vadd.f32 %v7571, %v7731
        %v7733 = vpop.f32.mrb[0].mxu0
        %v7734 = vpop.f32.mrb[0].mxu0
        %v7735 = vadd.f32 %v7574, %v7734
        %v7736 = vpop.f32.mrb[0].mxu0
        %7737 = vdwg.mxu0
        %v7738 = vmax.f32 %v7612, 0.0
        %v7739 = vmax.f32 %v7615, 0.0
        %v7740 = vmax.f32 %v7620, 0.0
        %v7741 = vmax.f32 %v7623, 0.0
        %v7742 = vmax.f32 %v7628, 0.0
        %v7743 = vmax.f32 %v7631, 0.0
        %v7744 = vmax.f32 %v7636, 0.0
        %v7745 = vmax.f32 %v7639, 0.0
        %v7746 = vmax.f32 %v7644, 0.0
        %v7747 = vmax.f32 %v7647, 0.0
        %v7748 = vmax.f32 %v7652, 0.0
        %v7749 = vmax.f32 %v7655, 0.0
        %v7750 = vmax.f32 %v7660, 0.0
        %v7751 = vmax.f32 %v7663, 0.0
        %v7752 = vmax.f32 %v7668, 0.0
        %v7753 = vmax.f32 %v7671, 0.0
        %v7754 = vmax.f32 %v7676, 0.0
        %v7755 = vmax.f32 %v7679, 0.0
        %v7756 = vmax.f32 %v7684, 0.0
        %v7757 = vmax.f32 %v7687, 0.0
        %v7758 = vmax.f32 %v7692, 0.0
        %v7759 = vmax.f32 %v7695, 0.0
        %v7760 = vmax.f32 %v7700, 0.0
        %v7761 = vmax.f32 %v7703, 0.0
        %v7762 = vmax.f32 %v7708, 0.0
        %v7763 = vmax.f32 %v7711, 0.0
        %v7764 = vmax.f32 %v7716, 0.0
        %v7765 = vmax.f32 %v7719, 0.0
        %v7766 = vmax.f32 %v7724, 0.0
        %v7767 = vmax.f32 %v7727, 0.0
        %v7768 = vmax.f32 %v7732, 0.0
        %v7769 = vmax.f32 %v7735, 0.0
        %v7770 = vsel %vm690, %v7738, 0.0
        %v7771 = vsel %vm690, %v7739, 0.0
        %v7772 = vadd.f32 %v7770, %v7771
        %v7773 = vsel %vm690, %v7740, 0.0
        %v7774 = vadd.f32 %v7772, %v7773
        %v7775 = vsel %vm690, %v7741, 0.0
        %v7776 = vadd.f32 %v7774, %v7775
        %v7777 = vsel %vm690, %v7742, 0.0
        %v7778 = vadd.f32 %v7776, %v7777
        %v7779 = vsel %vm690, %v7743, 0.0
        %v7780 = vadd.f32 %v7778, %v7779
        %v7781 = vsel %vm690, %v7744, 0.0
        %v7782 = vadd.f32 %v7780, %v7781
        %v7783 = vsel %vm690, %v7745, 0.0
        %v7784 = vadd.f32 %v7782, %v7783
        %v7785 = vsel %vm690, %v7746, 0.0
        %v7786 = vadd.f32 %v7784, %v7785
        %v7787 = vsel %vm690, %v7747, 0.0
        %v7788 = vadd.f32 %v7786, %v7787
        %v7789 = vsel %vm690, %v7748, 0.0
        %v7790 = vadd.f32 %v7788, %v7789
        %v7791 = vsel %vm690, %v7749, 0.0
        %v7792 = vadd.f32 %v7790, %v7791
        %v7793 = vsel %vm690, %v7750, 0.0
        %v7794 = vadd.f32 %v7792, %v7793
        %v7795 = vsel %vm690, %v7751, 0.0
        %v7796 = vadd.f32 %v7794, %v7795
        %v7797 = vsel %vm690, %v7752, 0.0
        %v7798 = vadd.f32 %v7796, %v7797
        %v7799 = vsel %vm690, %v7753, 0.0
        %v7800 = vadd.f32 %v7798, %v7799
        %v7801 = vsel %vm690, %v7754, 0.0
        %v7802 = vadd.f32 %v7800, %v7801
        %v7803 = vsel %vm690, %v7755, 0.0
        %v7804 = vadd.f32 %v7802, %v7803
        %v7805 = vsel %vm690, %v7756, 0.0
        %v7806 = vadd.f32 %v7804, %v7805
        %v7807 = vsel %vm690, %v7757, 0.0
        %v7808 = vadd.f32 %v7806, %v7807
        %v7809 = vsel %vm690, %v7758, 0.0
        %v7810 = vadd.f32 %v7808, %v7809
        %v7811 = vsel %vm690, %v7759, 0.0
        %v7812 = vadd.f32 %v7810, %v7811
        %v7813 = vsel %vm690, %v7760, 0.0
        %v7814 = vadd.f32 %v7812, %v7813
        %v7815 = vsel %vm690, %v7761, 0.0
        %v7816 = vadd.f32 %v7814, %v7815
        %v7817 = vsel %vm690, %v7762, 0.0
        %v7818 = vadd.f32 %v7816, %v7817
        %v7819 = vsel %vm690, %v7763, 0.0
        %v7820 = vadd.f32 %v7818, %v7819
        %v7821 = vsel %vm690, %v7764, 0.0
        %v7822 = vadd.f32 %v7820, %v7821
        %v7823 = vsel %vm690, %v7765, 0.0
        %v7824 = vadd.f32 %v7822, %v7823
        %v7825 = vsel %vm690, %v7766, 0.0
        %v7826 = vadd.f32 %v7824, %v7825
        %v7827 = vsel %vm690, %v7767, 0.0
        %v7828 = vadd.f32 %v7826, %v7827
        %v7829 = vsel %vm690, %v7768, 0.0
        %v7830 = vadd.f32 %v7828, %v7829
        %v7831 = vsel %vm690, %v7769, 0.0
        %v7832 = vadd.f32 %v7830, %v7831
        %v7833 = vrot.slane %v7832, 4
        %v7834 = vadd.f32 %v7832, %v7833
        %v7835 = vrot.slane %v7834, 2
        %v7836 = vadd.f32 %v7834, %v7835
        %v7837 = vrot.slane %v7836, 1
        %v7838 = vadd.f32 %v7836, %v7837
        %v7839 = vmul.f32 %v7838, 0.00390625
        %v7840 = vld [vmem:[%s17] sm:$0xff]
        %v7841 = vld [vmem:[%s17 + $0x8] sm:$0xff]
        %v7842 = vld [vmem:[%s17 + $0x10] sm:$0xff]
        %v7843 = vld [vmem:[%s17 + $0x18] sm:$0xff]
        %v7844 = vld [vmem:[%s17 + $0x20] sm:$0xff]
        %v7845 = vld [vmem:[%s17 + $0x28] sm:$0xff]
        %v7846 = vld [vmem:[%s17 + $0x30] sm:$0xff]
        %v7847 = vld [vmem:[%s17 + $0x38] sm:$0xff]
        %v7848 = vld [vmem:[%s18] sm:$0x1]
        %v7850 = vsel %vm690, %v7839, 0
        %7852 = vmatprep.subr.mxu0 0.0
        %7853 = vmatpush1.msra.mxu0 %v7840
        %7854 = vmatprep.subr.mxu0 0.0
        %7855 = vmatpush1.msra.mxu0 %v7841
        %7856 = vmatprep.subr.mxu0 0.0
        %7857 = vmatpush1.msra.mxu0 %v7842
        %7858 = vmatprep.subr.mxu0 0.0
        %7859 = vmatpush1.msra.mxu0 %v7843
        %7860 = vmatprep.subr.mxu0 0.0
        %7861 = vmatpush1.msra.mxu0 %v7844
        %7862 = vmatprep.subr.mxu0 0.0
        %7863 = vmatpush1.msra.mxu0 %v7845
        %7864 = vmatprep.subr.mxu0 0.0
        %7865 = vmatpush1.msra.mxu0 %v7846
        %7866 = vmatprep.subr.mxu0 0.0
        %7867 = vmatpush1.msra.mxu0 %v7847
        %7868 = vmatprep.subr.mxu0 0.0
        %7869 = vmatpush1.msra.mxu0 0.0
        %7870 = vmatprep.subr.mxu0 0.0
        %7871 = vmatpush1.msra.mxu0 0.0
        %7872 = vmatprep.subr.mxu0 0.0
        %7873 = vmatpush1.msra.mxu0 0.0
        %7874 = vmatprep.subr.mxu0 0.0
        %7875 = vmatpush1.msra.mxu0 0.0
        %7876 = vmatprep.subr.mxu0 0.0
        %7877 = vmatpush1.msra.mxu0 0.0
        %7878 = vmatprep.subr.mxu0 0.0
        %7879 = vmatpush1.msra.mxu0 0.0
        %7880 = vmatprep.subr.mxu0 0.0
        %7881 = vmatpush1.msra.mxu0 0.0
        %7882 = vmatprep.subr.mxu0 0.0
        %7883 = vmatpush1.msra.mxu0 0.0
        %7884 = vmatprep.subr.mxu0 0.0
        %7885 = vmatpush1.msra.mxu0 0.0
        %7886 = vmatprep.subr.mxu0 0.0
        %7887 = vmatpush1.msra.mxu0 0.0
        %7888 = vmatprep.subr.mxu0 0.0
        %7889 = vmatpush1.msra.mxu0 0.0
        %7890 = vmatprep.subr.mxu0 0.0
        %7891 = vmatpush1.msra.mxu0 0.0
        %7892 = vmatprep.subr.mxu0 0.0
        %7893 = vmatpush1.msra.mxu0 0.0
        %7894 = vmatprep.subr.mxu0 0.0
        %7895 = vmatpush1.msra.mxu0 0.0
        %7896 = vmatprep.subr.mxu0 0.0
        %7897 = vmatpush1.msra.mxu0 0.0
        %7898 = vmatprep.subr.mxu0 0.0
        %7899 = vmatpush1.msra.mxu0 0.0
        %7900 = vmatprep.subr.mxu0 0.0
        %7901 = vmatpush1.msra.mxu0 0.0
        %7902 = vmatprep.subr.mxu0 0.0
        %7903 = vmatpush1.msra.mxu0 0.0
        %7904 = vmatprep.subr.mxu0 0.0
        %7905 = vmatpush1.msra.mxu0 0.0
        %7906 = vmatprep.subr.mxu0 0.0
        %7907 = vmatpush1.msra.mxu0 0.0
        %7908 = vmatprep.subr.mxu0 0.0
        %7909 = vmatpush1.msra.mxu0 0.0
        %7910 = vmatprep.subr.mxu0 0.0
        %7911 = vmatpush1.msra.mxu0 0.0
        %7912 = vmatprep.subr.mxu0 0.0
        %7913 = vmatpush1.msra.mxu0 0.0
        %7914 = vmatprep.subr.mxu0 0.0
        %7915 = vmatpush1.msra.mxu0 0.0
        %7916 = vmatprep.mubr.f32.mxu0 0.0
        %7917 = vmatmul.mubr.f32.gmra.mrb[0].mxu0 %v7850
        %v7918 = vpop.f32.mrb[0].mxu0
        %v7919 = vadd.f32 %v7848, %v7918
        %v7920 = vpop.f32.mrb[0].mxu0
        %7921 = vdwg.mxu0
        %v7922 = vmax.f32 %v7919, 0.0
        %v7923 = vld [vmem:[%s19] sm:$0xff]
        %v7924 = vld [vmem:[%s19 + $0x8] sm:$0xff]
        %v7925 = vld [vmem:[%s19 + $0x10] sm:$0xff]
        %v7926 = vld [vmem:[%s19 + $0x18] sm:$0xff]
        %v7927 = vld [vmem:[%s19 + $0x20] sm:$0xff]
        %v7928 = vld [vmem:[%s19 + $0x28] sm:$0xff]
        %v7929 = vld [vmem:[%s19 + $0x30] sm:$0xff]
        %v7930 = vld [vmem:[%s19 + $0x38] sm:$0xff]
        %v7931 = vld [vmem:[%s20] sm:$0x1]
        %v7933 = vsel %vm690, %v7922, 0
        %7935 = vmatprep.subr.mxu0 0.0
        %7936 = vmatpush1.msra.mxu0 %v7923
        %7937 = vmatprep.subr.mxu0 0.0
        %7938 = vmatpush1.msra.mxu0 %v7924
        %7939 = vmatprep.subr.mxu0 0.0
        %7940 = vmatpush1.msra.mxu0 %v7925
        %7941 = vmatprep.subr.mxu0 0.0
        %7942 = vmatpush1.msra.mxu0 %v7926
        %7943 = vmatprep.subr.mxu0 0.0
        %7944 = vmatpush1.msra.mxu0 %v7927
        %7945 = vmatprep.subr.mxu0 0.0
        %7946 = vmatpush1.msra.mxu0 %v7928
        %7947 = vmatprep.subr.mxu0 0.0
        %7948 = vmatpush1.msra.mxu0 %v7929
        %7949 = vmatprep.subr.mxu0 0.0
        %7950 = vmatpush1.msra.mxu0 %v7930
        %7951 = vmatprep.subr.mxu0 0.0
        %7952 = vmatpush1.msra.mxu0 0.0
        %7953 = vmatprep.subr.mxu0 0.0
        %7954 = vmatpush1.msra.mxu0 0.0
        %7955 = vmatprep.subr.mxu0 0.0
        %7956 = vmatpush1.msra.mxu0 0.0
        %7957 = vmatprep.subr.mxu0 0.0
        %7958 = vmatpush1.msra.mxu0 0.0
        %7959 = vmatprep.subr.mxu0 0.0
        %7960 = vmatpush1.msra.mxu0 0.0
        %7961 = vmatprep.subr.mxu0 0.0
        %7962 = vmatpush1.msra.mxu0 0.0
        %7963 = vmatprep.subr.mxu0 0.0
        %7964 = vmatpush1.msra.mxu0 0.0
        %7965 = vmatprep.subr.mxu0 0.0
        %7966 = vmatpush1.msra.mxu0 0.0
        %7967 = vmatprep.subr.mxu0 0.0
        %7968 = vmatpush1.msra.mxu0 0.0
        %7969 = vmatprep.subr.mxu0 0.0
        %7970 = vmatpush1.msra.mxu0 0.0
        %7971 = vmatprep.subr.mxu0 0.0
        %7972 = vmatpush1.msra.mxu0 0.0
        %7973 = vmatprep.subr.mxu0 0.0
        %7974 = vmatpush1.msra.mxu0 0.0
        %7975 = vmatprep.subr.mxu0 0.0
        %7976 = vmatpush1.msra.mxu0 0.0
        %7977 = vmatprep.subr.mxu0 0.0
        %7978 = vmatpush1.msra.mxu0 0.0
        %7979 = vmatprep.subr.mxu0 0.0
        %7980 = vmatpush1.msra.mxu0 0.0
        %7981 = vmatprep.subr.mxu0 0.0
        %7982 = vmatpush1.msra.mxu0 0.0
        %7983 = vmatprep.subr.mxu0 0.0
        %7984 = vmatpush1.msra.mxu0 0.0
        %7985 = vmatprep.subr.mxu0 0.0
        %7986 = vmatpush1.msra.mxu0 0.0
        %7987 = vmatprep.subr.mxu0 0.0
        %7988 = vmatpush1.msra.mxu0 0.0
        %7989 = vmatprep.subr.mxu0 0.0
        %7990 = vmatpush1.msra.mxu0 0.0
        %7991 = vmatprep.subr.mxu0 0.0
        %7992 = vmatpush1.msra.mxu0 0.0
        %7993 = vmatprep.subr.mxu0 0.0
        %7994 = vmatpush1.msra.mxu0 0.0
        %7995 = vmatprep.subr.mxu0 0.0
        %7996 = vmatpush1.msra.mxu0 0.0
        %7997 = vmatprep.subr.mxu0 0.0
        %7998 = vmatpush1.msra.mxu0 0.0
        %7999 = vmatprep.mubr.f32.mxu0 0.0
        %8000 = vmatmul.mubr.f32.gmra.mrb[0].mxu0 %v7933
        %v8001 = vpop.f32.mrb[0].mxu0
        %v8002 = vadd.f32 %v7931, %v8001
        %v8003 = vpop.f32.mrb[0].mxu0
        %8004 = vdwg.mxu0
        %v8005 = vmax.f32 %v8002, 0.0
        %v8006 = vpack.c.bf16 %v8005, %v8005
        %v8007 = vld [vmem:[%s1] sm:$0xf]
        %v8008 = vld [vmem:[%s1 + $0x4] sm:$0xf]
        %v8009 = vld [vmem:[%s1 + $0x8] sm:$0xf]
        %v8010 = vld [vmem:[%s1 + $0xc] sm:$0xf]
        %v8011 = vld [vmem:[%s1 + $0x10] sm:$0xf]
        %v8012 = vld [vmem:[%s1 + $0x14] sm:$0xf]
        %v8013 = vld [vmem:[%s1 + $0x18] sm:$0xf]
        %v8014 = vld [vmem:[%s1 + $0x1c] sm:$0xf]
        %v8015 = vld [vmem:[%s2] sm:$0x1]
        %v8024 = vunpack.c.l.b16 %v8007
        %v8025 = vunpack.c.l.b16 %v8008
        %v8026 = vunpack.c.l.b16 %v8009
        %v8027 = vunpack.c.l.b16 %v8010
        %v8028 = vunpack.c.l.b16 %v8011
        %v8029 = vunpack.c.l.b16 %v8012
        %v8030 = vunpack.c.l.b16 %v8013
        %v8031 = vunpack.c.l.b16 %v8014
        %v8032 = vpack.c.b16 %v8025, %v8024
        %v8033 = vpack.c.b16 %v8027, %v8026
        %v8034 = vpack.c.b16 %v8029, %v8028
        %v8035 = vpack.c.b16 %v8031, %v8030
        %v8041 = vsel %vm690, %v8006, 0
        %8043 = vmatprep.subr.bf16.mxu0 0
        %8044 = vmatpush1.bf16.msra.mxu0 %v8032
        %8045 = vmatprep.subr.bf16.mxu0 0
        %8046 = vmatpush1.bf16.msra.mxu0 %v8033
        %8047 = vmatprep.subr.bf16.mxu0 0
        %8048 = vmatpush1.bf16.msra.mxu0 %v8034
        %8049 = vmatprep.subr.bf16.mxu0 0
        %8050 = vmatpush1.bf16.msra.mxu0 %v8035
        %8051 = vmatprep.subr.bf16.mxu0 0
        %8052 = vmatpush1.bf16.msra.mxu0 0
        %8053 = vmatprep.subr.bf16.mxu0 0
        %8054 = vmatpush1.bf16.msra.mxu0 0
        %8055 = vmatprep.subr.bf16.mxu0 0
        %8056 = vmatpush1.bf16.msra.mxu0 0
        %8057 = vmatprep.subr.bf16.mxu0 0
        %8058 = vmatpush1.bf16.msra.mxu0 0
        %8059 = vmatprep.subr.bf16.mxu0 0
        %8060 = vmatpush1.bf16.msra.mxu0 0
        %8061 = vmatprep.subr.bf16.mxu0 0
        %8062 = vmatpush1.bf16.msra.mxu0 0
        %8063 = vmatprep.subr.bf16.mxu0 0
        %8064 = vmatpush1.bf16.msra.mxu0 0
        %8065 = vmatprep.subr.bf16.mxu0 0
        %8066 = vmatpush1.bf16.msra.mxu0 0
        %8067 = vmatprep.subr.bf16.mxu0 0
        %8068 = vmatpush1.bf16.msra.mxu0 0
        %8069 = vmatprep.subr.bf16.mxu0 0
        %8070 = vmatpush1.bf16.msra.mxu0 0
        %8071 = vmatprep.subr.bf16.mxu0 0
        %8072 = vmatpush1.bf16.msra.mxu0 0
        %8073 = vmatprep.subr.bf16.mxu0 0
        %8074 = vmatpush1.bf16.msra.mxu0 0
        %8075 = vmatprep.mubr.bf16.mxu0 0
        %8076 = vmatmul.mubr.bf16.gmra.mrb[0].mxu0 %v8041
        %v8077 = vpop.f32.mrb[0].mxu0
        %v8078 = vadd.f32 %v8015, %v8077
        %v8079 = vpop.f32.mrb[0].mxu0
        %v8080 = vpop.f32.mrb[0].mxu0
        %v8081 = vpop.f32.mrb[0].mxu0
        %8082 = vdwg.mxu0
        %v8083 = vmax.f32 %v8078, 0.0
        %v8084 = vld [vmem:[%s3 + $0x8] sm:$0xf]
        %v8085 = vpack.c.bf16 %v8083, %v8083
        %v8086 = vld [vmem:[%s4] sm:$0x1]
        %v8088 = vsel %vm846, %v8085, 0
        %v8091 = vsel %vm3201, %v8084, 0
        %8093 = vmatprep.subr.bf16.mxu0 0
        %8094 = vmatpush1.bf16.msra.mxu0 %v8091
        %8095 = vmatprep.subr.bf16.mxu0 0
        %8096 = vmatpush1.bf16.msra.mxu0 0
        %8097 = vmatprep.subr.bf16.mxu0 0
        %8098 = vmatpush1.bf16.msra.mxu0 0
        %8099 = vmatprep.subr.bf16.mxu0 0
        %8100 = vmatpush1.bf16.msra.mxu0 0
        %8101 = vmatprep.subr.bf16.mxu0 0
        %8102 = vmatpush1.bf16.msra.mxu0 0
        %8103 = vmatprep.subr.bf16.mxu0 0
        %8104 = vmatpush1.bf16.msra.mxu0 0
        %8105 = vmatprep.subr.bf16.mxu0 0
        %8106 = vmatpush1.bf16.msra.mxu0 0
        %8107 = vmatprep.subr.bf16.mxu0 0
        %8108 = vmatpush1.bf16.msra.mxu0 0
        %8109 = vmatprep.subr.bf16.mxu0 0
        %8110 = vmatpush1.bf16.msra.mxu0 0
        %8111 = vmatprep.subr.bf16.mxu0 0
        %8112 = vmatpush1.bf16.msra.mxu0 0
        %8113 = vmatprep.subr.bf16.mxu0 0
        %8114 = vmatpush1.bf16.msra.mxu0 0
        %8115 = vmatprep.subr.bf16.mxu0 0
        %8116 = vmatpush1.bf16.msra.mxu0 0
        %8117 = vmatprep.subr.bf16.mxu0 0
        %8118 = vmatpush1.bf16.msra.mxu0 0
        %8119 = vmatprep.subr.bf16.mxu0 0
        %8120 = vmatpush1.bf16.msra.mxu0 0
        %8121 = vmatprep.subr.bf16.mxu0 0
        %8122 = vmatpush1.bf16.msra.mxu0 0
        %8123 = vmatprep.subr.bf16.mxu0 0
        %8124 = vmatpush1.bf16.msra.mxu0 0
        %8125 = vmatprep.mubr.bf16.mxu0 0
        %8126 = vmatmul.mubr.bf16.gmra.mrb[0].mxu0 %v8088
        %v8127 = vpop.f32.mrb[0].mxu0
        %v8128 = vadd.f32 %v8086, %v8127
        %v8129 = vpop.f32.mrb[0].mxu0
        %v8130 = vpop.f32.mrb[0].mxu0
        %v8131 = vpop.f32.mrb[0].mxu0
        %8132 = vdwg.mxu0
        %v8133 = vmax.f32 %v8128, 0.0
        %v8134 = vld [vmem:[%s3430 + $0x8] sm:$0xf]
        %v8135 = vpack.c.bf16 %v8133, %v8133
        %v8136 = vld [vmem:[%s3436] sm:$0x1]
        %v8138 = vsel %vm846, %v8135, 0
        %v8141 = vsel %vm3201, %v8134, 0
        %8143 = vmatprep.subr.bf16.mxu0 0
        %8144 = vmatpush1.bf16.msra.mxu0 %v8141
        %8145 = vmatprep.subr.bf16.mxu0 0
        %8146 = vmatpush1.bf16.msra.mxu0 0
        %8147 = vmatprep.subr.bf16.mxu0 0
        %8148 = vmatpush1.bf16.msra.mxu0 0
        %8149 = vmatprep.subr.bf16.mxu0 0
        %8150 = vmatpush1.bf16.msra.mxu0 0
        %8151 = vmatprep.subr.bf16.mxu0 0
        %8152 = vmatpush1.bf16.msra.mxu0 0
        %8153 = vmatprep.subr.bf16.mxu0 0
        %8154 = vmatpush1.bf16.msra.mxu0 0
        %8155 = vmatprep.subr.bf16.mxu0 0
        %8156 = vmatpush1.bf16.msra.mxu0 0
        %8157 = vmatprep.subr.bf16.mxu0 0
        %8158 = vmatpush1.bf16.msra.mxu0 0
        %8159 = vmatprep.subr.bf16.mxu0 0
        %8160 = vmatpush1.bf16.msra.mxu0 0
        %8161 = vmatprep.subr.bf16.mxu0 0
        %8162 = vmatpush1.bf16.msra.mxu0 0
        %8163 = vmatprep.subr.bf16.mxu0 0
        %8164 = vmatpush1.bf16.msra.mxu0 0
        %8165 = vmatprep.subr.bf16.mxu0 0
        %8166 = vmatpush1.bf16.msra.mxu0 0
        %8167 = vmatprep.subr.bf16.mxu0 0
        %8168 = vmatpush1.bf16.msra.mxu0 0
        %8169 = vmatprep.subr.bf16.mxu0 0
        %8170 = vmatpush1.bf16.msra.mxu0 0
        %8171 = vmatprep.subr.bf16.mxu0 0
        %8172 = vmatpush1.bf16.msra.mxu0 0
        %8173 = vmatprep.subr.bf16.mxu0 0
        %8174 = vmatpush1.bf16.msra.mxu0 0
        %8175 = vmatprep.mubr.bf16.mxu0 0
        %8176 = vmatmul.mubr.bf16.gmra.mrb[0].mxu0 %v8138
        %v8177 = vpop.f32.mrb[0].mxu0
        %v8178 = vadd.f32 %v8136, %v8177
        %v8179 = vpop.f32.mrb[0].mxu0
        %v8180 = vpop.f32.mrb[0].mxu0
        %v8181 = vpop.f32.mrb[0].mxu0
        %8182 = vdwg.mxu0
        %v8183 = vmax.f32 %v8178, 0.0
        %v8184 = vld [vmem:[%s4597 + $0x8] sm:$0xf]
        %v8185 = vpack.c.bf16 %v8183, %v8183
        %v8186 = vld [vmem:[%s4603] sm:$0x1]
        %v8188 = vsel %vm846, %v8185, 0
        %v8191 = vsel %vm3201, %v8184, 0
        %8193 = vmatprep.subr.bf16.mxu0 0
        %8194 = vmatpush1.bf16.msra.mxu0 %v8191
        %8195 = vmatprep.subr.bf16.mxu0 0
        %8196 = vmatpush1.bf16.msra.mxu0 0
        %8197 = vmatprep.subr.bf16.mxu0 0
        %8198 = vmatpush1.bf16.msra.mxu0 0
        %8199 = vmatprep.subr.bf16.mxu0 0
        %8200 = vmatpush1.bf16.msra.mxu0 0
        %8201 = vmatprep.subr.bf16.mxu0 0
        %8202 = vmatpush1.bf16.msra.mxu0 0
        %8203 = vmatprep.subr.bf16.mxu0 0
        %8204 = vmatpush1.bf16.msra.mxu0 0
        %8205 = vmatprep.subr.bf16.mxu0 0
        %8206 = vmatpush1.bf16.msra.mxu0 0
        %8207 = vmatprep.subr.bf16.mxu0 0
        %8208 = vmatpush1.bf16.msra.mxu0 0
        %8209 = vmatprep.subr.bf16.mxu0 0
        %8210 = vmatpush1.bf16.msra.mxu0 0
        %8211 = vmatprep.subr.bf16.mxu0 0
        %8212 = vmatpush1.bf16.msra.mxu0 0
        %8213 = vmatprep.subr.bf16.mxu0 0
        %8214 = vmatpush1.bf16.msra.mxu0 0
        %8215 = vmatprep.subr.bf16.mxu0 0
        %8216 = vmatpush1.bf16.msra.mxu0 0
        %8217 = vmatprep.subr.bf16.mxu0 0
        %8218 = vmatpush1.bf16.msra.mxu0 0
        %8219 = vmatprep.subr.bf16.mxu0 0
        %8220 = vmatpush1.bf16.msra.mxu0 0
        %8221 = vmatprep.subr.bf16.mxu0 0
        %8222 = vmatpush1.bf16.msra.mxu0 0
        %8223 = vmatprep.subr.bf16.mxu0 0
        %8224 = vmatpush1.bf16.msra.mxu0 0
        %8225 = vmatprep.mubr.bf16.mxu0 0
        %8226 = vmatmul.mubr.bf16.gmra.mrb[0].mxu0 %v8188
        %v8227 = vpop.f32.mrb[0].mxu0
        %v8228 = vadd.f32 %v8186, %v8227
        %v8229 = vpop.f32.mrb[0].mxu0
        %v8230 = vpop.f32.mrb[0].mxu0
        %v8231 = vpop.f32.mrb[0].mxu0
        %8232 = vdwg.mxu0
        %v8233 = vmax.f32 %v8228, 0.0
        %v8234 = vpack.c.bf16 %v8233, %v8233
        %v8235 = vld [vmem:[%s5] sm:$0x3]
        %v8236 = vld [vmem:[#allocation6] sm:$0x1]
        %v8238 = vsel %vm846, %v8234, 0
        %v8241 = vsel %vm3201, %v8235, 0
        %8243 = vmatprep.subr.bf16.mxu0 0
        %8244 = vmatpush1.bf16.msra.mxu0 %v8241
        %8245 = vmatprep.subr.bf16.mxu0 0
        %8246 = vmatpush1.bf16.msra.mxu0 0
        %8247 = vmatprep.subr.bf16.mxu0 0
        %8248 = vmatpush1.bf16.msra.mxu0 0
        %8249 = vmatprep.subr.bf16.mxu0 0
        %8250 = vmatpush1.bf16.msra.mxu0 0
        %8251 = vmatprep.subr.bf16.mxu0 0
        %8252 = vmatpush1.bf16.msra.mxu0 0
        %8253 = vmatprep.subr.bf16.mxu0 0
        %8254 = vmatpush1.bf16.msra.mxu0 0
        %8255 = vmatprep.subr.bf16.mxu0 0
        %8256 = vmatpush1.bf16.msra.mxu0 0
        %8257 = vmatprep.subr.bf16.mxu0 0
        %8258 = vmatpush1.bf16.msra.mxu0 0
        %8259 = vmatprep.subr.bf16.mxu0 0
        %8260 = vmatpush1.bf16.msra.mxu0 0
        %8261 = vmatprep.subr.bf16.mxu0 0
        %8262 = vmatpush1.bf16.msra.mxu0 0
        %8263 = vmatprep.subr.bf16.mxu0 0
        %8264 = vmatpush1.bf16.msra.mxu0 0
        %8265 = vmatprep.subr.bf16.mxu0 0
        %8266 = vmatpush1.bf16.msra.mxu0 0
        %8267 = vmatprep.subr.bf16.mxu0 0
        %8268 = vmatpush1.bf16.msra.mxu0 0
        %8269 = vmatprep.subr.bf16.mxu0 0
        %8270 = vmatpush1.bf16.msra.mxu0 0
        %8271 = vmatprep.subr.bf16.mxu0 0
        %8272 = vmatpush1.bf16.msra.mxu0 0
        %8273 = vmatprep.subr.bf16.mxu0 0
        %8274 = vmatpush1.bf16.msra.mxu0 0
        %8275 = vmatprep.mubr.bf16.mxu0 0
        %8276 = vmatmul.mubr.bf16.gmra.mrb[0].mxu0 %v8238
        %v8277 = vpop.f32.mrb[0].mxu0
        %v8278 = vadd.f32 %v8236, %v8277
        %v8279 = vpop.f32.mrb[0].mxu0
        %v8280 = vpop.f32.mrb[0].mxu0
        %v8281 = vpop.f32.mrb[0].mxu0
        %8282 = vdwg.mxu0
        %v8283 = vld [vmem:[%s7] sm:$0xff]
        %v8284 = vld [vmem:[%s7 + $0x8] sm:$0xff]
        %v8285 = vld [vmem:[%s7 + $0x10] sm:$0xff]
        %v8286 = vld [vmem:[%s7 + $0x18] sm:$0xff]
        %v8287 = vld [vmem:[%s7 + $0x20] sm:$0xff]
        %v8288 = vld [vmem:[%s7 + $0x28] sm:$0xff]
        %v8289 = vld [vmem:[%s7 + $0x30] sm:$0xff]
        %v8290 = vld [vmem:[%s7 + $0x38] sm:$0xff]
        %v8291 = vld [vmem:[%s8] sm:$0x1]
        %v8293 = vsel %vm690, %v8005, 0
        %8295 = vmatprep.subr.mxu0 0.0
        %8296 = vmatpush1.msra.mxu0 %v8283
        %8297 = vmatprep.subr.mxu0 0.0
        %8298 = vmatpush1.msra.mxu0 %v8284
        %8299 = vmatprep.subr.mxu0 0.0
        %8300 = vmatpush1.msra.mxu0 %v8285
        %8301 = vmatprep.subr.mxu0 0.0
        %8302 = vmatpush1.msra.mxu0 %v8286
        %8303 = vmatprep.subr.mxu0 0.0
        %8304 = vmatpush1.msra.mxu0 %v8287
        %8305 = vmatprep.subr.mxu0 0.0
        %8306 = vmatpush1.msra.mxu0 %v8288
        %8307 = vmatprep.subr.mxu0 0.0
        %8308 = vmatpush1.msra.mxu0 %v8289
        %8309 = vmatprep.subr.mxu0 0.0
        %8310 = vmatpush1.msra.mxu0 %v8290
        %8311 = vmatprep.subr.mxu0 0.0
        %8312 = vmatpush1.msra.mxu0 0.0
        %8313 = vmatprep.subr.mxu0 0.0
        %8314 = vmatpush1.msra.mxu0 0.0
        %8315 = vmatprep.subr.mxu0 0.0
        %8316 = vmatpush1.msra.mxu0 0.0
        %8317 = vmatprep.subr.mxu0 0.0
        %8318 = vmatpush1.msra.mxu0 0.0
        %8319 = vmatprep.subr.mxu0 0.0
        %8320 = vmatpush1.msra.mxu0 0.0
        %8321 = vmatprep.subr.mxu0 0.0
        %8322 = vmatpush1.msra.mxu0 0.0
        %8323 = vmatprep.subr.mxu0 0.0
        %8324 = vmatpush1.msra.mxu0 0.0
        %8325 = vmatprep.subr.mxu0 0.0
        %8326 = vmatpush1.msra.mxu0 0.0
        %8327 = vmatprep.subr.mxu0 0.0
        %8328 = vmatpush1.msra.mxu0 0.0
        %8329 = vmatprep.subr.mxu0 0.0
        %8330 = vmatpush1.msra.mxu0 0.0
        %8331 = vmatprep.subr.mxu0 0.0
        %8332 = vmatpush1.msra.mxu0 0.0
        %8333 = vmatprep.subr.mxu0 0.0
        %8334 = vmatpush1.msra.mxu0 0.0
        %8335 = vmatprep.subr.mxu0 0.0
        %8336 = vmatpush1.msra.mxu0 0.0
        %8337 = vmatprep.subr.mxu0 0.0
        %8338 = vmatpush1.msra.mxu0 0.0
        %8339 = vmatprep.subr.mxu0 0.0
        %8340 = vmatpush1.msra.mxu0 0.0
        %8341 = vmatprep.subr.mxu0 0.0
        %8342 = vmatpush1.msra.mxu0 0.0
        %8343 = vmatprep.subr.mxu0 0.0
        %8344 = vmatpush1.msra.mxu0 0.0
        %8345 = vmatprep.subr.mxu0 0.0
        %8346 = vmatpush1.msra.mxu0 0.0
        %8347 = vmatprep.subr.mxu0 0.0
        %8348 = vmatpush1.msra.mxu0 0.0
        %8349 = vmatprep.subr.mxu0 0.0
        %8350 = vmatpush1.msra.mxu0 0.0
        %8351 = vmatprep.subr.mxu0 0.0
        %8352 = vmatpush1.msra.mxu0 0.0
        %8353 = vmatprep.subr.mxu0 0.0
        %8354 = vmatpush1.msra.mxu0 0.0
        %8355 = vmatprep.subr.mxu0 0.0
        %8356 = vmatpush1.msra.mxu0 0.0
        %8357 = vmatprep.subr.mxu0 0.0
        %8358 = vmatpush1.msra.mxu0 0.0
        %8359 = vmatprep.mubr.f32.mxu0 0.0
        %8360 = vmatmul.mubr.f32.gmra.mrb[0].mxu0 %v8293
        %v8361 = vpop.f32.mrb[0].mxu0
        %v8362 = vadd.f32 %v8291, %v8361
        %v8363 = vpop.f32.mrb[0].mxu0
        %8364 = vdwg.mxu0
        %v8365 = vmax.f32 %v8362, 0.0
        %v8366 = vld [vmem:[%s9] sm:$0xf]
        %v8367 = vld [vmem:[%s10] sm:$0x1]
        %v8369 = vsel %vm846, %v8365, 0
        %v8372 = vsel %vm850, %v8366, 0
        %8374 = vmatprep.subr.mxu0 0.0
        %8375 = vmatpush1.msra.mxu0 %v8372
        %8376 = vmatprep.subr.mxu0 0.0
        %8377 = vmatpush1.msra.mxu0 0.0
        %8378 = vmatprep.subr.mxu0 0.0
        %8379 = vmatpush1.msra.mxu0 0.0
        %8380 = vmatprep.subr.mxu0 0.0
        %8381 = vmatpush1.msra.mxu0 0.0
        %8382 = vmatprep.subr.mxu0 0.0
        %8383 = vmatpush1.msra.mxu0 0.0
        %8384 = vmatprep.subr.mxu0 0.0
        %8385 = vmatpush1.msra.mxu0 0.0
        %8386 = vmatprep.subr.mxu0 0.0
        %8387 = vmatpush1.msra.mxu0 0.0
        %8388 = vmatprep.subr.mxu0 0.0
        %8389 = vmatpush1.msra.mxu0 0.0
        %8390 = vmatprep.subr.mxu0 0.0
        %8391 = vmatpush1.msra.mxu0 0.0
        %8392 = vmatprep.subr.mxu0 0.0
        %8393 = vmatpush1.msra.mxu0 0.0
        %8394 = vmatprep.subr.mxu0 0.0
        %8395 = vmatpush1.msra.mxu0 0.0
        %8396 = vmatprep.subr.mxu0 0.0
        %8397 = vmatpush1.msra.mxu0 0.0
        %8398 = vmatprep.subr.mxu0 0.0
        %8399 = vmatpush1.msra.mxu0 0.0
        %8400 = vmatprep.subr.mxu0 0.0
        %8401 = vmatpush1.msra.mxu0 0.0
        %8402 = vmatprep.subr.mxu0 0.0
        %8403 = vmatpush1.msra.mxu0 0.0
        %8404 = vmatprep.subr.mxu0 0.0
        %8405 = vmatpush1.msra.mxu0 0.0
        %8406 = vmatprep.subr.mxu0 0.0
        %8407 = vmatpush1.msra.mxu0 0.0
        %8408 = vmatprep.subr.mxu0 0.0
        %8409 = vmatpush1.msra.mxu0 0.0
        %8410 = vmatprep.subr.mxu0 0.0
        %8411 = vmatpush1.msra.mxu0 0.0
        %8412 = vmatprep.subr.mxu0 0.0
        %8413 = vmatpush1.msra.mxu0 0.0
        %8414 = vmatprep.subr.mxu0 0.0
        %8415 = vmatpush1.msra.mxu0 0.0
        %8416 = vmatprep.subr.mxu0 0.0
        %8417 = vmatpush1.msra.mxu0 0.0
        %8418 = vmatprep.subr.mxu0 0.0
        %8419 = vmatpush1.msra.mxu0 0.0
        %8420 = vmatprep.subr.mxu0 0.0
        %8421 = vmatpush1.msra.mxu0 0.0
        %8422 = vmatprep.subr.mxu0 0.0
        %8423 = vmatpush1.msra.mxu0 0.0
        %8424 = vmatprep.subr.mxu0 0.0
        %8425 = vmatpush1.msra.mxu0 0.0
        %8426 = vmatprep.subr.mxu0 0.0
        %8427 = vmatpush1.msra.mxu0 0.0
        %8428 = vmatprep.subr.mxu0 0.0
        %8429 = vmatpush1.msra.mxu0 0.0
        %8430 = vmatprep.subr.mxu0 0.0
        %8431 = vmatpush1.msra.mxu0 0.0
        %8432 = vmatprep.subr.mxu0 0.0
        %8433 = vmatpush1.msra.mxu0 0.0
        %8434 = vmatprep.subr.mxu0 0.0
        %8435 = vmatpush1.msra.mxu0 0.0
        %8436 = vmatprep.subr.mxu0 0.0
        %8437 = vmatpush1.msra.mxu0 0.0
        %8438 = vmatprep.mubr.f32.mxu0 0.0
        %8439 = vmatmul.mubr.f32.gmra.mrb[0].mxu0 %v8369
        %v8440 = vpop.f32.mrb[0].mxu0
        %v8441 = vadd.f32 %v8367, %v8440
        %v8442 = vpop.f32.mrb[0].mxu0
        %8443 = vdwg.mxu0
        %v8444 = vmax.f32 %v8441, 0.0
        %v8445 = vld [vmem:[%s11] sm:$0xf]
        %v8446 = vld [vmem:[%s12] sm:$0x1]
        %v8448 = vsel %vm846, %v8444, 0
        %v8451 = vsel %vm850, %v8445, 0
        %8453 = vmatprep.subr.mxu0 0.0
        %8454 = vmatpush1.msra.mxu0 %v8451
        %8455 = vmatprep.subr.mxu0 0.0
        %8456 = vmatpush1.msra.mxu0 0.0
        %8457 = vmatprep.subr.mxu0 0.0
        %8458 = vmatpush1.msra.mxu0 0.0
        %8459 = vmatprep.subr.mxu0 0.0
        %8460 = vmatpush1.msra.mxu0 0.0
        %8461 = vmatprep.subr.mxu0 0.0
        %8462 = vmatpush1.msra.mxu0 0.0
        %8463 = vmatprep.subr.mxu0 0.0
        %8464 = vmatpush1.msra.mxu0 0.0
        %8465 = vmatprep.subr.mxu0 0.0
        %8466 = vmatpush1.msra.mxu0 0.0
        %8467 = vmatprep.subr.mxu0 0.0
        %8468 = vmatpush1.msra.mxu0 0.0
        %8469 = vmatprep.subr.mxu0 0.0
        %8470 = vmatpush1.msra.mxu0 0.0
        %8471 = vmatprep.subr.mxu0 0.0
        %8472 = vmatpush1.msra.mxu0 0.0
        %8473 = vmatprep.subr.mxu0 0.0
        %8474 = vmatpush1.msra.mxu0 0.0
        %8475 = vmatprep.subr.mxu0 0.0
        %8476 = vmatpush1.msra.mxu0 0.0
        %8477 = vmatprep.subr.mxu0 0.0
        %8478 = vmatpush1.msra.mxu0 0.0
        %8479 = vmatprep.subr.mxu0 0.0
        %8480 = vmatpush1.msra.mxu0 0.0
        %8481 = vmatprep.subr.mxu0 0.0
        %8482 = vmatpush1.msra.mxu0 0.0
        %8483 = vmatprep.subr.mxu0 0.0
        %8484 = vmatpush1.msra.mxu0 0.0
        %8485 = vmatprep.subr.mxu0 0.0
        %8486 = vmatpush1.msra.mxu0 0.0
        %8487 = vmatprep.subr.mxu0 0.0
        %8488 = vmatpush1.msra.mxu0 0.0
        %8489 = vmatprep.subr.mxu0 0.0
        %8490 = vmatpush1.msra.mxu0 0.0
        %8491 = vmatprep.subr.mxu0 0.0
        %8492 = vmatpush1.msra.mxu0 0.0
        %8493 = vmatprep.subr.mxu0 0.0
        %8494 = vmatpush1.msra.mxu0 0.0
        %8495 = vmatprep.subr.mxu0 0.0
        %8496 = vmatpush1.msra.mxu0 0.0
        %8497 = vmatprep.subr.mxu0 0.0
        %8498 = vmatpush1.msra.mxu0 0.0
        %8499 = vmatprep.subr.mxu0 0.0
        %8500 = vmatpush1.msra.mxu0 0.0
        %8501 = vmatprep.subr.mxu0 0.0
        %8502 = vmatpush1.msra.mxu0 0.0
        %8503 = vmatprep.subr.mxu0 0.0
        %8504 = vmatpush1.msra.mxu0 0.0
        %8505 = vmatprep.subr.mxu0 0.0
        %8506 = vmatpush1.msra.mxu0 0.0
        %8507 = vmatprep.subr.mxu0 0.0
        %8508 = vmatpush1.msra.mxu0 0.0
        %8509 = vmatprep.subr.mxu0 0.0
        %8510 = vmatpush1.msra.mxu0 0.0
        %8511 = vmatprep.subr.mxu0 0.0
        %8512 = vmatpush1.msra.mxu0 0.0
        %8513 = vmatprep.subr.mxu0 0.0
        %8514 = vmatpush1.msra.mxu0 0.0
        %8515 = vmatprep.subr.mxu0 0.0
        %8516 = vmatpush1.msra.mxu0 0.0
        %8517 = vmatprep.mubr.f32.mxu0 0.0
        %8518 = vmatmul.mubr.f32.gmra.mrb[0].mxu0 %v8448
        %v8519 = vpop.f32.mrb[0].mxu0
        %v8520 = vadd.f32 %v8446, %v8519
        %v8521 = vpop.f32.mrb[0].mxu0
        %8522 = vdwg.mxu0
        %v8523 = vmax.f32 %v8520, 0.0
        %v8524 = vld [vmem:[%s13] sm:$0xf]
        %v8525 = vld [vmem:[%s14] sm:$0x1]
        %v8527 = vsel %vm846, %v8523, 0
        %v8530 = vsel %vm850, %v8524, 0
        %8532 = vmatprep.subr.mxu0 0.0
        %8533 = vmatpush1.msra.mxu0 %v8530
        %8534 = vmatprep.subr.mxu0 0.0
        %8535 = vmatpush1.msra.mxu0 0.0
        %8536 = vmatprep.subr.mxu0 0.0
        %8537 = vmatpush1.msra.mxu0 0.0
        %8538 = vmatprep.subr.mxu0 0.0
        %8539 = vmatpush1.msra.mxu0 0.0
        %8540 = vmatprep.subr.mxu0 0.0
        %8541 = vmatpush1.msra.mxu0 0.0
        %8542 = vmatprep.subr.mxu0 0.0
        %8543 = vmatpush1.msra.mxu0 0.0
        %8544 = vmatprep.subr.mxu0 0.0
        %8545 = vmatpush1.msra.mxu0 0.0
        %8546 = vmatprep.subr.mxu0 0.0
        %8547 = vmatpush1.msra.mxu0 0.0
        %8548 = vmatprep.subr.mxu0 0.0
        %8549 = vmatpush1.msra.mxu0 0.0
        %8550 = vmatprep.subr.mxu0 0.0
        %8551 = vmatpush1.msra.mxu0 0.0
        %8552 = vmatprep.subr.mxu0 0.0
        %8553 = vmatpush1.msra.mxu0 0.0
        %8554 = vmatprep.subr.mxu0 0.0
        %8555 = vmatpush1.msra.mxu0 0.0
        %8556 = vmatprep.subr.mxu0 0.0
        %8557 = vmatpush1.msra.mxu0 0.0
        %8558 = vmatprep.subr.mxu0 0.0
        %8559 = vmatpush1.msra.mxu0 0.0
        %8560 = vmatprep.subr.mxu0 0.0
        %8561 = vmatpush1.msra.mxu0 0.0
        %8562 = vmatprep.subr.mxu0 0.0
        %8563 = vmatpush1.msra.mxu0 0.0
        %8564 = vmatprep.subr.mxu0 0.0
        %8565 = vmatpush1.msra.mxu0 0.0
        %8566 = vmatprep.subr.mxu0 0.0
        %8567 = vmatpush1.msra.mxu0 0.0
        %8568 = vmatprep.subr.mxu0 0.0
        %8569 = vmatpush1.msra.mxu0 0.0
        %8570 = vmatprep.subr.mxu0 0.0
        %8571 = vmatpush1.msra.mxu0 0.0
        %8572 = vmatprep.subr.mxu0 0.0
        %8573 = vmatpush1.msra.mxu0 0.0
        %8574 = vmatprep.subr.mxu0 0.0
        %8575 = vmatpush1.msra.mxu0 0.0
        %8576 = vmatprep.subr.mxu0 0.0
        %8577 = vmatpush1.msra.mxu0 0.0
        %8578 = vmatprep.subr.mxu0 0.0
        %8579 = vmatpush1.msra.mxu0 0.0
        %8580 = vmatprep.subr.mxu0 0.0
        %8581 = vmatpush1.msra.mxu0 0.0
        %8582 = vmatprep.subr.mxu0 0.0
        %8583 = vmatpush1.msra.mxu0 0.0
        %8584 = vmatprep.subr.mxu0 0.0
        %8585 = vmatpush1.msra.mxu0 0.0
        %8586 = vmatprep.subr.mxu0 0.0
        %8587 = vmatpush1.msra.mxu0 0.0
        %8588 = vmatprep.subr.mxu0 0.0
        %8589 = vmatpush1.msra.mxu0 0.0
        %8590 = vmatprep.subr.mxu0 0.0
        %8591 = vmatpush1.msra.mxu0 0.0
        %8592 = vmatprep.subr.mxu0 0.0
        %8593 = vmatpush1.msra.mxu0 0.0
        %8594 = vmatprep.subr.mxu0 0.0
        %8595 = vmatpush1.msra.mxu0 0.0
        %8596 = vmatprep.mubr.f32.mxu0 0.0
        %8597 = vmatmul.mubr.f32.gmra.mrb[0].mxu0 %v8527
        %v8598 = vpop.f32.mrb[0].mxu0
        %v8599 = vadd.f32 %v8525, %v8598
        %v8600 = vpop.f32.mrb[0].mxu0
        %8601 = vdwg.mxu0
        %8603 = vset.pattern.permute.xlu0 0
        %8604 = vperm.xlu0 %8603, %v8278
        %v8605 = vpop.permute.xlu0 %8604
        %v8607 = vadd.f32 %v8605, %v8599
        %s8608 = sadd.s32 0, 32
        %s8609 = scalar_lea.vmem %s656, %s8608
        %v8610 = vld [vmem:[%s8609] sm:$0xff]
        %v8611 = vld [vmem:[%s8609 + $0x8] sm:$0xff]
        %v8612 = vld [vmem:[%s8609 + $0x10] sm:$0xff]
        %v8613 = vld [vmem:[%s8609 + $0x18] sm:$0xff]
        %v8614 = vld [vmem:[%s8609 + $0x20] sm:$0xff]
        %v8615 = vld [vmem:[%s8609 + $0x28] sm:$0xff]
        %v8616 = vld [vmem:[%s8609 + $0x30] sm:$0xff]
        %v8617 = vld [vmem:[%s8609 + $0x38] sm:$0xff]
        %v8618 = vld [vmem:[#allocation5] sm:$0xff]
        %v8619 = vld [vmem:[#allocation5 + $0x8] sm:$0xff]
        %v8620 = vld [vmem:[#allocation5 + $0x10] sm:$0xff]
        %v8621 = vld [vmem:[#allocation5 + $0x18] sm:$0xff]
        %v8622 = vld [vmem:[#allocation5 + $0x20] sm:$0xff]
        %v8623 = vld [vmem:[#allocation5 + $0x28] sm:$0xff]
        %v8624 = vld [vmem:[#allocation5 + $0x30] sm:$0xff]
        %v8625 = vld [vmem:[#allocation5 + $0x38] sm:$0xff]
        %8627 = vset.pattern.permute.xlu0 0
        %8628 = vperm.xlu0 %8627, %v8618
        %v8629 = vpop.permute.xlu0 %8628
        %8632 = vset.pattern.permute.xlu0 0
        %8633 = vperm.xlu0 %8632, %v8619
        %v8634 = vpop.permute.xlu0 %8633
        %8637 = vset.pattern.permute.xlu0 0
        %8638 = vperm.xlu0 %8637, %v8620
        %v8639 = vpop.permute.xlu0 %8638
        %8642 = vset.pattern.permute.xlu0 0
        %8643 = vperm.xlu0 %8642, %v8621
        %v8644 = vpop.permute.xlu0 %8643
        %8647 = vset.pattern.permute.xlu0 0
        %8648 = vperm.xlu0 %8647, %v8622
        %v8649 = vpop.permute.xlu0 %8648
        %8652 = vset.pattern.permute.xlu0 0
        %8653 = vperm.xlu0 %8652, %v8623
        %v8654 = vpop.permute.xlu0 %8653
        %8657 = vset.pattern.permute.xlu0 0
        %8658 = vperm.xlu0 %8657, %v8624
        %v8659 = vpop.permute.xlu0 %8658
        %8662 = vset.pattern.permute.xlu0 0
        %8663 = vperm.xlu0 %8662, %v8625
        %v8664 = vpop.permute.xlu0 %8663
        %v8666 = vlaneseq
        %v8667 = vshrl.u32 %v8666, 7
        %v8668 = vsub.s32 0, %v8667
        %v8669 = vrot.slane %v1079, %v8668
        %v8670 = vadd.f32 %v8629, %v8669
        %v8671 = vadd.f32 %v8634, %v8669
        %v8672 = vadd.f32 %v8639, %v8669
        %v8673 = vadd.f32 %v8644, %v8669
        %v8674 = vadd.f32 %v8649, %v8669
        %v8675 = vadd.f32 %v8654, %v8669
        %v8676 = vadd.f32 %v8659, %v8669
        %v8677 = vadd.f32 %v8664, %v8669
        %v8678 = vsub.f32 0.0, %v8670
        %v8679 = vsub.f32 0.0, %v8671
        %v8680 = vsub.f32 0.0, %v8672
        %v8681 = vsub.f32 0.0, %v8673
        %v8682 = vsub.f32 0.0, %v8674
        %v8683 = vsub.f32 0.0, %v8675
        %v8684 = vsub.f32 0.0, %v8676
        %v8685 = vsub.f32 0.0, %v8677
        %v8686 = vmul.f32 %v8678, 1.442695
        %v8687 = vpow.pop %v8686
        %v8688 = vmul.f32 %v8679, 1.442695
        %v8689 = vpow.pop %v8688
        %v8690 = vmul.f32 %v8680, 1.442695
        %v8691 = vpow.pop %v8690
        %v8692 = vmul.f32 %v8681, 1.442695
        %v8693 = vpow.pop %v8692
        %v8694 = vmul.f32 %v8682, 1.442695
        %v8695 = vpow.pop %v8694
        %v8696 = vmul.f32 %v8683, 1.442695
        %v8697 = vpow.pop %v8696
        %v8698 = vmul.f32 %v8684, 1.442695
        %v8699 = vpow.pop %v8698
        %v8700 = vmul.f32 %v8685, 1.442695
        %v8701 = vpow.pop %v8700
        %v8702 = vadd.f32 %v8687, 1.0
        %v8703 = vadd.f32 %v8689, 1.0
        %v8704 = vadd.f32 %v8691, 1.0
        %v8705 = vadd.f32 %v8693, 1.0
        %v8706 = vadd.f32 %v8695, 1.0
        %v8707 = vadd.f32 %v8697, 1.0
        %v8708 = vadd.f32 %v8699, 1.0
        %v8709 = vadd.f32 %v8701, 1.0
        %v8710 = vrcp.pop %v8702
        %v8711 = vmul.f32 1.0, %v8710
        %v8712 = vrcp.pop %v8703
        %v8713 = vmul.f32 1.0, %v8712
        %v8714 = vrcp.pop %v8704
        %v8715 = vmul.f32 1.0, %v8714
        %v8716 = vrcp.pop %v8705
        %v8717 = vmul.f32 1.0, %v8716
        %v8718 = vrcp.pop %v8706
        %v8719 = vmul.f32 1.0, %v8718
        %v8720 = vrcp.pop %v8707
        %v8721 = vmul.f32 1.0, %v8720
        %v8722 = vrcp.pop %v8708
        %v8723 = vmul.f32 1.0, %v8722
        %v8724 = vrcp.pop %v8709
        %v8725 = vmul.f32 1.0, %v8724
        %v8726 = vadd.f32 %v8711, 1.0
        %v8727 = vadd.f32 %v8713, 1.0
        %v8728 = vadd.f32 %v8715, 1.0
        %v8729 = vadd.f32 %v8717, 1.0
        %v8730 = vadd.f32 %v8719, 1.0
        %v8731 = vadd.f32 %v8721, 1.0
        %v8732 = vadd.f32 %v8723, 1.0
        %v8733 = vadd.f32 %v8725, 1.0
        %v8734 = vmul.f32 %v8726, %v8610
        %v8735 = vmul.f32 %v8727, %v8611
        %v8736 = vmul.f32 %v8728, %v8612
        %v8737 = vmul.f32 %v8729, %v8613
        %v8738 = vmul.f32 %v8730, %v8614
        %v8739 = vmul.f32 %v8731, %v8615
        %v8740 = vmul.f32 %v8732, %v8616
        %v8741 = vmul.f32 %v8733, %v8617
        %v8742 = vlaneseq
        %v8743 = vshrl.u32 %v8742, 7
        %v8744 = vsub.s32 0, %v8743
        %v8745 = vrot.slane %v8607, %v8744
        %v8746 = vadd.f32 %v8734, %v8745
        %v8747 = vadd.f32 %v8735, %v8745
        %v8748 = vadd.f32 %v8736, %v8745
        %v8749 = vadd.f32 %v8737, %v8745
        %v8750 = vadd.f32 %v8738, %v8745
        %v8751 = vadd.f32 %v8739, %v8745
        %v8752 = vadd.f32 %v8740, %v8745
        %v8753 = vadd.f32 %v8741, %v8745
        %v8754 = vsub.f32 0.0, %v8746
        %v8755 = vsub.f32 0.0, %v8747
        %v8756 = vsub.f32 0.0, %v8748
        %v8757 = vsub.f32 0.0, %v8749
        %v8758 = vsub.f32 0.0, %v8750
        %v8759 = vsub.f32 0.0, %v8751
        %v8760 = vsub.f32 0.0, %v8752
        %v8761 = vsub.f32 0.0, %v8753
        %v8762 = vmul.f32 %v8754, 1.442695
        %v8763 = vpow.pop %v8762
        %v8764 = vmul.f32 %v8755, 1.442695
        %v8765 = vpow.pop %v8764
        %v8766 = vmul.f32 %v8756, 1.442695
        %v8767 = vpow.pop %v8766
        %v8768 = vmul.f32 %v8757, 1.442695
        %v8769 = vpow.pop %v8768
        %v8770 = vmul.f32 %v8758, 1.442695
        %v8771 = vpow.pop %v8770
        %v8772 = vmul.f32 %v8759, 1.442695
        %v8773 = vpow.pop %v8772
        %v8774 = vmul.f32 %v8760, 1.442695
        %v8775 = vpow.pop %v8774
        %v8776 = vmul.f32 %v8761, 1.442695
        %v8777 = vpow.pop %v8776
        %v8778 = vadd.f32 %v8763, 1.0
        %v8779 = vadd.f32 %v8765, 1.0
        %v8780 = vadd.f32 %v8767, 1.0
        %v8781 = vadd.f32 %v8769, 1.0
        %v8782 = vadd.f32 %v8771, 1.0
        %v8783 = vadd.f32 %v8773, 1.0
        %v8784 = vadd.f32 %v8775, 1.0
        %v8785 = vadd.f32 %v8777, 1.0
        %v8786 = vrcp.pop %v8778
        %v8787 = vmul.f32 1.0, %v8786
        %v8788 = vrcp.pop %v8779
        %v8789 = vmul.f32 1.0, %v8788
        %v8790 = vrcp.pop %v8780
        %v8791 = vmul.f32 1.0, %v8790
        %v8792 = vrcp.pop %v8781
        %v8793 = vmul.f32 1.0, %v8792
        %v8794 = vrcp.pop %v8782
        %v8795 = vmul.f32 1.0, %v8794
        %v8796 = vrcp.pop %v8783
        %v8797 = vmul.f32 1.0, %v8796
        %v8798 = vrcp.pop %v8784
        %v8799 = vmul.f32 1.0, %v8798
        %v8800 = vrcp.pop %v8785
        %v8801 = vmul.f32 1.0, %v8800
        %v8802 = vadd.f32 %v8787, 1.0
        %v8803 = vadd.f32 %v8789, 1.0
        %v8804 = vadd.f32 %v8791, 1.0
        %v8805 = vadd.f32 %v8793, 1.0
        %v8806 = vadd.f32 %v8795, 1.0
        %v8807 = vadd.f32 %v8797, 1.0
        %v8808 = vadd.f32 %v8799, 1.0
        %v8809 = vadd.f32 %v8801, 1.0
        %v8810 = vmul.f32 %v8802, %v8610
        %v8811 = vmul.f32 %v8803, %v8611
        %v8812 = vmul.f32 %v8804, %v8612
        %v8813 = vmul.f32 %v8805, %v8613
        %v8814 = vmul.f32 %v8806, %v8614
        %v8815 = vmul.f32 %v8807, %v8615
        %v8816 = vmul.f32 %v8808, %v8616
        %v8817 = vmul.f32 %v8809, %v8617
        %8818 = vst.msk [vmem:[%s651] sm:$0xff] %vm690, %v8810
        %8819 = vst.msk [vmem:[%s651 + $0x8] sm:$0xff] %vm690, %v8811
        %8820 = vst.msk [vmem:[%s651 + $0x10] sm:$0xff] %vm690, %v8812
        %8821 = vst.msk [vmem:[%s651 + $0x18] sm:$0xff] %vm690, %v8813
        %8822 = vst.msk [vmem:[%s651 + $0x20] sm:$0xff] %vm690, %v8814
        %8823 = vst.msk [vmem:[%s651 + $0x28] sm:$0xff] %vm690, %v8815
        %8824 = vst.msk [vmem:[%s651 + $0x30] sm:$0xff] %vm690, %v8816
        %8825 = vst.msk [vmem:[%s651 + $0x38] sm:$0xff] %vm690, %v8817
        %s8826 = sadd.s32 64, 32
        %s8827 = scalar_lea.vmem %s656, %s8826
        %v8828 = vld [vmem:[%s8827] sm:$0xff]
        %v8829 = vld [vmem:[%s8827 + $0x8] sm:$0xff]
        %v8830 = vld [vmem:[%s8827 + $0x10] sm:$0xff]
        %v8831 = vld [vmem:[%s8827 + $0x18] sm:$0xff]
        %v8832 = vld [vmem:[%s8827 + $0x20] sm:$0xff]
        %v8833 = vld [vmem:[%s8827 + $0x28] sm:$0xff]
        %v8834 = vld [vmem:[%s8827 + $0x30] sm:$0xff]
        %v8835 = vld [vmem:[%s8827 + $0x38] sm:$0xff]
        %s8836 = scalar_lea.vmem [#allocation5], 64
        %v8837 = vld [vmem:[%s8836] sm:$0xff]
        %v8838 = vld [vmem:[%s8836 + $0x8] sm:$0xff]
        %v8839 = vld [vmem:[%s8836 + $0x10] sm:$0xff]
        %v8840 = vld [vmem:[%s8836 + $0x18] sm:$0xff]
        %v8841 = vld [vmem:[%s8836 + $0x20] sm:$0xff]
        %v8842 = vld [vmem:[%s8836 + $0x28] sm:$0xff]
        %v8843 = vld [vmem:[%s8836 + $0x30] sm:$0xff]
        %v8844 = vld [vmem:[%s8836 + $0x38] sm:$0xff]
        %8846 = vset.pattern.permute.xlu0 0
        %8847 = vperm.xlu0 %8846, %v8837
        %v8848 = vpop.permute.xlu0 %8847
        %8851 = vset.pattern.permute.xlu0 0
        %8852 = vperm.xlu0 %8851, %v8838
        %v8853 = vpop.permute.xlu0 %8852
        %8856 = vset.pattern.permute.xlu0 0
        %8857 = vperm.xlu0 %8856, %v8839
        %v8858 = vpop.permute.xlu0 %8857
        %8861 = vset.pattern.permute.xlu0 0
        %8862 = vperm.xlu0 %8861, %v8840
        %v8863 = vpop.permute.xlu0 %8862
        %8866 = vset.pattern.permute.xlu0 0
        %8867 = vperm.xlu0 %8866, %v8841
        %v8868 = vpop.permute.xlu0 %8867
        %8871 = vset.pattern.permute.xlu0 0
        %8872 = vperm.xlu0 %8871, %v8842
        %v8873 = vpop.permute.xlu0 %8872
        %8876 = vset.pattern.permute.xlu0 0
        %8877 = vperm.xlu0 %8876, %v8843
        %v8878 = vpop.permute.xlu0 %8877
        %8881 = vset.pattern.permute.xlu0 0
        %8882 = vperm.xlu0 %8881, %v8844
        %v8883 = vpop.permute.xlu0 %8882
        %v8885 = vadd.f32 %v8848, %v8669
        %v8886 = vadd.f32 %v8853, %v8669
        %v8887 = vadd.f32 %v8858, %v8669
        %v8888 = vadd.f32 %v8863, %v8669
        %v8889 = vadd.f32 %v8868, %v8669
        %v8890 = vadd.f32 %v8873, %v8669
        %v8891 = vadd.f32 %v8878, %v8669
        %v8892 = vadd.f32 %v8883, %v8669
        %v8893 = vsub.f32 0.0, %v8885
        %v8894 = vsub.f32 0.0, %v8886
        %v8895 = vsub.f32 0.0, %v8887
        %v8896 = vsub.f32 0.0, %v8888
        %v8897 = vsub.f32 0.0, %v8889
        %v8898 = vsub.f32 0.0, %v8890
        %v8899 = vsub.f32 0.0, %v8891
        %v8900 = vsub.f32 0.0, %v8892
        %v8901 = vmul.f32 %v8893, 1.442695
        %v8902 = vpow.pop %v8901
        %v8903 = vmul.f32 %v8894, 1.442695
        %v8904 = vpow.pop %v8903
        %v8905 = vmul.f32 %v8895, 1.442695
        %v8906 = vpow.pop %v8905
        %v8907 = vmul.f32 %v8896, 1.442695
        %v8908 = vpow.pop %v8907
        %v8909 = vmul.f32 %v8897, 1.442695
        %v8910 = vpow.pop %v8909
        %v8911 = vmul.f32 %v8898, 1.442695
        %v8912 = vpow.pop %v8911
        %v8913 = vmul.f32 %v8899, 1.442695
        %v8914 = vpow.pop %v8913
        %v8915 = vmul.f32 %v8900, 1.442695
        %v8916 = vpow.pop %v8915
        %v8917 = vadd.f32 %v8902, 1.0
        %v8918 = vadd.f32 %v8904, 1.0
        %v8919 = vadd.f32 %v8906, 1.0
        %v8920 = vadd.f32 %v8908, 1.0
        %v8921 = vadd.f32 %v8910, 1.0
        %v8922 = vadd.f32 %v8912, 1.0
        %v8923 = vadd.f32 %v8914, 1.0
        %v8924 = vadd.f32 %v8916, 1.0
        %v8925 = vrcp.pop %v8917
        %v8926 = vmul.f32 1.0, %v8925
        %v8927 = vrcp.pop %v8918
        %v8928 = vmul.f32 1.0, %v8927
        %v8929 = vrcp.pop %v8919
        %v8930 = vmul.f32 1.0, %v8929
        %v8931 = vrcp.pop %v8920
        %v8932 = vmul.f32 1.0, %v8931
        %v8933 = vrcp.pop %v8921
        %v8934 = vmul.f32 1.0, %v8933
        %v8935 = vrcp.pop %v8922
        %v8936 = vmul.f32 1.0, %v8935
        %v8937 = vrcp.pop %v8923
        %v8938 = vmul.f32 1.0, %v8937
        %v8939 = vrcp.pop %v8924
        %v8940 = vmul.f32 1.0, %v8939
        %v8941 = vadd.f32 %v8926, 1.0
        %v8942 = vadd.f32 %v8928, 1.0
        %v8943 = vadd.f32 %v8930, 1.0
        %v8944 = vadd.f32 %v8932, 1.0
        %v8945 = vadd.f32 %v8934, 1.0
        %v8946 = vadd.f32 %v8936, 1.0
        %v8947 = vadd.f32 %v8938, 1.0
        %v8948 = vadd.f32 %v8940, 1.0
        %v8949 = vmul.f32 %v8941, %v8828
        %v8950 = vmul.f32 %v8942, %v8829
        %v8951 = vmul.f32 %v8943, %v8830
        %v8952 = vmul.f32 %v8944, %v8831
        %v8953 = vmul.f32 %v8945, %v8832
        %v8954 = vmul.f32 %v8946, %v8833
        %v8955 = vmul.f32 %v8947, %v8834
        %v8956 = vmul.f32 %v8948, %v8835
        %v8957 = vadd.f32 %v8949, %v8745
        %v8958 = vadd.f32 %v8950, %v8745
        %v8959 = vadd.f32 %v8951, %v8745
        %v8960 = vadd.f32 %v8952, %v8745
        %v8961 = vadd.f32 %v8953, %v8745
        %v8962 = vadd.f32 %v8954, %v8745
        %v8963 = vadd.f32 %v8955, %v8745
        %v8964 = vadd.f32 %v8956, %v8745
        %v8965 = vsub.f32 0.0, %v8957
        %v8966 = vsub.f32 0.0, %v8958
        %v8967 = vsub.f32 0.0, %v8959
        %v8968 = vsub.f32 0.0, %v8960
        %v8969 = vsub.f32 0.0, %v8961
        %v8970 = vsub.f32 0.0, %v8962
        %v8971 = vsub.f32 0.0, %v8963
        %v8972 = vsub.f32 0.0, %v8964
        %v8973 = vmul.f32 %v8965, 1.442695
        %v8974 = vpow.pop %v8973
        %v8975 = vmul.f32 %v8966, 1.442695
        %v8976 = vpow.pop %v8975
        %v8977 = vmul.f32 %v8967, 1.442695
        %v8978 = vpow.pop %v8977
        %v8979 = vmul.f32 %v8968, 1.442695
        %v8980 = vpow.pop %v8979
        %v8981 = vmul.f32 %v8969, 1.442695
        %v8982 = vpow.pop %v8981
        %v8983 = vmul.f32 %v8970, 1.442695
        %v8984 = vpow.pop %v8983
        %v8985 = vmul.f32 %v8971, 1.442695
        %v8986 = vpow.pop %v8985
        %v8987 = vmul.f32 %v8972, 1.442695
        %v8988 = vpow.pop %v8987
        %v8989 = vadd.f32 %v8974, 1.0
        %v8990 = vadd.f32 %v8976, 1.0
        %v8991 = vadd.f32 %v8978, 1.0
        %v8992 = vadd.f32 %v8980, 1.0
        %v8993 = vadd.f32 %v8982, 1.0
        %v8994 = vadd.f32 %v8984, 1.0
        %v8995 = vadd.f32 %v8986, 1.0
        %v8996 = vadd.f32 %v8988, 1.0
        %v8997 = vrcp.pop %v8989
        %v8998 = vmul.f32 1.0, %v8997
        %v8999 = vrcp.pop %v8990
        %v9000 = vmul.f32 1.0, %v8999
        %v9001 = vrcp.pop %v8991
        %v9002 = vmul.f32 1.0, %v9001
        %v9003 = vrcp.pop %v8992
        %v9004 = vmul.f32 1.0, %v9003
        %v9005 = vrcp.pop %v8993
        %v9006 = vmul.f32 1.0, %v9005
        %v9007 = vrcp.pop %v8994
        %v9008 = vmul.f32 1.0, %v9007
        %v9009 = vrcp.pop %v8995
        %v9010 = vmul.f32 1.0, %v9009
        %v9011 = vrcp.pop %v8996
        %v9012 = vmul.f32 1.0, %v9011
        %v9013 = vadd.f32 %v8998, 1.0
        %v9014 = vadd.f32 %v9000, 1.0
        %v9015 = vadd.f32 %v9002, 1.0
        %v9016 = vadd.f32 %v9004, 1.0
        %v9017 = vadd.f32 %v9006, 1.0
        %v9018 = vadd.f32 %v9008, 1.0
        %v9019 = vadd.f32 %v9010, 1.0
        %v9020 = vadd.f32 %v9012, 1.0
        %v9021 = vmul.f32 %v9013, %v8828
        %v9022 = vmul.f32 %v9014, %v8829
        %v9023 = vmul.f32 %v9015, %v8830
        %v9024 = vmul.f32 %v9016, %v8831
        %v9025 = vmul.f32 %v9017, %v8832
        %v9026 = vmul.f32 %v9018, %v8833
        %v9027 = vmul.f32 %v9019, %v8834
        %v9028 = vmul.f32 %v9020, %v8835
        %s9029 = scalar_lea.vmem %s651, 64 [#allocation7]
        %9030 = vst.msk [vmem:[%s9029] sm:$0xff] %vm690, %v9021
        %9031 = vst.msk [vmem:[%s9029 + $0x8] sm:$0xff] %vm690, %v9022
        %9032 = vst.msk [vmem:[%s9029 + $0x10] sm:$0xff] %vm690, %v9023
        %9033 = vst.msk [vmem:[%s9029 + $0x18] sm:$0xff] %vm690, %v9024
        %9034 = vst.msk [vmem:[%s9029 + $0x20] sm:$0xff] %vm690, %v9025
        %9035 = vst.msk [vmem:[%s9029 + $0x28] sm:$0xff] %vm690, %v9026
        %9036 = vst.msk [vmem:[%s9029 + $0x30] sm:$0xff] %vm690, %v9027
        %9037 = vst.msk [vmem:[%s9029 + $0x38] sm:$0xff] %vm690, %v9028
        %s9038 = sadd.s32 128, 32
        %s9039 = scalar_lea.vmem %s656, %s9038
        %v9040 = vld [vmem:[%s9039] sm:$0xff]
        %v9041 = vld [vmem:[%s9039 + $0x8] sm:$0xff]
        %v9042 = vld [vmem:[%s9039 + $0x10] sm:$0xff]
        %v9043 = vld [vmem:[%s9039 + $0x18] sm:$0xff]
        %v9044 = vld [vmem:[%s9039 + $0x20] sm:$0xff]
        %v9045 = vld [vmem:[%s9039 + $0x28] sm:$0xff]
        %v9046 = vld [vmem:[%s9039 + $0x30] sm:$0xff]
        %v9047 = vld [vmem:[%s9039 + $0x38] sm:$0xff]
        %s9048 = scalar_lea.vmem [#allocation5], 128
        %v9049 = vld [vmem:[%s9048] sm:$0xff]
        %v9050 = vld [vmem:[%s9048 + $0x8] sm:$0xff]
        %v9051 = vld [vmem:[%s9048 + $0x10] sm:$0xff]
        %v9052 = vld [vmem:[%s9048 + $0x18] sm:$0xff]
        %v9053 = vld [vmem:[%s9048 + $0x20] sm:$0xff]
        %v9054 = vld [vmem:[%s9048 + $0x28] sm:$0xff]
        %v9055 = vld [vmem:[%s9048 + $0x30] sm:$0xff]
        %v9056 = vld [vmem:[%s9048 + $0x38] sm:$0xff]
        %9058 = vset.pattern.permute.xlu0 0
        %9059 = vperm.xlu0 %9058, %v9049
        %v9060 = vpop.permute.xlu0 %9059
        %9063 = vset.pattern.permute.xlu0 0
        %9064 = vperm.xlu0 %9063, %v9050
        %v9065 = vpop.permute.xlu0 %9064
        %9068 = vset.pattern.permute.xlu0 0
        %9069 = vperm.xlu0 %9068, %v9051
        %v9070 = vpop.permute.xlu0 %9069
        %9073 = vset.pattern.permute.xlu0 0
        %9074 = vperm.xlu0 %9073, %v9052
        %v9075 = vpop.permute.xlu0 %9074
        %9078 = vset.pattern.permute.xlu0 0
        %9079 = vperm.xlu0 %9078, %v9053
        %v9080 = vpop.permute.xlu0 %9079
        %9083 = vset.pattern.permute.xlu0 0
        %9084 = vperm.xlu0 %9083, %v9054
        %v9085 = vpop.permute.xlu0 %9084
        %9088 = vset.pattern.permute.xlu0 0
        %9089 = vperm.xlu0 %9088, %v9055
        %v9090 = vpop.permute.xlu0 %9089
        %9093 = vset.pattern.permute.xlu0 0
        %9094 = vperm.xlu0 %9093, %v9056
        %v9095 = vpop.permute.xlu0 %9094
        %v9097 = vadd.f32 %v9060, %v8669
        %v9098 = vadd.f32 %v9065, %v8669
        %v9099 = vadd.f32 %v9070, %v8669
        %v9100 = vadd.f32 %v9075, %v8669
        %v9101 = vadd.f32 %v9080, %v8669
        %v9102 = vadd.f32 %v9085, %v8669
        %v9103 = vadd.f32 %v9090, %v8669
        %v9104 = vadd.f32 %v9095, %v8669
        %v9105 = vsub.f32 0.0, %v9097
        %v9106 = vsub.f32 0.0, %v9098
        %v9107 = vsub.f32 0.0, %v9099
        %v9108 = vsub.f32 0.0, %v9100
        %v9109 = vsub.f32 0.0, %v9101
        %v9110 = vsub.f32 0.0, %v9102
        %v9111 = vsub.f32 0.0, %v9103
        %v9112 = vsub.f32 0.0, %v9104
        %v9113 = vmul.f32 %v9105, 1.442695
        %v9114 = vpow.pop %v9113
        %v9115 = vmul.f32 %v9106, 1.442695
        %v9116 = vpow.pop %v9115
        %v9117 = vmul.f32 %v9107, 1.442695
        %v9118 = vpow.pop %v9117
        %v9119 = vmul.f32 %v9108, 1.442695
        %v9120 = vpow.pop %v9119
        %v9121 = vmul.f32 %v9109, 1.442695
        %v9122 = vpow.pop %v9121
        %v9123 = vmul.f32 %v9110, 1.442695
        %v9124 = vpow.pop %v9123
        %v9125 = vmul.f32 %v9111, 1.442695
        %v9126 = vpow.pop %v9125
        %v9127 = vmul.f32 %v9112, 1.442695
        %v9128 = vpow.pop %v9127
        %v9129 = vadd.f32 %v9114, 1.0
        %v9130 = vadd.f32 %v9116, 1.0
        %v9131 = vadd.f32 %v9118, 1.0
        %v9132 = vadd.f32 %v9120, 1.0
        %v9133 = vadd.f32 %v9122, 1.0
        %v9134 = vadd.f32 %v9124, 1.0
        %v9135 = vadd.f32 %v9126, 1.0
        %v9136 = vadd.f32 %v9128, 1.0
        %v9137 = vrcp.pop %v9129
        %v9138 = vmul.f32 1.0, %v9137
        %v9139 = vrcp.pop %v9130
        %v9140 = vmul.f32 1.0, %v9139
        %v9141 = vrcp.pop %v9131
        %v9142 = vmul.f32 1.0, %v9141
        %v9143 = vrcp.pop %v9132
        %v9144 = vmul.f32 1.0, %v9143
        %v9145 = vrcp.pop %v9133
        %v9146 = vmul.f32 1.0, %v9145
        %v9147 = vrcp.pop %v9134
        %v9148 = vmul.f32 1.0, %v9147
        %v9149 = vrcp.pop %v9135
        %v9150 = vmul.f32 1.0, %v9149
        %v9151 = vrcp.pop %v9136
        %v9152 = vmul.f32 1.0, %v9151
        %v9153 = vadd.f32 %v9138, 1.0
        %v9154 = vadd.f32 %v9140, 1.0
        %v9155 = vadd.f32 %v9142, 1.0
        %v9156 = vadd.f32 %v9144, 1.0
        %v9157 = vadd.f32 %v9146, 1.0
        %v9158 = vadd.f32 %v9148, 1.0
        %v9159 = vadd.f32 %v9150, 1.0
        %v9160 = vadd.f32 %v9152, 1.0
        %v9161 = vmul.f32 %v9153, %v9040
        %v9162 = vmul.f32 %v9154, %v9041
        %v9163 = vmul.f32 %v9155, %v9042
        %v9164 = vmul.f32 %v9156, %v9043
        %v9165 = vmul.f32 %v9157, %v9044
        %v9166 = vmul.f32 %v9158, %v9045
        %v9167 = vmul.f32 %v9159, %v9046
        %v9168 = vmul.f32 %v9160, %v9047
        %v9169 = vadd.f32 %v9161, %v8745
        %v9170 = vadd.f32 %v9162, %v8745
        %v9171 = vadd.f32 %v9163, %v8745
        %v9172 = vadd.f32 %v9164, %v8745
        %v9173 = vadd.f32 %v9165, %v8745
        %v9174 = vadd.f32 %v9166, %v8745
        %v9175 = vadd.f32 %v9167, %v8745
        %v9176 = vadd.f32 %v9168, %v8745
        %v9177 = vsub.f32 0.0, %v9169
        %v9178 = vsub.f32 0.0, %v9170
        %v9179 = vsub.f32 0.0, %v9171
        %v9180 = vsub.f32 0.0, %v9172
        %v9181 = vsub.f32 0.0, %v9173
        %v9182 = vsub.f32 0.0, %v9174
        %v9183 = vsub.f32 0.0, %v9175
        %v9184 = vsub.f32 0.0, %v9176
        %v9185 = vmul.f32 %v9177, 1.442695
        %v9186 = vpow.pop %v9185
        %v9187 = vmul.f32 %v9178, 1.442695
        %v9188 = vpow.pop %v9187
        %v9189 = vmul.f32 %v9179, 1.442695
        %v9190 = vpow.pop %v9189
        %v9191 = vmul.f32 %v9180, 1.442695
        %v9192 = vpow.pop %v9191
        %v9193 = vmul.f32 %v9181, 1.442695
        %v9194 = vpow.pop %v9193
        %v9195 = vmul.f32 %v9182, 1.442695
        %v9196 = vpow.pop %v9195
        %v9197 = vmul.f32 %v9183, 1.442695
        %v9198 = vpow.pop %v9197
        %v9199 = vmul.f32 %v9184, 1.442695
        %v9200 = vpow.pop %v9199
        %v9201 = vadd.f32 %v9186, 1.0
        %v9202 = vadd.f32 %v9188, 1.0
        %v9203 = vadd.f32 %v9190, 1.0
        %v9204 = vadd.f32 %v9192, 1.0
        %v9205 = vadd.f32 %v9194, 1.0
        %v9206 = vadd.f32 %v9196, 1.0
        %v9207 = vadd.f32 %v9198, 1.0
        %v9208 = vadd.f32 %v9200, 1.0
        %v9209 = vrcp.pop %v9201
        %v9210 = vmul.f32 1.0, %v9209
        %v9211 = vrcp.pop %v9202
        %v9212 = vmul.f32 1.0, %v9211
        %v9213 = vrcp.pop %v9203
        %v9214 = vmul.f32 1.0, %v9213
        %v9215 = vrcp.pop %v9204
        %v9216 = vmul.f32 1.0, %v9215
        %v9217 = vrcp.pop %v9205
        %v9218 = vmul.f32 1.0, %v9217
        %v9219 = vrcp.pop %v9206
        %v9220 = vmul.f32 1.0, %v9219
        %v9221 = vrcp.pop %v9207
        %v9222 = vmul.f32 1.0, %v9221
        %v9223 = vrcp.pop %v9208
        %v9224 = vmul.f32 1.0, %v9223
        %v9225 = vadd.f32 %v9210, 1.0
        %v9226 = vadd.f32 %v9212, 1.0
        %v9227 = vadd.f32 %v9214, 1.0
        %v9228 = vadd.f32 %v9216, 1.0
        %v9229 = vadd.f32 %v9218, 1.0
        %v9230 = vadd.f32 %v9220, 1.0
        %v9231 = vadd.f32 %v9222, 1.0
        %v9232 = vadd.f32 %v9224, 1.0
        %v9233 = vmul.f32 %v9225, %v9040
        %v9234 = vmul.f32 %v9226, %v9041
        %v9235 = vmul.f32 %v9227, %v9042
        %v9236 = vmul.f32 %v9228, %v9043
        %v9237 = vmul.f32 %v9229, %v9044
        %v9238 = vmul.f32 %v9230, %v9045
        %v9239 = vmul.f32 %v9231, %v9046
        %v9240 = vmul.f32 %v9232, %v9047
        %s9241 = scalar_lea.vmem %s651, 128 [#allocation7]
        %9242 = vst.msk [vmem:[%s9241] sm:$0xff] %vm690, %v9233
        %9243 = vst.msk [vmem:[%s9241 + $0x8] sm:$0xff] %vm690, %v9234
        %9244 = vst.msk [vmem:[%s9241 + $0x10] sm:$0xff] %vm690, %v9235
        %9245 = vst.msk [vmem:[%s9241 + $0x18] sm:$0xff] %vm690, %v9236
        %9246 = vst.msk [vmem:[%s9241 + $0x20] sm:$0xff] %vm690, %v9237
        %9247 = vst.msk [vmem:[%s9241 + $0x28] sm:$0xff] %vm690, %v9238
        %9248 = vst.msk [vmem:[%s9241 + $0x30] sm:$0xff] %vm690, %v9239
        %9249 = vst.msk [vmem:[%s9241 + $0x38] sm:$0xff] %vm690, %v9240
        %s9250 = sadd.s32 192, 32
        %s9251 = scalar_lea.vmem %s656, %s9250
        %v9252 = vld [vmem:[%s9251] sm:$0xff]
        %v9253 = vld [vmem:[%s9251 + $0x8] sm:$0xff]
        %v9254 = vld [vmem:[%s9251 + $0x10] sm:$0xff]
        %v9255 = vld [vmem:[%s9251 + $0x18] sm:$0xff]
        %v9256 = vld [vmem:[%s9251 + $0x20] sm:$0xff]
        %v9257 = vld [vmem:[%s9251 + $0x28] sm:$0xff]
        %v9258 = vld [vmem:[%s9251 + $0x30] sm:$0xff]
        %v9259 = vld [vmem:[%s9251 + $0x38] sm:$0xff]
        %s9260 = scalar_lea.vmem [#allocation5], 192
        %v9261 = vld [vmem:[%s9260] sm:$0xff]
        %v9262 = vld [vmem:[%s9260 + $0x8] sm:$0xff]
        %v9263 = vld [vmem:[%s9260 + $0x10] sm:$0xff]
        %v9264 = vld [vmem:[%s9260 + $0x18] sm:$0xff]
        %v9265 = vld [vmem:[%s9260 + $0x20] sm:$0xff]
        %v9266 = vld [vmem:[%s9260 + $0x28] sm:$0xff]
        %v9267 = vld [vmem:[%s9260 + $0x30] sm:$0xff]
        %v9268 = vld [vmem:[%s9260 + $0x38] sm:$0xff]
        %9270 = vset.pattern.permute.xlu0 0
        %9271 = vperm.xlu0 %9270, %v9261
        %v9272 = vpop.permute.xlu0 %9271
        %9275 = vset.pattern.permute.xlu0 0
        %9276 = vperm.xlu0 %9275, %v9262
        %v9277 = vpop.permute.xlu0 %9276
        %9280 = vset.pattern.permute.xlu0 0
        %9281 = vperm.xlu0 %9280, %v9263
        %v9282 = vpop.permute.xlu0 %9281
        %9285 = vset.pattern.permute.xlu0 0
        %9286 = vperm.xlu0 %9285, %v9264
        %v9287 = vpop.permute.xlu0 %9286
        %9290 = vset.pattern.permute.xlu0 0
        %9291 = vperm.xlu0 %9290, %v9265
        %v9292 = vpop.permute.xlu0 %9291
        %9295 = vset.pattern.permute.xlu0 0
        %9296 = vperm.xlu0 %9295, %v9266
        %v9297 = vpop.permute.xlu0 %9296
        %9300 = vset.pattern.permute.xlu0 0
        %9301 = vperm.xlu0 %9300, %v9267
        %v9302 = vpop.permute.xlu0 %9301
        %9305 = vset.pattern.permute.xlu0 0
        %9306 = vperm.xlu0 %9305, %v9268
        %v9307 = vpop.permute.xlu0 %9306
        %v9309 = vadd.f32 %v9272, %v8669
        %v9310 = vadd.f32 %v9277, %v8669
        %v9311 = vadd.f32 %v9282, %v8669
        %v9312 = vadd.f32 %v9287, %v8669
        %v9313 = vadd.f32 %v9292, %v8669
        %v9314 = vadd.f32 %v9297, %v8669
        %v9315 = vadd.f32 %v9302, %v8669
        %v9316 = vadd.f32 %v9307, %v8669
        %v9317 = vsub.f32 0.0, %v9309
        %v9318 = vsub.f32 0.0, %v9310
        %v9319 = vsub.f32 0.0, %v9311
        %v9320 = vsub.f32 0.0, %v9312
        %v9321 = vsub.f32 0.0, %v9313
        %v9322 = vsub.f32 0.0, %v9314
        %v9323 = vsub.f32 0.0, %v9315
        %v9324 = vsub.f32 0.0, %v9316
        %v9325 = vmul.f32 %v9317, 1.442695
        %v9326 = vpow.pop %v9325
        %v9327 = vmul.f32 %v9318, 1.442695
        %v9328 = vpow.pop %v9327
        %v9329 = vmul.f32 %v9319, 1.442695
        %v9330 = vpow.pop %v9329
        %v9331 = vmul.f32 %v9320, 1.442695
        %v9332 = vpow.pop %v9331
        %v9333 = vmul.f32 %v9321, 1.442695
        %v9334 = vpow.pop %v9333
        %v9335 = vmul.f32 %v9322, 1.442695
        %v9336 = vpow.pop %v9335
        %v9337 = vmul.f32 %v9323, 1.442695
        %v9338 = vpow.pop %v9337
        %v9339 = vmul.f32 %v9324, 1.442695
        %v9340 = vpow.pop %v9339
        %v9341 = vadd.f32 %v9326, 1.0
        %v9342 = vadd.f32 %v9328, 1.0
        %v9343 = vadd.f32 %v9330, 1.0
        %v9344 = vadd.f32 %v9332, 1.0
        %v9345 = vadd.f32 %v9334, 1.0
        %v9346 = vadd.f32 %v9336, 1.0
        %v9347 = vadd.f32 %v9338, 1.0
        %v9348 = vadd.f32 %v9340, 1.0
        %v9349 = vrcp.pop %v9341
        %v9350 = vmul.f32 1.0, %v9349
        %v9351 = vrcp.pop %v9342
        %v9352 = vmul.f32 1.0, %v9351
        %v9353 = vrcp.pop %v9343
        %v9354 = vmul.f32 1.0, %v9353
        %v9355 = vrcp.pop %v9344
        %v9356 = vmul.f32 1.0, %v9355
        %v9357 = vrcp.pop %v9345
        %v9358 = vmul.f32 1.0, %v9357
        %v9359 = vrcp.pop %v9346
        %v9360 = vmul.f32 1.0, %v9359
        %v9361 = vrcp.pop %v9347
        %v9362 = vmul.f32 1.0, %v9361
        %v9363 = vrcp.pop %v9348
        %v9364 = vmul.f32 1.0, %v9363
        %v9365 = vadd.f32 %v9350, 1.0
        %v9366 = vadd.f32 %v9352, 1.0
        %v9367 = vadd.f32 %v9354, 1.0
        %v9368 = vadd.f32 %v9356, 1.0
        %v9369 = vadd.f32 %v9358, 1.0
        %v9370 = vadd.f32 %v9360, 1.0
        %v9371 = vadd.f32 %v9362, 1.0
        %v9372 = vadd.f32 %v9364, 1.0
        %v9373 = vmul.f32 %v9365, %v9252
        %v9374 = vmul.f32 %v9366, %v9253
        %v9375 = vmul.f32 %v9367, %v9254
        %v9376 = vmul.f32 %v9368, %v9255
        %v9377 = vmul.f32 %v9369, %v9256
        %v9378 = vmul.f32 %v9370, %v9257
        %v9379 = vmul.f32 %v9371, %v9258
        %v9380 = vmul.f32 %v9372, %v9259
        %v9381 = vadd.f32 %v9373, %v8745
        %v9382 = vadd.f32 %v9374, %v8745
        %v9383 = vadd.f32 %v9375, %v8745
        %v9384 = vadd.f32 %v9376, %v8745
        %v9385 = vadd.f32 %v9377, %v8745
        %v9386 = vadd.f32 %v9378, %v8745
        %v9387 = vadd.f32 %v9379, %v8745
        %v9388 = vadd.f32 %v9380, %v8745
        %v9389 = vsub.f32 0.0, %v9381
        %v9390 = vsub.f32 0.0, %v9382
        %v9391 = vsub.f32 0.0, %v9383
        %v9392 = vsub.f32 0.0, %v9384
        %v9393 = vsub.f32 0.0, %v9385
        %v9394 = vsub.f32 0.0, %v9386
        %v9395 = vsub.f32 0.0, %v9387
        %v9396 = vsub.f32 0.0, %v9388
        %v9397 = vmul.f32 %v9389, 1.442695
        %v9398 = vpow.pop %v9397
        %v9399 = vmul.f32 %v9390, 1.442695
        %v9400 = vpow.pop %v9399
        %v9401 = vmul.f32 %v9391, 1.442695
        %v9402 = vpow.pop %v9401
        %v9403 = vmul.f32 %v9392, 1.442695
        %v9404 = vpow.pop %v9403
        %v9405 = vmul.f32 %v9393, 1.442695
        %v9406 = vpow.pop %v9405
        %v9407 = vmul.f32 %v9394, 1.442695
        %v9408 = vpow.pop %v9407
        %v9409 = vmul.f32 %v9395, 1.442695
        %v9410 = vpow.pop %v9409
        %v9411 = vmul.f32 %v9396, 1.442695
        %v9412 = vpow.pop %v9411
        %v9413 = vadd.f32 %v9398, 1.0
        %v9414 = vadd.f32 %v9400, 1.0
        %v9415 = vadd.f32 %v9402, 1.0
        %v9416 = vadd.f32 %v9404, 1.0
        %v9417 = vadd.f32 %v9406, 1.0
        %v9418 = vadd.f32 %v9408, 1.0
        %v9419 = vadd.f32 %v9410, 1.0
        %v9420 = vadd.f32 %v9412, 1.0
        %v9421 = vrcp.pop %v9413
        %v9422 = vmul.f32 1.0, %v9421
        %v9423 = vrcp.pop %v9414
        %v9424 = vmul.f32 1.0, %v9423
        %v9425 = vrcp.pop %v9415
        %v9426 = vmul.f32 1.0, %v9425
        %v9427 = vrcp.pop %v9416
        %v9428 = vmul.f32 1.0, %v9427
        %v9429 = vrcp.pop %v9417
        %v9430 = vmul.f32 1.0, %v9429
        %v9431 = vrcp.pop %v9418
        %v9432 = vmul.f32 1.0, %v9431
        %v9433 = vrcp.pop %v9419
        %v9434 = vmul.f32 1.0, %v9433
        %v9435 = vrcp.pop %v9420
        %v9436 = vmul.f32 1.0, %v9435
        %v9437 = vadd.f32 %v9422, 1.0
        %v9438 = vadd.f32 %v9424, 1.0
        %v9439 = vadd.f32 %v9426, 1.0
        %v9440 = vadd.f32 %v9428, 1.0
        %v9441 = vadd.f32 %v9430, 1.0
        %v9442 = vadd.f32 %v9432, 1.0
        %v9443 = vadd.f32 %v9434, 1.0
        %v9444 = vadd.f32 %v9436, 1.0
        %v9445 = vmul.f32 %v9437, %v9252
        %v9446 = vmul.f32 %v9438, %v9253
        %v9447 = vmul.f32 %v9439, %v9254
        %v9448 = vmul.f32 %v9440, %v9255
        %v9449 = vmul.f32 %v9441, %v9256
        %v9450 = vmul.f32 %v9442, %v9257
        %v9451 = vmul.f32 %v9443, %v9258
        %v9452 = vmul.f32 %v9444, %v9259
        %s9453 = scalar_lea.vmem %s651, 192 [#allocation7]
        %9454 = vst.msk [vmem:[%s9453] sm:$0xff] %vm690, %v9445
        %9455 = vst.msk [vmem:[%s9453 + $0x8] sm:$0xff] %vm690, %v9446
        %9456 = vst.msk [vmem:[%s9453 + $0x10] sm:$0xff] %vm690, %v9447
        %9457 = vst.msk [vmem:[%s9453 + $0x18] sm:$0xff] %vm690, %v9448
        %9458 = vst.msk [vmem:[%s9453 + $0x20] sm:$0xff] %vm690, %v9449
        %9459 = vst.msk [vmem:[%s9453 + $0x28] sm:$0xff] %vm690, %v9450
        %9460 = vst.msk [vmem:[%s9453 + $0x30] sm:$0xff] %vm690, %v9451
        %9461 = vst.msk [vmem:[%s9453 + $0x38] sm:$0xff] %vm690, %v9452
        %s9462 = sand.u32 %s491, 1
        %s9463 = scalar_lea.sflag [#allocation8], %s9462
        %s9464 = sand.u32 %s491, 1
        %s9465 = smul.addr %s9464, 256
        %s9466 = scalar_lea.vmem [#allocation7], %s9465
        // Predicated region
        $region105: #{bam_forward.1} parent=103 // pred_check
          %p9467 = pneg %p501
        $region106: #{bam_forward.1} parent=103 // pred_check_branch
          %9469 = sbr.rel (%p9467) target = $region108
        $region107: #{bam_forward.1} parent=103 // pred_region
          %s9471 = ssub.s32 4096, 4096
          %9472 = vsyncadd %s9463, %s9471
          %s9473 = smul.addr %s37, 32
          %s9474 = smul.addr %s9473, 128
          %s9475 = scalar_lea.hbm %s21, %s9474
          %s9476 = sshll.u32 %s9466, 4
          %s9477 = int_to_ptr.vmem [resolvable:$true] %s9476
          %9482 = dma.vmem_to_hbm [thread:$0]  %s9477, 4096, %s9475, %s9463, 128, 128, 8
        $region108: #{bam_forward.1} parent=103 // pred_fallthru
          _
      $region104: #{bam_forward.1} parent=5 // pred_fallthru
        _
      %p9483 = scmp.le.s32.totalorder 2, %s32
      // Predicated region
      $region109: #{bam_forward.1} parent=5 // pred_check
        %p9484 = pneg %p9483
      $region110: #{bam_forward.1} parent=5 // pred_check_branch
        %9486 = sbr.rel (%p9484) target = $region112
      $region111: #{bam_forward.1} parent=5 // pred_region
        %s9487 = ssub.s32 %s32, 2
        // Predicated region
        $region113: #{bam_forward.1} parent=111 // pred_check
          %p9488 = pneg %p507
        $region114: #{bam_forward.1} parent=111 // pred_check_branch
          %9490 = sbr.rel (%p9488) target = $region116
        $region115: #{bam_forward.1} parent=111 // pred_region
          %s9491 = sand.u32 %s492, 1
          %s9492 = scalar_lea.sflag [#allocation8], %s9491
          %s9493 = sand.u32 %s492, 1
          %s9494 = smul.addr %s9493, 256
          %s9495 = scalar_lea.vmem [#allocation7], %s9494
          %9496 = dma.done %s9492, 4096
        $region116: #{bam_forward.1} parent=111 // pred_fallthru
          _
      $region112: #{bam_forward.1} parent=5 // pred_fallthru
        _
    $region6: #{bam_forward.1} parent=1 // loop_footer
      %s36 = sadd.s32 1, %s32
    $region7: #{bam_forward.1} parent=1 // loop_footer_branch
      %31 = sbr.rel target = $region3
    $region8: #{bam_forward.1} parent=1 // loop_exit
      _
    %9497 = vsyncpa [#allocation8], 1
    %s9498 = scalar_lea.sflag [#allocation8], 1
    %9499 = vsyncpa %s9498, 1

</llo_original>
